<compile_context>
chip_gen: v7x
topology: tpu7x:2x2x1
jax: 0.10.0
libtpu: 0.0.40
codegen_flags: <defaults>
</compile_context>

<pallas_src>
import functools

import jax
import jax.numpy as jnp
from jax.experimental import pallas as pl
from jax.experimental.pallas import tpu as pltpu


# ----------------------------- Pallas kernel ------------------------------ #

def _disc_fused_kernel(cols_ref, mask_ref, w1_ref, b1_ref, w2_ref, b2_ref,
                       wf_ref, bf_ref, o_ref, g_ref, p_ref):
    """Fused conv1 -> conv2 -> Linear -> Sigmoid for a tile of TB samples.

    cols_ref : (2, TB, 64, 64) bf16  conv1 im2col patches. dim0 = row-parity
                                     class p of the padded conv2 input,
                                     dim2 = 8x8 class-grid position i*8+j,
                                     dim3 = [q=0 patch (32) | q=1 patch (32)].
    mask_ref : (2, 1, 64, 2H) f32    1.0 on real conv1 outputs, 0.0 on
                                     conv2 zero-padding grid positions.
    w1_ref   : (64, 2H)  bf16        block-diagonal conv1 weight (both q).
    b1_ref   : (1, 2H)   f32
    w2_ref   : (16H, H)  bf16        conv2 weight, rows = (kh, kw//2, kw%2, cin).
    b2_ref   : (1, H)    f32
    wf_ref   : (64, H)   f32         Linear weight on the 8x8 conv2 grid
                                     (grid row/col 7 zeroed), channels on lanes.
    bf_ref   : (1, 1)    f32
    o_ref    : (1, 1, TB) f32        lane-dense sigmoid outputs for the tile.
    g_ref    : (2, TB, 8, 8, 2H) bf16  scratch: parity-split h1, col-parity on lanes.
    p_ref    : (TB*64, 16H) bf16     scratch: conv2 im2col patch matrix.
    """
    TB = cols_ref.shape[1]
    C1 = cols_ref.shape[3]
    H = wf_ref.shape[1]
    C2 = 2 * H

    # ---- Conv2d(2, H, k=4, s=2, p=1) + LeakyReLU(0.2): both column-parity
    # classes at once via the block-diagonal weight (q folded onto lanes). ----
    x1 = cols_ref[...].reshape(2 * TB * 64, C1)
    y1 = jnp.dot(x1, w1_ref[...], preferred_element_type=jnp.float32)
    y1 = y1 + b1_ref[...]
    y1 = jnp.maximum(y1, 0.2 * y1)                         # LeakyReLU(0.2)
    # TODO(synk): nn.Dropout(0.4) after conv1 is identity in eval mode.
    y1 = y1.reshape(2, TB, 64, C2) * mask_ref[...]          # conv2 zero padding
    g_ref[...] = y1.reshape(2, TB, 8, 8, C2).astype(jnp.bfloat16)

    # ---- In-VMEM conv2 im2col: 8 aligned slab copies into P (TB*64, 16H).
    # Each slab carries the two taps kw=2m, 2m+1 on lanes.  Odd-row / odd-col
    # tap offsets are wrap-around rotations: the wrapped rows land only in the
    # discarded (oh==7 / ow==7) output positions (zeroed by wf), so no halo or
    # per-step scratch zero-fill is needed. -----------------------------------
    for kh in range(4):
        blk = g_ref[kh % 2]                                 # (TB, 8, 8, C2)
        if kh // 2 == 1:                                    # +1 class-row shift
            blk = jnp.concatenate([blk[:, 1:], blk[:, :1]], axis=1)
        for m in range(2):
            sl = blk
            if m == 1:                                      # +1 class-col shift
                sl = jnp.concatenate([sl[:, :, 1:], sl[:, :, :1]], axis=2)
            g = kh * 2 + m
            p_ref[:, g * C2:(g + 1) * C2] = sl.reshape(TB * 64, C2)

    # ---- Conv2d(H, H, k=4, s=2, p=1) as ONE (TB*64,16H)@(16H,H) MXU matmul --
    h2 = jnp.dot(p_ref[...], w2_ref[...], preferred_element_type=jnp.float32)
    h2 = h2 + b2_ref[...]
    h2 = jnp.maximum(h2, 0.2 * h2)                          # LeakyReLU(0.2)
    # TODO(synk): nn.Dropout(0.4) after conv2 is identity in eval mode.

    # ---- Flatten + Linear(7*7*H, 1) + Sigmoid: VPU multiply + reductions ----
    prod = h2.reshape(TB, 64, H) * wf_ref[...]              # wf zero at grid 7s
    z = jnp.sum(prod, axis=2)                               # (TB, 64)
    z = jnp.sum(z, axis=1, keepdims=True) + bf_ref[...]     # (TB, 1)
    sig = pl.reciprocal(1.0 + jnp.exp(-z), approx=True)     # sigmoid via EUP
    # Lane-dense (1, TB) store without relying on a (TB,1)->(1,TB) relayout:
    # diagonal select + sublane reduction.
    row = jax.lax.broadcasted_iota(jnp.int32, (TB, TB), 0)
    col = jax.lax.broadcasted_iota(jnp.int32, (TB, TB), 1)
    o_ref[...] = jnp.sum(jnp.where(row == col, sig, 0.0),
                         axis=0, keepdims=True).reshape(1, 1, TB)


# ------------------------------ JAX glue ---------------------------------- #

def im2col(x_nhwc, k, stride, pad):
    """x: (B, H, W, C) -> patches (B, Ho, Wo, k*k*C) in (kh, kw, cin) order."""
    B, Hh, Ww, C = x_nhwc.shape
    xp = jnp.pad(x_nhwc, ((0, 0), (pad, pad), (pad, pad), (0, 0)))
    Ho = (Hh + 2 * pad - k) // stride + 1
    Wo = (Ww + 2 * pad - k) // stride + 1
    slabs = []
    for di in range(k):
        for dj in range(k):
            slabs.append(xp[:, di:di + (Ho - 1) * stride + 1:stride,
                            dj:dj + (Wo - 1) * stride + 1:stride, :])
    cols = jnp.stack(slabs, axis=3)                         # (B, Ho, Wo, k*k, C)
    return cols.reshape(B, Ho, Wo, k * k * C), Ho, Wo


def init_params(key, hidden_dim=64, num_classes=10, img_size=28):
    """PyTorch-layout parameters (Conv2d: (Cout,Cin,kH,kW); Linear as (in,out))."""
    ks = jax.random.split(key, 7)
    return {
        "w1": 0.05 * jax.random.normal(ks[0], (hidden_dim, 2, 4, 4), jnp.float32),
        "b1": 0.05 * jax.random.normal(ks[1], (hidden_dim,), jnp.float32),
        "w2": 0.05 * jax.random.normal(ks[2], (hidden_dim, hidden_dim, 4, 4), jnp.float32),
        "b2": 0.05 * jax.random.normal(ks[3], (hidden_dim,), jnp.float32),
        "wf": 0.05 * jax.random.normal(ks[4], (7 * 7 * hidden_dim, 1), jnp.float32),
        "bf": 0.05 * jax.random.normal(ks[5], (1,), jnp.float32),
        "embed": jax.random.normal(ks[6], (num_classes, img_size * img_size), jnp.float32),
    }


def prepare_params(params, hidden_dim=64):
    """One-time re-layout of PyTorch-style params into kernel-ready operands."""
    H = hidden_dim
    K1 = 4 * 4 * 2

    # conv1 weight, block-diagonal so both column-parity classes come out of
    # one matmul with q on lanes: rows = [q=0 patch | q=1 patch].
    w1 = jnp.transpose(params["w1"], (2, 3, 1, 0)).reshape(K1, H)
    w1bd = jnp.zeros((2 * K1, 2 * H), jnp.float32)
    w1bd = w1bd.at[:K1, :H].set(w1)
    w1bd = w1bd.at[K1:, H:].set(w1)
    b1c = jnp.concatenate([params["b1"], params["b1"]]).reshape(1, 2 * H)

    # conv2 weight, rows ordered (kh, m=kw//2, q=kw%2, cin) to match the lane
    # layout of the in-kernel patch matrix.
    w2 = jnp.transpose(params["w2"], (2, 3, 1, 0))          # (kh, kw, cin, cout)
    w2f = w2.reshape(4, 2, 2, H, H).reshape(16 * H, H)

    # Linear weight on the 8x8 conv2 output grid, channels on lanes, with the
    # NCHW-flatten permutation folded in and grid row/col 7 zeroed so invalid
    # conv2 rows contribute nothing.
    wf = params["wf"].reshape(H, 7, 7)                      # (cout, oh, ow)
    wf = jnp.transpose(wf, (1, 2, 0))                       # (oh, ow, cout)
    wf = jnp.zeros((8, 8, H), jnp.float32).at[:7, :7, :].set(wf).reshape(64, H)

    # Validity mask for the parity-grouped conv1 output grid: (p, ij, q*H+ch).
    mask = jnp.zeros((2, 2, 8, 8), jnp.float32)
    for p in (0, 1):
        for q in (0, 1):
            mask = mask.at[p, q, 1 - p:8 - p, 1 - q:8 - q].set(1.0)
    mask = jnp.transpose(mask, (0, 2, 3, 1)).reshape(2, 64, 2)
    mask = jnp.repeat(mask, H, axis=2)[:, None]             # (2, 1, 64, 2H)

    return {
        "w1bd": w1bd.astype(jnp.bfloat16),
        "b1c": b1c.astype(jnp.float32),
        "w2f": w2f.astype(jnp.bfloat16),
        "b2": params["b2"].reshape(1, H).astype(jnp.float32),
        "wf": wf,
        "bf": params["bf"].reshape(1, 1).astype(jnp.float32),
        "mask": mask,
        "embed": params["embed"],
    }


def discriminator_forward(prep, x_nchw, labels, hidden_dim=64, img_size=28,
                          tile_b=8):
    B = x_nchw.shape[0]
    H = hidden_dim

    # Embedding lookup + channel concat + NHWC (cheap XLA glue).
    emb = prep["embed"][labels].reshape(B, 1, img_size, img_size)
    x = jnp.concatenate([x_nchw, emb], axis=1)              # (B, 2, 28, 28) NCHW
    x = jnp.transpose(x, (0, 2, 3, 1))                      # (B, 28, 28, 2) NHWC

    # Conv1 im2col, grouped by the parity class (p, q) of the padded conv2
    # input position each conv1 output lands on; q is folded onto the K axis
    # so the in-kernel block-diagonal matmul emits both q classes on lanes.
    cols, _, _ = im2col(x, 4, 2, 1)                         # (B, 14, 14, 32)
    K1 = cols.shape[-1]
    g4 = jnp.zeros((B, 2, 2, 8, 8, K1), cols.dtype)
    for p in (0, 1):
        for q in (0, 1):
            g4 = g4.at[:, p, q, 1 - p:8 - p, 1 - q:8 - q, :].set(
                cols[:, 1 - p::2, 1 - q::2, :])
    cols2 = jnp.transpose(g4, (1, 0, 3, 4, 2, 5))           # (p, B, i, j, q, K1)
    cols2 = cols2.reshape(2, B, 64, 2 * K1).astype(jnp.bfloat16)

    TB = int(tile_b)
    nt = -(-B // TB)
    B_pad = nt * TB
    if B_pad != B:
        cols2 = jnp.pad(cols2, ((0, 0), (0, B_pad - B), (0, 0), (0, 0)))

    out = pl.pallas_call(
        _disc_fused_kernel,
        out_shape=jax.ShapeDtypeStruct((nt, 1, TB), jnp.float32),
        grid=(nt,),
        in_specs=[
            pl.BlockSpec((2, TB, 64, 2 * K1), lambda t: (0, t, 0, 0)),  # batch tile
            pl.BlockSpec((2, 1, 64, 2 * H), lambda t: (0, 0, 0, 0)),
            pl.BlockSpec((2 * K1, 2 * H), lambda t: (0, 0)),
            pl.BlockSpec((1, 2 * H), lambda t: (0, 0)),
            pl.BlockSpec((16 * H, H), lambda t: (0, 0)),
            pl.BlockSpec((1, H), lambda t: (0, 0)),
            pl.BlockSpec((64, H), lambda t: (0, 0)),
            pl.BlockSpec((1, 1), lambda t: (0, 0)),
        ],
        out_specs=pl.BlockSpec((1, 1, TB), lambda t: (t, 0, 0)),
        scratch_shapes=[
            pltpu.VMEM((2, TB, 8, 8, 2 * H), jnp.bfloat16),   # h1 (parity split)
            pltpu.VMEM((TB * 64, 16 * H), jnp.bfloat16),      # conv2 patch matrix
        ],
        compiler_params=pltpu.CompilerParams(
            dimension_semantics=("parallel",)),
    )(cols2, prep["mask"], prep["w1bd"], prep["b1c"], prep["w2f"],
      prep["b2"], prep["wf"], prep["bf"])
    return out.reshape(B_pad, 1)[:B]


# ------------------------- pure-JAX reference ------------------------------ #

def reference_forward(params, x_nchw, labels, img_size=28):
    B = x_nchw.shape[0]
    emb = params["embed"][labels].reshape(B, 1, img_size, img_size)
    x = jnp.concatenate([x_nchw, emb], axis=1)

    def conv(v, w, b):
        y = jax.lax.conv_general_dilated(
            v, w, window_strides=(2, 2), padding=((1, 1), (1, 1)),
            dimension_numbers=("NCHW", "OIHW", "NCHW"))
        return y + b.reshape(1, -1, 1, 1)

    h1 = jax.nn.leaky_relu(conv(x, params["w1"], params["b1"]), 0.2)
    h2 = jax.nn.leaky_relu(conv(h1, params["w2"], params["b2"]), 0.2)
    flat = h2.reshape(B, -1)                                # NCHW flatten (C,H,W)
    return jax.nn.sigmoid(flat @ params["wf"] + params["bf"])


# --------------------------------- main ------------------------------------ #

if __name__ == "__main__":
    hidden_dim = 64   # module default; Linear is 7*7*hidden_dim -> 1
    num_classes = 10
    img_size = 28     # fixed by the 7*7 flatten in the module
    batch = 10        # not a multiple of tile_b -> exercises batch padding
    tile_b = 8        # samples per grid step (8-32 sensible; keeps >=2 steps)

    key = jax.random.PRNGKey(0)
    k_params, k_x, k_lbl = jax.random.split(key, 3)

    params = init_params(k_params, hidden_dim, num_classes, img_size)
    prep = prepare_params(params, hidden_dim)               # one-time re-layout
    x = jax.random.normal(k_x, (batch, 1, img_size, img_size), jnp.float32)
    labels = jax.random.randint(k_lbl, (batch,), 0, num_classes, jnp.int32)

    fwd = jax.jit(functools.partial(discriminator_forward,
                                    hidden_dim=hidden_dim, img_size=img_size,
                                    tile_b=tile_b))
    out = jax.block_until_ready(fwd(prep, x, labels))
    ref = jax.block_until_ready(reference_forward(params, x, labels, img_size))

    assert out.shape == (batch, 1)
    assert bool(jnp.all(jnp.isfinite(out)))
    assert bool(jnp.allclose(out, ref, atol=3e-2)), (out, ref)
    print("KERNEL_OK")
</pallas_src>

<mosaic_0001>
module attributes {stable_mosaic.version = 11 : i64} {
  func.func @_disc_fused_kernel(%arg0: i32, %arg1: memref<2x8x64x64xbf16, #tpu.memory_space<vmem>>, %arg2: memref<2x1x64x128xf32, #tpu.memory_space<vmem>>, %arg3: memref<64x128xbf16, #tpu.memory_space<vmem>>, %arg4: memref<1x128xf32, #tpu.memory_space<vmem>>, %arg5: memref<1024x64xbf16, #tpu.memory_space<vmem>>, %arg6: memref<1x64xf32, #tpu.memory_space<vmem>>, %arg7: memref<64x64xf32, #tpu.memory_space<vmem>>, %arg8: memref<1x1xf32, #tpu.memory_space<vmem>>, %arg9: memref<1x1x8xf32, #tpu.memory_space<vmem>>, %arg10: memref<2x8x8x8x128xbf16, #tpu.memory_space<vmem>>, %arg11: memref<512x1024xbf16, #tpu.memory_space<vmem>>) attributes {dimension_semantics = [#tpu.dimension_semantics<parallel>], iteration_bounds = array<i64: 2>, scalar_prefetch = 0 : i64, scratch_operands = 2 : i64, tpu.core_type = #tpu.core_type<tc>, window_params = [{transform_indices = @transform_0, window_bounds = array<i64: 2, 8, 64, 64>}, {pipeline_mode = #tpu.pipeline_mode<synchronous>, transform_indices = @transform_1, window_bounds = array<i64: 2, 1, 64, 128>}, {pipeline_mode = #tpu.pipeline_mode<synchronous>, transform_indices = @transform_2, window_bounds = array<i64: 64, 128>}, {pipeline_mode = #tpu.pipeline_mode<synchronous>, transform_indices = @transform_3, window_bounds = array<i64: 1, 128>}, {pipeline_mode = #tpu.pipeline_mode<synchronous>, transform_indices = @transform_4, window_bounds = array<i64: 1024, 64>}, {pipeline_mode = #tpu.pipeline_mode<synchronous>, transform_indices = @transform_5, window_bounds = array<i64: 1, 64>}, {pipeline_mode = #tpu.pipeline_mode<synchronous>, transform_indices = @transform_6, window_bounds = array<i64: 64, 64>}, {pipeline_mode = #tpu.pipeline_mode<synchronous>, transform_indices = @transform_7, window_bounds = array<i64: 1, 1>}, {transform_indices = @transform_8, window_bounds = array<i64: 1, 1, 8>}]} {
    %c0 = arith.constant 0 : index
    %c0_0 = arith.constant 0 : index
    %c0_1 = arith.constant 0 : index
    %c0_2 = arith.constant 0 : index
    %0 = vector.load %arg1[%c0, %c0_0, %c0_1, %c0_2] : memref<2x8x64x64xbf16, #tpu.memory_space<vmem>>, vector<2x8x64x64xbf16>
    %1 = vector.shape_cast %0 : vector<2x8x64x64xbf16> to vector<1024x64xbf16>
    %c0_3 = arith.constant 0 : index
    %c0_4 = arith.constant 0 : index
    %2 = vector.load %arg3[%c0_3, %c0_4] : memref<64x128xbf16, #tpu.memory_space<vmem>>, vector<64x128xbf16>
    %cst = arith.constant dense<0.000000e+00> : vector<1024x128xf32>
    %3 = tpu.matmul %1, %2, %cst {dimension_numbers = #tpu.dot_dimension_numbers<[1], [0], [0], [1], [0, 0, 1, 1], [], []>} : vector<1024x64xbf16>, vector<64x128xbf16>, vector<1024x128xf32> -> vector<1024x128xf32>
    %c0_5 = arith.constant 0 : index
    %c0_6 = arith.constant 0 : index
    %4 = vector.load %arg4[%c0_5, %c0_6] : memref<1x128xf32, #tpu.memory_space<vmem>>, vector<1x128xf32>
    %5 = vector.broadcast %4 : vector<1x128xf32> to vector<1024x128xf32>
    %6 = arith.addf %3, %5 : vector<1024x128xf32>
    %cst_7 = arith.constant 2.000000e-01 : f32
    %7 = vector.broadcast %cst_7 : f32 to vector<1024x128xf32>
    %8 = arith.mulf %7, %6 : vector<1024x128xf32>
    %9 = arith.maximumf %6, %8 : vector<1024x128xf32>
    %10 = vector.shape_cast %9 : vector<1024x128xf32> to vector<2x8x64x128xf32>
    %c0_8 = arith.constant 0 : index
    %c0_9 = arith.constant 0 : index
    %c0_10 = arith.constant 0 : index
    %c0_11 = arith.constant 0 : index
    %11 = vector.load %arg2[%c0_8, %c0_9, %c0_10, %c0_11] : memref<2x1x64x128xf32, #tpu.memory_space<vmem>>, vector<2x1x64x128xf32>
    %12 = vector.broadcast %11 : vector<2x1x64x128xf32> to vector<2x8x64x128xf32>
    %13 = arith.mulf %10, %12 : vector<2x8x64x128xf32>
    %14 = vector.shape_cast %13 : vector<2x8x64x128xf32> to vector<2x8x8x8x128xf32>
    %15 = arith.truncf %14 : vector<2x8x8x8x128xf32> to vector<2x8x8x8x128xbf16>
    %c0_12 = arith.constant 0 : index
    %c0_13 = arith.constant 0 : index
    %c0_14 = arith.constant 0 : index
    %c0_15 = arith.constant 0 : index
    %c0_16 = arith.constant 0 : index
    %16 = vector.load %arg10[%c0_12, %c0_13, %c0_14, %c0_15, %c0_16] : memref<2x8x8x8x128xbf16, #tpu.memory_space<vmem>>, vector<2x8x8x8x128xbf16>
    tpu.vector_store %arg10[%c0_12, %c0_13, %c0_14, %c0_15, %c0_16], %15 {strides = array<i32>} : memref<2x8x8x8x128xbf16, #tpu.memory_space<vmem>>, vector<2x8x8x8x128xbf16>,
    %c0_17 = arith.constant 0 : index
    %c0_18 = arith.constant 0 : index
    %c0_19 = arith.constant 0 : index
    %c0_20 = arith.constant 0 : index
    %c0_21 = arith.constant 0 : index
    %17 = vector.load %arg10[%c0_17, %c0_18, %c0_19, %c0_20, %c0_21] : memref<2x8x8x8x128xbf16, #tpu.memory_space<vmem>>, vector<1x8x8x8x128xbf16>
    %18 = vector.shape_cast %17 : vector<1x8x8x8x128xbf16> to vector<8x8x8x128xbf16>
    %19 = vector.shape_cast %18 : vector<8x8x8x128xbf16> to vector<512x128xbf16>
    %c0_22 = arith.constant 0 : index
    %c0_23 = arith.constant 0 : index
    %20 = vector.load %arg11[%c0_22, %c0_23] : memref<512x1024xbf16, #tpu.memory_space<vmem>>, vector<512x128xbf16>
    tpu.vector_store %arg11[%c0_22, %c0_23], %19 {strides = array<i32>} : memref<512x1024xbf16, #tpu.memory_space<vmem>>, vector<512x128xbf16>,
    %21 = vector.extract_strided_slice %18 {offsets = [0, 0, 1, 0], sizes = [8, 8, 7, 128], strides = [1, 1, 1, 1]} : vector<8x8x8x128xbf16> to vector<8x8x7x128xbf16>
    %22 = vector.extract_strided_slice %18 {offsets = [0, 0, 0, 0], sizes = [8, 8, 1, 128], strides = [1, 1, 1, 1]} : vector<8x8x8x128xbf16> to vector<8x8x1x128xbf16>
    %23 = tpu.concatenate %21, %22 in 2 : vector<8x8x7x128xbf16>, vector<8x8x1x128xbf16> -> vector<8x8x8x128xbf16>
    %24 = vector.shape_cast %23 : vector<8x8x8x128xbf16> to vector<512x128xbf16>
    %c0_24 = arith.constant 0 : index
    %c128 = arith.constant 128 : index
    %25 = vector.load %arg11[%c0_24, %c128] : memref<512x1024xbf16, #tpu.memory_space<vmem>>, vector<512x128xbf16>
    tpu.vector_store %arg11[%c0_24, %c128], %24 {strides = array<i32>} : memref<512x1024xbf16, #tpu.memory_space<vmem>>, vector<512x128xbf16>,
    %c1 = arith.constant 1 : index
    %c0_25 = arith.constant 0 : index
    %c0_26 = arith.constant 0 : index
    %c0_27 = arith.constant 0 : index
    %c0_28 = arith.constant 0 : index
    %26 = vector.load %arg10[%c1, %c0_25, %c0_26, %c0_27, %c0_28] : memref<2x8x8x8x128xbf16, #tpu.memory_space<vmem>>, vector<1x8x8x8x128xbf16>
    %27 = vector.shape_cast %26 : vector<1x8x8x8x128xbf16> to vector<8x8x8x128xbf16>
    %28 = vector.shape_cast %27 : vector<8x8x8x128xbf16> to vector<512x128xbf16>
    %c0_29 = arith.constant 0 : index
    %c256 = arith.constant 256 : index
    %29 = vector.load %arg11[%c0_29, %c256] : memref<512x1024xbf16, #tpu.memory_space<vmem>>, vector<512x128xbf16>
    tpu.vector_store %arg11[%c0_29, %c256], %28 {strides = array<i32>} : memref<512x1024xbf16, #tpu.memory_space<vmem>>, vector<512x128xbf16>,
    %30 = vector.extract_strided_slice %27 {offsets = [0, 0, 1, 0], sizes = [8, 8, 7, 128], strides = [1, 1, 1, 1]} : vector<8x8x8x128xbf16> to vector<8x8x7x128xbf16>
    %31 = vector.extract_strided_slice %27 {offsets = [0, 0, 0, 0], sizes = [8, 8, 1, 128], strides = [1, 1, 1, 1]} : vector<8x8x8x128xbf16> to vector<8x8x1x128xbf16>
    %32 = tpu.concatenate %30, %31 in 2 : vector<8x8x7x128xbf16>, vector<8x8x1x128xbf16> -> vector<8x8x8x128xbf16>
    %33 = vector.shape_cast %32 : vector<8x8x8x128xbf16> to vector<512x128xbf16>
    %c0_30 = arith.constant 0 : index
    %c384 = arith.constant 384 : index
    %34 = vector.load %arg11[%c0_30, %c384] : memref<512x1024xbf16, #tpu.memory_space<vmem>>, vector<512x128xbf16>
    tpu.vector_store %arg11[%c0_30, %c384], %33 {strides = array<i32>} : memref<512x1024xbf16, #tpu.memory_space<vmem>>, vector<512x128xbf16>,
    %c0_31 = arith.constant 0 : index
    %c0_32 = arith.constant 0 : index
    %c0_33 = arith.constant 0 : index
    %c0_34 = arith.constant 0 : index
    %c0_35 = arith.constant 0 : index
    %35 = vector.load %arg10[%c0_31, %c0_32, %c0_33, %c0_34, %c0_35] : memref<2x8x8x8x128xbf16, #tpu.memory_space<vmem>>, vector<1x8x8x8x128xbf16>
    %36 = vector.shape_cast %35 : vector<1x8x8x8x128xbf16> to vector<8x8x8x128xbf16>
    %37 = vector.extract_strided_slice %36 {offsets = [0, 1, 0, 0], sizes = [8, 7, 8, 128], strides = [1, 1, 1, 1]} : vector<8x8x8x128xbf16> to vector<8x7x8x128xbf16>
    %38 = vector.extract_strided_slice %36 {offsets = [0, 0, 0, 0], sizes = [8, 1, 8, 128], strides = [1, 1, 1, 1]} : vector<8x8x8x128xbf16> to vector<8x1x8x128xbf16>
    %39 = tpu.concatenate %37, %38 in 1 : vector<8x7x8x128xbf16>, vector<8x1x8x128xbf16> -> vector<8x8x8x128xbf16>
    %40 = vector.shape_cast %39 : vector<8x8x8x128xbf16> to vector<512x128xbf16>
    %c0_36 = arith.constant 0 : index
    %c512 = arith.constant 512 : index
    %41 = vector.load %arg11[%c0_36, %c512] : memref<512x1024xbf16, #tpu.memory_space<vmem>>, vector<512x128xbf16>
    tpu.vector_store %arg11[%c0_36, %c512], %40 {strides = array<i32>} : memref<512x1024xbf16, #tpu.memory_space<vmem>>, vector<512x128xbf16>,
    %42 = vector.extract_strided_slice %39 {offsets = [0, 0, 1, 0], sizes = [8, 8, 7, 128], strides = [1, 1, 1, 1]} : vector<8x8x8x128xbf16> to vector<8x8x7x128xbf16>
    %43 = vector.extract_strided_slice %39 {offsets = [0, 0, 0, 0], sizes = [8, 8, 1, 128], strides = [1, 1, 1, 1]} : vector<8x8x8x128xbf16> to vector<8x8x1x128xbf16>
    %44 = tpu.concatenate %42, %43 in 2 : vector<8x8x7x128xbf16>, vector<8x8x1x128xbf16> -> vector<8x8x8x128xbf16>
    %45 = vector.shape_cast %44 : vector<8x8x8x128xbf16> to vector<512x128xbf16>
    %c0_37 = arith.constant 0 : index
    %c640 = arith.constant 640 : index
    %46 = vector.load %arg11[%c0_37, %c640] : memref<512x1024xbf16, #tpu.memory_space<vmem>>, vector<512x128xbf16>
    tpu.vector_store %arg11[%c0_37, %c640], %45 {strides = array<i32>} : memref<512x1024xbf16, #tpu.memory_space<vmem>>, vector<512x128xbf16>,
    %c1_38 = arith.constant 1 : index
    %c0_39 = arith.constant 0 : index
    %c0_40 = arith.constant 0 : index
    %c0_41 = arith.constant 0 : index
    %c0_42 = arith.constant 0 : index
    %47 = vector.load %arg10[%c1_38, %c0_39, %c0_40, %c0_41, %c0_42] : memref<2x8x8x8x128xbf16, #tpu.memory_space<vmem>>, vector<1x8x8x8x128xbf16>
    %48 = vector.shape_cast %47 : vector<1x8x8x8x128xbf16> to vector<8x8x8x128xbf16>
    %49 = vector.extract_strided_slice %48 {offsets = [0, 1, 0, 0], sizes = [8, 7, 8, 128], strides = [1, 1, 1, 1]} : vector<8x8x8x128xbf16> to vector<8x7x8x128xbf16>
    %50 = vector.extract_strided_slice %48 {offsets = [0, 0, 0, 0], sizes = [8, 1, 8, 128], strides = [1, 1, 1, 1]} : vector<8x8x8x128xbf16> to vector<8x1x8x128xbf16>
    %51 = tpu.concatenate %49, %50 in 1 : vector<8x7x8x128xbf16>, vector<8x1x8x128xbf16> -> vector<8x8x8x128xbf16>
    %52 = vector.shape_cast %51 : vector<8x8x8x128xbf16> to vector<512x128xbf16>
    %c0_43 = arith.constant 0 : index
    %c768 = arith.constant 768 : index
    %53 = vector.load %arg11[%c0_43, %c768] : memref<512x1024xbf16, #tpu.memory_space<vmem>>, vector<512x128xbf16>
    tpu.vector_store %arg11[%c0_43, %c768], %52 {strides = array<i32>} : memref<512x1024xbf16, #tpu.memory_space<vmem>>, vector<512x128xbf16>,
    %54 = vector.extract_strided_slice %51 {offsets = [0, 0, 1, 0], sizes = [8, 8, 7, 128], strides = [1, 1, 1, 1]} : vector<8x8x8x128xbf16> to vector<8x8x7x128xbf16>
    %55 = vector.extract_strided_slice %51 {offsets = [0, 0, 0, 0], sizes = [8, 8, 1, 128], strides = [1, 1, 1, 1]} : vector<8x8x8x128xbf16> to vector<8x8x1x128xbf16>
    %56 = tpu.concatenate %54, %55 in 2 : vector<8x8x7x128xbf16>, vector<8x8x1x128xbf16> -> vector<8x8x8x128xbf16>
    %57 = vector.shape_cast %56 : vector<8x8x8x128xbf16> to vector<512x128xbf16>
    %c0_44 = arith.constant 0 : index
    %c896 = arith.constant 896 : index
    %58 = vector.load %arg11[%c0_44, %c896] : memref<512x1024xbf16, #tpu.memory_space<vmem>>, vector<512x128xbf16>
    tpu.vector_store %arg11[%c0_44, %c896], %57 {strides = array<i32>} : memref<512x1024xbf16, #tpu.memory_space<vmem>>, vector<512x128xbf16>,
    %c0_45 = arith.constant 0 : index
    %c0_46 = arith.constant 0 : index
    %59 = vector.load %arg11[%c0_45, %c0_46] : memref<512x1024xbf16, #tpu.memory_space<vmem>>, vector<512x1024xbf16>
    %c0_47 = arith.constant 0 : index
    %c0_48 = arith.constant 0 : index
    %60 = vector.load %arg5[%c0_47, %c0_48] : memref<1024x64xbf16, #tpu.memory_space<vmem>>, vector<1024x64xbf16>
    %cst_49 = arith.constant dense<0.000000e+00> : vector<512x64xf32>
    %61 = tpu.matmul %59, %60, %cst_49 {dimension_numbers = #tpu.dot_dimension_numbers<[1], [0], [0], [1], [0, 0, 1, 1], [], []>} : vector<512x1024xbf16>, vector<1024x64xbf16>, vector<512x64xf32> -> vector<512x64xf32>
    %c0_50 = arith.constant 0 : index
    %c0_51 = arith.constant 0 : index
    %62 = vector.load %arg6[%c0_50, %c0_51] : memref<1x64xf32, #tpu.memory_space<vmem>>, vector<1x64xf32>
    %63 = vector.broadcast %62 : vector<1x64xf32> to vector<512x64xf32>
    %64 = arith.addf %61, %63 : vector<512x64xf32>
    %cst_52 = arith.constant 2.000000e-01 : f32
    %65 = vector.broadcast %cst_52 : f32 to vector<512x64xf32>
    %66 = arith.mulf %65, %64 : vector<512x64xf32>
    %67 = arith.maximumf %64, %66 : vector<512x64xf32>
    %68 = vector.shape_cast %67 : vector<512x64xf32> to vector<8x64x64xf32>
    %c0_53 = arith.constant 0 : index
    %c0_54 = arith.constant 0 : index
    %69 = vector.load %arg7[%c0_53, %c0_54] : memref<64x64xf32, #tpu.memory_space<vmem>>, vector<64x64xf32>
    %70 = vector.shape_cast %69 : vector<64x64xf32> to vector<1x64x64xf32>
    %71 = vector.broadcast %70 : vector<1x64x64xf32> to vector<8x64x64xf32>
    %72 = arith.mulf %68, %71 : vector<8x64x64xf32>
    %cst_55 = arith.constant dense<0.000000e+00> : vector<8x64xf32>
    %73 = vector.multi_reduction <add>, %72, %cst_55 [2] : vector<8x64x64xf32> to vector<8x64xf32>
    %cst_56 = arith.constant dense<0.000000e+00> : vector<8xf32>
    %74 = vector.multi_reduction <add>, %73, %cst_56 [1] : vector<8x64xf32> to vector<8xf32>
    %75 = vector.shape_cast %74 : vector<8xf32> to vector<8x1xf32>
    %c0_57 = arith.constant 0 : index
    %c0_58 = arith.constant 0 : index
    %76 = vector.load %arg8[%c0_57, %c0_58] : memref<1x1xf32, #tpu.memory_space<vmem>>, vector<1x1xf32>
    %77 = vector.broadcast %76 : vector<1x1xf32> to vector<8x1xf32>
    %78 = arith.addf %75, %77 : vector<8x1xf32>
    %cst_59 = arith.constant 0.000000e+00 : f32
    %79 = vector.broadcast %cst_59 : f32 to vector<8x1xf32>
    %80 = arith.subf %79, %78 : vector<8x1xf32>
    %81 = math.exp %80 : vector<8x1xf32>
    %cst_60 = arith.constant 1.000000e+00 : f32
    %82 = vector.broadcast %cst_60 : f32 to vector<8x1xf32>
    %83 = arith.addf %82, %81 : vector<8x1xf32>
    %84 = tpu.reciprocal %83 {approx = true} : vector<8x1xf32> -> vector<8x1xf32>
    %85 = tpu.iota {dimensions = array<i32: 0>} : vector<8x8xi32>
    %86 = tpu.iota {dimensions = array<i32: 1>} : vector<8x8xi32>
    %87 = arith.cmpi eq, %85, %86 : vector<8x8xi32>
    %cst_61 = arith.constant 0.000000e+00 : f32
    %88 = vector.shape_cast %84 : vector<8x1xf32> to vector<8x1xf32>
    %89 = vector.broadcast %88 : vector<8x1xf32> to vector<8x8xf32>
    %90 = vector.broadcast %cst_61 : f32 to vector<8x8xf32>
    %91 = arith.select %87, %89, %90 : vector<8x8xi1>, vector<8x8xf32>
    %cst_62 = arith.constant dense<0.000000e+00> : vector<8xf32>
    %92 = vector.multi_reduction <add>, %91, %cst_62 [0] : vector<8x8xf32> to vector<8xf32>
    %93 = vector.shape_cast %92 : vector<8xf32> to vector<1x8xf32>
    %94 = vector.shape_cast %93 : vector<1x8xf32> to vector<1x1x8xf32>
    %c0_63 = arith.constant 0 : index
    %c0_64 = arith.constant 0 : index
    %c0_65 = arith.constant 0 : index
    %95 = vector.load %arg9[%c0_63, %c0_64, %c0_65] : memref<1x1x8xf32, #tpu.memory_space<vmem>>, vector<1x1x8xf32>
    tpu.vector_store %arg9[%c0_63, %c0_64, %c0_65], %94 {strides = array<i32>} : memref<1x1x8xf32, #tpu.memory_space<vmem>>, vector<1x1x8xf32>,
    return
  }
  func.func @transform_0(%arg0: i32) -> (i32, i32, i32, i32) {
    %c0_i32 = arith.constant 0 : i32
    %c0_i32_0 = arith.constant 0 : i32
    %c0_i32_1 = arith.constant 0 : i32
    %c0_i32_2 = arith.constant 0 : i32
    return %c0_i32, %arg0, %c0_i32_0, %c0_i32_1 : i32, i32, i32, i32
  }
  func.func @transform_1(%arg0: i32) -> (i32, i32, i32, i32) {
    %c0_i32 = arith.constant 0 : i32
    %c0_i32_0 = arith.constant 0 : i32
    %c0_i32_1 = arith.constant 0 : i32
    %c0_i32_2 = arith.constant 0 : i32
    %c0_i32_3 = arith.constant 0 : i32
    return %c0_i32, %c0_i32_0, %c0_i32_1, %c0_i32_2 : i32, i32, i32, i32
  }
  func.func @transform_2(%arg0: i32) -> (i32, i32) {
    %c0_i32 = arith.constant 0 : i32
    %c0_i32_0 = arith.constant 0 : i32
    %c0_i32_1 = arith.constant 0 : i32
    return %c0_i32, %c0_i32_0 : i32, i32
  }
  func.func @transform_3(%arg0: i32) -> (i32, i32) {
    %c0_i32 = arith.constant 0 : i32
    %c0_i32_0 = arith.constant 0 : i32
    %c0_i32_1 = arith.constant 0 : i32
    return %c0_i32, %c0_i32_0 : i32, i32
  }
  func.func @transform_4(%arg0: i32) -> (i32, i32) {
    %c0_i32 = arith.constant 0 : i32
    %c0_i32_0 = arith.constant 0 : i32
    %c0_i32_1 = arith.constant 0 : i32
    return %c0_i32, %c0_i32_0 : i32, i32
  }
  func.func @transform_5(%arg0: i32) -> (i32, i32) {
    %c0_i32 = arith.constant 0 : i32
    %c0_i32_0 = arith.constant 0 : i32
    %c0_i32_1 = arith.constant 0 : i32
    return %c0_i32, %c0_i32_0 : i32, i32
  }
  func.func @transform_6(%arg0: i32) -> (i32, i32) {
    %c0_i32 = arith.constant 0 : i32
    %c0_i32_0 = arith.constant 0 : i32
    %c0_i32_1 = arith.constant 0 : i32
    return %c0_i32, %c0_i32_0 : i32, i32
  }
  func.func @transform_7(%arg0: i32) -> (i32, i32) {
    %c0_i32 = arith.constant 0 : i32
    %c0_i32_0 = arith.constant 0 : i32
    %c0_i32_1 = arith.constant 0 : i32
    return %c0_i32, %c0_i32_0 : i32, i32
  }
  func.func @transform_8(%arg0: i32) -> (i32, i32, i32) {
    %c0_i32 = arith.constant 0 : i32
    %c0_i32_0 = arith.constant 0 : i32
    %c0_i32_1 = arith.constant 0 : i32
    return %arg0, %c0_i32, %c0_i32_0 : i32, i32, i32
  }
}

</mosaic_0001>

<llo_original>
// kernel: discriminator_forward.1
$region0: #{discriminator_forward.1}
  #allocation0 [shape = 'u32[]', space=smem, size = 0x4, offset = 0x4, fixed_abs, tag = 'smem constant byte address 0x4 - core index']
  #allocation1 [shape = 'u32[144,128]{1,0:T(1,128)}', space=vmem, size = 0x12000, scoped, tag = 'internal scratch']
  #allocation2 [shape = 'bf16[2,8,8,8,128]{4,3,2,1,0:T(8,128)(2,1)}', space=vmem, size = 0x40000, scoped, tag = 'scratch operand']
  #allocation3 [shape = 'bf16[512,1024]{1,0:T(16,128)(2,1)}', space=vmem, size = 0x100000, scoped, tag = 'scratch operand']
  #allocation4 [shape = 'f32[1,1]{1,0:T(1,128)S(1)}', space=vmem, size = 0x200, scoped, tag = 'scoped memory for discriminator_forward.1']
  %s0 = inlined_call_operand.vmem [shape: bf16[2,16,64,64], index: 0, kind: input, shape index: {}]
  %s1 = inlined_call_operand.vmem [shape: f32[2,1,64,128], index: 1, kind: input, shape index: {}]
  %s2 = inlined_call_operand.vmem [shape: bf16[64,128], index: 2, kind: input, shape index: {}]
  %s3 = inlined_call_operand.vmem [shape: f32[1,128], index: 3, kind: input, shape index: {}]
  %s4 = inlined_call_operand.vmem [shape: bf16[1024,64], index: 4, kind: input, shape index: {}]
  %s5 = inlined_call_operand.vmem [shape: f32[1,64], index: 5, kind: input, shape index: {}]
  %s6 = inlined_call_operand.vmem [shape: f32[64,64], index: 6, kind: input, shape index: {}]
  %s7 = inlined_call_operand.<no memory space> [shape: f32[1,1], index: 7, kind: input, shape index: {}]
  %s8 = inlined_call_operand.vmem [shape: f32[2,1,8], index: 8, kind: output, shape index: {}]
  %s9 = sld [smem:[#allocation0]]
  $region106: #{discriminator_forward.1} parent=0
    _
  %s11 = ssub.s32 1, %s9
  %s12 = scalar_select 0, %s11, %s9
  %v13 = vstv %s7
  %14 = vst [vmem:[#allocation4] sm:$0x1] %v13
  $region1: #{discriminator_forward.1} parent=0
    #allocation5 [shape = 'u8[524288]{0}', space=vmem, size = 0x80000, scoped, tag = 'input window, operand 0']
    loop: start=0, step=1, limit=4
    $region2: #{discriminator_forward.1} parent=1 // loop_pre_header
      _
    $region3: #{discriminator_forward.1} parent=1 // loop_header
      %s16 = sphi 0, %s20
      %p17 = scmp.ge.s32.totalorder %s16, 4
      %s26 = sphi 0, %s28
      %s29 = sphi 0, %s26
      %s30 = sphi 0, %s29
      %s46 = sphi 0, %s30
      %s50 = sphi 0, %s50
      %s52 = sphi 0, %s50
      %s53 = sphi 0, %s52
      %s67 = sphi 0, %s53
      %s71 = sphi 0, %s71
      %s73 = sphi 0, %s71
      %s74 = sphi 0, %s73
      %s88 = sphi 0, %s74
      %s92 = sphi 0, %s92
      %s94 = sphi 0, %s92
      %s95 = sphi 0, %s94
      %s109 = sphi 0, %s95
      %s113 = sphi 0, %s113
      %s115 = sphi 0, %s113
      %s116 = sphi 0, %s115
      %s130 = sphi 0, %s116
      %s134 = sphi 0, %s134
      %s136 = sphi 0, %s134
      %s137 = sphi 0, %s136
      %s151 = sphi 0, %s137
      %s155 = sphi 0, %s155
      %s157 = sphi 0, %s155
      %s158 = sphi 0, %s157
      %s172 = sphi 0, %s158
      %s176 = sphi 0, %s176
      %s178 = sphi 0, %s176
      %s179 = sphi 0, %s178
      %s193 = sphi 0, %s179
      %s199 = sphi 0, %s201
      %s202 = sphi 0, %s199
      %s203 = sphi 0, %s202
      %s219 = sphi 0, %s203
    $region4: #{discriminator_forward.1} parent=1 // loop_header_branch
      %19 = sbr.rel (%p17) target = $region8
    $region5: #{discriminator_forward.1} parent=1 // loop_body
      %s21 = ssub.s32 %s16, 1
      %s22 = ssub.s32 %s16, 2
      %s23 = sadd.s32 %s16, 1
      %s24 = ssub.s32 %s16, %s23
      %p25 = scmp.eq.s32.totalorder %s24, 0
      %s27 = sadd.s32 %s26, 1
      %s28 = scalar_select %p25, %s26, %s27
      %p31 = pneg %p25
      %p32 = scmp.eq.s32.totalorder %s16, 1
      %p33 = por %p31, %p32
      %p34 = scmp.ne.s32.totalorder %s26, %s29
      %p35 = scmp.eq.s32.totalorder %s16, 0
      %p36 = por %p34, %p35
      %p37 = scmp.ne.s32.totalorder %s26, %s29
      %p38 = scmp.eq.s32.totalorder %s21, 1
      %p39 = por %p37, %p38
      %p40 = scmp.ne.s32.totalorder %s29, %s30
      %p41 = scmp.eq.s32.totalorder %s21, 0
      %p42 = por %p40, %p41
      %p43 = scmp.ne.s32.totalorder %s29, %s30
      %p44 = scmp.eq.s32.totalorder %s22, 1
      %p45 = por %p43, %p44
      %p47 = scmp.ne.s32.totalorder %s30, %s46
      %p48 = scmp.eq.s32.totalorder %s22, 0
      %p49 = por %p47, %p48
      %s51 = sadd.s32 %s50, 1
      %p54 = scmp.eq.s32.totalorder %s16, 1
      %p55 = scmp.ne.s32.totalorder %s50, %s52
      %p56 = scmp.eq.s32.totalorder %s16, 0
      %p57 = por %p55, %p56
      %p58 = scmp.ne.s32.totalorder %s50, %s52
      %p59 = scmp.eq.s32.totalorder %s21, 1
      %p60 = por %p58, %p59
      %p61 = scmp.ne.s32.totalorder %s52, %s53
      %p62 = scmp.eq.s32.totalorder %s21, 0
      %p63 = por %p61, %p62
      %p64 = scmp.ne.s32.totalorder %s52, %s53
      %p65 = scmp.eq.s32.totalorder %s22, 1
      %p66 = por %p64, %p65
      %p68 = scmp.ne.s32.totalorder %s53, %s67
      %p69 = scmp.eq.s32.totalorder %s22, 0
      %p70 = por %p68, %p69
      %s72 = sadd.s32 %s71, 1
      %p75 = scmp.eq.s32.totalorder %s16, 1
      %p76 = scmp.ne.s32.totalorder %s71, %s73
      %p77 = scmp.eq.s32.totalorder %s16, 0
      %p78 = por %p76, %p77
      %p79 = scmp.ne.s32.totalorder %s71, %s73
      %p80 = scmp.eq.s32.totalorder %s21, 1
      %p81 = por %p79, %p80
      %p82 = scmp.ne.s32.totalorder %s73, %s74
      %p83 = scmp.eq.s32.totalorder %s21, 0
      %p84 = por %p82, %p83
      %p85 = scmp.ne.s32.totalorder %s73, %s74
      %p86 = scmp.eq.s32.totalorder %s22, 1
      %p87 = por %p85, %p86
      %p89 = scmp.ne.s32.totalorder %s74, %s88
      %p90 = scmp.eq.s32.totalorder %s22, 0
      %p91 = por %p89, %p90
      %s93 = sadd.s32 %s92, 1
      %p96 = scmp.eq.s32.totalorder %s16, 1
      %p97 = scmp.ne.s32.totalorder %s92, %s94
      %p98 = scmp.eq.s32.totalorder %s16, 0
      %p99 = por %p97, %p98
      %p100 = scmp.ne.s32.totalorder %s92, %s94
      %p101 = scmp.eq.s32.totalorder %s21, 1
      %p102 = por %p100, %p101
      %p103 = scmp.ne.s32.totalorder %s94, %s95
      %p104 = scmp.eq.s32.totalorder %s21, 0
      %p105 = por %p103, %p104
      %p106 = scmp.ne.s32.totalorder %s94, %s95
      %p107 = scmp.eq.s32.totalorder %s22, 1
      %p108 = por %p106, %p107
      %p110 = scmp.ne.s32.totalorder %s95, %s109
      %p111 = scmp.eq.s32.totalorder %s22, 0
      %p112 = por %p110, %p111
      %s114 = sadd.s32 %s113, 1
      %p117 = scmp.eq.s32.totalorder %s16, 1
      %p118 = scmp.ne.s32.totalorder %s113, %s115
      %p119 = scmp.eq.s32.totalorder %s16, 0
      %p120 = por %p118, %p119
      %p121 = scmp.ne.s32.totalorder %s113, %s115
      %p122 = scmp.eq.s32.totalorder %s21, 1
      %p123 = por %p121, %p122
      %p124 = scmp.ne.s32.totalorder %s115, %s116
      %p125 = scmp.eq.s32.totalorder %s21, 0
      %p126 = por %p124, %p125
      %p127 = scmp.ne.s32.totalorder %s115, %s116
      %p128 = scmp.eq.s32.totalorder %s22, 1
      %p129 = por %p127, %p128
      %p131 = scmp.ne.s32.totalorder %s116, %s130
      %p132 = scmp.eq.s32.totalorder %s22, 0
      %p133 = por %p131, %p132
      %s135 = sadd.s32 %s134, 1
      %p138 = scmp.eq.s32.totalorder %s16, 1
      %p139 = scmp.ne.s32.totalorder %s134, %s136
      %p140 = scmp.eq.s32.totalorder %s16, 0
      %p141 = por %p139, %p140
      %p142 = scmp.ne.s32.totalorder %s134, %s136
      %p143 = scmp.eq.s32.totalorder %s21, 1
      %p144 = por %p142, %p143
      %p145 = scmp.ne.s32.totalorder %s136, %s137
      %p146 = scmp.eq.s32.totalorder %s21, 0
      %p147 = por %p145, %p146
      %p148 = scmp.ne.s32.totalorder %s136, %s137
      %p149 = scmp.eq.s32.totalorder %s22, 1
      %p150 = por %p148, %p149
      %p152 = scmp.ne.s32.totalorder %s137, %s151
      %p153 = scmp.eq.s32.totalorder %s22, 0
      %p154 = por %p152, %p153
      %s156 = sadd.s32 %s155, 1
      %p159 = scmp.eq.s32.totalorder %s16, 1
      %p160 = scmp.ne.s32.totalorder %s155, %s157
      %p161 = scmp.eq.s32.totalorder %s16, 0
      %p162 = por %p160, %p161
      %p163 = scmp.ne.s32.totalorder %s155, %s157
      %p164 = scmp.eq.s32.totalorder %s21, 1
      %p165 = por %p163, %p164
      %p166 = scmp.ne.s32.totalorder %s157, %s158
      %p167 = scmp.eq.s32.totalorder %s21, 0
      %p168 = por %p166, %p167
      %p169 = scmp.ne.s32.totalorder %s157, %s158
      %p170 = scmp.eq.s32.totalorder %s22, 1
      %p171 = por %p169, %p170
      %p173 = scmp.ne.s32.totalorder %s158, %s172
      %p174 = scmp.eq.s32.totalorder %s22, 0
      %p175 = por %p173, %p174
      %s177 = sadd.s32 %s176, 1
      %p180 = scmp.eq.s32.totalorder %s16, 1
      %p181 = scmp.ne.s32.totalorder %s176, %s178
      %p182 = scmp.eq.s32.totalorder %s16, 0
      %p183 = por %p181, %p182
      %p184 = scmp.ne.s32.totalorder %s176, %s178
      %p185 = scmp.eq.s32.totalorder %s21, 1
      %p186 = por %p184, %p185
      %p187 = scmp.ne.s32.totalorder %s178, %s179
      %p188 = scmp.eq.s32.totalorder %s21, 0
      %p189 = por %p187, %p188
      %p190 = scmp.ne.s32.totalorder %s178, %s179
      %p191 = scmp.eq.s32.totalorder %s22, 1
      %p192 = por %p190, %p191
      %p194 = scmp.ne.s32.totalorder %s179, %s193
      %p195 = scmp.eq.s32.totalorder %s22, 0
      %p196 = por %p194, %p195
      %s197 = ssub.s32 %s16, %s23
      %p198 = scmp.eq.s32.totalorder %s197, 0
      %s200 = sadd.s32 %s199, 1
      %s201 = scalar_select %p198, %s199, %s200
      %p204 = pneg %p198
      %p205 = scmp.eq.s32.totalorder %s16, 1
      %p206 = por %p204, %p205
      %p207 = scmp.ne.s32.totalorder %s199, %s202
      %p208 = scmp.eq.s32.totalorder %s16, 0
      %p209 = por %p207, %p208
      %p210 = scmp.ne.s32.totalorder %s199, %s202
      %p211 = scmp.eq.s32.totalorder %s21, 1
      %p212 = por %p210, %p211
      %p213 = scmp.ne.s32.totalorder %s202, %s203
      %p214 = scmp.eq.s32.totalorder %s21, 0
      %p215 = por %p213, %p214
      %p216 = scmp.ne.s32.totalorder %s202, %s203
      %p217 = scmp.eq.s32.totalorder %s22, 1
      %p218 = por %p216, %p217
      %p220 = scmp.ne.s32.totalorder %s203, %s219
      %p221 = scmp.eq.s32.totalorder %s22, 0
      %p222 = por %p220, %p221
      %p223 = scmp.le.s32.totalorder 1, %s16
      %p224 = scmp.lt.s32.totalorder %s16, 3
      %p225 = pnand %p223, %p224
      %p226 = pneg %p225
      // Predicated region
      $region9: #{discriminator_forward.1} parent=5 // pred_check
        _
      $region10: #{discriminator_forward.1} parent=5 // pred_check_branch
        %228 = sbr.rel (%p225) target = $region12
      $region11: #{discriminator_forward.1} parent=5 // pred_region
        %s229 = ssub.s32 %s16, 1
        // Predicated region
        $region13: #{discriminator_forward.1} parent=11 // pred_check
          %p230 = pneg %p63
        $region14: #{discriminator_forward.1} parent=11 // pred_check_branch
          %232 = sbr.rel (%p230) target = $region16
        $region15: #{discriminator_forward.1} parent=11 // pred_region
          _
        $region16: #{discriminator_forward.1} parent=11 // pred_fallthru
          _
        // Predicated region
        $region17: #{discriminator_forward.1} parent=11 // pred_check
          %p233 = pneg %p84
        $region18: #{discriminator_forward.1} parent=11 // pred_check_branch
          %235 = sbr.rel (%p233) target = $region20
        $region19: #{discriminator_forward.1} parent=11 // pred_region
          _
        $region20: #{discriminator_forward.1} parent=11 // pred_fallthru
          _
        // Predicated region
        $region21: #{discriminator_forward.1} parent=11 // pred_check
          %p236 = pneg %p105
        $region22: #{discriminator_forward.1} parent=11 // pred_check_branch
          %238 = sbr.rel (%p236) target = $region24
        $region23: #{discriminator_forward.1} parent=11 // pred_region
          _
        $region24: #{discriminator_forward.1} parent=11 // pred_fallthru
          _
        // Predicated region
        $region25: #{discriminator_forward.1} parent=11 // pred_check
          %p239 = pneg %p126
        $region26: #{discriminator_forward.1} parent=11 // pred_check_branch
          %241 = sbr.rel (%p239) target = $region28
        $region27: #{discriminator_forward.1} parent=11 // pred_region
          _
        $region28: #{discriminator_forward.1} parent=11 // pred_fallthru
          _
        // Predicated region
        $region29: #{discriminator_forward.1} parent=11 // pred_check
          %p242 = pneg %p147
        $region30: #{discriminator_forward.1} parent=11 // pred_check_branch
          %244 = sbr.rel (%p242) target = $region32
        $region31: #{discriminator_forward.1} parent=11 // pred_region
          _
        $region32: #{discriminator_forward.1} parent=11 // pred_fallthru
          _
        // Predicated region
        $region33: #{discriminator_forward.1} parent=11 // pred_check
          %p245 = pneg %p168
        $region34: #{discriminator_forward.1} parent=11 // pred_check_branch
          %247 = sbr.rel (%p245) target = $region36
        $region35: #{discriminator_forward.1} parent=11 // pred_region
          _
        $region36: #{discriminator_forward.1} parent=11 // pred_fallthru
          _
        // Predicated region
        $region37: #{discriminator_forward.1} parent=11 // pred_check
          %p248 = pneg %p189
        $region38: #{discriminator_forward.1} parent=11 // pred_check_branch
          %250 = sbr.rel (%p248) target = $region40
        $region39: #{discriminator_forward.1} parent=11 // pred_region
          _
        $region40: #{discriminator_forward.1} parent=11 // pred_fallthru
          _
      $region12: #{discriminator_forward.1} parent=5 // pred_fallthru
        _
      %p251 = scmp.lt.s32.totalorder %s16, 2
      // Predicated region
      $region41: #{discriminator_forward.1} parent=5 // pred_check
        %p252 = pneg %p251
      $region42: #{discriminator_forward.1} parent=5 // pred_check_branch
        %254 = sbr.rel (%p252) target = $region44
      $region43: #{discriminator_forward.1} parent=5 // pred_region
        // Predicated region
        $region45: #{discriminator_forward.1} parent=43 // pred_check
          %p255 = pneg %p36
        $region46: #{discriminator_forward.1} parent=43 // pred_check_branch
          %257 = sbr.rel (%p255) target = $region48
        $region47: #{discriminator_forward.1} parent=43 // pred_region
          %s258 = sand.u32 %s26, 1
          %s259 = sand.u32 %s26, 1
          %s260 = smul.addr %s259, 512
          %s261 = scalar_lea.vmem [#allocation5], %s260
          %s262 = smul.u32 8, %s16
          %s263 = smul.addr %s262, 8
          %s264 = smul.addr %s263, 4
          %s265 = scalar_lea.vmem %s0, %s264
          // Predicated region
          $region49: #{discriminator_forward.1} parent=47 // pred_check
            _
          $region50: #{discriminator_forward.1} parent=47 // pred_check_branch
            %267 = sbr.rel (0) target = $region52
          $region51: #{discriminator_forward.1} parent=47 // pred_region
            // Predicated region
            $region53: #{discriminator_forward.1} parent=51 // pred_check
              _
            $region54: #{discriminator_forward.1} parent=51 // pred_check_branch
              %269 = sbr.rel target = $region56
            $region55: #{discriminator_forward.1} parent=51 // pred_region
              // Predicated region
              $region68: #{discriminator_forward.1} parent=55 // pred_check
                _
              $region69: #{discriminator_forward.1} parent=55 // pred_check_branch
                %538 = sbr.rel (0) target = $region71
              $region70: #{discriminator_forward.1} parent=55 // pred_region
                loop: start=0, step=1, limit=1
                $region72: #{discriminator_forward.1} parent=70 // loop_pre_header
                  _
                $region73: #{discriminator_forward.1} parent=70 // loop_header
                  %s540 = sphi 0, %s544
                  %p541 = scmp.ge.s32.totalorder %s540, 1
                  %s545 = sphi %s265, %s265
                  %s546 = sphi %s261, %s261
                $region74: #{discriminator_forward.1} parent=70 // loop_header_branch
                  %543 = sbr.rel (%p541) target = $region78
                $region75: #{discriminator_forward.1} parent=70 // loop_body
                  _
                $region76: #{discriminator_forward.1} parent=70 // loop_footer
                  %s544 = sadd.s32 1, %s540
                $region77: #{discriminator_forward.1} parent=70 // loop_footer_branch
                  %539 = sbr.rel target = $region73
                $region78: #{discriminator_forward.1} parent=70 // loop_exit
                  _
                loop: start=0, step=1, limit=1
                $region79: #{discriminator_forward.1} parent=70 // loop_pre_header
                  _
                $region80: #{discriminator_forward.1} parent=70 // loop_header
                  %s549 = sphi 0, %s553
                  %p550 = scmp.ge.s32.totalorder %s549, 1
                  %s554 = sphi %s265, %s265
                  %s555 = sphi %s261, %s261
                $region81: #{discriminator_forward.1} parent=70 // loop_header_branch
                  %552 = sbr.rel (%p550) target = $region85
                $region82: #{discriminator_forward.1} parent=70 // loop_body
                  %v556 = vld [vmem:[%s554] sm:$0xf]
                  %557 = vst [vmem:[%s555] sm:$0xf] %v556
                  %v558 = vld [vmem:[%s554 + $0x4] sm:$0xf]
                  %559 = vst [vmem:[%s555 + $0x4] sm:$0xf] %v558
                  %v560 = vld [vmem:[%s554 + $0x8] sm:$0xf]
                  %561 = vst [vmem:[%s555 + $0x8] sm:$0xf] %v560
                  %v562 = vld [vmem:[%s554 + $0xc] sm:$0xf]
                  %563 = vst [vmem:[%s555 + $0xc] sm:$0xf] %v562
                  %v564 = vld [vmem:[%s554 + $0x10] sm:$0xf]
                  %565 = vst [vmem:[%s555 + $0x10] sm:$0xf] %v564
                  %v566 = vld [vmem:[%s554 + $0x14] sm:$0xf]
                  %567 = vst [vmem:[%s555 + $0x14] sm:$0xf] %v566
                  %v568 = vld [vmem:[%s554 + $0x18] sm:$0xf]
                  %569 = vst [vmem:[%s555 + $0x18] sm:$0xf] %v568
                  %v570 = vld [vmem:[%s554 + $0x1c] sm:$0xf]
                  %571 = vst [vmem:[%s555 + $0x1c] sm:$0xf] %v570
                  %v572 = vld [vmem:[%s554 + $0x20] sm:$0xf]
                  %573 = vst [vmem:[%s555 + $0x20] sm:$0xf] %v572
                  %v574 = vld [vmem:[%s554 + $0x24] sm:$0xf]
                  %575 = vst [vmem:[%s555 + $0x24] sm:$0xf] %v574
                  %v576 = vld [vmem:[%s554 + $0x28] sm:$0xf]
                  %577 = vst [vmem:[%s555 + $0x28] sm:$0xf] %v576
                  %v578 = vld [vmem:[%s554 + $0x2c] sm:$0xf]
                  %579 = vst [vmem:[%s555 + $0x2c] sm:$0xf] %v578
                  %v580 = vld [vmem:[%s554 + $0x30] sm:$0xf]
                  %581 = vst [vmem:[%s555 + $0x30] sm:$0xf] %v580
                  %v582 = vld [vmem:[%s554 + $0x34] sm:$0xf]
                  %583 = vst [vmem:[%s555 + $0x34] sm:$0xf] %v582
                  %v584 = vld [vmem:[%s554 + $0x38] sm:$0xf]
                  %585 = vst [vmem:[%s555 + $0x38] sm:$0xf] %v584
                  %v586 = vld [vmem:[%s554 + $0x3c] sm:$0xf]
                  %587 = vst [vmem:[%s555 + $0x3c] sm:$0xf] %v586
                  %v588 = vld [vmem:[%s554 + $0x40] sm:$0xf]
                  %589 = vst [vmem:[%s555 + $0x40] sm:$0xf] %v588
                  %v590 = vld [vmem:[%s554 + $0x44] sm:$0xf]
                  %591 = vst [vmem:[%s555 + $0x44] sm:$0xf] %v590
                  %v592 = vld [vmem:[%s554 + $0x48] sm:$0xf]
                  %593 = vst [vmem:[%s555 + $0x48] sm:$0xf] %v592
                  %v594 = vld [vmem:[%s554 + $0x4c] sm:$0xf]
                  %595 = vst [vmem:[%s555 + $0x4c] sm:$0xf] %v594
                  %v596 = vld [vmem:[%s554 + $0x50] sm:$0xf]
                  %597 = vst [vmem:[%s555 + $0x50] sm:$0xf] %v596
                  %v598 = vld [vmem:[%s554 + $0x54] sm:$0xf]
                  %599 = vst [vmem:[%s555 + $0x54] sm:$0xf] %v598
                  %v600 = vld [vmem:[%s554 + $0x58] sm:$0xf]
                  %601 = vst [vmem:[%s555 + $0x58] sm:$0xf] %v600
                  %v602 = vld [vmem:[%s554 + $0x5c] sm:$0xf]
                  %603 = vst [vmem:[%s555 + $0x5c] sm:$0xf] %v602
                  %v604 = vld [vmem:[%s554 + $0x60] sm:$0xf]
                  %605 = vst [vmem:[%s555 + $0x60] sm:$0xf] %v604
                  %v606 = vld [vmem:[%s554 + $0x64] sm:$0xf]
                  %607 = vst [vmem:[%s555 + $0x64] sm:$0xf] %v606
                  %v608 = vld [vmem:[%s554 + $0x68] sm:$0xf]
                  %609 = vst [vmem:[%s555 + $0x68] sm:$0xf] %v608
                  %v610 = vld [vmem:[%s554 + $0x6c] sm:$0xf]
                  %611 = vst [vmem:[%s555 + $0x6c] sm:$0xf] %v610
                  %v612 = vld [vmem:[%s554 + $0x70] sm:$0xf]
                  %613 = vst [vmem:[%s555 + $0x70] sm:$0xf] %v612
                  %v614 = vld [vmem:[%s554 + $0x74] sm:$0xf]
                  %615 = vst [vmem:[%s555 + $0x74] sm:$0xf] %v614
                  %v616 = vld [vmem:[%s554 + $0x78] sm:$0xf]
                  %617 = vst [vmem:[%s555 + $0x78] sm:$0xf] %v616
                  %v618 = vld [vmem:[%s554 + $0x7c] sm:$0xf]
                  %619 = vst [vmem:[%s555 + $0x7c] sm:$0xf] %v618
                  %v620 = vld [vmem:[%s554 + $0x80] sm:$0xf]
                  %621 = vst [vmem:[%s555 + $0x80] sm:$0xf] %v620
                  %v622 = vld [vmem:[%s554 + $0x84] sm:$0xf]
                  %623 = vst [vmem:[%s555 + $0x84] sm:$0xf] %v622
                  %v624 = vld [vmem:[%s554 + $0x88] sm:$0xf]
                  %625 = vst [vmem:[%s555 + $0x88] sm:$0xf] %v624
                  %v626 = vld [vmem:[%s554 + $0x8c] sm:$0xf]
                  %627 = vst [vmem:[%s555 + $0x8c] sm:$0xf] %v626
                  %v628 = vld [vmem:[%s554 + $0x90] sm:$0xf]
                  %629 = vst [vmem:[%s555 + $0x90] sm:$0xf] %v628
                  %v630 = vld [vmem:[%s554 + $0x94] sm:$0xf]
                  %631 = vst [vmem:[%s555 + $0x94] sm:$0xf] %v630
                  %v632 = vld [vmem:[%s554 + $0x98] sm:$0xf]
                  %633 = vst [vmem:[%s555 + $0x98] sm:$0xf] %v632
                  %v634 = vld [vmem:[%s554 + $0x9c] sm:$0xf]
                  %635 = vst [vmem:[%s555 + $0x9c] sm:$0xf] %v634
                  %v636 = vld [vmem:[%s554 + $0xa0] sm:$0xf]
                  %637 = vst [vmem:[%s555 + $0xa0] sm:$0xf] %v636
                  %v638 = vld [vmem:[%s554 + $0xa4] sm:$0xf]
                  %639 = vst [vmem:[%s555 + $0xa4] sm:$0xf] %v638
                  %v640 = vld [vmem:[%s554 + $0xa8] sm:$0xf]
                  %641 = vst [vmem:[%s555 + $0xa8] sm:$0xf] %v640
                  %v642 = vld [vmem:[%s554 + $0xac] sm:$0xf]
                  %643 = vst [vmem:[%s555 + $0xac] sm:$0xf] %v642
                  %v644 = vld [vmem:[%s554 + $0xb0] sm:$0xf]
                  %645 = vst [vmem:[%s555 + $0xb0] sm:$0xf] %v644
                  %v646 = vld [vmem:[%s554 + $0xb4] sm:$0xf]
                  %647 = vst [vmem:[%s555 + $0xb4] sm:$0xf] %v646
                  %v648 = vld [vmem:[%s554 + $0xb8] sm:$0xf]
                  %649 = vst [vmem:[%s555 + $0xb8] sm:$0xf] %v648
                  %v650 = vld [vmem:[%s554 + $0xbc] sm:$0xf]
                  %651 = vst [vmem:[%s555 + $0xbc] sm:$0xf] %v650
                  %v652 = vld [vmem:[%s554 + $0xc0] sm:$0xf]
                  %653 = vst [vmem:[%s555 + $0xc0] sm:$0xf] %v652
                  %v654 = vld [vmem:[%s554 + $0xc4] sm:$0xf]
                  %655 = vst [vmem:[%s555 + $0xc4] sm:$0xf] %v654
                  %v656 = vld [vmem:[%s554 + $0xc8] sm:$0xf]
                  %657 = vst [vmem:[%s555 + $0xc8] sm:$0xf] %v656
                  %v658 = vld [vmem:[%s554 + $0xcc] sm:$0xf]
                  %659 = vst [vmem:[%s555 + $0xcc] sm:$0xf] %v658
                  %v660 = vld [vmem:[%s554 + $0xd0] sm:$0xf]
                  %661 = vst [vmem:[%s555 + $0xd0] sm:$0xf] %v660
                  %v662 = vld [vmem:[%s554 + $0xd4] sm:$0xf]
                  %663 = vst [vmem:[%s555 + $0xd4] sm:$0xf] %v662
                  %v664 = vld [vmem:[%s554 + $0xd8] sm:$0xf]
                  %665 = vst [vmem:[%s555 + $0xd8] sm:$0xf] %v664
                  %v666 = vld [vmem:[%s554 + $0xdc] sm:$0xf]
                  %667 = vst [vmem:[%s555 + $0xdc] sm:$0xf] %v666
                  %v668 = vld [vmem:[%s554 + $0xe0] sm:$0xf]
                  %669 = vst [vmem:[%s555 + $0xe0] sm:$0xf] %v668
                  %v670 = vld [vmem:[%s554 + $0xe4] sm:$0xf]
                  %671 = vst [vmem:[%s555 + $0xe4] sm:$0xf] %v670
                  %v672 = vld [vmem:[%s554 + $0xe8] sm:$0xf]
                  %673 = vst [vmem:[%s555 + $0xe8] sm:$0xf] %v672
                  %v674 = vld [vmem:[%s554 + $0xec] sm:$0xf]
                  %675 = vst [vmem:[%s555 + $0xec] sm:$0xf] %v674
                  %v676 = vld [vmem:[%s554 + $0xf0] sm:$0xf]
                  %677 = vst [vmem:[%s555 + $0xf0] sm:$0xf] %v676
                  %v678 = vld [vmem:[%s554 + $0xf4] sm:$0xf]
                  %679 = vst [vmem:[%s555 + $0xf4] sm:$0xf] %v678
                  %v680 = vld [vmem:[%s554 + $0xf8] sm:$0xf]
                  %681 = vst [vmem:[%s555 + $0xf8] sm:$0xf] %v680
                  %v682 = vld [vmem:[%s554 + $0xfc] sm:$0xf]
                  %683 = vst [vmem:[%s555 + $0xfc] sm:$0xf] %v682
                  %v684 = vld [vmem:[%s554 + $0x200] sm:$0xf]
                  %685 = vst [vmem:[%s555 + $0x100] sm:$0xf] %v684
                  %v686 = vld [vmem:[%s554 + $0x204] sm:$0xf]
                  %687 = vst [vmem:[%s555 + $0x104] sm:$0xf] %v686
                  %v688 = vld [vmem:[%s554 + $0x208] sm:$0xf]
                  %689 = vst [vmem:[%s555 + $0x108] sm:$0xf] %v688
                  %v690 = vld [vmem:[%s554 + $0x20c] sm:$0xf]
                  %691 = vst [vmem:[%s555 + $0x10c] sm:$0xf] %v690
                  %v692 = vld [vmem:[%s554 + $0x210] sm:$0xf]
                  %693 = vst [vmem:[%s555 + $0x110] sm:$0xf] %v692
                  %v694 = vld [vmem:[%s554 + $0x214] sm:$0xf]
                  %695 = vst [vmem:[%s555 + $0x114] sm:$0xf] %v694
                  %v696 = vld [vmem:[%s554 + $0x218] sm:$0xf]
                  %697 = vst [vmem:[%s555 + $0x118] sm:$0xf] %v696
                  %v698 = vld [vmem:[%s554 + $0x21c] sm:$0xf]
                  %699 = vst [vmem:[%s555 + $0x11c] sm:$0xf] %v698
                  %v700 = vld [vmem:[%s554 + $0x220] sm:$0xf]
                  %701 = vst [vmem:[%s555 + $0x120] sm:$0xf] %v700
                  %v702 = vld [vmem:[%s554 + $0x224] sm:$0xf]
                  %703 = vst [vmem:[%s555 + $0x124] sm:$0xf] %v702
                  %v704 = vld [vmem:[%s554 + $0x228] sm:$0xf]
                  %705 = vst [vmem:[%s555 + $0x128] sm:$0xf] %v704
                  %v706 = vld [vmem:[%s554 + $0x22c] sm:$0xf]
                  %707 = vst [vmem:[%s555 + $0x12c] sm:$0xf] %v706
                  %v708 = vld [vmem:[%s554 + $0x230] sm:$0xf]
                  %709 = vst [vmem:[%s555 + $0x130] sm:$0xf] %v708
                  %v710 = vld [vmem:[%s554 + $0x234] sm:$0xf]
                  %711 = vst [vmem:[%s555 + $0x134] sm:$0xf] %v710
                  %v712 = vld [vmem:[%s554 + $0x238] sm:$0xf]
                  %713 = vst [vmem:[%s555 + $0x138] sm:$0xf] %v712
                  %v714 = vld [vmem:[%s554 + $0x23c] sm:$0xf]
                  %715 = vst [vmem:[%s555 + $0x13c] sm:$0xf] %v714
                  %v716 = vld [vmem:[%s554 + $0x240] sm:$0xf]
                  %717 = vst [vmem:[%s555 + $0x140] sm:$0xf] %v716
                  %v718 = vld [vmem:[%s554 + $0x244] sm:$0xf]
                  %719 = vst [vmem:[%s555 + $0x144] sm:$0xf] %v718
                  %v720 = vld [vmem:[%s554 + $0x248] sm:$0xf]
                  %721 = vst [vmem:[%s555 + $0x148] sm:$0xf] %v720
                  %v722 = vld [vmem:[%s554 + $0x24c] sm:$0xf]
                  %723 = vst [vmem:[%s555 + $0x14c] sm:$0xf] %v722
                  %v724 = vld [vmem:[%s554 + $0x250] sm:$0xf]
                  %725 = vst [vmem:[%s555 + $0x150] sm:$0xf] %v724
                  %v726 = vld [vmem:[%s554 + $0x254] sm:$0xf]
                  %727 = vst [vmem:[%s555 + $0x154] sm:$0xf] %v726
                  %v728 = vld [vmem:[%s554 + $0x258] sm:$0xf]
                  %729 = vst [vmem:[%s555 + $0x158] sm:$0xf] %v728
                  %v730 = vld [vmem:[%s554 + $0x25c] sm:$0xf]
                  %731 = vst [vmem:[%s555 + $0x15c] sm:$0xf] %v730
                  %v732 = vld [vmem:[%s554 + $0x260] sm:$0xf]
                  %733 = vst [vmem:[%s555 + $0x160] sm:$0xf] %v732
                  %v734 = vld [vmem:[%s554 + $0x264] sm:$0xf]
                  %735 = vst [vmem:[%s555 + $0x164] sm:$0xf] %v734
                  %v736 = vld [vmem:[%s554 + $0x268] sm:$0xf]
                  %737 = vst [vmem:[%s555 + $0x168] sm:$0xf] %v736
                  %v738 = vld [vmem:[%s554 + $0x26c] sm:$0xf]
                  %739 = vst [vmem:[%s555 + $0x16c] sm:$0xf] %v738
                  %v740 = vld [vmem:[%s554 + $0x270] sm:$0xf]
                  %741 = vst [vmem:[%s555 + $0x170] sm:$0xf] %v740
                  %v742 = vld [vmem:[%s554 + $0x274] sm:$0xf]
                  %743 = vst [vmem:[%s555 + $0x174] sm:$0xf] %v742
                  %v744 = vld [vmem:[%s554 + $0x278] sm:$0xf]
                  %745 = vst [vmem:[%s555 + $0x178] sm:$0xf] %v744
                  %v746 = vld [vmem:[%s554 + $0x27c] sm:$0xf]
                  %747 = vst [vmem:[%s555 + $0x17c] sm:$0xf] %v746
                  %v748 = vld [vmem:[%s554 + $0x280] sm:$0xf]
                  %749 = vst [vmem:[%s555 + $0x180] sm:$0xf] %v748
                  %v750 = vld [vmem:[%s554 + $0x284] sm:$0xf]
                  %751 = vst [vmem:[%s555 + $0x184] sm:$0xf] %v750
                  %v752 = vld [vmem:[%s554 + $0x288] sm:$0xf]
                  %753 = vst [vmem:[%s555 + $0x188] sm:$0xf] %v752
                  %v754 = vld [vmem:[%s554 + $0x28c] sm:$0xf]
                  %755 = vst [vmem:[%s555 + $0x18c] sm:$0xf] %v754
                  %v756 = vld [vmem:[%s554 + $0x290] sm:$0xf]
                  %757 = vst [vmem:[%s555 + $0x190] sm:$0xf] %v756
                  %v758 = vld [vmem:[%s554 + $0x294] sm:$0xf]
                  %759 = vst [vmem:[%s555 + $0x194] sm:$0xf] %v758
                  %v760 = vld [vmem:[%s554 + $0x298] sm:$0xf]
                  %761 = vst [vmem:[%s555 + $0x198] sm:$0xf] %v760
                  %v762 = vld [vmem:[%s554 + $0x29c] sm:$0xf]
                  %763 = vst [vmem:[%s555 + $0x19c] sm:$0xf] %v762
                  %v764 = vld [vmem:[%s554 + $0x2a0] sm:$0xf]
                  %765 = vst [vmem:[%s555 + $0x1a0] sm:$0xf] %v764
                  %v766 = vld [vmem:[%s554 + $0x2a4] sm:$0xf]
                  %767 = vst [vmem:[%s555 + $0x1a4] sm:$0xf] %v766
                  %v768 = vld [vmem:[%s554 + $0x2a8] sm:$0xf]
                  %769 = vst [vmem:[%s555 + $0x1a8] sm:$0xf] %v768
                  %v770 = vld [vmem:[%s554 + $0x2ac] sm:$0xf]
                  %771 = vst [vmem:[%s555 + $0x1ac] sm:$0xf] %v770
                  %v772 = vld [vmem:[%s554 + $0x2b0] sm:$0xf]
                  %773 = vst [vmem:[%s555 + $0x1b0] sm:$0xf] %v772
                  %v774 = vld [vmem:[%s554 + $0x2b4] sm:$0xf]
                  %775 = vst [vmem:[%s555 + $0x1b4] sm:$0xf] %v774
                  %v776 = vld [vmem:[%s554 + $0x2b8] sm:$0xf]
                  %777 = vst [vmem:[%s555 + $0x1b8] sm:$0xf] %v776
                  %v778 = vld [vmem:[%s554 + $0x2bc] sm:$0xf]
                  %779 = vst [vmem:[%s555 + $0x1bc] sm:$0xf] %v778
                  %v780 = vld [vmem:[%s554 + $0x2c0] sm:$0xf]
                  %781 = vst [vmem:[%s555 + $0x1c0] sm:$0xf] %v780
                  %v782 = vld [vmem:[%s554 + $0x2c4] sm:$0xf]
                  %783 = vst [vmem:[%s555 + $0x1c4] sm:$0xf] %v782
                  %v784 = vld [vmem:[%s554 + $0x2c8] sm:$0xf]
                  %785 = vst [vmem:[%s555 + $0x1c8] sm:$0xf] %v784
                  %v786 = vld [vmem:[%s554 + $0x2cc] sm:$0xf]
                  %787 = vst [vmem:[%s555 + $0x1cc] sm:$0xf] %v786
                  %v788 = vld [vmem:[%s554 + $0x2d0] sm:$0xf]
                  %789 = vst [vmem:[%s555 + $0x1d0] sm:$0xf] %v788
                  %v790 = vld [vmem:[%s554 + $0x2d4] sm:$0xf]
                  %791 = vst [vmem:[%s555 + $0x1d4] sm:$0xf] %v790
                  %v792 = vld [vmem:[%s554 + $0x2d8] sm:$0xf]
                  %793 = vst [vmem:[%s555 + $0x1d8] sm:$0xf] %v792
                  %v794 = vld [vmem:[%s554 + $0x2dc] sm:$0xf]
                  %795 = vst [vmem:[%s555 + $0x1dc] sm:$0xf] %v794
                  %v796 = vld [vmem:[%s554 + $0x2e0] sm:$0xf]
                  %797 = vst [vmem:[%s555 + $0x1e0] sm:$0xf] %v796
                  %v798 = vld [vmem:[%s554 + $0x2e4] sm:$0xf]
                  %799 = vst [vmem:[%s555 + $0x1e4] sm:$0xf] %v798
                  %v800 = vld [vmem:[%s554 + $0x2e8] sm:$0xf]
                  %801 = vst [vmem:[%s555 + $0x1e8] sm:$0xf] %v800
                  %v802 = vld [vmem:[%s554 + $0x2ec] sm:$0xf]
                  %803 = vst [vmem:[%s555 + $0x1ec] sm:$0xf] %v802
                  %v804 = vld [vmem:[%s554 + $0x2f0] sm:$0xf]
                  %805 = vst [vmem:[%s555 + $0x1f0] sm:$0xf] %v804
                  %v806 = vld [vmem:[%s554 + $0x2f4] sm:$0xf]
                  %807 = vst [vmem:[%s555 + $0x1f4] sm:$0xf] %v806
                  %v808 = vld [vmem:[%s554 + $0x2f8] sm:$0xf]
                  %809 = vst [vmem:[%s555 + $0x1f8] sm:$0xf] %v808
                  %v810 = vld [vmem:[%s554 + $0x2fc] sm:$0xf]
                  %811 = vst [vmem:[%s555 + $0x1fc] sm:$0xf] %v810
                $region83: #{discriminator_forward.1} parent=70 // loop_footer
                  %s553 = sadd.s32 1, %s549
                $region84: #{discriminator_forward.1} parent=70 // loop_footer_branch
                  %548 = sbr.rel target = $region80
                $region85: #{discriminator_forward.1} parent=70 // loop_exit
                  _
              $region71: #{discriminator_forward.1} parent=55 // pred_fallthru
                _
            $region56: #{discriminator_forward.1} parent=51 // pred_fallthru
              _
            // Predicated region
            $region57: #{discriminator_forward.1} parent=51 // pred_check
              _
            $region58: #{discriminator_forward.1} parent=51 // pred_check_branch
              %271 = sbr.rel (0) target = $region60
            $region59: #{discriminator_forward.1} parent=51 // pred_region
              loop: start=0, step=1, limit=1
              $region61: #{discriminator_forward.1} parent=59 // loop_pre_header
                _
              $region62: #{discriminator_forward.1} parent=59 // loop_header
                %s274 = sphi 0, %s278
                %p275 = scmp.ge.s32.totalorder %s274, 1
                %s279 = sphi %s265, %s265
                %s280 = sphi %s261, %s261
              $region63: #{discriminator_forward.1} parent=59 // loop_header_branch
                %277 = sbr.rel (%p275) target = $region67
              $region64: #{discriminator_forward.1} parent=59 // loop_body
                %v281 = vld [vmem:[%s279] sm:$0xf]
                %282 = vst [vmem:[%s280] sm:$0xf] %v281
                %v283 = vld [vmem:[%s279 + $0x4] sm:$0xf]
                %284 = vst [vmem:[%s280 + $0x4] sm:$0xf] %v283
                %v285 = vld [vmem:[%s279 + $0x8] sm:$0xf]
                %286 = vst [vmem:[%s280 + $0x8] sm:$0xf] %v285
                %v287 = vld [vmem:[%s279 + $0xc] sm:$0xf]
                %288 = vst [vmem:[%s280 + $0xc] sm:$0xf] %v287
                %v289 = vld [vmem:[%s279 + $0x10] sm:$0xf]
                %290 = vst [vmem:[%s280 + $0x10] sm:$0xf] %v289
                %v291 = vld [vmem:[%s279 + $0x14] sm:$0xf]
                %292 = vst [vmem:[%s280 + $0x14] sm:$0xf] %v291
                %v293 = vld [vmem:[%s279 + $0x18] sm:$0xf]
                %294 = vst [vmem:[%s280 + $0x18] sm:$0xf] %v293
                %v295 = vld [vmem:[%s279 + $0x1c] sm:$0xf]
                %296 = vst [vmem:[%s280 + $0x1c] sm:$0xf] %v295
                %v297 = vld [vmem:[%s279 + $0x20] sm:$0xf]
                %298 = vst [vmem:[%s280 + $0x20] sm:$0xf] %v297
                %v299 = vld [vmem:[%s279 + $0x24] sm:$0xf]
                %300 = vst [vmem:[%s280 + $0x24] sm:$0xf] %v299
                %v301 = vld [vmem:[%s279 + $0x28] sm:$0xf]
                %302 = vst [vmem:[%s280 + $0x28] sm:$0xf] %v301
                %v303 = vld [vmem:[%s279 + $0x2c] sm:$0xf]
                %304 = vst [vmem:[%s280 + $0x2c] sm:$0xf] %v303
                %v305 = vld [vmem:[%s279 + $0x30] sm:$0xf]
                %306 = vst [vmem:[%s280 + $0x30] sm:$0xf] %v305
                %v307 = vld [vmem:[%s279 + $0x34] sm:$0xf]
                %308 = vst [vmem:[%s280 + $0x34] sm:$0xf] %v307
                %v309 = vld [vmem:[%s279 + $0x38] sm:$0xf]
                %310 = vst [vmem:[%s280 + $0x38] sm:$0xf] %v309
                %v311 = vld [vmem:[%s279 + $0x3c] sm:$0xf]
                %312 = vst [vmem:[%s280 + $0x3c] sm:$0xf] %v311
                %v313 = vld [vmem:[%s279 + $0x40] sm:$0xf]
                %314 = vst [vmem:[%s280 + $0x40] sm:$0xf] %v313
                %v315 = vld [vmem:[%s279 + $0x44] sm:$0xf]
                %316 = vst [vmem:[%s280 + $0x44] sm:$0xf] %v315
                %v317 = vld [vmem:[%s279 + $0x48] sm:$0xf]
                %318 = vst [vmem:[%s280 + $0x48] sm:$0xf] %v317
                %v319 = vld [vmem:[%s279 + $0x4c] sm:$0xf]
                %320 = vst [vmem:[%s280 + $0x4c] sm:$0xf] %v319
                %v321 = vld [vmem:[%s279 + $0x50] sm:$0xf]
                %322 = vst [vmem:[%s280 + $0x50] sm:$0xf] %v321
                %v323 = vld [vmem:[%s279 + $0x54] sm:$0xf]
                %324 = vst [vmem:[%s280 + $0x54] sm:$0xf] %v323
                %v325 = vld [vmem:[%s279 + $0x58] sm:$0xf]
                %326 = vst [vmem:[%s280 + $0x58] sm:$0xf] %v325
                %v327 = vld [vmem:[%s279 + $0x5c] sm:$0xf]
                %328 = vst [vmem:[%s280 + $0x5c] sm:$0xf] %v327
                %v329 = vld [vmem:[%s279 + $0x60] sm:$0xf]
                %330 = vst [vmem:[%s280 + $0x60] sm:$0xf] %v329
                %v331 = vld [vmem:[%s279 + $0x64] sm:$0xf]
                %332 = vst [vmem:[%s280 + $0x64] sm:$0xf] %v331
                %v333 = vld [vmem:[%s279 + $0x68] sm:$0xf]
                %334 = vst [vmem:[%s280 + $0x68] sm:$0xf] %v333
                %v335 = vld [vmem:[%s279 + $0x6c] sm:$0xf]
                %336 = vst [vmem:[%s280 + $0x6c] sm:$0xf] %v335
                %v337 = vld [vmem:[%s279 + $0x70] sm:$0xf]
                %338 = vst [vmem:[%s280 + $0x70] sm:$0xf] %v337
                %v339 = vld [vmem:[%s279 + $0x74] sm:$0xf]
                %340 = vst [vmem:[%s280 + $0x74] sm:$0xf] %v339
                %v341 = vld [vmem:[%s279 + $0x78] sm:$0xf]
                %342 = vst [vmem:[%s280 + $0x78] sm:$0xf] %v341
                %v343 = vld [vmem:[%s279 + $0x7c] sm:$0xf]
                %344 = vst [vmem:[%s280 + $0x7c] sm:$0xf] %v343
                %v345 = vld [vmem:[%s279 + $0x80] sm:$0xf]
                %346 = vst [vmem:[%s280 + $0x80] sm:$0xf] %v345
                %v347 = vld [vmem:[%s279 + $0x84] sm:$0xf]
                %348 = vst [vmem:[%s280 + $0x84] sm:$0xf] %v347
                %v349 = vld [vmem:[%s279 + $0x88] sm:$0xf]
                %350 = vst [vmem:[%s280 + $0x88] sm:$0xf] %v349
                %v351 = vld [vmem:[%s279 + $0x8c] sm:$0xf]
                %352 = vst [vmem:[%s280 + $0x8c] sm:$0xf] %v351
                %v353 = vld [vmem:[%s279 + $0x90] sm:$0xf]
                %354 = vst [vmem:[%s280 + $0x90] sm:$0xf] %v353
                %v355 = vld [vmem:[%s279 + $0x94] sm:$0xf]
                %356 = vst [vmem:[%s280 + $0x94] sm:$0xf] %v355
                %v357 = vld [vmem:[%s279 + $0x98] sm:$0xf]
                %358 = vst [vmem:[%s280 + $0x98] sm:$0xf] %v357
                %v359 = vld [vmem:[%s279 + $0x9c] sm:$0xf]
                %360 = vst [vmem:[%s280 + $0x9c] sm:$0xf] %v359
                %v361 = vld [vmem:[%s279 + $0xa0] sm:$0xf]
                %362 = vst [vmem:[%s280 + $0xa0] sm:$0xf] %v361
                %v363 = vld [vmem:[%s279 + $0xa4] sm:$0xf]
                %364 = vst [vmem:[%s280 + $0xa4] sm:$0xf] %v363
                %v365 = vld [vmem:[%s279 + $0xa8] sm:$0xf]
                %366 = vst [vmem:[%s280 + $0xa8] sm:$0xf] %v365
                %v367 = vld [vmem:[%s279 + $0xac] sm:$0xf]
                %368 = vst [vmem:[%s280 + $0xac] sm:$0xf] %v367
                %v369 = vld [vmem:[%s279 + $0xb0] sm:$0xf]
                %370 = vst [vmem:[%s280 + $0xb0] sm:$0xf] %v369
                %v371 = vld [vmem:[%s279 + $0xb4] sm:$0xf]
                %372 = vst [vmem:[%s280 + $0xb4] sm:$0xf] %v371
                %v373 = vld [vmem:[%s279 + $0xb8] sm:$0xf]
                %374 = vst [vmem:[%s280 + $0xb8] sm:$0xf] %v373
                %v375 = vld [vmem:[%s279 + $0xbc] sm:$0xf]
                %376 = vst [vmem:[%s280 + $0xbc] sm:$0xf] %v375
                %v377 = vld [vmem:[%s279 + $0xc0] sm:$0xf]
                %378 = vst [vmem:[%s280 + $0xc0] sm:$0xf] %v377
                %v379 = vld [vmem:[%s279 + $0xc4] sm:$0xf]
                %380 = vst [vmem:[%s280 + $0xc4] sm:$0xf] %v379
                %v381 = vld [vmem:[%s279 + $0xc8] sm:$0xf]
                %382 = vst [vmem:[%s280 + $0xc8] sm:$0xf] %v381
                %v383 = vld [vmem:[%s279 + $0xcc] sm:$0xf]
                %384 = vst [vmem:[%s280 + $0xcc] sm:$0xf] %v383
                %v385 = vld [vmem:[%s279 + $0xd0] sm:$0xf]
                %386 = vst [vmem:[%s280 + $0xd0] sm:$0xf] %v385
                %v387 = vld [vmem:[%s279 + $0xd4] sm:$0xf]
                %388 = vst [vmem:[%s280 + $0xd4] sm:$0xf] %v387
                %v389 = vld [vmem:[%s279 + $0xd8] sm:$0xf]
                %390 = vst [vmem:[%s280 + $0xd8] sm:$0xf] %v389
                %v391 = vld [vmem:[%s279 + $0xdc] sm:$0xf]
                %392 = vst [vmem:[%s280 + $0xdc] sm:$0xf] %v391
                %v393 = vld [vmem:[%s279 + $0xe0] sm:$0xf]
                %394 = vst [vmem:[%s280 + $0xe0] sm:$0xf] %v393
                %v395 = vld [vmem:[%s279 + $0xe4] sm:$0xf]
                %396 = vst [vmem:[%s280 + $0xe4] sm:$0xf] %v395
                %v397 = vld [vmem:[%s279 + $0xe8] sm:$0xf]
                %398 = vst [vmem:[%s280 + $0xe8] sm:$0xf] %v397
                %v399 = vld [vmem:[%s279 + $0xec] sm:$0xf]
                %400 = vst [vmem:[%s280 + $0xec] sm:$0xf] %v399
                %v401 = vld [vmem:[%s279 + $0xf0] sm:$0xf]
                %402 = vst [vmem:[%s280 + $0xf0] sm:$0xf] %v401
                %v403 = vld [vmem:[%s279 + $0xf4] sm:$0xf]
                %404 = vst [vmem:[%s280 + $0xf4] sm:$0xf] %v403
                %v405 = vld [vmem:[%s279 + $0xf8] sm:$0xf]
                %406 = vst [vmem:[%s280 + $0xf8] sm:$0xf] %v405
                %v407 = vld [vmem:[%s279 + $0xfc] sm:$0xf]
                %408 = vst [vmem:[%s280 + $0xfc] sm:$0xf] %v407
                %v409 = vld [vmem:[%s279 + $0x200] sm:$0xf]
                %410 = vst [vmem:[%s280 + $0x100] sm:$0xf] %v409
                %v411 = vld [vmem:[%s279 + $0x204] sm:$0xf]
                %412 = vst [vmem:[%s280 + $0x104] sm:$0xf] %v411
                %v413 = vld [vmem:[%s279 + $0x208] sm:$0xf]
                %414 = vst [vmem:[%s280 + $0x108] sm:$0xf] %v413
                %v415 = vld [vmem:[%s279 + $0x20c] sm:$0xf]
                %416 = vst [vmem:[%s280 + $0x10c] sm:$0xf] %v415
                %v417 = vld [vmem:[%s279 + $0x210] sm:$0xf]
                %418 = vst [vmem:[%s280 + $0x110] sm:$0xf] %v417
                %v419 = vld [vmem:[%s279 + $0x214] sm:$0xf]
                %420 = vst [vmem:[%s280 + $0x114] sm:$0xf] %v419
                %v421 = vld [vmem:[%s279 + $0x218] sm:$0xf]
                %422 = vst [vmem:[%s280 + $0x118] sm:$0xf] %v421
                %v423 = vld [vmem:[%s279 + $0x21c] sm:$0xf]
                %424 = vst [vmem:[%s280 + $0x11c] sm:$0xf] %v423
                %v425 = vld [vmem:[%s279 + $0x220] sm:$0xf]
                %426 = vst [vmem:[%s280 + $0x120] sm:$0xf] %v425
                %v427 = vld [vmem:[%s279 + $0x224] sm:$0xf]
                %428 = vst [vmem:[%s280 + $0x124] sm:$0xf] %v427
                %v429 = vld [vmem:[%s279 + $0x228] sm:$0xf]
                %430 = vst [vmem:[%s280 + $0x128] sm:$0xf] %v429
                %v431 = vld [vmem:[%s279 + $0x22c] sm:$0xf]
                %432 = vst [vmem:[%s280 + $0x12c] sm:$0xf] %v431
                %v433 = vld [vmem:[%s279 + $0x230] sm:$0xf]
                %434 = vst [vmem:[%s280 + $0x130] sm:$0xf] %v433
                %v435 = vld [vmem:[%s279 + $0x234] sm:$0xf]
                %436 = vst [vmem:[%s280 + $0x134] sm:$0xf] %v435
                %v437 = vld [vmem:[%s279 + $0x238] sm:$0xf]
                %438 = vst [vmem:[%s280 + $0x138] sm:$0xf] %v437
                %v439 = vld [vmem:[%s279 + $0x23c] sm:$0xf]
                %440 = vst [vmem:[%s280 + $0x13c] sm:$0xf] %v439
                %v441 = vld [vmem:[%s279 + $0x240] sm:$0xf]
                %442 = vst [vmem:[%s280 + $0x140] sm:$0xf] %v441
                %v443 = vld [vmem:[%s279 + $0x244] sm:$0xf]
                %444 = vst [vmem:[%s280 + $0x144] sm:$0xf] %v443
                %v445 = vld [vmem:[%s279 + $0x248] sm:$0xf]
                %446 = vst [vmem:[%s280 + $0x148] sm:$0xf] %v445
                %v447 = vld [vmem:[%s279 + $0x24c] sm:$0xf]
                %448 = vst [vmem:[%s280 + $0x14c] sm:$0xf] %v447
                %v449 = vld [vmem:[%s279 + $0x250] sm:$0xf]
                %450 = vst [vmem:[%s280 + $0x150] sm:$0xf] %v449
                %v451 = vld [vmem:[%s279 + $0x254] sm:$0xf]
                %452 = vst [vmem:[%s280 + $0x154] sm:$0xf] %v451
                %v453 = vld [vmem:[%s279 + $0x258] sm:$0xf]
                %454 = vst [vmem:[%s280 + $0x158] sm:$0xf] %v453
                %v455 = vld [vmem:[%s279 + $0x25c] sm:$0xf]
                %456 = vst [vmem:[%s280 + $0x15c] sm:$0xf] %v455
                %v457 = vld [vmem:[%s279 + $0x260] sm:$0xf]
                %458 = vst [vmem:[%s280 + $0x160] sm:$0xf] %v457
                %v459 = vld [vmem:[%s279 + $0x264] sm:$0xf]
                %460 = vst [vmem:[%s280 + $0x164] sm:$0xf] %v459
                %v461 = vld [vmem:[%s279 + $0x268] sm:$0xf]
                %462 = vst [vmem:[%s280 + $0x168] sm:$0xf] %v461
                %v463 = vld [vmem:[%s279 + $0x26c] sm:$0xf]
                %464 = vst [vmem:[%s280 + $0x16c] sm:$0xf] %v463
                %v465 = vld [vmem:[%s279 + $0x270] sm:$0xf]
                %466 = vst [vmem:[%s280 + $0x170] sm:$0xf] %v465
                %v467 = vld [vmem:[%s279 + $0x274] sm:$0xf]
                %468 = vst [vmem:[%s280 + $0x174] sm:$0xf] %v467
                %v469 = vld [vmem:[%s279 + $0x278] sm:$0xf]
                %470 = vst [vmem:[%s280 + $0x178] sm:$0xf] %v469
                %v471 = vld [vmem:[%s279 + $0x27c] sm:$0xf]
                %472 = vst [vmem:[%s280 + $0x17c] sm:$0xf] %v471
                %v473 = vld [vmem:[%s279 + $0x280] sm:$0xf]
                %474 = vst [vmem:[%s280 + $0x180] sm:$0xf] %v473
                %v475 = vld [vmem:[%s279 + $0x284] sm:$0xf]
                %476 = vst [vmem:[%s280 + $0x184] sm:$0xf] %v475
                %v477 = vld [vmem:[%s279 + $0x288] sm:$0xf]
                %478 = vst [vmem:[%s280 + $0x188] sm:$0xf] %v477
                %v479 = vld [vmem:[%s279 + $0x28c] sm:$0xf]
                %480 = vst [vmem:[%s280 + $0x18c] sm:$0xf] %v479
                %v481 = vld [vmem:[%s279 + $0x290] sm:$0xf]
                %482 = vst [vmem:[%s280 + $0x190] sm:$0xf] %v481
                %v483 = vld [vmem:[%s279 + $0x294] sm:$0xf]
                %484 = vst [vmem:[%s280 + $0x194] sm:$0xf] %v483
                %v485 = vld [vmem:[%s279 + $0x298] sm:$0xf]
                %486 = vst [vmem:[%s280 + $0x198] sm:$0xf] %v485
                %v487 = vld [vmem:[%s279 + $0x29c] sm:$0xf]
                %488 = vst [vmem:[%s280 + $0x19c] sm:$0xf] %v487
                %v489 = vld [vmem:[%s279 + $0x2a0] sm:$0xf]
                %490 = vst [vmem:[%s280 + $0x1a0] sm:$0xf] %v489
                %v491 = vld [vmem:[%s279 + $0x2a4] sm:$0xf]
                %492 = vst [vmem:[%s280 + $0x1a4] sm:$0xf] %v491
                %v493 = vld [vmem:[%s279 + $0x2a8] sm:$0xf]
                %494 = vst [vmem:[%s280 + $0x1a8] sm:$0xf] %v493
                %v495 = vld [vmem:[%s279 + $0x2ac] sm:$0xf]
                %496 = vst [vmem:[%s280 + $0x1ac] sm:$0xf] %v495
                %v497 = vld [vmem:[%s279 + $0x2b0] sm:$0xf]
                %498 = vst [vmem:[%s280 + $0x1b0] sm:$0xf] %v497
                %v499 = vld [vmem:[%s279 + $0x2b4] sm:$0xf]
                %500 = vst [vmem:[%s280 + $0x1b4] sm:$0xf] %v499
                %v501 = vld [vmem:[%s279 + $0x2b8] sm:$0xf]
                %502 = vst [vmem:[%s280 + $0x1b8] sm:$0xf] %v501
                %v503 = vld [vmem:[%s279 + $0x2bc] sm:$0xf]
                %504 = vst [vmem:[%s280 + $0x1bc] sm:$0xf] %v503
                %v505 = vld [vmem:[%s279 + $0x2c0] sm:$0xf]
                %506 = vst [vmem:[%s280 + $0x1c0] sm:$0xf] %v505
                %v507 = vld [vmem:[%s279 + $0x2c4] sm:$0xf]
                %508 = vst [vmem:[%s280 + $0x1c4] sm:$0xf] %v507
                %v509 = vld [vmem:[%s279 + $0x2c8] sm:$0xf]
                %510 = vst [vmem:[%s280 + $0x1c8] sm:$0xf] %v509
                %v511 = vld [vmem:[%s279 + $0x2cc] sm:$0xf]
                %512 = vst [vmem:[%s280 + $0x1cc] sm:$0xf] %v511
                %v513 = vld [vmem:[%s279 + $0x2d0] sm:$0xf]
                %514 = vst [vmem:[%s280 + $0x1d0] sm:$0xf] %v513
                %v515 = vld [vmem:[%s279 + $0x2d4] sm:$0xf]
                %516 = vst [vmem:[%s280 + $0x1d4] sm:$0xf] %v515
                %v517 = vld [vmem:[%s279 + $0x2d8] sm:$0xf]
                %518 = vst [vmem:[%s280 + $0x1d8] sm:$0xf] %v517
                %v519 = vld [vmem:[%s279 + $0x2dc] sm:$0xf]
                %520 = vst [vmem:[%s280 + $0x1dc] sm:$0xf] %v519
                %v521 = vld [vmem:[%s279 + $0x2e0] sm:$0xf]
                %522 = vst [vmem:[%s280 + $0x1e0] sm:$0xf] %v521
                %v523 = vld [vmem:[%s279 + $0x2e4] sm:$0xf]
                %524 = vst [vmem:[%s280 + $0x1e4] sm:$0xf] %v523
                %v525 = vld [vmem:[%s279 + $0x2e8] sm:$0xf]
                %526 = vst [vmem:[%s280 + $0x1e8] sm:$0xf] %v525
                %v527 = vld [vmem:[%s279 + $0x2ec] sm:$0xf]
                %528 = vst [vmem:[%s280 + $0x1ec] sm:$0xf] %v527
                %v529 = vld [vmem:[%s279 + $0x2f0] sm:$0xf]
                %530 = vst [vmem:[%s280 + $0x1f0] sm:$0xf] %v529
                %v531 = vld [vmem:[%s279 + $0x2f4] sm:$0xf]
                %532 = vst [vmem:[%s280 + $0x1f4] sm:$0xf] %v531
                %v533 = vld [vmem:[%s279 + $0x2f8] sm:$0xf]
                %534 = vst [vmem:[%s280 + $0x1f8] sm:$0xf] %v533
                %v535 = vld [vmem:[%s279 + $0x2fc] sm:$0xf]
                %536 = vst [vmem:[%s280 + $0x1fc] sm:$0xf] %v535
              $region65: #{discriminator_forward.1} parent=59 // loop_footer
                %s278 = sadd.s32 1, %s274
              $region66: #{discriminator_forward.1} parent=59 // loop_footer_branch
                %273 = sbr.rel target = $region62
              $region67: #{discriminator_forward.1} parent=59 // loop_exit
                _
            $region60: #{discriminator_forward.1} parent=51 // pred_fallthru
              _
          $region52: #{discriminator_forward.1} parent=47 // pred_fallthru
            _
          %812 = vnop
        $region48: #{discriminator_forward.1} parent=43 // pred_fallthru
          _
      $region44: #{discriminator_forward.1} parent=5 // pred_fallthru
        _
      %p813 = scmp.le.s32.totalorder 1, %s16
      %p814 = scmp.lt.s32.totalorder %s16, 3
      %p815 = pnand %p813, %p814
      %p816 = pneg %p815
      // Predicated region
      $region86: #{discriminator_forward.1} parent=5 // pred_check
        _
      $region87: #{discriminator_forward.1} parent=5 // pred_check_branch
        %818 = sbr.rel (%p815) target = $region89
      $region88: #{discriminator_forward.1} parent=5 // pred_region
        %s819 = ssub.s32 %s16, 1
        %s820 = sand.u32 %s29, 1
        %s821 = sand.u32 %s29, 1
        %s822 = smul.addr %s821, 512
        %s823 = scalar_lea.vmem [#allocation5], %s822
        // Predicated region
        $region90: #{discriminator_forward.1} parent=88 // pred_check
          %p824 = pneg %p42
        $region91: #{discriminator_forward.1} parent=88 // pred_check_branch
          %826 = sbr.rel (%p824) target = $region93
        $region92: #{discriminator_forward.1} parent=88 // pred_region
          _
        $region93: #{discriminator_forward.1} parent=88 // pred_fallthru
          _
        %s827 = sand.u32 %s29, 1
        %s828 = sand.u32 %s29, 1
        %s829 = smul.addr %s828, 512
        %s830 = scalar_lea.vmem [#allocation5], %s829
        %p831 = pneg %p42
        %p832 = pneg %p39
        %p833 = pneg %p63
        %p834 = pneg %p60
        %p835 = pneg %p84
        %p836 = pneg %p81
        %p837 = pneg %p105
        %p838 = pneg %p102
        %p839 = pneg %p126
        %p840 = pneg %p123
        %p841 = pneg %p147
        %p842 = pneg %p144
        %p843 = pneg %p168
        %p844 = pneg %p165
        %p845 = pneg %p189
        %p846 = pneg %p186
        %p847 = pneg %p215
        %p848 = pneg %p212
        %p849 = scmp.lt.s32.totalorder %s21, 1
        %s850 = scalar_select %p849, %s21, 1
        %s851 = scalar_lea.vmem %s8, %s850
        %s852 = smul.u32 8, %s21
        %p853 = scmp.lt.s32.totalorder %s21, 1
        %s854 = scalar_select %p853, %s21, 1
        %s855 = scalar_lea.vmem %s8, %s854
        %v857 = vld [vmem:[%s823] sm:$0xf]
        %v858 = vld [vmem:[%s823 + $0x4] sm:$0xf]
        %v859 = vld [vmem:[%s823 + $0x8] sm:$0xf]
        %v860 = vld [vmem:[%s823 + $0xc] sm:$0xf]
        %v861 = vld [vmem:[%s823 + $0x10] sm:$0xf]
        %v862 = vld [vmem:[%s823 + $0x14] sm:$0xf]
        %v863 = vld [vmem:[%s823 + $0x18] sm:$0xf]
        %v864 = vld [vmem:[%s823 + $0x1c] sm:$0xf]
        %v865 = vld [vmem:[%s823 + $0x20] sm:$0xf]
        %v866 = vld [vmem:[%s823 + $0x24] sm:$0xf]
        %v867 = vld [vmem:[%s823 + $0x28] sm:$0xf]
        %v868 = vld [vmem:[%s823 + $0x2c] sm:$0xf]
        %v869 = vld [vmem:[%s823 + $0x30] sm:$0xf]
        %v870 = vld [vmem:[%s823 + $0x34] sm:$0xf]
        %v871 = vld [vmem:[%s823 + $0x38] sm:$0xf]
        %v872 = vld [vmem:[%s823 + $0x3c] sm:$0xf]
        %v873 = vld [vmem:[%s823 + $0x40] sm:$0xf]
        %v874 = vld [vmem:[%s823 + $0x44] sm:$0xf]
        %v875 = vld [vmem:[%s823 + $0x48] sm:$0xf]
        %v876 = vld [vmem:[%s823 + $0x4c] sm:$0xf]
        %v877 = vld [vmem:[%s823 + $0x50] sm:$0xf]
        %v878 = vld [vmem:[%s823 + $0x54] sm:$0xf]
        %v879 = vld [vmem:[%s823 + $0x58] sm:$0xf]
        %v880 = vld [vmem:[%s823 + $0x5c] sm:$0xf]
        %v881 = vld [vmem:[%s823 + $0x60] sm:$0xf]
        %v882 = vld [vmem:[%s823 + $0x64] sm:$0xf]
        %v883 = vld [vmem:[%s823 + $0x68] sm:$0xf]
        %v884 = vld [vmem:[%s823 + $0x6c] sm:$0xf]
        %v885 = vld [vmem:[%s823 + $0x70] sm:$0xf]
        %v886 = vld [vmem:[%s823 + $0x74] sm:$0xf]
        %v887 = vld [vmem:[%s823 + $0x78] sm:$0xf]
        %v888 = vld [vmem:[%s823 + $0x7c] sm:$0xf]
        %v889 = vld [vmem:[%s823 + $0x80] sm:$0xf]
        %v890 = vld [vmem:[%s823 + $0x84] sm:$0xf]
        %v891 = vld [vmem:[%s823 + $0x88] sm:$0xf]
        %v892 = vld [vmem:[%s823 + $0x8c] sm:$0xf]
        %v893 = vld [vmem:[%s823 + $0x90] sm:$0xf]
        %v894 = vld [vmem:[%s823 + $0x94] sm:$0xf]
        %v895 = vld [vmem:[%s823 + $0x98] sm:$0xf]
        %v896 = vld [vmem:[%s823 + $0x9c] sm:$0xf]
        %v897 = vld [vmem:[%s823 + $0xa0] sm:$0xf]
        %v898 = vld [vmem:[%s823 + $0xa4] sm:$0xf]
        %v899 = vld [vmem:[%s823 + $0xa8] sm:$0xf]
        %v900 = vld [vmem:[%s823 + $0xac] sm:$0xf]
        %v901 = vld [vmem:[%s823 + $0xb0] sm:$0xf]
        %v902 = vld [vmem:[%s823 + $0xb4] sm:$0xf]
        %v903 = vld [vmem:[%s823 + $0xb8] sm:$0xf]
        %v904 = vld [vmem:[%s823 + $0xbc] sm:$0xf]
        %v905 = vld [vmem:[%s823 + $0xc0] sm:$0xf]
        %v906 = vld [vmem:[%s823 + $0xc4] sm:$0xf]
        %v907 = vld [vmem:[%s823 + $0xc8] sm:$0xf]
        %v908 = vld [vmem:[%s823 + $0xcc] sm:$0xf]
        %v909 = vld [vmem:[%s823 + $0xd0] sm:$0xf]
        %v910 = vld [vmem:[%s823 + $0xd4] sm:$0xf]
        %v911 = vld [vmem:[%s823 + $0xd8] sm:$0xf]
        %v912 = vld [vmem:[%s823 + $0xdc] sm:$0xf]
        %v913 = vld [vmem:[%s823 + $0xe0] sm:$0xf]
        %v914 = vld [vmem:[%s823 + $0xe4] sm:$0xf]
        %v915 = vld [vmem:[%s823 + $0xe8] sm:$0xf]
        %v916 = vld [vmem:[%s823 + $0xec] sm:$0xf]
        %v917 = vld [vmem:[%s823 + $0xf0] sm:$0xf]
        %v918 = vld [vmem:[%s823 + $0xf4] sm:$0xf]
        %v919 = vld [vmem:[%s823 + $0xf8] sm:$0xf]
        %v920 = vld [vmem:[%s823 + $0xfc] sm:$0xf]
        %v921 = vld [vmem:[%s823 + $0x100] sm:$0xf]
        %v922 = vld [vmem:[%s823 + $0x104] sm:$0xf]
        %v923 = vld [vmem:[%s823 + $0x108] sm:$0xf]
        %v924 = vld [vmem:[%s823 + $0x10c] sm:$0xf]
        %v925 = vld [vmem:[%s823 + $0x110] sm:$0xf]
        %v926 = vld [vmem:[%s823 + $0x114] sm:$0xf]
        %v927 = vld [vmem:[%s823 + $0x118] sm:$0xf]
        %v928 = vld [vmem:[%s823 + $0x11c] sm:$0xf]
        %v929 = vld [vmem:[%s823 + $0x120] sm:$0xf]
        %v930 = vld [vmem:[%s823 + $0x124] sm:$0xf]
        %v931 = vld [vmem:[%s823 + $0x128] sm:$0xf]
        %v932 = vld [vmem:[%s823 + $0x12c] sm:$0xf]
        %v933 = vld [vmem:[%s823 + $0x130] sm:$0xf]
        %v934 = vld [vmem:[%s823 + $0x134] sm:$0xf]
        %v935 = vld [vmem:[%s823 + $0x138] sm:$0xf]
        %v936 = vld [vmem:[%s823 + $0x13c] sm:$0xf]
        %v937 = vld [vmem:[%s823 + $0x140] sm:$0xf]
        %v938 = vld [vmem:[%s823 + $0x144] sm:$0xf]
        %v939 = vld [vmem:[%s823 + $0x148] sm:$0xf]
        %v940 = vld [vmem:[%s823 + $0x14c] sm:$0xf]
        %v941 = vld [vmem:[%s823 + $0x150] sm:$0xf]
        %v942 = vld [vmem:[%s823 + $0x154] sm:$0xf]
        %v943 = vld [vmem:[%s823 + $0x158] sm:$0xf]
        %v944 = vld [vmem:[%s823 + $0x15c] sm:$0xf]
        %v945 = vld [vmem:[%s823 + $0x160] sm:$0xf]
        %v946 = vld [vmem:[%s823 + $0x164] sm:$0xf]
        %v947 = vld [vmem:[%s823 + $0x168] sm:$0xf]
        %v948 = vld [vmem:[%s823 + $0x16c] sm:$0xf]
        %v949 = vld [vmem:[%s823 + $0x170] sm:$0xf]
        %v950 = vld [vmem:[%s823 + $0x174] sm:$0xf]
        %v951 = vld [vmem:[%s823 + $0x178] sm:$0xf]
        %v952 = vld [vmem:[%s823 + $0x17c] sm:$0xf]
        %v953 = vld [vmem:[%s823 + $0x180] sm:$0xf]
        %v954 = vld [vmem:[%s823 + $0x184] sm:$0xf]
        %v955 = vld [vmem:[%s823 + $0x188] sm:$0xf]
        %v956 = vld [vmem:[%s823 + $0x18c] sm:$0xf]
        %v957 = vld [vmem:[%s823 + $0x190] sm:$0xf]
        %v958 = vld [vmem:[%s823 + $0x194] sm:$0xf]
        %v959 = vld [vmem:[%s823 + $0x198] sm:$0xf]
        %v960 = vld [vmem:[%s823 + $0x19c] sm:$0xf]
        %v961 = vld [vmem:[%s823 + $0x1a0] sm:$0xf]
        %v962 = vld [vmem:[%s823 + $0x1a4] sm:$0xf]
        %v963 = vld [vmem:[%s823 + $0x1a8] sm:$0xf]
        %v964 = vld [vmem:[%s823 + $0x1ac] sm:$0xf]
        %v965 = vld [vmem:[%s823 + $0x1b0] sm:$0xf]
        %v966 = vld [vmem:[%s823 + $0x1b4] sm:$0xf]
        %v967 = vld [vmem:[%s823 + $0x1b8] sm:$0xf]
        %v968 = vld [vmem:[%s823 + $0x1bc] sm:$0xf]
        %v969 = vld [vmem:[%s823 + $0x1c0] sm:$0xf]
        %v970 = vld [vmem:[%s823 + $0x1c4] sm:$0xf]
        %v971 = vld [vmem:[%s823 + $0x1c8] sm:$0xf]
        %v972 = vld [vmem:[%s823 + $0x1cc] sm:$0xf]
        %v973 = vld [vmem:[%s823 + $0x1d0] sm:$0xf]
        %v974 = vld [vmem:[%s823 + $0x1d4] sm:$0xf]
        %v975 = vld [vmem:[%s823 + $0x1d8] sm:$0xf]
        %v976 = vld [vmem:[%s823 + $0x1dc] sm:$0xf]
        %v977 = vld [vmem:[%s823 + $0x1e0] sm:$0xf]
        %v978 = vld [vmem:[%s823 + $0x1e4] sm:$0xf]
        %v979 = vld [vmem:[%s823 + $0x1e8] sm:$0xf]
        %v980 = vld [vmem:[%s823 + $0x1ec] sm:$0xf]
        %v981 = vld [vmem:[%s823 + $0x1f0] sm:$0xf]
        %v982 = vld [vmem:[%s823 + $0x1f4] sm:$0xf]
        %v983 = vld [vmem:[%s823 + $0x1f8] sm:$0xf]
        %v984 = vld [vmem:[%s823 + $0x1fc] sm:$0xf]
        %v985 = vld [vmem:[%s2] sm:$0xf]
        %v986 = vld [vmem:[%s2 + $0x4] sm:$0xf]
        %v987 = vld [vmem:[%s2 + $0x8] sm:$0xf]
        %v988 = vld [vmem:[%s2 + $0xc] sm:$0xf]
        %v989 = vld [vmem:[%s2 + $0x10] sm:$0xf]
        %v990 = vld [vmem:[%s2 + $0x14] sm:$0xf]
        %v991 = vld [vmem:[%s2 + $0x18] sm:$0xf]
        %v992 = vld [vmem:[%s2 + $0x1c] sm:$0xf]
        %v993 = vld [vmem:[%s3] sm:$0x1]
        %v995 = vlaneseq
        %v996 = vshrl.u32 %v995, 7
        %v997 = vsub.s32 0, %v996
        %v998 = vrot.slane %v993, %v997
        %v1128 = vunpack.c.l.b16 %v857
        %v1129 = vunpack.c.l.b16 %v858
        %v1130 = vunpack.c.l.b16 %v859
        %v1131 = vunpack.c.l.b16 %v860
        %v1132 = vunpack.c.l.b16 %v861
        %v1133 = vunpack.c.l.b16 %v862
        %v1134 = vunpack.c.l.b16 %v863
        %v1135 = vunpack.c.l.b16 %v864
        %v1136 = vunpack.c.l.b16 %v865
        %v1137 = vunpack.c.l.b16 %v866
        %v1138 = vunpack.c.l.b16 %v867
        %v1139 = vunpack.c.l.b16 %v868
        %v1140 = vunpack.c.l.b16 %v869
        %v1141 = vunpack.c.l.b16 %v870
        %v1142 = vunpack.c.l.b16 %v871
        %v1143 = vunpack.c.l.b16 %v872
        %v1144 = vunpack.c.l.b16 %v873
        %v1145 = vunpack.c.l.b16 %v874
        %v1146 = vunpack.c.l.b16 %v875
        %v1147 = vunpack.c.l.b16 %v876
        %v1148 = vunpack.c.l.b16 %v877
        %v1149 = vunpack.c.l.b16 %v878
        %v1150 = vunpack.c.l.b16 %v879
        %v1151 = vunpack.c.l.b16 %v880
        %v1152 = vunpack.c.l.b16 %v881
        %v1153 = vunpack.c.l.b16 %v882
        %v1154 = vunpack.c.l.b16 %v883
        %v1155 = vunpack.c.l.b16 %v884
        %v1156 = vunpack.c.l.b16 %v885
        %v1157 = vunpack.c.l.b16 %v886
        %v1158 = vunpack.c.l.b16 %v887
        %v1159 = vunpack.c.l.b16 %v888
        %v1160 = vunpack.c.l.b16 %v889
        %v1161 = vunpack.c.l.b16 %v890
        %v1162 = vunpack.c.l.b16 %v891
        %v1163 = vunpack.c.l.b16 %v892
        %v1164 = vunpack.c.l.b16 %v893
        %v1165 = vunpack.c.l.b16 %v894
        %v1166 = vunpack.c.l.b16 %v895
        %v1167 = vunpack.c.l.b16 %v896
        %v1168 = vunpack.c.l.b16 %v897
        %v1169 = vunpack.c.l.b16 %v898
        %v1170 = vunpack.c.l.b16 %v899
        %v1171 = vunpack.c.l.b16 %v900
        %v1172 = vunpack.c.l.b16 %v901
        %v1173 = vunpack.c.l.b16 %v902
        %v1174 = vunpack.c.l.b16 %v903
        %v1175 = vunpack.c.l.b16 %v904
        %v1176 = vunpack.c.l.b16 %v905
        %v1177 = vunpack.c.l.b16 %v906
        %v1178 = vunpack.c.l.b16 %v907
        %v1179 = vunpack.c.l.b16 %v908
        %v1180 = vunpack.c.l.b16 %v909
        %v1181 = vunpack.c.l.b16 %v910
        %v1182 = vunpack.c.l.b16 %v911
        %v1183 = vunpack.c.l.b16 %v912
        %v1184 = vunpack.c.l.b16 %v913
        %v1185 = vunpack.c.l.b16 %v914
        %v1186 = vunpack.c.l.b16 %v915
        %v1187 = vunpack.c.l.b16 %v916
        %v1188 = vunpack.c.l.b16 %v917
        %v1189 = vunpack.c.l.b16 %v918
        %v1190 = vunpack.c.l.b16 %v919
        %v1191 = vunpack.c.l.b16 %v920
        %v1192 = vunpack.c.l.b16 %v921
        %v1193 = vunpack.c.l.b16 %v922
        %v1194 = vunpack.c.l.b16 %v923
        %v1195 = vunpack.c.l.b16 %v924
        %v1196 = vunpack.c.l.b16 %v925
        %v1197 = vunpack.c.l.b16 %v926
        %v1198 = vunpack.c.l.b16 %v927
        %v1199 = vunpack.c.l.b16 %v928
        %v1200 = vunpack.c.l.b16 %v929
        %v1201 = vunpack.c.l.b16 %v930
        %v1202 = vunpack.c.l.b16 %v931
        %v1203 = vunpack.c.l.b16 %v932
        %v1204 = vunpack.c.l.b16 %v933
        %v1205 = vunpack.c.l.b16 %v934
        %v1206 = vunpack.c.l.b16 %v935
        %v1207 = vunpack.c.l.b16 %v936
        %v1208 = vunpack.c.l.b16 %v937
        %v1209 = vunpack.c.l.b16 %v938
        %v1210 = vunpack.c.l.b16 %v939
        %v1211 = vunpack.c.l.b16 %v940
        %v1212 = vunpack.c.l.b16 %v941
        %v1213 = vunpack.c.l.b16 %v942
        %v1214 = vunpack.c.l.b16 %v943
        %v1215 = vunpack.c.l.b16 %v944
        %v1216 = vunpack.c.l.b16 %v945
        %v1217 = vunpack.c.l.b16 %v946
        %v1218 = vunpack.c.l.b16 %v947
        %v1219 = vunpack.c.l.b16 %v948
        %v1220 = vunpack.c.l.b16 %v949
        %v1221 = vunpack.c.l.b16 %v950
        %v1222 = vunpack.c.l.b16 %v951
        %v1223 = vunpack.c.l.b16 %v952
        %v1224 = vunpack.c.l.b16 %v953
        %v1225 = vunpack.c.l.b16 %v954
        %v1226 = vunpack.c.l.b16 %v955
        %v1227 = vunpack.c.l.b16 %v956
        %v1228 = vunpack.c.l.b16 %v957
        %v1229 = vunpack.c.l.b16 %v958
        %v1230 = vunpack.c.l.b16 %v959
        %v1231 = vunpack.c.l.b16 %v960
        %v1232 = vunpack.c.l.b16 %v961
        %v1233 = vunpack.c.l.b16 %v962
        %v1234 = vunpack.c.l.b16 %v963
        %v1235 = vunpack.c.l.b16 %v964
        %v1236 = vunpack.c.l.b16 %v965
        %v1237 = vunpack.c.l.b16 %v966
        %v1238 = vunpack.c.l.b16 %v967
        %v1239 = vunpack.c.l.b16 %v968
        %v1240 = vunpack.c.l.b16 %v969
        %v1241 = vunpack.c.l.b16 %v970
        %v1242 = vunpack.c.l.b16 %v971
        %v1243 = vunpack.c.l.b16 %v972
        %v1244 = vunpack.c.l.b16 %v973
        %v1245 = vunpack.c.l.b16 %v974
        %v1246 = vunpack.c.l.b16 %v975
        %v1247 = vunpack.c.l.b16 %v976
        %v1248 = vunpack.c.l.b16 %v977
        %v1249 = vunpack.c.l.b16 %v978
        %v1250 = vunpack.c.l.b16 %v979
        %v1251 = vunpack.c.l.b16 %v980
        %v1252 = vunpack.c.l.b16 %v981
        %v1253 = vunpack.c.l.b16 %v982
        %v1254 = vunpack.c.l.b16 %v983
        %v1255 = vunpack.c.l.b16 %v984
        %v1256 = vpack.c.b16 %v1129, %v1128
        %v1257 = vpack.c.b16 %v1131, %v1130
        %v1258 = vpack.c.b16 %v1133, %v1132
        %v1259 = vpack.c.b16 %v1135, %v1134
        %v1260 = vpack.c.b16 %v1137, %v1136
        %v1261 = vpack.c.b16 %v1139, %v1138
        %v1262 = vpack.c.b16 %v1141, %v1140
        %v1263 = vpack.c.b16 %v1143, %v1142
        %v1264 = vpack.c.b16 %v1145, %v1144
        %v1265 = vpack.c.b16 %v1147, %v1146
        %v1266 = vpack.c.b16 %v1149, %v1148
        %v1267 = vpack.c.b16 %v1151, %v1150
        %v1268 = vpack.c.b16 %v1153, %v1152
        %v1269 = vpack.c.b16 %v1155, %v1154
        %v1270 = vpack.c.b16 %v1157, %v1156
        %v1271 = vpack.c.b16 %v1159, %v1158
        %v1272 = vpack.c.b16 %v1161, %v1160
        %v1273 = vpack.c.b16 %v1163, %v1162
        %v1274 = vpack.c.b16 %v1165, %v1164
        %v1275 = vpack.c.b16 %v1167, %v1166
        %v1276 = vpack.c.b16 %v1169, %v1168
        %v1277 = vpack.c.b16 %v1171, %v1170
        %v1278 = vpack.c.b16 %v1173, %v1172
        %v1279 = vpack.c.b16 %v1175, %v1174
        %v1280 = vpack.c.b16 %v1177, %v1176
        %v1281 = vpack.c.b16 %v1179, %v1178
        %v1282 = vpack.c.b16 %v1181, %v1180
        %v1283 = vpack.c.b16 %v1183, %v1182
        %v1284 = vpack.c.b16 %v1185, %v1184
        %v1285 = vpack.c.b16 %v1187, %v1186
        %v1286 = vpack.c.b16 %v1189, %v1188
        %v1287 = vpack.c.b16 %v1191, %v1190
        %v1288 = vpack.c.b16 %v1193, %v1192
        %v1289 = vpack.c.b16 %v1195, %v1194
        %v1290 = vpack.c.b16 %v1197, %v1196
        %v1291 = vpack.c.b16 %v1199, %v1198
        %v1292 = vpack.c.b16 %v1201, %v1200
        %v1293 = vpack.c.b16 %v1203, %v1202
        %v1294 = vpack.c.b16 %v1205, %v1204
        %v1295 = vpack.c.b16 %v1207, %v1206
        %v1296 = vpack.c.b16 %v1209, %v1208
        %v1297 = vpack.c.b16 %v1211, %v1210
        %v1298 = vpack.c.b16 %v1213, %v1212
        %v1299 = vpack.c.b16 %v1215, %v1214
        %v1300 = vpack.c.b16 %v1217, %v1216
        %v1301 = vpack.c.b16 %v1219, %v1218
        %v1302 = vpack.c.b16 %v1221, %v1220
        %v1303 = vpack.c.b16 %v1223, %v1222
        %v1304 = vpack.c.b16 %v1225, %v1224
        %v1305 = vpack.c.b16 %v1227, %v1226
        %v1306 = vpack.c.b16 %v1229, %v1228
        %v1307 = vpack.c.b16 %v1231, %v1230
        %v1308 = vpack.c.b16 %v1233, %v1232
        %v1309 = vpack.c.b16 %v1235, %v1234
        %v1310 = vpack.c.b16 %v1237, %v1236
        %v1311 = vpack.c.b16 %v1239, %v1238
        %v1312 = vpack.c.b16 %v1241, %v1240
        %v1313 = vpack.c.b16 %v1243, %v1242
        %v1314 = vpack.c.b16 %v1245, %v1244
        %v1315 = vpack.c.b16 %v1247, %v1246
        %v1316 = vpack.c.b16 %v1249, %v1248
        %v1317 = vpack.c.b16 %v1251, %v1250
        %v1318 = vpack.c.b16 %v1253, %v1252
        %v1319 = vpack.c.b16 %v1255, %v1254
        %v1328 = vunpack.c.l.b16 %v985
        %v1329 = vunpack.c.l.b16 %v986
        %v1330 = vunpack.c.l.b16 %v987
        %v1331 = vunpack.c.l.b16 %v988
        %v1332 = vunpack.c.l.b16 %v989
        %v1333 = vunpack.c.l.b16 %v990
        %v1334 = vunpack.c.l.b16 %v991
        %v1335 = vunpack.c.l.b16 %v992
        %v1336 = vpack.c.b16 %v1329, %v1328
        %v1337 = vpack.c.b16 %v1331, %v1330
        %v1338 = vpack.c.b16 %v1333, %v1332
        %v1339 = vpack.c.b16 %v1335, %v1334
        %vm1344 = vcmask 523264
        %v1346 = vsel %vm1344, %v1256, 0
        %v1349 = vsel %vm1344, %v1257, 0
        %v1352 = vsel %vm1344, %v1258, 0
        %v1355 = vsel %vm1344, %v1259, 0
        %v1358 = vsel %vm1344, %v1260, 0
        %v1361 = vsel %vm1344, %v1261, 0
        %v1364 = vsel %vm1344, %v1262, 0
        %v1367 = vsel %vm1344, %v1263, 0
        %v1370 = vsel %vm1344, %v1264, 0
        %v1373 = vsel %vm1344, %v1265, 0
        %v1376 = vsel %vm1344, %v1266, 0
        %v1379 = vsel %vm1344, %v1267, 0
        %v1382 = vsel %vm1344, %v1268, 0
        %v1385 = vsel %vm1344, %v1269, 0
        %v1388 = vsel %vm1344, %v1270, 0
        %v1391 = vsel %vm1344, %v1271, 0
        %v1394 = vsel %vm1344, %v1272, 0
        %v1397 = vsel %vm1344, %v1273, 0
        %v1400 = vsel %vm1344, %v1274, 0
        %v1403 = vsel %vm1344, %v1275, 0
        %v1406 = vsel %vm1344, %v1276, 0
        %v1409 = vsel %vm1344, %v1277, 0
        %v1412 = vsel %vm1344, %v1278, 0
        %v1415 = vsel %vm1344, %v1279, 0
        %v1418 = vsel %vm1344, %v1280, 0
        %v1421 = vsel %vm1344, %v1281, 0
        %v1424 = vsel %vm1344, %v1282, 0
        %v1427 = vsel %vm1344, %v1283, 0
        %v1430 = vsel %vm1344, %v1284, 0
        %v1433 = vsel %vm1344, %v1285, 0
        %v1436 = vsel %vm1344, %v1286, 0
        %v1439 = vsel %vm1344, %v1287, 0
        %v1442 = vsel %vm1344, %v1288, 0
        %v1445 = vsel %vm1344, %v1289, 0
        %v1448 = vsel %vm1344, %v1290, 0
        %v1451 = vsel %vm1344, %v1291, 0
        %v1454 = vsel %vm1344, %v1292, 0
        %v1457 = vsel %vm1344, %v1293, 0
        %v1460 = vsel %vm1344, %v1294, 0
        %v1463 = vsel %vm1344, %v1295, 0
        %v1466 = vsel %vm1344, %v1296, 0
        %v1469 = vsel %vm1344, %v1297, 0
        %v1472 = vsel %vm1344, %v1298, 0
        %v1475 = vsel %vm1344, %v1299, 0
        %v1478 = vsel %vm1344, %v1300, 0
        %v1481 = vsel %vm1344, %v1301, 0
        %v1484 = vsel %vm1344, %v1302, 0
        %v1487 = vsel %vm1344, %v1303, 0
        %v1490 = vsel %vm1344, %v1304, 0
        %v1493 = vsel %vm1344, %v1305, 0
        %v1496 = vsel %vm1344, %v1306, 0
        %v1499 = vsel %vm1344, %v1307, 0
        %v1502 = vsel %vm1344, %v1308, 0
        %v1505 = vsel %vm1344, %v1309, 0
        %v1508 = vsel %vm1344, %v1310, 0
        %v1511 = vsel %vm1344, %v1311, 0
        %v1514 = vsel %vm1344, %v1312, 0
        %v1517 = vsel %vm1344, %v1313, 0
        %v1520 = vsel %vm1344, %v1314, 0
        %v1523 = vsel %vm1344, %v1315, 0
        %v1526 = vsel %vm1344, %v1316, 0
        %v1529 = vsel %vm1344, %v1317, 0
        %v1532 = vsel %vm1344, %v1318, 0
        %v1535 = vsel %vm1344, %v1319, 0
        %1537 = vmatprep.subr.bf16.mxu0 0
        %1538 = vmatpush1.bf16.msra.mxu0 %v1336
        %1539 = vmatprep.subr.bf16.mxu0 0
        %1540 = vmatpush1.bf16.msra.mxu0 %v1337
        %1541 = vmatprep.subr.bf16.mxu0 0
        %1542 = vmatpush1.bf16.msra.mxu0 %v1338
        %1543 = vmatprep.subr.bf16.mxu0 0
        %1544 = vmatpush1.bf16.msra.mxu0 %v1339
        %1545 = vmatprep.subr.bf16.mxu0 0
        %1546 = vmatpush1.bf16.msra.mxu0 0
        %1547 = vmatprep.subr.bf16.mxu0 0
        %1548 = vmatpush1.bf16.msra.mxu0 0
        %1549 = vmatprep.subr.bf16.mxu0 0
        %1550 = vmatpush1.bf16.msra.mxu0 0
        %1551 = vmatprep.subr.bf16.mxu0 0
        %1552 = vmatpush1.bf16.msra.mxu0 0
        %1553 = vmatprep.subr.bf16.mxu0 0
        %1554 = vmatpush1.bf16.msra.mxu0 0
        %1555 = vmatprep.subr.bf16.mxu0 0
        %1556 = vmatpush1.bf16.msra.mxu0 0
        %1557 = vmatprep.subr.bf16.mxu0 0
        %1558 = vmatpush1.bf16.msra.mxu0 0
        %1559 = vmatprep.subr.bf16.mxu0 0
        %1560 = vmatpush1.bf16.msra.mxu0 0
        %1561 = vmatprep.subr.bf16.mxu0 0
        %1562 = vmatpush1.bf16.msra.mxu0 0
        %1563 = vmatprep.subr.bf16.mxu0 0
        %1564 = vmatpush1.bf16.msra.mxu0 0
        %1565 = vmatprep.subr.bf16.mxu0 0
        %1566 = vmatpush1.bf16.msra.mxu0 0
        %1567 = vmatprep.subr.bf16.mxu0 0
        %1568 = vmatpush1.bf16.msra.mxu0 0
        %1569 = vmatprep.mubr.bf16.mxu0 0
        %1570 = vmatmul.mubr.bf16.gmra.mrb[0].mxu0 %v1346
        %v1571 = vpop.f32.mrb[0].mxu0
        %v1572 = vadd.f32 %v998, %v1571
        %v1573 = vpop.f32.mrb[0].mxu0
        %v1574 = vpop.f32.mrb[0].mxu0
        %v1575 = vadd.f32 %v998, %v1574
        %v1576 = vpop.f32.mrb[0].mxu0
        %1577 = vmatprep.mubr.bf16.mxu0 0
        %1578 = vmatmul.mubr.bf16.gmra.mrb[0].mxu0 %v1349
        %v1579 = vpop.f32.mrb[0].mxu0
        %v1580 = vadd.f32 %v998, %v1579
        %v1581 = vpop.f32.mrb[0].mxu0
        %v1582 = vpop.f32.mrb[0].mxu0
        %v1583 = vadd.f32 %v998, %v1582
        %v1584 = vpop.f32.mrb[0].mxu0
        %1585 = vmatprep.mubr.bf16.mxu0 0
        %1586 = vmatmul.mubr.bf16.gmra.mrb[0].mxu0 %v1352
        %v1587 = vpop.f32.mrb[0].mxu0
        %v1588 = vadd.f32 %v998, %v1587
        %v1589 = vpop.f32.mrb[0].mxu0
        %v1590 = vpop.f32.mrb[0].mxu0
        %v1591 = vadd.f32 %v998, %v1590
        %v1592 = vpop.f32.mrb[0].mxu0
        %1593 = vmatprep.mubr.bf16.mxu0 0
        %1594 = vmatmul.mubr.bf16.gmra.mrb[0].mxu0 %v1355
        %v1595 = vpop.f32.mrb[0].mxu0
        %v1596 = vadd.f32 %v998, %v1595
        %v1597 = vpop.f32.mrb[0].mxu0
        %v1598 = vpop.f32.mrb[0].mxu0
        %v1599 = vadd.f32 %v998, %v1598
        %v1600 = vpop.f32.mrb[0].mxu0
        %1601 = vmatprep.mubr.bf16.mxu0 0
        %1602 = vmatmul.mubr.bf16.gmra.mrb[0].mxu0 %v1358
        %v1603 = vpop.f32.mrb[0].mxu0
        %v1604 = vadd.f32 %v998, %v1603
        %v1605 = vpop.f32.mrb[0].mxu0
        %v1606 = vpop.f32.mrb[0].mxu0
        %v1607 = vadd.f32 %v998, %v1606
        %v1608 = vpop.f32.mrb[0].mxu0
        %1609 = vmatprep.mubr.bf16.mxu0 0
        %1610 = vmatmul.mubr.bf16.gmra.mrb[0].mxu0 %v1361
        %v1611 = vpop.f32.mrb[0].mxu0
        %v1612 = vadd.f32 %v998, %v1611
        %v1613 = vpop.f32.mrb[0].mxu0
        %v1614 = vpop.f32.mrb[0].mxu0
        %v1615 = vadd.f32 %v998, %v1614
        %v1616 = vpop.f32.mrb[0].mxu0
        %1617 = vmatprep.mubr.bf16.mxu0 0
        %1618 = vmatmul.mubr.bf16.gmra.mrb[0].mxu0 %v1364
        %v1619 = vpop.f32.mrb[0].mxu0
        %v1620 = vadd.f32 %v998, %v1619
        %v1621 = vpop.f32.mrb[0].mxu0
        %v1622 = vpop.f32.mrb[0].mxu0
        %v1623 = vadd.f32 %v998, %v1622
        %v1624 = vpop.f32.mrb[0].mxu0
        %1625 = vmatprep.mubr.bf16.mxu0 0
        %1626 = vmatmul.mubr.bf16.gmra.mrb[0].mxu0 %v1367
        %v1627 = vpop.f32.mrb[0].mxu0
        %v1628 = vadd.f32 %v998, %v1627
        %v1629 = vpop.f32.mrb[0].mxu0
        %v1630 = vpop.f32.mrb[0].mxu0
        %v1631 = vadd.f32 %v998, %v1630
        %v1632 = vpop.f32.mrb[0].mxu0
        %1633 = vmatprep.mubr.bf16.mxu0 0
        %1634 = vmatmul.mubr.bf16.gmra.mrb[0].mxu0 %v1370
        %v1635 = vpop.f32.mrb[0].mxu0
        %v1636 = vadd.f32 %v998, %v1635
        %v1637 = vpop.f32.mrb[0].mxu0
        %v1638 = vpop.f32.mrb[0].mxu0
        %v1639 = vadd.f32 %v998, %v1638
        %v1640 = vpop.f32.mrb[0].mxu0
        %1641 = vmatprep.mubr.bf16.mxu0 0
        %1642 = vmatmul.mubr.bf16.gmra.mrb[0].mxu0 %v1373
        %v1643 = vpop.f32.mrb[0].mxu0
        %v1644 = vadd.f32 %v998, %v1643
        %v1645 = vpop.f32.mrb[0].mxu0
        %v1646 = vpop.f32.mrb[0].mxu0
        %v1647 = vadd.f32 %v998, %v1646
        %v1648 = vpop.f32.mrb[0].mxu0
        %1649 = vmatprep.mubr.bf16.mxu0 0
        %1650 = vmatmul.mubr.bf16.gmra.mrb[0].mxu0 %v1376
        %v1651 = vpop.f32.mrb[0].mxu0
        %v1652 = vadd.f32 %v998, %v1651
        %v1653 = vpop.f32.mrb[0].mxu0
        %v1654 = vpop.f32.mrb[0].mxu0
        %v1655 = vadd.f32 %v998, %v1654
        %v1656 = vpop.f32.mrb[0].mxu0
        %1657 = vmatprep.mubr.bf16.mxu0 0
        %1658 = vmatmul.mubr.bf16.gmra.mrb[0].mxu0 %v1379
        %v1659 = vpop.f32.mrb[0].mxu0
        %v1660 = vadd.f32 %v998, %v1659
        %v1661 = vpop.f32.mrb[0].mxu0
        %v1662 = vpop.f32.mrb[0].mxu0
        %v1663 = vadd.f32 %v998, %v1662
        %v1664 = vpop.f32.mrb[0].mxu0
        %1665 = vmatprep.mubr.bf16.mxu0 0
        %1666 = vmatmul.mubr.bf16.gmra.mrb[0].mxu0 %v1382
        %v1667 = vpop.f32.mrb[0].mxu0
        %v1668 = vadd.f32 %v998, %v1667
        %v1669 = vpop.f32.mrb[0].mxu0
        %v1670 = vpop.f32.mrb[0].mxu0
        %v1671 = vadd.f32 %v998, %v1670
        %v1672 = vpop.f32.mrb[0].mxu0
        %1673 = vmatprep.mubr.bf16.mxu0 0
        %1674 = vmatmul.mubr.bf16.gmra.mrb[0].mxu0 %v1385
        %v1675 = vpop.f32.mrb[0].mxu0
        %v1676 = vadd.f32 %v998, %v1675
        %v1677 = vpop.f32.mrb[0].mxu0
        %v1678 = vpop.f32.mrb[0].mxu0
        %v1679 = vadd.f32 %v998, %v1678
        %v1680 = vpop.f32.mrb[0].mxu0
        %1681 = vmatprep.mubr.bf16.mxu0 0
        %1682 = vmatmul.mubr.bf16.gmra.mrb[0].mxu0 %v1388
        %v1683 = vpop.f32.mrb[0].mxu0
        %v1684 = vadd.f32 %v998, %v1683
        %v1685 = vpop.f32.mrb[0].mxu0
        %v1686 = vpop.f32.mrb[0].mxu0
        %v1687 = vadd.f32 %v998, %v1686
        %v1688 = vpop.f32.mrb[0].mxu0
        %1689 = vmatprep.mubr.bf16.mxu0 0
        %1690 = vmatmul.mubr.bf16.gmra.mrb[0].mxu0 %v1391
        %v1691 = vpop.f32.mrb[0].mxu0
        %v1692 = vadd.f32 %v998, %v1691
        %v1693 = vpop.f32.mrb[0].mxu0
        %v1694 = vpop.f32.mrb[0].mxu0
        %v1695 = vadd.f32 %v998, %v1694
        %v1696 = vpop.f32.mrb[0].mxu0
        %1697 = vmatprep.mubr.bf16.mxu0 0
        %1698 = vmatmul.mubr.bf16.gmra.mrb[0].mxu0 %v1394
        %v1699 = vpop.f32.mrb[0].mxu0
        %v1700 = vadd.f32 %v998, %v1699
        %v1701 = vpop.f32.mrb[0].mxu0
        %v1702 = vpop.f32.mrb[0].mxu0
        %v1703 = vadd.f32 %v998, %v1702
        %v1704 = vpop.f32.mrb[0].mxu0
        %1705 = vmatprep.mubr.bf16.mxu0 0
        %1706 = vmatmul.mubr.bf16.gmra.mrb[0].mxu0 %v1397
        %v1707 = vpop.f32.mrb[0].mxu0
        %v1708 = vadd.f32 %v998, %v1707
        %v1709 = vpop.f32.mrb[0].mxu0
        %v1710 = vpop.f32.mrb[0].mxu0
        %v1711 = vadd.f32 %v998, %v1710
        %v1712 = vpop.f32.mrb[0].mxu0
        %1713 = vmatprep.mubr.bf16.mxu0 0
        %1714 = vmatmul.mubr.bf16.gmra.mrb[0].mxu0 %v1400
        %v1715 = vpop.f32.mrb[0].mxu0
        %v1716 = vadd.f32 %v998, %v1715
        %v1717 = vpop.f32.mrb[0].mxu0
        %v1718 = vpop.f32.mrb[0].mxu0
        %v1719 = vadd.f32 %v998, %v1718
        %v1720 = vpop.f32.mrb[0].mxu0
        %1721 = vmatprep.mubr.bf16.mxu0 0
        %1722 = vmatmul.mubr.bf16.gmra.mrb[0].mxu0 %v1403
        %v1723 = vpop.f32.mrb[0].mxu0
        %v1724 = vadd.f32 %v998, %v1723
        %v1725 = vpop.f32.mrb[0].mxu0
        %v1726 = vpop.f32.mrb[0].mxu0
        %v1727 = vadd.f32 %v998, %v1726
        %v1728 = vpop.f32.mrb[0].mxu0
        %1729 = vmatprep.mubr.bf16.mxu0 0
        %1730 = vmatmul.mubr.bf16.gmra.mrb[0].mxu0 %v1406
        %v1731 = vpop.f32.mrb[0].mxu0
        %v1732 = vadd.f32 %v998, %v1731
        %v1733 = vpop.f32.mrb[0].mxu0
        %v1734 = vpop.f32.mrb[0].mxu0
        %v1735 = vadd.f32 %v998, %v1734
        %v1736 = vpop.f32.mrb[0].mxu0
        %1737 = vmatprep.mubr.bf16.mxu0 0
        %1738 = vmatmul.mubr.bf16.gmra.mrb[0].mxu0 %v1409
        %v1739 = vpop.f32.mrb[0].mxu0
        %v1740 = vadd.f32 %v998, %v1739
        %v1741 = vpop.f32.mrb[0].mxu0
        %v1742 = vpop.f32.mrb[0].mxu0
        %v1743 = vadd.f32 %v998, %v1742
        %v1744 = vpop.f32.mrb[0].mxu0
        %1745 = vmatprep.mubr.bf16.mxu0 0
        %1746 = vmatmul.mubr.bf16.gmra.mrb[0].mxu0 %v1412
        %v1747 = vpop.f32.mrb[0].mxu0
        %v1748 = vadd.f32 %v998, %v1747
        %v1749 = vpop.f32.mrb[0].mxu0
        %v1750 = vpop.f32.mrb[0].mxu0
        %v1751 = vadd.f32 %v998, %v1750
        %v1752 = vpop.f32.mrb[0].mxu0
        %1753 = vmatprep.mubr.bf16.mxu0 0
        %1754 = vmatmul.mubr.bf16.gmra.mrb[0].mxu0 %v1415
        %v1755 = vpop.f32.mrb[0].mxu0
        %v1756 = vadd.f32 %v998, %v1755
        %v1757 = vpop.f32.mrb[0].mxu0
        %v1758 = vpop.f32.mrb[0].mxu0
        %v1759 = vadd.f32 %v998, %v1758
        %v1760 = vpop.f32.mrb[0].mxu0
        %1761 = vmatprep.mubr.bf16.mxu0 0
        %1762 = vmatmul.mubr.bf16.gmra.mrb[0].mxu0 %v1418
        %v1763 = vpop.f32.mrb[0].mxu0
        %v1764 = vadd.f32 %v998, %v1763
        %v1765 = vpop.f32.mrb[0].mxu0
        %v1766 = vpop.f32.mrb[0].mxu0
        %v1767 = vadd.f32 %v998, %v1766
        %v1768 = vpop.f32.mrb[0].mxu0
        %1769 = vmatprep.mubr.bf16.mxu0 0
        %1770 = vmatmul.mubr.bf16.gmra.mrb[0].mxu0 %v1421
        %v1771 = vpop.f32.mrb[0].mxu0
        %v1772 = vadd.f32 %v998, %v1771
        %v1773 = vpop.f32.mrb[0].mxu0
        %v1774 = vpop.f32.mrb[0].mxu0
        %v1775 = vadd.f32 %v998, %v1774
        %v1776 = vpop.f32.mrb[0].mxu0
        %1777 = vmatprep.mubr.bf16.mxu0 0
        %1778 = vmatmul.mubr.bf16.gmra.mrb[0].mxu0 %v1424
        %v1779 = vpop.f32.mrb[0].mxu0
        %v1780 = vadd.f32 %v998, %v1779
        %v1781 = vpop.f32.mrb[0].mxu0
        %v1782 = vpop.f32.mrb[0].mxu0
        %v1783 = vadd.f32 %v998, %v1782
        %v1784 = vpop.f32.mrb[0].mxu0
        %1785 = vmatprep.mubr.bf16.mxu0 0
        %1786 = vmatmul.mubr.bf16.gmra.mrb[0].mxu0 %v1427
        %v1787 = vpop.f32.mrb[0].mxu0
        %v1788 = vadd.f32 %v998, %v1787
        %v1789 = vpop.f32.mrb[0].mxu0
        %v1790 = vpop.f32.mrb[0].mxu0
        %v1791 = vadd.f32 %v998, %v1790
        %v1792 = vpop.f32.mrb[0].mxu0
        %1793 = vmatprep.mubr.bf16.mxu0 0
        %1794 = vmatmul.mubr.bf16.gmra.mrb[0].mxu0 %v1430
        %v1795 = vpop.f32.mrb[0].mxu0
        %v1796 = vadd.f32 %v998, %v1795
        %v1797 = vpop.f32.mrb[0].mxu0
        %v1798 = vpop.f32.mrb[0].mxu0
        %v1799 = vadd.f32 %v998, %v1798
        %v1800 = vpop.f32.mrb[0].mxu0
        %1801 = vmatprep.mubr.bf16.mxu0 0
        %1802 = vmatmul.mubr.bf16.gmra.mrb[0].mxu0 %v1433
        %v1803 = vpop.f32.mrb[0].mxu0
        %v1804 = vadd.f32 %v998, %v1803
        %v1805 = vpop.f32.mrb[0].mxu0
        %v1806 = vpop.f32.mrb[0].mxu0
        %v1807 = vadd.f32 %v998, %v1806
        %v1808 = vpop.f32.mrb[0].mxu0
        %1809 = vmatprep.mubr.bf16.mxu0 0
        %1810 = vmatmul.mubr.bf16.gmra.mrb[0].mxu0 %v1436
        %v1811 = vpop.f32.mrb[0].mxu0
        %v1812 = vadd.f32 %v998, %v1811
        %v1813 = vpop.f32.mrb[0].mxu0
        %v1814 = vpop.f32.mrb[0].mxu0
        %v1815 = vadd.f32 %v998, %v1814
        %v1816 = vpop.f32.mrb[0].mxu0
        %1817 = vmatprep.mubr.bf16.mxu0 0
        %1818 = vmatmul.mubr.bf16.gmra.mrb[0].mxu0 %v1439
        %v1819 = vpop.f32.mrb[0].mxu0
        %v1820 = vadd.f32 %v998, %v1819
        %v1821 = vpop.f32.mrb[0].mxu0
        %v1822 = vpop.f32.mrb[0].mxu0
        %v1823 = vadd.f32 %v998, %v1822
        %v1824 = vpop.f32.mrb[0].mxu0
        %1825 = vmatprep.mubr.bf16.mxu0 0
        %1826 = vmatmul.mubr.bf16.gmra.mrb[0].mxu0 %v1442
        %v1827 = vpop.f32.mrb[0].mxu0
        %v1828 = vadd.f32 %v998, %v1827
        %v1829 = vpop.f32.mrb[0].mxu0
        %v1830 = vpop.f32.mrb[0].mxu0
        %v1831 = vadd.f32 %v998, %v1830
        %v1832 = vpop.f32.mrb[0].mxu0
        %1833 = vmatprep.mubr.bf16.mxu0 0
        %1834 = vmatmul.mubr.bf16.gmra.mrb[0].mxu0 %v1445
        %v1835 = vpop.f32.mrb[0].mxu0
        %v1836 = vadd.f32 %v998, %v1835
        %v1837 = vpop.f32.mrb[0].mxu0
        %v1838 = vpop.f32.mrb[0].mxu0
        %v1839 = vadd.f32 %v998, %v1838
        %v1840 = vpop.f32.mrb[0].mxu0
        %1841 = vmatprep.mubr.bf16.mxu0 0
        %1842 = vmatmul.mubr.bf16.gmra.mrb[0].mxu0 %v1448
        %v1843 = vpop.f32.mrb[0].mxu0
        %v1844 = vadd.f32 %v998, %v1843
        %v1845 = vpop.f32.mrb[0].mxu0
        %v1846 = vpop.f32.mrb[0].mxu0
        %v1847 = vadd.f32 %v998, %v1846
        %v1848 = vpop.f32.mrb[0].mxu0
        %1849 = vmatprep.mubr.bf16.mxu0 0
        %1850 = vmatmul.mubr.bf16.gmra.mrb[0].mxu0 %v1451
        %v1851 = vpop.f32.mrb[0].mxu0
        %v1852 = vadd.f32 %v998, %v1851
        %v1853 = vpop.f32.mrb[0].mxu0
        %v1854 = vpop.f32.mrb[0].mxu0
        %v1855 = vadd.f32 %v998, %v1854
        %v1856 = vpop.f32.mrb[0].mxu0
        %1857 = vmatprep.mubr.bf16.mxu0 0
        %1858 = vmatmul.mubr.bf16.gmra.mrb[0].mxu0 %v1454
        %v1859 = vpop.f32.mrb[0].mxu0
        %v1860 = vadd.f32 %v998, %v1859
        %v1861 = vpop.f32.mrb[0].mxu0
        %v1862 = vpop.f32.mrb[0].mxu0
        %v1863 = vadd.f32 %v998, %v1862
        %v1864 = vpop.f32.mrb[0].mxu0
        %1865 = vmatprep.mubr.bf16.mxu0 0
        %1866 = vmatmul.mubr.bf16.gmra.mrb[0].mxu0 %v1457
        %v1867 = vpop.f32.mrb[0].mxu0
        %v1868 = vadd.f32 %v998, %v1867
        %v1869 = vpop.f32.mrb[0].mxu0
        %v1870 = vpop.f32.mrb[0].mxu0
        %v1871 = vadd.f32 %v998, %v1870
        %v1872 = vpop.f32.mrb[0].mxu0
        %1873 = vmatprep.mubr.bf16.mxu0 0
        %1874 = vmatmul.mubr.bf16.gmra.mrb[0].mxu0 %v1460
        %v1875 = vpop.f32.mrb[0].mxu0
        %v1876 = vadd.f32 %v998, %v1875
        %v1877 = vpop.f32.mrb[0].mxu0
        %v1878 = vpop.f32.mrb[0].mxu0
        %v1879 = vadd.f32 %v998, %v1878
        %v1880 = vpop.f32.mrb[0].mxu0
        %1881 = vmatprep.mubr.bf16.mxu0 0
        %1882 = vmatmul.mubr.bf16.gmra.mrb[0].mxu0 %v1463
        %v1883 = vpop.f32.mrb[0].mxu0
        %v1884 = vadd.f32 %v998, %v1883
        %v1885 = vpop.f32.mrb[0].mxu0
        %v1886 = vpop.f32.mrb[0].mxu0
        %v1887 = vadd.f32 %v998, %v1886
        %v1888 = vpop.f32.mrb[0].mxu0
        %1889 = vmatprep.mubr.bf16.mxu0 0
        %1890 = vmatmul.mubr.bf16.gmra.mrb[0].mxu0 %v1466
        %v1891 = vpop.f32.mrb[0].mxu0
        %v1892 = vadd.f32 %v998, %v1891
        %v1893 = vpop.f32.mrb[0].mxu0
        %v1894 = vpop.f32.mrb[0].mxu0
        %v1895 = vadd.f32 %v998, %v1894
        %v1896 = vpop.f32.mrb[0].mxu0
        %1897 = vmatprep.mubr.bf16.mxu0 0
        %1898 = vmatmul.mubr.bf16.gmra.mrb[0].mxu0 %v1469
        %v1899 = vpop.f32.mrb[0].mxu0
        %v1900 = vadd.f32 %v998, %v1899
        %v1901 = vpop.f32.mrb[0].mxu0
        %v1902 = vpop.f32.mrb[0].mxu0
        %v1903 = vadd.f32 %v998, %v1902
        %v1904 = vpop.f32.mrb[0].mxu0
        %1905 = vmatprep.mubr.bf16.mxu0 0
        %1906 = vmatmul.mubr.bf16.gmra.mrb[0].mxu0 %v1472
        %v1907 = vpop.f32.mrb[0].mxu0
        %v1908 = vadd.f32 %v998, %v1907
        %v1909 = vpop.f32.mrb[0].mxu0
        %v1910 = vpop.f32.mrb[0].mxu0
        %v1911 = vadd.f32 %v998, %v1910
        %v1912 = vpop.f32.mrb[0].mxu0
        %1913 = vmatprep.mubr.bf16.mxu0 0
        %1914 = vmatmul.mubr.bf16.gmra.mrb[0].mxu0 %v1475
        %v1915 = vpop.f32.mrb[0].mxu0
        %v1916 = vadd.f32 %v998, %v1915
        %v1917 = vpop.f32.mrb[0].mxu0
        %v1918 = vpop.f32.mrb[0].mxu0
        %v1919 = vadd.f32 %v998, %v1918
        %v1920 = vpop.f32.mrb[0].mxu0
        %1921 = vmatprep.mubr.bf16.mxu0 0
        %1922 = vmatmul.mubr.bf16.gmra.mrb[0].mxu0 %v1478
        %v1923 = vpop.f32.mrb[0].mxu0
        %v1924 = vadd.f32 %v998, %v1923
        %v1925 = vpop.f32.mrb[0].mxu0
        %v1926 = vpop.f32.mrb[0].mxu0
        %v1927 = vadd.f32 %v998, %v1926
        %v1928 = vpop.f32.mrb[0].mxu0
        %1929 = vmatprep.mubr.bf16.mxu0 0
        %1930 = vmatmul.mubr.bf16.gmra.mrb[0].mxu0 %v1481
        %v1931 = vpop.f32.mrb[0].mxu0
        %v1932 = vadd.f32 %v998, %v1931
        %v1933 = vpop.f32.mrb[0].mxu0
        %v1934 = vpop.f32.mrb[0].mxu0
        %v1935 = vadd.f32 %v998, %v1934
        %v1936 = vpop.f32.mrb[0].mxu0
        %1937 = vmatprep.mubr.bf16.mxu0 0
        %1938 = vmatmul.mubr.bf16.gmra.mrb[0].mxu0 %v1484
        %v1939 = vpop.f32.mrb[0].mxu0
        %v1940 = vadd.f32 %v998, %v1939
        %v1941 = vpop.f32.mrb[0].mxu0
        %v1942 = vpop.f32.mrb[0].mxu0
        %v1943 = vadd.f32 %v998, %v1942
        %v1944 = vpop.f32.mrb[0].mxu0
        %1945 = vmatprep.mubr.bf16.mxu0 0
        %1946 = vmatmul.mubr.bf16.gmra.mrb[0].mxu0 %v1487
        %v1947 = vpop.f32.mrb[0].mxu0
        %v1948 = vadd.f32 %v998, %v1947
        %v1949 = vpop.f32.mrb[0].mxu0
        %v1950 = vpop.f32.mrb[0].mxu0
        %v1951 = vadd.f32 %v998, %v1950
        %v1952 = vpop.f32.mrb[0].mxu0
        %1953 = vmatprep.mubr.bf16.mxu0 0
        %1954 = vmatmul.mubr.bf16.gmra.mrb[0].mxu0 %v1490
        %v1955 = vpop.f32.mrb[0].mxu0
        %v1956 = vadd.f32 %v998, %v1955
        %v1957 = vpop.f32.mrb[0].mxu0
        %v1958 = vpop.f32.mrb[0].mxu0
        %v1959 = vadd.f32 %v998, %v1958
        %v1960 = vpop.f32.mrb[0].mxu0
        %1961 = vmatprep.mubr.bf16.mxu0 0
        %1962 = vmatmul.mubr.bf16.gmra.mrb[0].mxu0 %v1493
        %v1963 = vpop.f32.mrb[0].mxu0
        %v1964 = vadd.f32 %v998, %v1963
        %v1965 = vpop.f32.mrb[0].mxu0
        %v1966 = vpop.f32.mrb[0].mxu0
        %v1967 = vadd.f32 %v998, %v1966
        %v1968 = vpop.f32.mrb[0].mxu0
        %1969 = vmatprep.mubr.bf16.mxu0 0
        %1970 = vmatmul.mubr.bf16.gmra.mrb[0].mxu0 %v1496
        %v1971 = vpop.f32.mrb[0].mxu0
        %v1972 = vadd.f32 %v998, %v1971
        %v1973 = vpop.f32.mrb[0].mxu0
        %v1974 = vpop.f32.mrb[0].mxu0
        %v1975 = vadd.f32 %v998, %v1974
        %v1976 = vpop.f32.mrb[0].mxu0
        %1977 = vmatprep.mubr.bf16.mxu0 0
        %1978 = vmatmul.mubr.bf16.gmra.mrb[0].mxu0 %v1499
        %v1979 = vpop.f32.mrb[0].mxu0
        %v1980 = vadd.f32 %v998, %v1979
        %v1981 = vpop.f32.mrb[0].mxu0
        %v1982 = vpop.f32.mrb[0].mxu0
        %v1983 = vadd.f32 %v998, %v1982
        %v1984 = vpop.f32.mrb[0].mxu0
        %1985 = vmatprep.mubr.bf16.mxu0 0
        %1986 = vmatmul.mubr.bf16.gmra.mrb[0].mxu0 %v1502
        %v1987 = vpop.f32.mrb[0].mxu0
        %v1988 = vadd.f32 %v998, %v1987
        %v1989 = vpop.f32.mrb[0].mxu0
        %v1990 = vpop.f32.mrb[0].mxu0
        %v1991 = vadd.f32 %v998, %v1990
        %v1992 = vpop.f32.mrb[0].mxu0
        %1993 = vmatprep.mubr.bf16.mxu0 0
        %1994 = vmatmul.mubr.bf16.gmra.mrb[0].mxu0 %v1505
        %v1995 = vpop.f32.mrb[0].mxu0
        %v1996 = vadd.f32 %v998, %v1995
        %v1997 = vpop.f32.mrb[0].mxu0
        %v1998 = vpop.f32.mrb[0].mxu0
        %v1999 = vadd.f32 %v998, %v1998
        %v2000 = vpop.f32.mrb[0].mxu0
        %2001 = vmatprep.mubr.bf16.mxu0 0
        %2002 = vmatmul.mubr.bf16.gmra.mrb[0].mxu0 %v1508
        %v2003 = vpop.f32.mrb[0].mxu0
        %v2004 = vadd.f32 %v998, %v2003
        %v2005 = vpop.f32.mrb[0].mxu0
        %v2006 = vpop.f32.mrb[0].mxu0
        %v2007 = vadd.f32 %v998, %v2006
        %v2008 = vpop.f32.mrb[0].mxu0
        %2009 = vmatprep.mubr.bf16.mxu0 0
        %2010 = vmatmul.mubr.bf16.gmra.mrb[0].mxu0 %v1511
        %v2011 = vpop.f32.mrb[0].mxu0
        %v2012 = vadd.f32 %v998, %v2011
        %v2013 = vpop.f32.mrb[0].mxu0
        %v2014 = vpop.f32.mrb[0].mxu0
        %v2015 = vadd.f32 %v998, %v2014
        %v2016 = vpop.f32.mrb[0].mxu0
        %2017 = vmatprep.mubr.bf16.mxu0 0
        %2018 = vmatmul.mubr.bf16.gmra.mrb[0].mxu0 %v1514
        %v2019 = vpop.f32.mrb[0].mxu0
        %v2020 = vadd.f32 %v998, %v2019
        %v2021 = vpop.f32.mrb[0].mxu0
        %v2022 = vpop.f32.mrb[0].mxu0
        %v2023 = vadd.f32 %v998, %v2022
        %v2024 = vpop.f32.mrb[0].mxu0
        %2025 = vmatprep.mubr.bf16.mxu0 0
        %2026 = vmatmul.mubr.bf16.gmra.mrb[0].mxu0 %v1517
        %v2027 = vpop.f32.mrb[0].mxu0
        %v2028 = vadd.f32 %v998, %v2027
        %v2029 = vpop.f32.mrb[0].mxu0
        %v2030 = vpop.f32.mrb[0].mxu0
        %v2031 = vadd.f32 %v998, %v2030
        %v2032 = vpop.f32.mrb[0].mxu0
        %2033 = vmatprep.mubr.bf16.mxu0 0
        %2034 = vmatmul.mubr.bf16.gmra.mrb[0].mxu0 %v1520
        %v2035 = vpop.f32.mrb[0].mxu0
        %v2036 = vadd.f32 %v998, %v2035
        %v2037 = vpop.f32.mrb[0].mxu0
        %v2038 = vpop.f32.mrb[0].mxu0
        %v2039 = vadd.f32 %v998, %v2038
        %v2040 = vpop.f32.mrb[0].mxu0
        %2041 = vmatprep.mubr.bf16.mxu0 0
        %2042 = vmatmul.mubr.bf16.gmra.mrb[0].mxu0 %v1523
        %v2043 = vpop.f32.mrb[0].mxu0
        %v2044 = vadd.f32 %v998, %v2043
        %v2045 = vpop.f32.mrb[0].mxu0
        %v2046 = vpop.f32.mrb[0].mxu0
        %v2047 = vadd.f32 %v998, %v2046
        %v2048 = vpop.f32.mrb[0].mxu0
        %2049 = vmatprep.mubr.bf16.mxu0 0
        %2050 = vmatmul.mubr.bf16.gmra.mrb[0].mxu0 %v1526
        %v2051 = vpop.f32.mrb[0].mxu0
        %v2052 = vadd.f32 %v998, %v2051
        %v2053 = vpop.f32.mrb[0].mxu0
        %v2054 = vpop.f32.mrb[0].mxu0
        %v2055 = vadd.f32 %v998, %v2054
        %v2056 = vpop.f32.mrb[0].mxu0
        %2057 = vmatprep.mubr.bf16.mxu0 0
        %2058 = vmatmul.mubr.bf16.gmra.mrb[0].mxu0 %v1529
        %v2059 = vpop.f32.mrb[0].mxu0
        %v2060 = vadd.f32 %v998, %v2059
        %v2061 = vpop.f32.mrb[0].mxu0
        %v2062 = vpop.f32.mrb[0].mxu0
        %v2063 = vadd.f32 %v998, %v2062
        %v2064 = vpop.f32.mrb[0].mxu0
        %2065 = vmatprep.mubr.bf16.mxu0 0
        %2066 = vmatmul.mubr.bf16.gmra.mrb[0].mxu0 %v1532
        %v2067 = vpop.f32.mrb[0].mxu0
        %v2068 = vadd.f32 %v998, %v2067
        %v2069 = vpop.f32.mrb[0].mxu0
        %v2070 = vpop.f32.mrb[0].mxu0
        %v2071 = vadd.f32 %v998, %v2070
        %v2072 = vpop.f32.mrb[0].mxu0
        %2073 = vmatprep.mubr.bf16.mxu0 0
        %2074 = vmatmul.mubr.bf16.gmra.mrb[0].mxu0 %v1535
        %v2075 = vpop.f32.mrb[0].mxu0
        %v2076 = vadd.f32 %v998, %v2075
        %v2077 = vpop.f32.mrb[0].mxu0
        %v2078 = vpop.f32.mrb[0].mxu0
        %v2079 = vadd.f32 %v998, %v2078
        %v2080 = vpop.f32.mrb[0].mxu0
        %2081 = vdwg.mxu0
        %v2082 = vmul.f32 %v1572, 0.2
        %v2083 = vmul.f32 %v1575, 0.2
        %v2084 = vmul.f32 %v1580, 0.2
        %v2085 = vmul.f32 %v1583, 0.2
        %v2086 = vmul.f32 %v1588, 0.2
        %v2087 = vmul.f32 %v1591, 0.2
        %v2088 = vmul.f32 %v1596, 0.2
        %v2089 = vmul.f32 %v1599, 0.2
        %v2090 = vmul.f32 %v1604, 0.2
        %v2091 = vmul.f32 %v1607, 0.2
        %v2092 = vmul.f32 %v1612, 0.2
        %v2093 = vmul.f32 %v1615, 0.2
        %v2094 = vmul.f32 %v1620, 0.2
        %v2095 = vmul.f32 %v1623, 0.2
        %v2096 = vmul.f32 %v1628, 0.2
        %v2097 = vmul.f32 %v1631, 0.2
        %v2098 = vmul.f32 %v1636, 0.2
        %v2099 = vmul.f32 %v1639, 0.2
        %v2100 = vmul.f32 %v1644, 0.2
        %v2101 = vmul.f32 %v1647, 0.2
        %v2102 = vmul.f32 %v1652, 0.2
        %v2103 = vmul.f32 %v1655, 0.2
        %v2104 = vmul.f32 %v1660, 0.2
        %v2105 = vmul.f32 %v1663, 0.2
        %v2106 = vmul.f32 %v1668, 0.2
        %v2107 = vmul.f32 %v1671, 0.2
        %v2108 = vmul.f32 %v1676, 0.2
        %v2109 = vmul.f32 %v1679, 0.2
        %v2110 = vmul.f32 %v1684, 0.2
        %v2111 = vmul.f32 %v1687, 0.2
        %v2112 = vmul.f32 %v1692, 0.2
        %v2113 = vmul.f32 %v1695, 0.2
        %v2114 = vmul.f32 %v1700, 0.2
        %v2115 = vmul.f32 %v1703, 0.2
        %v2116 = vmul.f32 %v1708, 0.2
        %v2117 = vmul.f32 %v1711, 0.2
        %v2118 = vmul.f32 %v1716, 0.2
        %v2119 = vmul.f32 %v1719, 0.2
        %v2120 = vmul.f32 %v1724, 0.2
        %v2121 = vmul.f32 %v1727, 0.2
        %v2122 = vmul.f32 %v1732, 0.2
        %v2123 = vmul.f32 %v1735, 0.2
        %v2124 = vmul.f32 %v1740, 0.2
        %v2125 = vmul.f32 %v1743, 0.2
        %v2126 = vmul.f32 %v1748, 0.2
        %v2127 = vmul.f32 %v1751, 0.2
        %v2128 = vmul.f32 %v1756, 0.2
        %v2129 = vmul.f32 %v1759, 0.2
        %v2130 = vmul.f32 %v1764, 0.2
        %v2131 = vmul.f32 %v1767, 0.2
        %v2132 = vmul.f32 %v1772, 0.2
        %v2133 = vmul.f32 %v1775, 0.2
        %v2134 = vmul.f32 %v1780, 0.2
        %v2135 = vmul.f32 %v1783, 0.2
        %v2136 = vmul.f32 %v1788, 0.2
        %v2137 = vmul.f32 %v1791, 0.2
        %v2138 = vmul.f32 %v1796, 0.2
        %v2139 = vmul.f32 %v1799, 0.2
        %v2140 = vmul.f32 %v1804, 0.2
        %v2141 = vmul.f32 %v1807, 0.2
        %v2142 = vmul.f32 %v1812, 0.2
        %v2143 = vmul.f32 %v1815, 0.2
        %v2144 = vmul.f32 %v1820, 0.2
        %v2145 = vmul.f32 %v1823, 0.2
        %v2146 = vmul.f32 %v1828, 0.2
        %v2147 = vmul.f32 %v1831, 0.2
        %v2148 = vmul.f32 %v1836, 0.2
        %v2149 = vmul.f32 %v1839, 0.2
        %v2150 = vmul.f32 %v1844, 0.2
        %v2151 = vmul.f32 %v1847, 0.2
        %v2152 = vmul.f32 %v1852, 0.2
        %v2153 = vmul.f32 %v1855, 0.2
        %v2154 = vmul.f32 %v1860, 0.2
        %v2155 = vmul.f32 %v1863, 0.2
        %v2156 = vmul.f32 %v1868, 0.2
        %v2157 = vmul.f32 %v1871, 0.2
        %v2158 = vmul.f32 %v1876, 0.2
        %v2159 = vmul.f32 %v1879, 0.2
        %v2160 = vmul.f32 %v1884, 0.2
        %v2161 = vmul.f32 %v1887, 0.2
        %v2162 = vmul.f32 %v1892, 0.2
        %v2163 = vmul.f32 %v1895, 0.2
        %v2164 = vmul.f32 %v1900, 0.2
        %v2165 = vmul.f32 %v1903, 0.2
        %v2166 = vmul.f32 %v1908, 0.2
        %v2167 = vmul.f32 %v1911, 0.2
        %v2168 = vmul.f32 %v1916, 0.2
        %v2169 = vmul.f32 %v1919, 0.2
        %v2170 = vmul.f32 %v1924, 0.2
        %v2171 = vmul.f32 %v1927, 0.2
        %v2172 = vmul.f32 %v1932, 0.2
        %v2173 = vmul.f32 %v1935, 0.2
        %v2174 = vmul.f32 %v1940, 0.2
        %v2175 = vmul.f32 %v1943, 0.2
        %v2176 = vmul.f32 %v1948, 0.2
        %v2177 = vmul.f32 %v1951, 0.2
        %v2178 = vmul.f32 %v1956, 0.2
        %v2179 = vmul.f32 %v1959, 0.2
        %v2180 = vmul.f32 %v1964, 0.2
        %v2181 = vmul.f32 %v1967, 0.2
        %v2182 = vmul.f32 %v1972, 0.2
        %v2183 = vmul.f32 %v1975, 0.2
        %v2184 = vmul.f32 %v1980, 0.2
        %v2185 = vmul.f32 %v1983, 0.2
        %v2186 = vmul.f32 %v1988, 0.2
        %v2187 = vmul.f32 %v1991, 0.2
        %v2188 = vmul.f32 %v1996, 0.2
        %v2189 = vmul.f32 %v1999, 0.2
        %v2190 = vmul.f32 %v2004, 0.2
        %v2191 = vmul.f32 %v2007, 0.2
        %v2192 = vmul.f32 %v2012, 0.2
        %v2193 = vmul.f32 %v2015, 0.2
        %v2194 = vmul.f32 %v2020, 0.2
        %v2195 = vmul.f32 %v2023, 0.2
        %v2196 = vmul.f32 %v2028, 0.2
        %v2197 = vmul.f32 %v2031, 0.2
        %v2198 = vmul.f32 %v2036, 0.2
        %v2199 = vmul.f32 %v2039, 0.2
        %v2200 = vmul.f32 %v2044, 0.2
        %v2201 = vmul.f32 %v2047, 0.2
        %v2202 = vmul.f32 %v2052, 0.2
        %v2203 = vmul.f32 %v2055, 0.2
        %v2204 = vmul.f32 %v2060, 0.2
        %v2205 = vmul.f32 %v2063, 0.2
        %v2206 = vmul.f32 %v2068, 0.2
        %v2207 = vmul.f32 %v2071, 0.2
        %v2208 = vmul.f32 %v2076, 0.2
        %v2209 = vmul.f32 %v2079, 0.2
        %v2210 = vmax.f32 %v1572, %v2082
        %v2211 = vmax.f32 %v1575, %v2083
        %v2212 = vmax.f32 %v1580, %v2084
        %v2213 = vmax.f32 %v1583, %v2085
        %v2214 = vmax.f32 %v1588, %v2086
        %v2215 = vmax.f32 %v1591, %v2087
        %v2216 = vmax.f32 %v1596, %v2088
        %v2217 = vmax.f32 %v1599, %v2089
        %v2218 = vmax.f32 %v1604, %v2090
        %v2219 = vmax.f32 %v1607, %v2091
        %v2220 = vmax.f32 %v1612, %v2092
        %v2221 = vmax.f32 %v1615, %v2093
        %v2222 = vmax.f32 %v1620, %v2094
        %v2223 = vmax.f32 %v1623, %v2095
        %v2224 = vmax.f32 %v1628, %v2096
        %v2225 = vmax.f32 %v1631, %v2097
        %v2226 = vmax.f32 %v1636, %v2098
        %v2227 = vmax.f32 %v1639, %v2099
        %v2228 = vmax.f32 %v1644, %v2100
        %v2229 = vmax.f32 %v1647, %v2101
        %v2230 = vmax.f32 %v1652, %v2102
        %v2231 = vmax.f32 %v1655, %v2103
        %v2232 = vmax.f32 %v1660, %v2104
        %v2233 = vmax.f32 %v1663, %v2105
        %v2234 = vmax.f32 %v1668, %v2106
        %v2235 = vmax.f32 %v1671, %v2107
        %v2236 = vmax.f32 %v1676, %v2108
        %v2237 = vmax.f32 %v1679, %v2109
        %v2238 = vmax.f32 %v1684, %v2110
        %v2239 = vmax.f32 %v1687, %v2111
        %v2240 = vmax.f32 %v1692, %v2112
        %v2241 = vmax.f32 %v1695, %v2113
        %v2242 = vmax.f32 %v1700, %v2114
        %v2243 = vmax.f32 %v1703, %v2115
        %v2244 = vmax.f32 %v1708, %v2116
        %v2245 = vmax.f32 %v1711, %v2117
        %v2246 = vmax.f32 %v1716, %v2118
        %v2247 = vmax.f32 %v1719, %v2119
        %v2248 = vmax.f32 %v1724, %v2120
        %v2249 = vmax.f32 %v1727, %v2121
        %v2250 = vmax.f32 %v1732, %v2122
        %v2251 = vmax.f32 %v1735, %v2123
        %v2252 = vmax.f32 %v1740, %v2124
        %v2253 = vmax.f32 %v1743, %v2125
        %v2254 = vmax.f32 %v1748, %v2126
        %v2255 = vmax.f32 %v1751, %v2127
        %v2256 = vmax.f32 %v1756, %v2128
        %v2257 = vmax.f32 %v1759, %v2129
        %v2258 = vmax.f32 %v1764, %v2130
        %v2259 = vmax.f32 %v1767, %v2131
        %v2260 = vmax.f32 %v1772, %v2132
        %v2261 = vmax.f32 %v1775, %v2133
        %v2262 = vmax.f32 %v1780, %v2134
        %v2263 = vmax.f32 %v1783, %v2135
        %v2264 = vmax.f32 %v1788, %v2136
        %v2265 = vmax.f32 %v1791, %v2137
        %v2266 = vmax.f32 %v1796, %v2138
        %v2267 = vmax.f32 %v1799, %v2139
        %v2268 = vmax.f32 %v1804, %v2140
        %v2269 = vmax.f32 %v1807, %v2141
        %v2270 = vmax.f32 %v1812, %v2142
        %v2271 = vmax.f32 %v1815, %v2143
        %v2272 = vmax.f32 %v1820, %v2144
        %v2273 = vmax.f32 %v1823, %v2145
        %v2274 = vmax.f32 %v1828, %v2146
        %v2275 = vmax.f32 %v1831, %v2147
        %v2276 = vmax.f32 %v1836, %v2148
        %v2277 = vmax.f32 %v1839, %v2149
        %v2278 = vmax.f32 %v1844, %v2150
        %v2279 = vmax.f32 %v1847, %v2151
        %v2280 = vmax.f32 %v1852, %v2152
        %v2281 = vmax.f32 %v1855, %v2153
        %v2282 = vmax.f32 %v1860, %v2154
        %v2283 = vmax.f32 %v1863, %v2155
        %v2284 = vmax.f32 %v1868, %v2156
        %v2285 = vmax.f32 %v1871, %v2157
        %v2286 = vmax.f32 %v1876, %v2158
        %v2287 = vmax.f32 %v1879, %v2159
        %v2288 = vmax.f32 %v1884, %v2160
        %v2289 = vmax.f32 %v1887, %v2161
        %v2290 = vmax.f32 %v1892, %v2162
        %v2291 = vmax.f32 %v1895, %v2163
        %v2292 = vmax.f32 %v1900, %v2164
        %v2293 = vmax.f32 %v1903, %v2165
        %v2294 = vmax.f32 %v1908, %v2166
        %v2295 = vmax.f32 %v1911, %v2167
        %v2296 = vmax.f32 %v1916, %v2168
        %v2297 = vmax.f32 %v1919, %v2169
        %v2298 = vmax.f32 %v1924, %v2170
        %v2299 = vmax.f32 %v1927, %v2171
        %v2300 = vmax.f32 %v1932, %v2172
        %v2301 = vmax.f32 %v1935, %v2173
        %v2302 = vmax.f32 %v1940, %v2174
        %v2303 = vmax.f32 %v1943, %v2175
        %v2304 = vmax.f32 %v1948, %v2176
        %v2305 = vmax.f32 %v1951, %v2177
        %v2306 = vmax.f32 %v1956, %v2178
        %v2307 = vmax.f32 %v1959, %v2179
        %v2308 = vmax.f32 %v1964, %v2180
        %v2309 = vmax.f32 %v1967, %v2181
        %v2310 = vmax.f32 %v1972, %v2182
        %v2311 = vmax.f32 %v1975, %v2183
        %v2312 = vmax.f32 %v1980, %v2184
        %v2313 = vmax.f32 %v1983, %v2185
        %v2314 = vmax.f32 %v1988, %v2186
        %v2315 = vmax.f32 %v1991, %v2187
        %v2316 = vmax.f32 %v1996, %v2188
        %v2317 = vmax.f32 %v1999, %v2189
        %v2318 = vmax.f32 %v2004, %v2190
        %v2319 = vmax.f32 %v2007, %v2191
        %v2320 = vmax.f32 %v2012, %v2192
        %v2321 = vmax.f32 %v2015, %v2193
        %v2322 = vmax.f32 %v2020, %v2194
        %v2323 = vmax.f32 %v2023, %v2195
        %v2324 = vmax.f32 %v2028, %v2196
        %v2325 = vmax.f32 %v2031, %v2197
        %v2326 = vmax.f32 %v2036, %v2198
        %v2327 = vmax.f32 %v2039, %v2199
        %v2328 = vmax.f32 %v2044, %v2200
        %v2329 = vmax.f32 %v2047, %v2201
        %v2330 = vmax.f32 %v2052, %v2202
        %v2331 = vmax.f32 %v2055, %v2203
        %v2332 = vmax.f32 %v2060, %v2204
        %v2333 = vmax.f32 %v2063, %v2205
        %v2334 = vmax.f32 %v2068, %v2206
        %v2335 = vmax.f32 %v2071, %v2207
        %v2336 = vmax.f32 %v2076, %v2208
        %v2337 = vmax.f32 %v2079, %v2209
        %v2338 = vld [vmem:[%s1] sm:$0xff]
        %v2339 = vld [vmem:[%s1 + $0x8] sm:$0xff]
        %v2340 = vld [vmem:[%s1 + $0x10] sm:$0xff]
        %v2341 = vld [vmem:[%s1 + $0x18] sm:$0xff]
        %v2342 = vld [vmem:[%s1 + $0x20] sm:$0xff]
        %v2343 = vld [vmem:[%s1 + $0x28] sm:$0xff]
        %v2344 = vld [vmem:[%s1 + $0x30] sm:$0xff]
        %v2345 = vld [vmem:[%s1 + $0x38] sm:$0xff]
        %v2346 = vld [vmem:[%s1 + $0x40] sm:$0xff]
        %v2347 = vld [vmem:[%s1 + $0x48] sm:$0xff]
        %v2348 = vld [vmem:[%s1 + $0x50] sm:$0xff]
        %v2349 = vld [vmem:[%s1 + $0x58] sm:$0xff]
        %v2350 = vld [vmem:[%s1 + $0x60] sm:$0xff]
        %v2351 = vld [vmem:[%s1 + $0x68] sm:$0xff]
        %v2352 = vld [vmem:[%s1 + $0x70] sm:$0xff]
        %v2353 = vld [vmem:[%s1 + $0x78] sm:$0xff]
        %v2354 = vmul.f32 %v2210, %v2338
        %v2355 = vmul.f32 %v2211, %v2339
        %v2356 = vmul.f32 %v2212, %v2340
        %v2357 = vmul.f32 %v2213, %v2341
        %v2358 = vmul.f32 %v2214, %v2342
        %v2359 = vmul.f32 %v2215, %v2343
        %v2360 = vmul.f32 %v2216, %v2344
        %v2361 = vmul.f32 %v2217, %v2345
        %v2362 = vmul.f32 %v2218, %v2338
        %v2363 = vmul.f32 %v2219, %v2339
        %v2364 = vmul.f32 %v2220, %v2340
        %v2365 = vmul.f32 %v2221, %v2341
        %v2366 = vmul.f32 %v2222, %v2342
        %v2367 = vmul.f32 %v2223, %v2343
        %v2368 = vmul.f32 %v2224, %v2344
        %v2369 = vmul.f32 %v2225, %v2345
        %v2370 = vmul.f32 %v2226, %v2338
        %v2371 = vmul.f32 %v2227, %v2339
        %v2372 = vmul.f32 %v2228, %v2340
        %v2373 = vmul.f32 %v2229, %v2341
        %v2374 = vmul.f32 %v2230, %v2342
        %v2375 = vmul.f32 %v2231, %v2343
        %v2376 = vmul.f32 %v2232, %v2344
        %v2377 = vmul.f32 %v2233, %v2345
        %v2378 = vmul.f32 %v2234, %v2338
        %v2379 = vmul.f32 %v2235, %v2339
        %v2380 = vmul.f32 %v2236, %v2340
        %v2381 = vmul.f32 %v2237, %v2341
        %v2382 = vmul.f32 %v2238, %v2342
        %v2383 = vmul.f32 %v2239, %v2343
        %v2384 = vmul.f32 %v2240, %v2344
        %v2385 = vmul.f32 %v2241, %v2345
        %v2386 = vmul.f32 %v2242, %v2338
        %v2387 = vmul.f32 %v2243, %v2339
        %v2388 = vmul.f32 %v2244, %v2340
        %v2389 = vmul.f32 %v2245, %v2341
        %v2390 = vmul.f32 %v2246, %v2342
        %v2391 = vmul.f32 %v2247, %v2343
        %v2392 = vmul.f32 %v2248, %v2344
        %v2393 = vmul.f32 %v2249, %v2345
        %v2394 = vmul.f32 %v2250, %v2338
        %v2395 = vmul.f32 %v2251, %v2339
        %v2396 = vmul.f32 %v2252, %v2340
        %v2397 = vmul.f32 %v2253, %v2341
        %v2398 = vmul.f32 %v2254, %v2342
        %v2399 = vmul.f32 %v2255, %v2343
        %v2400 = vmul.f32 %v2256, %v2344
        %v2401 = vmul.f32 %v2257, %v2345
        %v2402 = vmul.f32 %v2258, %v2338
        %v2403 = vmul.f32 %v2259, %v2339
        %v2404 = vmul.f32 %v2260, %v2340
        %v2405 = vmul.f32 %v2261, %v2341
        %v2406 = vmul.f32 %v2262, %v2342
        %v2407 = vmul.f32 %v2263, %v2343
        %v2408 = vmul.f32 %v2264, %v2344
        %v2409 = vmul.f32 %v2265, %v2345
        %v2410 = vmul.f32 %v2266, %v2338
        %v2411 = vmul.f32 %v2267, %v2339
        %v2412 = vmul.f32 %v2268, %v2340
        %v2413 = vmul.f32 %v2269, %v2341
        %v2414 = vmul.f32 %v2270, %v2342
        %v2415 = vmul.f32 %v2271, %v2343
        %v2416 = vmul.f32 %v2272, %v2344
        %v2417 = vmul.f32 %v2273, %v2345
        %v2418 = vmul.f32 %v2274, %v2346
        %v2419 = vmul.f32 %v2275, %v2347
        %v2420 = vmul.f32 %v2276, %v2348
        %v2421 = vmul.f32 %v2277, %v2349
        %v2422 = vmul.f32 %v2278, %v2350
        %v2423 = vmul.f32 %v2279, %v2351
        %v2424 = vmul.f32 %v2280, %v2352
        %v2425 = vmul.f32 %v2281, %v2353
        %v2426 = vmul.f32 %v2282, %v2346
        %v2427 = vmul.f32 %v2283, %v2347
        %v2428 = vmul.f32 %v2284, %v2348
        %v2429 = vmul.f32 %v2285, %v2349
        %v2430 = vmul.f32 %v2286, %v2350
        %v2431 = vmul.f32 %v2287, %v2351
        %v2432 = vmul.f32 %v2288, %v2352
        %v2433 = vmul.f32 %v2289, %v2353
        %v2434 = vmul.f32 %v2290, %v2346
        %v2435 = vmul.f32 %v2291, %v2347
        %v2436 = vmul.f32 %v2292, %v2348
        %v2437 = vmul.f32 %v2293, %v2349
        %v2438 = vmul.f32 %v2294, %v2350
        %v2439 = vmul.f32 %v2295, %v2351
        %v2440 = vmul.f32 %v2296, %v2352
        %v2441 = vmul.f32 %v2297, %v2353
        %v2442 = vmul.f32 %v2298, %v2346
        %v2443 = vmul.f32 %v2299, %v2347
        %v2444 = vmul.f32 %v2300, %v2348
        %v2445 = vmul.f32 %v2301, %v2349
        %v2446 = vmul.f32 %v2302, %v2350
        %v2447 = vmul.f32 %v2303, %v2351
        %v2448 = vmul.f32 %v2304, %v2352
        %v2449 = vmul.f32 %v2305, %v2353
        %v2450 = vmul.f32 %v2306, %v2346
        %v2451 = vmul.f32 %v2307, %v2347
        %v2452 = vmul.f32 %v2308, %v2348
        %v2453 = vmul.f32 %v2309, %v2349
        %v2454 = vmul.f32 %v2310, %v2350
        %v2455 = vmul.f32 %v2311, %v2351
        %v2456 = vmul.f32 %v2312, %v2352
        %v2457 = vmul.f32 %v2313, %v2353
        %v2458 = vmul.f32 %v2314, %v2346
        %v2459 = vmul.f32 %v2315, %v2347
        %v2460 = vmul.f32 %v2316, %v2348
        %v2461 = vmul.f32 %v2317, %v2349
        %v2462 = vmul.f32 %v2318, %v2350
        %v2463 = vmul.f32 %v2319, %v2351
        %v2464 = vmul.f32 %v2320, %v2352
        %v2465 = vmul.f32 %v2321, %v2353
        %v2466 = vmul.f32 %v2322, %v2346
        %v2467 = vmul.f32 %v2323, %v2347
        %v2468 = vmul.f32 %v2324, %v2348
        %v2469 = vmul.f32 %v2325, %v2349
        %v2470 = vmul.f32 %v2326, %v2350
        %v2471 = vmul.f32 %v2327, %v2351
        %v2472 = vmul.f32 %v2328, %v2352
        %v2473 = vmul.f32 %v2329, %v2353
        %v2474 = vmul.f32 %v2330, %v2346
        %v2475 = vmul.f32 %v2331, %v2347
        %v2476 = vmul.f32 %v2332, %v2348
        %v2477 = vmul.f32 %v2333, %v2349
        %v2478 = vmul.f32 %v2334, %v2350
        %v2479 = vmul.f32 %v2335, %v2351
        %v2480 = vmul.f32 %v2336, %v2352
        %v2481 = vmul.f32 %v2337, %v2353
        %v2482 = vpack.c.bf16 %v2354, %v2354
        %v2483 = vpack.c.bf16 %v2355, %v2355
        %v2484 = vpack.c.bf16 %v2356, %v2356
        %v2485 = vpack.c.bf16 %v2357, %v2357
        %v2486 = vpack.c.bf16 %v2358, %v2358
        %v2487 = vpack.c.bf16 %v2359, %v2359
        %v2488 = vpack.c.bf16 %v2360, %v2360
        %v2489 = vpack.c.bf16 %v2361, %v2361
        %v2490 = vpack.c.bf16 %v2362, %v2362
        %v2491 = vpack.c.bf16 %v2363, %v2363
        %v2492 = vpack.c.bf16 %v2364, %v2364
        %v2493 = vpack.c.bf16 %v2365, %v2365
        %v2494 = vpack.c.bf16 %v2366, %v2366
        %v2495 = vpack.c.bf16 %v2367, %v2367
        %v2496 = vpack.c.bf16 %v2368, %v2368
        %v2497 = vpack.c.bf16 %v2369, %v2369
        %v2498 = vpack.c.bf16 %v2370, %v2370
        %v2499 = vpack.c.bf16 %v2371, %v2371
        %v2500 = vpack.c.bf16 %v2372, %v2372
        %v2501 = vpack.c.bf16 %v2373, %v2373
        %v2502 = vpack.c.bf16 %v2374, %v2374
        %v2503 = vpack.c.bf16 %v2375, %v2375
        %v2504 = vpack.c.bf16 %v2376, %v2376
        %v2505 = vpack.c.bf16 %v2377, %v2377
        %v2506 = vpack.c.bf16 %v2378, %v2378
        %v2507 = vpack.c.bf16 %v2379, %v2379
        %v2508 = vpack.c.bf16 %v2380, %v2380
        %v2509 = vpack.c.bf16 %v2381, %v2381
        %v2510 = vpack.c.bf16 %v2382, %v2382
        %v2511 = vpack.c.bf16 %v2383, %v2383
        %v2512 = vpack.c.bf16 %v2384, %v2384
        %v2513 = vpack.c.bf16 %v2385, %v2385
        %v2514 = vpack.c.bf16 %v2386, %v2386
        %v2515 = vpack.c.bf16 %v2387, %v2387
        %v2516 = vpack.c.bf16 %v2388, %v2388
        %v2517 = vpack.c.bf16 %v2389, %v2389
        %v2518 = vpack.c.bf16 %v2390, %v2390
        %v2519 = vpack.c.bf16 %v2391, %v2391
        %v2520 = vpack.c.bf16 %v2392, %v2392
        %v2521 = vpack.c.bf16 %v2393, %v2393
        %v2522 = vpack.c.bf16 %v2394, %v2394
        %v2523 = vpack.c.bf16 %v2395, %v2395
        %v2524 = vpack.c.bf16 %v2396, %v2396
        %v2525 = vpack.c.bf16 %v2397, %v2397
        %v2526 = vpack.c.bf16 %v2398, %v2398
        %v2527 = vpack.c.bf16 %v2399, %v2399
        %v2528 = vpack.c.bf16 %v2400, %v2400
        %v2529 = vpack.c.bf16 %v2401, %v2401
        %v2530 = vpack.c.bf16 %v2402, %v2402
        %v2531 = vpack.c.bf16 %v2403, %v2403
        %v2532 = vpack.c.bf16 %v2404, %v2404
        %v2533 = vpack.c.bf16 %v2405, %v2405
        %v2534 = vpack.c.bf16 %v2406, %v2406
        %v2535 = vpack.c.bf16 %v2407, %v2407
        %v2536 = vpack.c.bf16 %v2408, %v2408
        %v2537 = vpack.c.bf16 %v2409, %v2409
        %v2538 = vpack.c.bf16 %v2410, %v2410
        %v2539 = vpack.c.bf16 %v2411, %v2411
        %v2540 = vpack.c.bf16 %v2412, %v2412
        %v2541 = vpack.c.bf16 %v2413, %v2413
        %v2542 = vpack.c.bf16 %v2414, %v2414
        %v2543 = vpack.c.bf16 %v2415, %v2415
        %v2544 = vpack.c.bf16 %v2416, %v2416
        %v2545 = vpack.c.bf16 %v2417, %v2417
        %v2546 = vpack.c.bf16 %v2418, %v2418
        %v2547 = vpack.c.bf16 %v2419, %v2419
        %v2548 = vpack.c.bf16 %v2420, %v2420
        %v2549 = vpack.c.bf16 %v2421, %v2421
        %v2550 = vpack.c.bf16 %v2422, %v2422
        %v2551 = vpack.c.bf16 %v2423, %v2423
        %v2552 = vpack.c.bf16 %v2424, %v2424
        %v2553 = vpack.c.bf16 %v2425, %v2425
        %v2554 = vpack.c.bf16 %v2426, %v2426
        %v2555 = vpack.c.bf16 %v2427, %v2427
        %v2556 = vpack.c.bf16 %v2428, %v2428
        %v2557 = vpack.c.bf16 %v2429, %v2429
        %v2558 = vpack.c.bf16 %v2430, %v2430
        %v2559 = vpack.c.bf16 %v2431, %v2431
        %v2560 = vpack.c.bf16 %v2432, %v2432
        %v2561 = vpack.c.bf16 %v2433, %v2433
        %v2562 = vpack.c.bf16 %v2434, %v2434
        %v2563 = vpack.c.bf16 %v2435, %v2435
        %v2564 = vpack.c.bf16 %v2436, %v2436
        %v2565 = vpack.c.bf16 %v2437, %v2437
        %v2566 = vpack.c.bf16 %v2438, %v2438
        %v2567 = vpack.c.bf16 %v2439, %v2439
        %v2568 = vpack.c.bf16 %v2440, %v2440
        %v2569 = vpack.c.bf16 %v2441, %v2441
        %v2570 = vpack.c.bf16 %v2442, %v2442
        %v2571 = vpack.c.bf16 %v2443, %v2443
        %v2572 = vpack.c.bf16 %v2444, %v2444
        %v2573 = vpack.c.bf16 %v2445, %v2445
        %v2574 = vpack.c.bf16 %v2446, %v2446
        %v2575 = vpack.c.bf16 %v2447, %v2447
        %v2576 = vpack.c.bf16 %v2448, %v2448
        %v2577 = vpack.c.bf16 %v2449, %v2449
        %v2578 = vpack.c.bf16 %v2450, %v2450
        %v2579 = vpack.c.bf16 %v2451, %v2451
        %v2580 = vpack.c.bf16 %v2452, %v2452
        %v2581 = vpack.c.bf16 %v2453, %v2453
        %v2582 = vpack.c.bf16 %v2454, %v2454
        %v2583 = vpack.c.bf16 %v2455, %v2455
        %v2584 = vpack.c.bf16 %v2456, %v2456
        %v2585 = vpack.c.bf16 %v2457, %v2457
        %v2586 = vpack.c.bf16 %v2458, %v2458
        %v2587 = vpack.c.bf16 %v2459, %v2459
        %v2588 = vpack.c.bf16 %v2460, %v2460
        %v2589 = vpack.c.bf16 %v2461, %v2461
        %v2590 = vpack.c.bf16 %v2462, %v2462
        %v2591 = vpack.c.bf16 %v2463, %v2463
        %v2592 = vpack.c.bf16 %v2464, %v2464
        %v2593 = vpack.c.bf16 %v2465, %v2465
        %v2594 = vpack.c.bf16 %v2466, %v2466
        %v2595 = vpack.c.bf16 %v2467, %v2467
        %v2596 = vpack.c.bf16 %v2468, %v2468
        %v2597 = vpack.c.bf16 %v2469, %v2469
        %v2598 = vpack.c.bf16 %v2470, %v2470
        %v2599 = vpack.c.bf16 %v2471, %v2471
        %v2600 = vpack.c.bf16 %v2472, %v2472
        %v2601 = vpack.c.bf16 %v2473, %v2473
        %v2602 = vpack.c.bf16 %v2474, %v2474
        %v2603 = vpack.c.bf16 %v2475, %v2475
        %v2604 = vpack.c.bf16 %v2476, %v2476
        %v2605 = vpack.c.bf16 %v2477, %v2477
        %v2606 = vpack.c.bf16 %v2478, %v2478
        %v2607 = vpack.c.bf16 %v2479, %v2479
        %v2608 = vpack.c.bf16 %v2480, %v2480
        %v2609 = vpack.c.bf16 %v2481, %v2481
        %2610 = vst [vmem:[#allocation2] sm:$0xf] %v2482
        %2611 = vst [vmem:[#allocation2 + $0x4] sm:$0xf] %v2483
        %2612 = vst [vmem:[#allocation2 + $0x8] sm:$0xf] %v2484
        %2613 = vst [vmem:[#allocation2 + $0xc] sm:$0xf] %v2485
        %2614 = vst [vmem:[#allocation2 + $0x10] sm:$0xf] %v2486
        %2615 = vst [vmem:[#allocation2 + $0x14] sm:$0xf] %v2487
        %2616 = vst [vmem:[#allocation2 + $0x18] sm:$0xf] %v2488
        %2617 = vst [vmem:[#allocation2 + $0x1c] sm:$0xf] %v2489
        %2618 = vst [vmem:[#allocation2 + $0x20] sm:$0xf] %v2490
        %2619 = vst [vmem:[#allocation2 + $0x24] sm:$0xf] %v2491
        %2620 = vst [vmem:[#allocation2 + $0x28] sm:$0xf] %v2492
        %2621 = vst [vmem:[#allocation2 + $0x2c] sm:$0xf] %v2493
        %2622 = vst [vmem:[#allocation2 + $0x30] sm:$0xf] %v2494
        %2623 = vst [vmem:[#allocation2 + $0x34] sm:$0xf] %v2495
        %2624 = vst [vmem:[#allocation2 + $0x38] sm:$0xf] %v2496
        %2625 = vst [vmem:[#allocation2 + $0x3c] sm:$0xf] %v2497
        %2626 = vst [vmem:[#allocation2 + $0x40] sm:$0xf] %v2498
        %2627 = vst [vmem:[#allocation2 + $0x44] sm:$0xf] %v2499
        %2628 = vst [vmem:[#allocation2 + $0x48] sm:$0xf] %v2500
        %2629 = vst [vmem:[#allocation2 + $0x4c] sm:$0xf] %v2501
        %2630 = vst [vmem:[#allocation2 + $0x50] sm:$0xf] %v2502
        %2631 = vst [vmem:[#allocation2 + $0x54] sm:$0xf] %v2503
        %2632 = vst [vmem:[#allocation2 + $0x58] sm:$0xf] %v2504
        %2633 = vst [vmem:[#allocation2 + $0x5c] sm:$0xf] %v2505
        %2634 = vst [vmem:[#allocation2 + $0x60] sm:$0xf] %v2506
        %2635 = vst [vmem:[#allocation2 + $0x64] sm:$0xf] %v2507
        %2636 = vst [vmem:[#allocation2 + $0x68] sm:$0xf] %v2508
        %2637 = vst [vmem:[#allocation2 + $0x6c] sm:$0xf] %v2509
        %2638 = vst [vmem:[#allocation2 + $0x70] sm:$0xf] %v2510
        %2639 = vst [vmem:[#allocation2 + $0x74] sm:$0xf] %v2511
        %2640 = vst [vmem:[#allocation2 + $0x78] sm:$0xf] %v2512
        %2641 = vst [vmem:[#allocation2 + $0x7c] sm:$0xf] %v2513
        %2642 = vst [vmem:[#allocation2 + $0x80] sm:$0xf] %v2514
        %2643 = vst [vmem:[#allocation2 + $0x84] sm:$0xf] %v2515
        %2644 = vst [vmem:[#allocation2 + $0x88] sm:$0xf] %v2516
        %2645 = vst [vmem:[#allocation2 + $0x8c] sm:$0xf] %v2517
        %2646 = vst [vmem:[#allocation2 + $0x90] sm:$0xf] %v2518
        %2647 = vst [vmem:[#allocation2 + $0x94] sm:$0xf] %v2519
        %2648 = vst [vmem:[#allocation2 + $0x98] sm:$0xf] %v2520
        %2649 = vst [vmem:[#allocation2 + $0x9c] sm:$0xf] %v2521
        %2650 = vst [vmem:[#allocation2 + $0xa0] sm:$0xf] %v2522
        %2651 = vst [vmem:[#allocation2 + $0xa4] sm:$0xf] %v2523
        %2652 = vst [vmem:[#allocation2 + $0xa8] sm:$0xf] %v2524
        %2653 = vst [vmem:[#allocation2 + $0xac] sm:$0xf] %v2525
        %2654 = vst [vmem:[#allocation2 + $0xb0] sm:$0xf] %v2526
        %2655 = vst [vmem:[#allocation2 + $0xb4] sm:$0xf] %v2527
        %2656 = vst [vmem:[#allocation2 + $0xb8] sm:$0xf] %v2528
        %2657 = vst [vmem:[#allocation2 + $0xbc] sm:$0xf] %v2529
        %2658 = vst [vmem:[#allocation2 + $0xc0] sm:$0xf] %v2530
        %2659 = vst [vmem:[#allocation2 + $0xc4] sm:$0xf] %v2531
        %2660 = vst [vmem:[#allocation2 + $0xc8] sm:$0xf] %v2532
        %2661 = vst [vmem:[#allocation2 + $0xcc] sm:$0xf] %v2533
        %2662 = vst [vmem:[#allocation2 + $0xd0] sm:$0xf] %v2534
        %2663 = vst [vmem:[#allocation2 + $0xd4] sm:$0xf] %v2535
        %2664 = vst [vmem:[#allocation2 + $0xd8] sm:$0xf] %v2536
        %2665 = vst [vmem:[#allocation2 + $0xdc] sm:$0xf] %v2537
        %2666 = vst [vmem:[#allocation2 + $0xe0] sm:$0xf] %v2538
        %2667 = vst [vmem:[#allocation2 + $0xe4] sm:$0xf] %v2539
        %2668 = vst [vmem:[#allocation2 + $0xe8] sm:$0xf] %v2540
        %2669 = vst [vmem:[#allocation2 + $0xec] sm:$0xf] %v2541
        %2670 = vst [vmem:[#allocation2 + $0xf0] sm:$0xf] %v2542
        %2671 = vst [vmem:[#allocation2 + $0xf4] sm:$0xf] %v2543
        %2672 = vst [vmem:[#allocation2 + $0xf8] sm:$0xf] %v2544
        %2673 = vst [vmem:[#allocation2 + $0xfc] sm:$0xf] %v2545
        %2674 = vst [vmem:[#allocation2 + $0x100] sm:$0xf] %v2546
        %2675 = vst [vmem:[#allocation2 + $0x104] sm:$0xf] %v2547
        %2676 = vst [vmem:[#allocation2 + $0x108] sm:$0xf] %v2548
        %2677 = vst [vmem:[#allocation2 + $0x10c] sm:$0xf] %v2549
        %2678 = vst [vmem:[#allocation2 + $0x110] sm:$0xf] %v2550
        %2679 = vst [vmem:[#allocation2 + $0x114] sm:$0xf] %v2551
        %2680 = vst [vmem:[#allocation2 + $0x118] sm:$0xf] %v2552
        %2681 = vst [vmem:[#allocation2 + $0x11c] sm:$0xf] %v2553
        %2682 = vst [vmem:[#allocation2 + $0x120] sm:$0xf] %v2554
        %2683 = vst [vmem:[#allocation2 + $0x124] sm:$0xf] %v2555
        %2684 = vst [vmem:[#allocation2 + $0x128] sm:$0xf] %v2556
        %2685 = vst [vmem:[#allocation2 + $0x12c] sm:$0xf] %v2557
        %2686 = vst [vmem:[#allocation2 + $0x130] sm:$0xf] %v2558
        %2687 = vst [vmem:[#allocation2 + $0x134] sm:$0xf] %v2559
        %2688 = vst [vmem:[#allocation2 + $0x138] sm:$0xf] %v2560
        %2689 = vst [vmem:[#allocation2 + $0x13c] sm:$0xf] %v2561
        %2690 = vst [vmem:[#allocation2 + $0x140] sm:$0xf] %v2562
        %2691 = vst [vmem:[#allocation2 + $0x144] sm:$0xf] %v2563
        %2692 = vst [vmem:[#allocation2 + $0x148] sm:$0xf] %v2564
        %2693 = vst [vmem:[#allocation2 + $0x14c] sm:$0xf] %v2565
        %2694 = vst [vmem:[#allocation2 + $0x150] sm:$0xf] %v2566
        %2695 = vst [vmem:[#allocation2 + $0x154] sm:$0xf] %v2567
        %2696 = vst [vmem:[#allocation2 + $0x158] sm:$0xf] %v2568
        %2697 = vst [vmem:[#allocation2 + $0x15c] sm:$0xf] %v2569
        %2698 = vst [vmem:[#allocation2 + $0x160] sm:$0xf] %v2570
        %2699 = vst [vmem:[#allocation2 + $0x164] sm:$0xf] %v2571
        %2700 = vst [vmem:[#allocation2 + $0x168] sm:$0xf] %v2572
        %2701 = vst [vmem:[#allocation2 + $0x16c] sm:$0xf] %v2573
        %2702 = vst [vmem:[#allocation2 + $0x170] sm:$0xf] %v2574
        %2703 = vst [vmem:[#allocation2 + $0x174] sm:$0xf] %v2575
        %2704 = vst [vmem:[#allocation2 + $0x178] sm:$0xf] %v2576
        %2705 = vst [vmem:[#allocation2 + $0x17c] sm:$0xf] %v2577
        %2706 = vst [vmem:[#allocation2 + $0x180] sm:$0xf] %v2578
        %2707 = vst [vmem:[#allocation2 + $0x184] sm:$0xf] %v2579
        %2708 = vst [vmem:[#allocation2 + $0x188] sm:$0xf] %v2580
        %2709 = vst [vmem:[#allocation2 + $0x18c] sm:$0xf] %v2581
        %2710 = vst [vmem:[#allocation2 + $0x190] sm:$0xf] %v2582
        %2711 = vst [vmem:[#allocation2 + $0x194] sm:$0xf] %v2583
        %2712 = vst [vmem:[#allocation2 + $0x198] sm:$0xf] %v2584
        %2713 = vst [vmem:[#allocation2 + $0x19c] sm:$0xf] %v2585
        %2714 = vst [vmem:[#allocation2 + $0x1a0] sm:$0xf] %v2586
        %2715 = vst [vmem:[#allocation2 + $0x1a4] sm:$0xf] %v2587
        %2716 = vst [vmem:[#allocation2 + $0x1a8] sm:$0xf] %v2588
        %2717 = vst [vmem:[#allocation2 + $0x1ac] sm:$0xf] %v2589
        %2718 = vst [vmem:[#allocation2 + $0x1b0] sm:$0xf] %v2590
        %2719 = vst [vmem:[#allocation2 + $0x1b4] sm:$0xf] %v2591
        %2720 = vst [vmem:[#allocation2 + $0x1b8] sm:$0xf] %v2592
        %2721 = vst [vmem:[#allocation2 + $0x1bc] sm:$0xf] %v2593
        %2722 = vst [vmem:[#allocation2 + $0x1c0] sm:$0xf] %v2594
        %2723 = vst [vmem:[#allocation2 + $0x1c4] sm:$0xf] %v2595
        %2724 = vst [vmem:[#allocation2 + $0x1c8] sm:$0xf] %v2596
        %2725 = vst [vmem:[#allocation2 + $0x1cc] sm:$0xf] %v2597
        %2726 = vst [vmem:[#allocation2 + $0x1d0] sm:$0xf] %v2598
        %2727 = vst [vmem:[#allocation2 + $0x1d4] sm:$0xf] %v2599
        %2728 = vst [vmem:[#allocation2 + $0x1d8] sm:$0xf] %v2600
        %2729 = vst [vmem:[#allocation2 + $0x1dc] sm:$0xf] %v2601
        %2730 = vst [vmem:[#allocation2 + $0x1e0] sm:$0xf] %v2602
        %2731 = vst [vmem:[#allocation2 + $0x1e4] sm:$0xf] %v2603
        %2732 = vst [vmem:[#allocation2 + $0x1e8] sm:$0xf] %v2604
        %2733 = vst [vmem:[#allocation2 + $0x1ec] sm:$0xf] %v2605
        %2734 = vst [vmem:[#allocation2 + $0x1f0] sm:$0xf] %v2606
        %2735 = vst [vmem:[#allocation2 + $0x1f4] sm:$0xf] %v2607
        %2736 = vst [vmem:[#allocation2 + $0x1f8] sm:$0xf] %v2608
        %2737 = vst [vmem:[#allocation2 + $0x1fc] sm:$0xf] %v2609
        %v2738 = vld [vmem:[#allocation2] sm:$0xf]
        %v2739 = vld [vmem:[#allocation2 + $0x4] sm:$0xf]
        %v2740 = vld [vmem:[#allocation2 + $0x8] sm:$0xf]
        %v2741 = vld [vmem:[#allocation2 + $0xc] sm:$0xf]
        %v2742 = vld [vmem:[#allocation2 + $0x10] sm:$0xf]
        %v2743 = vld [vmem:[#allocation2 + $0x14] sm:$0xf]
        %v2744 = vld [vmem:[#allocation2 + $0x18] sm:$0xf]
        %v2745 = vld [vmem:[#allocation2 + $0x1c] sm:$0xf]
        %v2746 = vld [vmem:[#allocation2 + $0x20] sm:$0xf]
        %v2747 = vld [vmem:[#allocation2 + $0x24] sm:$0xf]
        %v2748 = vld [vmem:[#allocation2 + $0x28] sm:$0xf]
        %v2749 = vld [vmem:[#allocation2 + $0x2c] sm:$0xf]
        %v2750 = vld [vmem:[#allocation2 + $0x30] sm:$0xf]
        %v2751 = vld [vmem:[#allocation2 + $0x34] sm:$0xf]
        %v2752 = vld [vmem:[#allocation2 + $0x38] sm:$0xf]
        %v2753 = vld [vmem:[#allocation2 + $0x3c] sm:$0xf]
        %v2754 = vld [vmem:[#allocation2 + $0x40] sm:$0xf]
        %v2755 = vld [vmem:[#allocation2 + $0x44] sm:$0xf]
        %v2756 = vld [vmem:[#allocation2 + $0x48] sm:$0xf]
        %v2757 = vld [vmem:[#allocation2 + $0x4c] sm:$0xf]
        %v2758 = vld [vmem:[#allocation2 + $0x50] sm:$0xf]
        %v2759 = vld [vmem:[#allocation2 + $0x54] sm:$0xf]
        %v2760 = vld [vmem:[#allocation2 + $0x58] sm:$0xf]
        %v2761 = vld [vmem:[#allocation2 + $0x5c] sm:$0xf]
        %v2762 = vld [vmem:[#allocation2 + $0x60] sm:$0xf]
        %v2763 = vld [vmem:[#allocation2 + $0x64] sm:$0xf]
        %v2764 = vld [vmem:[#allocation2 + $0x68] sm:$0xf]
        %v2765 = vld [vmem:[#allocation2 + $0x6c] sm:$0xf]
        %v2766 = vld [vmem:[#allocation2 + $0x70] sm:$0xf]
        %v2767 = vld [vmem:[#allocation2 + $0x74] sm:$0xf]
        %v2768 = vld [vmem:[#allocation2 + $0x78] sm:$0xf]
        %v2769 = vld [vmem:[#allocation2 + $0x7c] sm:$0xf]
        %v2770 = vld [vmem:[#allocation2 + $0x80] sm:$0xf]
        %v2771 = vld [vmem:[#allocation2 + $0x84] sm:$0xf]
        %v2772 = vld [vmem:[#allocation2 + $0x88] sm:$0xf]
        %v2773 = vld [vmem:[#allocation2 + $0x8c] sm:$0xf]
        %v2774 = vld [vmem:[#allocation2 + $0x90] sm:$0xf]
        %v2775 = vld [vmem:[#allocation2 + $0x94] sm:$0xf]
        %v2776 = vld [vmem:[#allocation2 + $0x98] sm:$0xf]
        %v2777 = vld [vmem:[#allocation2 + $0x9c] sm:$0xf]
        %v2778 = vld [vmem:[#allocation2 + $0xa0] sm:$0xf]
        %v2779 = vld [vmem:[#allocation2 + $0xa4] sm:$0xf]
        %v2780 = vld [vmem:[#allocation2 + $0xa8] sm:$0xf]
        %v2781 = vld [vmem:[#allocation2 + $0xac] sm:$0xf]
        %v2782 = vld [vmem:[#allocation2 + $0xb0] sm:$0xf]
        %v2783 = vld [vmem:[#allocation2 + $0xb4] sm:$0xf]
        %v2784 = vld [vmem:[#allocation2 + $0xb8] sm:$0xf]
        %v2785 = vld [vmem:[#allocation2 + $0xbc] sm:$0xf]
        %v2786 = vld [vmem:[#allocation2 + $0xc0] sm:$0xf]
        %v2787 = vld [vmem:[#allocation2 + $0xc4] sm:$0xf]
        %v2788 = vld [vmem:[#allocation2 + $0xc8] sm:$0xf]
        %v2789 = vld [vmem:[#allocation2 + $0xcc] sm:$0xf]
        %v2790 = vld [vmem:[#allocation2 + $0xd0] sm:$0xf]
        %v2791 = vld [vmem:[#allocation2 + $0xd4] sm:$0xf]
        %v2792 = vld [vmem:[#allocation2 + $0xd8] sm:$0xf]
        %v2793 = vld [vmem:[#allocation2 + $0xdc] sm:$0xf]
        %v2794 = vld [vmem:[#allocation2 + $0xe0] sm:$0xf]
        %v2795 = vld [vmem:[#allocation2 + $0xe4] sm:$0xf]
        %v2796 = vld [vmem:[#allocation2 + $0xe8] sm:$0xf]
        %v2797 = vld [vmem:[#allocation2 + $0xec] sm:$0xf]
        %v2798 = vld [vmem:[#allocation2 + $0xf0] sm:$0xf]
        %v2799 = vld [vmem:[#allocation2 + $0xf4] sm:$0xf]
        %v2800 = vld [vmem:[#allocation2 + $0xf8] sm:$0xf]
        %v2801 = vld [vmem:[#allocation2 + $0xfc] sm:$0xf]
        %v2866 = vunpack.c.l.b16 %v2738
        %v2867 = vunpack.c.l.b16 %v2739
        %v2868 = vunpack.c.l.b16 %v2740
        %v2869 = vunpack.c.l.b16 %v2741
        %v2870 = vunpack.c.l.b16 %v2742
        %v2871 = vunpack.c.l.b16 %v2743
        %v2872 = vunpack.c.l.b16 %v2744
        %v2873 = vunpack.c.l.b16 %v2745
        %v2874 = vunpack.c.l.b16 %v2746
        %v2875 = vunpack.c.l.b16 %v2747
        %v2876 = vunpack.c.l.b16 %v2748
        %v2877 = vunpack.c.l.b16 %v2749
        %v2878 = vunpack.c.l.b16 %v2750
        %v2879 = vunpack.c.l.b16 %v2751
        %v2880 = vunpack.c.l.b16 %v2752
        %v2881 = vunpack.c.l.b16 %v2753
        %v2882 = vunpack.c.l.b16 %v2754
        %v2883 = vunpack.c.l.b16 %v2755
        %v2884 = vunpack.c.l.b16 %v2756
        %v2885 = vunpack.c.l.b16 %v2757
        %v2886 = vunpack.c.l.b16 %v2758
        %v2887 = vunpack.c.l.b16 %v2759
        %v2888 = vunpack.c.l.b16 %v2760
        %v2889 = vunpack.c.l.b16 %v2761
        %v2890 = vunpack.c.l.b16 %v2762
        %v2891 = vunpack.c.l.b16 %v2763
        %v2892 = vunpack.c.l.b16 %v2764
        %v2893 = vunpack.c.l.b16 %v2765
        %v2894 = vunpack.c.l.b16 %v2766
        %v2895 = vunpack.c.l.b16 %v2767
        %v2896 = vunpack.c.l.b16 %v2768
        %v2897 = vunpack.c.l.b16 %v2769
        %v2898 = vunpack.c.l.b16 %v2770
        %v2899 = vunpack.c.l.b16 %v2771
        %v2900 = vunpack.c.l.b16 %v2772
        %v2901 = vunpack.c.l.b16 %v2773
        %v2902 = vunpack.c.l.b16 %v2774
        %v2903 = vunpack.c.l.b16 %v2775
        %v2904 = vunpack.c.l.b16 %v2776
        %v2905 = vunpack.c.l.b16 %v2777
        %v2906 = vunpack.c.l.b16 %v2778
        %v2907 = vunpack.c.l.b16 %v2779
        %v2908 = vunpack.c.l.b16 %v2780
        %v2909 = vunpack.c.l.b16 %v2781
        %v2910 = vunpack.c.l.b16 %v2782
        %v2911 = vunpack.c.l.b16 %v2783
        %v2912 = vunpack.c.l.b16 %v2784
        %v2913 = vunpack.c.l.b16 %v2785
        %v2914 = vunpack.c.l.b16 %v2786
        %v2915 = vunpack.c.l.b16 %v2787
        %v2916 = vunpack.c.l.b16 %v2788
        %v2917 = vunpack.c.l.b16 %v2789
        %v2918 = vunpack.c.l.b16 %v2790
        %v2919 = vunpack.c.l.b16 %v2791
        %v2920 = vunpack.c.l.b16 %v2792
        %v2921 = vunpack.c.l.b16 %v2793
        %v2922 = vunpack.c.l.b16 %v2794
        %v2923 = vunpack.c.l.b16 %v2795
        %v2924 = vunpack.c.l.b16 %v2796
        %v2925 = vunpack.c.l.b16 %v2797
        %v2926 = vunpack.c.l.b16 %v2798
        %v2927 = vunpack.c.l.b16 %v2799
        %v2928 = vunpack.c.l.b16 %v2800
        %v2929 = vunpack.c.l.b16 %v2801
        %v2930 = vpack.c.b16 %v2867, %v2866
        %v2931 = vpack.c.b16 %v2869, %v2868
        %v2932 = vpack.c.b16 %v2871, %v2870
        %v2933 = vpack.c.b16 %v2873, %v2872
        %v2934 = vpack.c.b16 %v2875, %v2874
        %v2935 = vpack.c.b16 %v2877, %v2876
        %v2936 = vpack.c.b16 %v2879, %v2878
        %v2937 = vpack.c.b16 %v2881, %v2880
        %v2938 = vpack.c.b16 %v2883, %v2882
        %v2939 = vpack.c.b16 %v2885, %v2884
        %v2940 = vpack.c.b16 %v2887, %v2886
        %v2941 = vpack.c.b16 %v2889, %v2888
        %v2942 = vpack.c.b16 %v2891, %v2890
        %v2943 = vpack.c.b16 %v2893, %v2892
        %v2944 = vpack.c.b16 %v2895, %v2894
        %v2945 = vpack.c.b16 %v2897, %v2896
        %v2946 = vpack.c.b16 %v2899, %v2898
        %v2947 = vpack.c.b16 %v2901, %v2900
        %v2948 = vpack.c.b16 %v2903, %v2902
        %v2949 = vpack.c.b16 %v2905, %v2904
        %v2950 = vpack.c.b16 %v2907, %v2906
        %v2951 = vpack.c.b16 %v2909, %v2908
        %v2952 = vpack.c.b16 %v2911, %v2910
        %v2953 = vpack.c.b16 %v2913, %v2912
        %v2954 = vpack.c.b16 %v2915, %v2914
        %v2955 = vpack.c.b16 %v2917, %v2916
        %v2956 = vpack.c.b16 %v2919, %v2918
        %v2957 = vpack.c.b16 %v2921, %v2920
        %v2958 = vpack.c.b16 %v2923, %v2922
        %v2959 = vpack.c.b16 %v2925, %v2924
        %v2960 = vpack.c.b16 %v2927, %v2926
        %v2961 = vpack.c.b16 %v2929, %v2928
        %2994 = vst [vmem:[#allocation3] sm:$0xff] %v2930
        %2995 = vst [vmem:[#allocation3 + $0x40] sm:$0xff] %v2931
        %2996 = vst [vmem:[#allocation3 + $0x80] sm:$0xff] %v2932
        %2997 = vst [vmem:[#allocation3 + $0xc0] sm:$0xff] %v2933
        %2998 = vst [vmem:[#allocation3 + $0x100] sm:$0xff] %v2934
        %2999 = vst [vmem:[#allocation3 + $0x140] sm:$0xff] %v2935
        %3000 = vst [vmem:[#allocation3 + $0x180] sm:$0xff] %v2936
        %3001 = vst [vmem:[#allocation3 + $0x1c0] sm:$0xff] %v2937
        %3002 = vst [vmem:[#allocation3 + $0x200] sm:$0xff] %v2938
        %3003 = vst [vmem:[#allocation3 + $0x240] sm:$0xff] %v2939
        %3004 = vst [vmem:[#allocation3 + $0x280] sm:$0xff] %v2940
        %3005 = vst [vmem:[#allocation3 + $0x2c0] sm:$0xff] %v2941
        %3006 = vst [vmem:[#allocation3 + $0x300] sm:$0xff] %v2942
        %3007 = vst [vmem:[#allocation3 + $0x340] sm:$0xff] %v2943
        %3008 = vst [vmem:[#allocation3 + $0x380] sm:$0xff] %v2944
        %3009 = vst [vmem:[#allocation3 + $0x3c0] sm:$0xff] %v2945
        %3010 = vst [vmem:[#allocation3 + $0x400] sm:$0xff] %v2946
        %3011 = vst [vmem:[#allocation3 + $0x440] sm:$0xff] %v2947
        %3012 = vst [vmem:[#allocation3 + $0x480] sm:$0xff] %v2948
        %3013 = vst [vmem:[#allocation3 + $0x4c0] sm:$0xff] %v2949
        %3014 = vst [vmem:[#allocation3 + $0x500] sm:$0xff] %v2950
        %3015 = vst [vmem:[#allocation3 + $0x540] sm:$0xff] %v2951
        %3016 = vst [vmem:[#allocation3 + $0x580] sm:$0xff] %v2952
        %3017 = vst [vmem:[#allocation3 + $0x5c0] sm:$0xff] %v2953
        %3018 = vst [vmem:[#allocation3 + $0x600] sm:$0xff] %v2954
        %3019 = vst [vmem:[#allocation3 + $0x640] sm:$0xff] %v2955
        %3020 = vst [vmem:[#allocation3 + $0x680] sm:$0xff] %v2956
        %3021 = vst [vmem:[#allocation3 + $0x6c0] sm:$0xff] %v2957
        %3022 = vst [vmem:[#allocation3 + $0x700] sm:$0xff] %v2958
        %3023 = vst [vmem:[#allocation3 + $0x740] sm:$0xff] %v2959
        %3024 = vst [vmem:[#allocation3 + $0x780] sm:$0xff] %v2960
        %3025 = vst [vmem:[#allocation3 + $0x7c0] sm:$0xff] %v2961
        %v3026 = vpack.c.b16 %v2866, %v2866
        %v3027 = vpack.c.b16 %v2867, %v2867
        %v3028 = vpack.c.b16 %v2868, %v2868
        %v3029 = vpack.c.b16 %v2869, %v2869
        %v3030 = vpack.c.b16 %v2870, %v2870
        %v3031 = vpack.c.b16 %v2871, %v2871
        %v3032 = vpack.c.b16 %v2872, %v2872
        %v3033 = vpack.c.b16 %v2873, %v2873
        %v3034 = vpack.c.b16 %v2874, %v2874
        %v3035 = vpack.c.b16 %v2875, %v2875
        %v3036 = vpack.c.b16 %v2876, %v2876
        %v3037 = vpack.c.b16 %v2877, %v2877
        %v3038 = vpack.c.b16 %v2878, %v2878
        %v3039 = vpack.c.b16 %v2879, %v2879
        %v3040 = vpack.c.b16 %v2880, %v2880
        %v3041 = vpack.c.b16 %v2881, %v2881
        %v3042 = vpack.c.b16 %v2882, %v2882
        %v3043 = vpack.c.b16 %v2883, %v2883
        %v3044 = vpack.c.b16 %v2884, %v2884
        %v3045 = vpack.c.b16 %v2885, %v2885
        %v3046 = vpack.c.b16 %v2886, %v2886
        %v3047 = vpack.c.b16 %v2887, %v2887
        %v3048 = vpack.c.b16 %v2888, %v2888
        %v3049 = vpack.c.b16 %v2889, %v2889
        %v3050 = vpack.c.b16 %v2890, %v2890
        %v3051 = vpack.c.b16 %v2891, %v2891
        %v3052 = vpack.c.b16 %v2892, %v2892
        %v3053 = vpack.c.b16 %v2893, %v2893
        %v3054 = vpack.c.b16 %v2894, %v2894
        %v3055 = vpack.c.b16 %v2895, %v2895
        %v3056 = vpack.c.b16 %v2896, %v2896
        %v3057 = vpack.c.b16 %v2897, %v2897
        %v3058 = vpack.c.b16 %v2898, %v2898
        %v3059 = vpack.c.b16 %v2899, %v2899
        %v3060 = vpack.c.b16 %v2900, %v2900
        %v3061 = vpack.c.b16 %v2901, %v2901
        %v3062 = vpack.c.b16 %v2902, %v2902
        %v3063 = vpack.c.b16 %v2903, %v2903
        %v3064 = vpack.c.b16 %v2904, %v2904
        %v3065 = vpack.c.b16 %v2905, %v2905
        %v3066 = vpack.c.b16 %v2906, %v2906
        %v3067 = vpack.c.b16 %v2907, %v2907
        %v3068 = vpack.c.b16 %v2908, %v2908
        %v3069 = vpack.c.b16 %v2909, %v2909
        %v3070 = vpack.c.b16 %v2910, %v2910
        %v3071 = vpack.c.b16 %v2911, %v2911
        %v3072 = vpack.c.b16 %v2912, %v2912
        %v3073 = vpack.c.b16 %v2913, %v2913
        %v3074 = vpack.c.b16 %v2914, %v2914
        %v3075 = vpack.c.b16 %v2915, %v2915
        %v3076 = vpack.c.b16 %v2916, %v2916
        %v3077 = vpack.c.b16 %v2917, %v2917
        %v3078 = vpack.c.b16 %v2918, %v2918
        %v3079 = vpack.c.b16 %v2919, %v2919
        %v3080 = vpack.c.b16 %v2920, %v2920
        %v3081 = vpack.c.b16 %v2921, %v2921
        %v3082 = vpack.c.b16 %v2922, %v2922
        %v3083 = vpack.c.b16 %v2923, %v2923
        %v3084 = vpack.c.b16 %v2924, %v2924
        %v3085 = vpack.c.b16 %v2925, %v2925
        %v3086 = vpack.c.b16 %v2926, %v2926
        %v3087 = vpack.c.b16 %v2927, %v2927
        %v3088 = vpack.c.b16 %v2928, %v2928
        %v3089 = vpack.c.b16 %v2929, %v2929
        %v3091 = vshrl.u32 %v3026, 16
        %v3093 = vshll.u32 %v3026, 16
        %v3095 = vrot.slane %v3093, 1
        %v3096 = vor.u32 %v3091, %v3095
        %v3098 = vshrl.u32 %v3027, 16
        %v3100 = vshll.u32 %v3027, 16
        %v3102 = vrot.slane %v3100, 1
        %v3103 = vor.u32 %v3098, %v3102
        %v3105 = vshrl.u32 %v3028, 16
        %v3107 = vshll.u32 %v3028, 16
        %v3109 = vrot.slane %v3107, 1
        %v3110 = vor.u32 %v3105, %v3109
        %v3112 = vshrl.u32 %v3029, 16
        %v3114 = vshll.u32 %v3029, 16
        %v3116 = vrot.slane %v3114, 1
        %v3117 = vor.u32 %v3112, %v3116
        %v3119 = vshrl.u32 %v3030, 16
        %v3121 = vshll.u32 %v3030, 16
        %v3123 = vrot.slane %v3121, 1
        %v3124 = vor.u32 %v3119, %v3123
        %v3126 = vshrl.u32 %v3031, 16
        %v3128 = vshll.u32 %v3031, 16
        %v3130 = vrot.slane %v3128, 1
        %v3131 = vor.u32 %v3126, %v3130
        %v3133 = vshrl.u32 %v3032, 16
        %v3135 = vshll.u32 %v3032, 16
        %v3137 = vrot.slane %v3135, 1
        %v3138 = vor.u32 %v3133, %v3137
        %v3140 = vshrl.u32 %v3033, 16
        %v3142 = vshll.u32 %v3033, 16
        %v3144 = vrot.slane %v3142, 1
        %v3145 = vor.u32 %v3140, %v3144
        %v3147 = vshrl.u32 %v3034, 16
        %v3149 = vshll.u32 %v3034, 16
        %v3151 = vrot.slane %v3149, 1
        %v3152 = vor.u32 %v3147, %v3151
        %v3154 = vshrl.u32 %v3035, 16
        %v3156 = vshll.u32 %v3035, 16
        %v3158 = vrot.slane %v3156, 1
        %v3159 = vor.u32 %v3154, %v3158
        %v3161 = vshrl.u32 %v3036, 16
        %v3163 = vshll.u32 %v3036, 16
        %v3165 = vrot.slane %v3163, 1
        %v3166 = vor.u32 %v3161, %v3165
        %v3168 = vshrl.u32 %v3037, 16
        %v3170 = vshll.u32 %v3037, 16
        %v3172 = vrot.slane %v3170, 1
        %v3173 = vor.u32 %v3168, %v3172
        %v3175 = vshrl.u32 %v3038, 16
        %v3177 = vshll.u32 %v3038, 16
        %v3179 = vrot.slane %v3177, 1
        %v3180 = vor.u32 %v3175, %v3179
        %v3182 = vshrl.u32 %v3039, 16
        %v3184 = vshll.u32 %v3039, 16
        %v3186 = vrot.slane %v3184, 1
        %v3187 = vor.u32 %v3182, %v3186
        %v3189 = vshrl.u32 %v3040, 16
        %v3191 = vshll.u32 %v3040, 16
        %v3193 = vrot.slane %v3191, 1
        %v3194 = vor.u32 %v3189, %v3193
        %v3196 = vshrl.u32 %v3041, 16
        %v3198 = vshll.u32 %v3041, 16
        %v3200 = vrot.slane %v3198, 1
        %v3201 = vor.u32 %v3196, %v3200
        %v3203 = vshrl.u32 %v3042, 16
        %v3205 = vshll.u32 %v3042, 16
        %v3207 = vrot.slane %v3205, 1
        %v3208 = vor.u32 %v3203, %v3207
        %v3210 = vshrl.u32 %v3043, 16
        %v3212 = vshll.u32 %v3043, 16
        %v3214 = vrot.slane %v3212, 1
        %v3215 = vor.u32 %v3210, %v3214
        %v3217 = vshrl.u32 %v3044, 16
        %v3219 = vshll.u32 %v3044, 16
        %v3221 = vrot.slane %v3219, 1
        %v3222 = vor.u32 %v3217, %v3221
        %v3224 = vshrl.u32 %v3045, 16
        %v3226 = vshll.u32 %v3045, 16
        %v3228 = vrot.slane %v3226, 1
        %v3229 = vor.u32 %v3224, %v3228
        %v3231 = vshrl.u32 %v3046, 16
        %v3233 = vshll.u32 %v3046, 16
        %v3235 = vrot.slane %v3233, 1
        %v3236 = vor.u32 %v3231, %v3235
        %v3238 = vshrl.u32 %v3047, 16
        %v3240 = vshll.u32 %v3047, 16
        %v3242 = vrot.slane %v3240, 1
        %v3243 = vor.u32 %v3238, %v3242
        %v3245 = vshrl.u32 %v3048, 16
        %v3247 = vshll.u32 %v3048, 16
        %v3249 = vrot.slane %v3247, 1
        %v3250 = vor.u32 %v3245, %v3249
        %v3252 = vshrl.u32 %v3049, 16
        %v3254 = vshll.u32 %v3049, 16
        %v3256 = vrot.slane %v3254, 1
        %v3257 = vor.u32 %v3252, %v3256
        %v3259 = vshrl.u32 %v3050, 16
        %v3261 = vshll.u32 %v3050, 16
        %v3263 = vrot.slane %v3261, 1
        %v3264 = vor.u32 %v3259, %v3263
        %v3266 = vshrl.u32 %v3051, 16
        %v3268 = vshll.u32 %v3051, 16
        %v3270 = vrot.slane %v3268, 1
        %v3271 = vor.u32 %v3266, %v3270
        %v3273 = vshrl.u32 %v3052, 16
        %v3275 = vshll.u32 %v3052, 16
        %v3277 = vrot.slane %v3275, 1
        %v3278 = vor.u32 %v3273, %v3277
        %v3280 = vshrl.u32 %v3053, 16
        %v3282 = vshll.u32 %v3053, 16
        %v3284 = vrot.slane %v3282, 1
        %v3285 = vor.u32 %v3280, %v3284
        %v3287 = vshrl.u32 %v3054, 16
        %v3289 = vshll.u32 %v3054, 16
        %v3291 = vrot.slane %v3289, 1
        %v3292 = vor.u32 %v3287, %v3291
        %v3294 = vshrl.u32 %v3055, 16
        %v3296 = vshll.u32 %v3055, 16
        %v3298 = vrot.slane %v3296, 1
        %v3299 = vor.u32 %v3294, %v3298
        %v3301 = vshrl.u32 %v3056, 16
        %v3303 = vshll.u32 %v3056, 16
        %v3305 = vrot.slane %v3303, 1
        %v3306 = vor.u32 %v3301, %v3305
        %v3308 = vshrl.u32 %v3057, 16
        %v3310 = vshll.u32 %v3057, 16
        %v3312 = vrot.slane %v3310, 1
        %v3313 = vor.u32 %v3308, %v3312
        %v3315 = vshrl.u32 %v3058, 16
        %v3317 = vshll.u32 %v3058, 16
        %v3319 = vrot.slane %v3317, 1
        %v3320 = vor.u32 %v3315, %v3319
        %v3322 = vshrl.u32 %v3059, 16
        %v3324 = vshll.u32 %v3059, 16
        %v3326 = vrot.slane %v3324, 1
        %v3327 = vor.u32 %v3322, %v3326
        %v3329 = vshrl.u32 %v3060, 16
        %v3331 = vshll.u32 %v3060, 16
        %v3333 = vrot.slane %v3331, 1
        %v3334 = vor.u32 %v3329, %v3333
        %v3336 = vshrl.u32 %v3061, 16
        %v3338 = vshll.u32 %v3061, 16
        %v3340 = vrot.slane %v3338, 1
        %v3341 = vor.u32 %v3336, %v3340
        %v3343 = vshrl.u32 %v3062, 16
        %v3345 = vshll.u32 %v3062, 16
        %v3347 = vrot.slane %v3345, 1
        %v3348 = vor.u32 %v3343, %v3347
        %v3350 = vshrl.u32 %v3063, 16
        %v3352 = vshll.u32 %v3063, 16
        %v3354 = vrot.slane %v3352, 1
        %v3355 = vor.u32 %v3350, %v3354
        %v3357 = vshrl.u32 %v3064, 16
        %v3359 = vshll.u32 %v3064, 16
        %v3361 = vrot.slane %v3359, 1
        %v3362 = vor.u32 %v3357, %v3361
        %v3364 = vshrl.u32 %v3065, 16
        %v3366 = vshll.u32 %v3065, 16
        %v3368 = vrot.slane %v3366, 1
        %v3369 = vor.u32 %v3364, %v3368
        %v3371 = vshrl.u32 %v3066, 16
        %v3373 = vshll.u32 %v3066, 16
        %v3375 = vrot.slane %v3373, 1
        %v3376 = vor.u32 %v3371, %v3375
        %v3378 = vshrl.u32 %v3067, 16
        %v3380 = vshll.u32 %v3067, 16
        %v3382 = vrot.slane %v3380, 1
        %v3383 = vor.u32 %v3378, %v3382
        %v3385 = vshrl.u32 %v3068, 16
        %v3387 = vshll.u32 %v3068, 16
        %v3389 = vrot.slane %v3387, 1
        %v3390 = vor.u32 %v3385, %v3389
        %v3392 = vshrl.u32 %v3069, 16
        %v3394 = vshll.u32 %v3069, 16
        %v3396 = vrot.slane %v3394, 1
        %v3397 = vor.u32 %v3392, %v3396
        %v3399 = vshrl.u32 %v3070, 16
        %v3401 = vshll.u32 %v3070, 16
        %v3403 = vrot.slane %v3401, 1
        %v3404 = vor.u32 %v3399, %v3403
        %v3406 = vshrl.u32 %v3071, 16
        %v3408 = vshll.u32 %v3071, 16
        %v3410 = vrot.slane %v3408, 1
        %v3411 = vor.u32 %v3406, %v3410
        %v3413 = vshrl.u32 %v3072, 16
        %v3415 = vshll.u32 %v3072, 16
        %v3417 = vrot.slane %v3415, 1
        %v3418 = vor.u32 %v3413, %v3417
        %v3420 = vshrl.u32 %v3073, 16
        %v3422 = vshll.u32 %v3073, 16
        %v3424 = vrot.slane %v3422, 1
        %v3425 = vor.u32 %v3420, %v3424
        %v3427 = vshrl.u32 %v3074, 16
        %v3429 = vshll.u32 %v3074, 16
        %v3431 = vrot.slane %v3429, 1
        %v3432 = vor.u32 %v3427, %v3431
        %v3434 = vshrl.u32 %v3075, 16
        %v3436 = vshll.u32 %v3075, 16
        %v3438 = vrot.slane %v3436, 1
        %v3439 = vor.u32 %v3434, %v3438
        %v3441 = vshrl.u32 %v3076, 16
        %v3443 = vshll.u32 %v3076, 16
        %v3445 = vrot.slane %v3443, 1
        %v3446 = vor.u32 %v3441, %v3445
        %v3448 = vshrl.u32 %v3077, 16
        %v3450 = vshll.u32 %v3077, 16
        %v3452 = vrot.slane %v3450, 1
        %v3453 = vor.u32 %v3448, %v3452
        %v3455 = vshrl.u32 %v3078, 16
        %v3457 = vshll.u32 %v3078, 16
        %v3459 = vrot.slane %v3457, 1
        %v3460 = vor.u32 %v3455, %v3459
        %v3462 = vshrl.u32 %v3079, 16
        %v3464 = vshll.u32 %v3079, 16
        %v3466 = vrot.slane %v3464, 1
        %v3467 = vor.u32 %v3462, %v3466
        %v3469 = vshrl.u32 %v3080, 16
        %v3471 = vshll.u32 %v3080, 16
        %v3473 = vrot.slane %v3471, 1
        %v3474 = vor.u32 %v3469, %v3473
        %v3476 = vshrl.u32 %v3081, 16
        %v3478 = vshll.u32 %v3081, 16
        %v3480 = vrot.slane %v3478, 1
        %v3481 = vor.u32 %v3476, %v3480
        %v3483 = vshrl.u32 %v3082, 16
        %v3485 = vshll.u32 %v3082, 16
        %v3487 = vrot.slane %v3485, 1
        %v3488 = vor.u32 %v3483, %v3487
        %v3490 = vshrl.u32 %v3083, 16
        %v3492 = vshll.u32 %v3083, 16
        %v3494 = vrot.slane %v3492, 1
        %v3495 = vor.u32 %v3490, %v3494
        %v3497 = vshrl.u32 %v3084, 16
        %v3499 = vshll.u32 %v3084, 16
        %v3501 = vrot.slane %v3499, 1
        %v3502 = vor.u32 %v3497, %v3501
        %v3504 = vshrl.u32 %v3085, 16
        %v3506 = vshll.u32 %v3085, 16
        %v3508 = vrot.slane %v3506, 1
        %v3509 = vor.u32 %v3504, %v3508
        %v3511 = vshrl.u32 %v3086, 16
        %v3513 = vshll.u32 %v3086, 16
        %v3515 = vrot.slane %v3513, 1
        %v3516 = vor.u32 %v3511, %v3515
        %v3518 = vshrl.u32 %v3087, 16
        %v3520 = vshll.u32 %v3087, 16
        %v3522 = vrot.slane %v3520, 1
        %v3523 = vor.u32 %v3518, %v3522
        %v3525 = vshrl.u32 %v3088, 16
        %v3527 = vshll.u32 %v3088, 16
        %v3529 = vrot.slane %v3527, 1
        %v3530 = vor.u32 %v3525, %v3529
        %v3532 = vshrl.u32 %v3089, 16
        %v3534 = vshll.u32 %v3089, 16
        %v3536 = vrot.slane %v3534, 1
        %v3537 = vor.u32 %v3532, %v3536
        %v3602 = vrot.slane %v3093, 5
        %v3603 = vrot.slane %v3100, 5
        %v3604 = vrot.slane %v3107, 5
        %v3605 = vrot.slane %v3114, 5
        %v3606 = vrot.slane %v3121, 5
        %v3607 = vrot.slane %v3128, 5
        %v3608 = vrot.slane %v3135, 5
        %v3609 = vrot.slane %v3142, 5
        %v3610 = vrot.slane %v3149, 5
        %v3611 = vrot.slane %v3156, 5
        %v3612 = vrot.slane %v3163, 5
        %v3613 = vrot.slane %v3170, 5
        %v3614 = vrot.slane %v3177, 5
        %v3615 = vrot.slane %v3184, 5
        %v3616 = vrot.slane %v3191, 5
        %v3617 = vrot.slane %v3198, 5
        %v3618 = vrot.slane %v3205, 5
        %v3619 = vrot.slane %v3212, 5
        %v3620 = vrot.slane %v3219, 5
        %v3621 = vrot.slane %v3226, 5
        %v3622 = vrot.slane %v3233, 5
        %v3623 = vrot.slane %v3240, 5
        %v3624 = vrot.slane %v3247, 5
        %v3625 = vrot.slane %v3254, 5
        %v3626 = vrot.slane %v3261, 5
        %v3627 = vrot.slane %v3268, 5
        %v3628 = vrot.slane %v3275, 5
        %v3629 = vrot.slane %v3282, 5
        %v3630 = vrot.slane %v3289, 5
        %v3631 = vrot.slane %v3296, 5
        %v3632 = vrot.slane %v3303, 5
        %v3633 = vrot.slane %v3310, 5
        %v3634 = vrot.slane %v3317, 5
        %v3635 = vrot.slane %v3324, 5
        %v3636 = vrot.slane %v3331, 5
        %v3637 = vrot.slane %v3338, 5
        %v3638 = vrot.slane %v3345, 5
        %v3639 = vrot.slane %v3352, 5
        %v3640 = vrot.slane %v3359, 5
        %v3641 = vrot.slane %v3366, 5
        %v3642 = vrot.slane %v3373, 5
        %v3643 = vrot.slane %v3380, 5
        %v3644 = vrot.slane %v3387, 5
        %v3645 = vrot.slane %v3394, 5
        %v3646 = vrot.slane %v3401, 5
        %v3647 = vrot.slane %v3408, 5
        %v3648 = vrot.slane %v3415, 5
        %v3649 = vrot.slane %v3422, 5
        %v3650 = vrot.slane %v3429, 5
        %v3651 = vrot.slane %v3436, 5
        %v3652 = vrot.slane %v3443, 5
        %v3653 = vrot.slane %v3450, 5
        %v3654 = vrot.slane %v3457, 5
        %v3655 = vrot.slane %v3464, 5
        %v3656 = vrot.slane %v3471, 5
        %v3657 = vrot.slane %v3478, 5
        %v3658 = vrot.slane %v3485, 5
        %v3659 = vrot.slane %v3492, 5
        %v3660 = vrot.slane %v3499, 5
        %v3661 = vrot.slane %v3506, 5
        %v3662 = vrot.slane %v3513, 5
        %v3663 = vrot.slane %v3520, 5
        %v3664 = vrot.slane %v3527, 5
        %v3665 = vrot.slane %v3534, 5
        %vm3730 = vcmask 1043456
        %vm3731 = vsmask.f32 3328
        %vm3732 = vmand %vm3730, %vm3731
        %v3733 = vsel %vm3732, %v3096, %v3602
        %v3734 = vsel %vm3732, %v3103, %v3603
        %v3735 = vsel %vm3732, %v3110, %v3604
        %v3736 = vsel %vm3732, %v3117, %v3605
        %v3737 = vsel %vm3732, %v3124, %v3606
        %v3738 = vsel %vm3732, %v3131, %v3607
        %v3739 = vsel %vm3732, %v3138, %v3608
        %v3740 = vsel %vm3732, %v3145, %v3609
        %v3741 = vsel %vm3732, %v3152, %v3610
        %v3742 = vsel %vm3732, %v3159, %v3611
        %v3743 = vsel %vm3732, %v3166, %v3612
        %v3744 = vsel %vm3732, %v3173, %v3613
        %v3745 = vsel %vm3732, %v3180, %v3614
        %v3746 = vsel %vm3732, %v3187, %v3615
        %v3747 = vsel %vm3732, %v3194, %v3616
        %v3748 = vsel %vm3732, %v3201, %v3617
        %v3749 = vsel %vm3732, %v3208, %v3618
        %v3750 = vsel %vm3732, %v3215, %v3619
        %v3751 = vsel %vm3732, %v3222, %v3620
        %v3752 = vsel %vm3732, %v3229, %v3621
        %v3753 = vsel %vm3732, %v3236, %v3622
        %v3754 = vsel %vm3732, %v3243, %v3623
        %v3755 = vsel %vm3732, %v3250, %v3624
        %v3756 = vsel %vm3732, %v3257, %v3625
        %v3757 = vsel %vm3732, %v3264, %v3626
        %v3758 = vsel %vm3732, %v3271, %v3627
        %v3759 = vsel %vm3732, %v3278, %v3628
        %v3760 = vsel %vm3732, %v3285, %v3629
        %v3761 = vsel %vm3732, %v3292, %v3630
        %v3762 = vsel %vm3732, %v3299, %v3631
        %v3763 = vsel %vm3732, %v3306, %v3632
        %v3764 = vsel %vm3732, %v3313, %v3633
        %v3765 = vsel %vm3732, %v3320, %v3634
        %v3766 = vsel %vm3732, %v3327, %v3635
        %v3767 = vsel %vm3732, %v3334, %v3636
        %v3768 = vsel %vm3732, %v3341, %v3637
        %v3769 = vsel %vm3732, %v3348, %v3638
        %v3770 = vsel %vm3732, %v3355, %v3639
        %v3771 = vsel %vm3732, %v3362, %v3640
        %v3772 = vsel %vm3732, %v3369, %v3641
        %v3773 = vsel %vm3732, %v3376, %v3642
        %v3774 = vsel %vm3732, %v3383, %v3643
        %v3775 = vsel %vm3732, %v3390, %v3644
        %v3776 = vsel %vm3732, %v3397, %v3645
        %v3777 = vsel %vm3732, %v3404, %v3646
        %v3778 = vsel %vm3732, %v3411, %v3647
        %v3779 = vsel %vm3732, %v3418, %v3648
        %v3780 = vsel %vm3732, %v3425, %v3649
        %v3781 = vsel %vm3732, %v3432, %v3650
        %v3782 = vsel %vm3732, %v3439, %v3651
        %v3783 = vsel %vm3732, %v3446, %v3652
        %v3784 = vsel %vm3732, %v3453, %v3653
        %v3785 = vsel %vm3732, %v3460, %v3654
        %v3786 = vsel %vm3732, %v3467, %v3655
        %v3787 = vsel %vm3732, %v3474, %v3656
        %v3788 = vsel %vm3732, %v3481, %v3657
        %v3789 = vsel %vm3732, %v3488, %v3658
        %v3790 = vsel %vm3732, %v3495, %v3659
        %v3791 = vsel %vm3732, %v3502, %v3660
        %v3792 = vsel %vm3732, %v3509, %v3661
        %v3793 = vsel %vm3732, %v3516, %v3662
        %v3794 = vsel %vm3732, %v3523, %v3663
        %v3795 = vsel %vm3732, %v3530, %v3664
        %v3796 = vsel %vm3732, %v3537, %v3665
        %v3861 = vunpack.c.l.b16 %v3733
        %v3862 = vunpack.c.l.b16 %v3734
        %v3863 = vunpack.c.l.b16 %v3735
        %v3864 = vunpack.c.l.b16 %v3736
        %v3865 = vunpack.c.l.b16 %v3737
        %v3866 = vunpack.c.l.b16 %v3738
        %v3867 = vunpack.c.l.b16 %v3739
        %v3868 = vunpack.c.l.b16 %v3740
        %v3869 = vunpack.c.l.b16 %v3741
        %v3870 = vunpack.c.l.b16 %v3742
        %v3871 = vunpack.c.l.b16 %v3743
        %v3872 = vunpack.c.l.b16 %v3744
        %v3873 = vunpack.c.l.b16 %v3745
        %v3874 = vunpack.c.l.b16 %v3746
        %v3875 = vunpack.c.l.b16 %v3747
        %v3876 = vunpack.c.l.b16 %v3748
        %v3877 = vunpack.c.l.b16 %v3749
        %v3878 = vunpack.c.l.b16 %v3750
        %v3879 = vunpack.c.l.b16 %v3751
        %v3880 = vunpack.c.l.b16 %v3752
        %v3881 = vunpack.c.l.b16 %v3753
        %v3882 = vunpack.c.l.b16 %v3754
        %v3883 = vunpack.c.l.b16 %v3755
        %v3884 = vunpack.c.l.b16 %v3756
        %v3885 = vunpack.c.l.b16 %v3757
        %v3886 = vunpack.c.l.b16 %v3758
        %v3887 = vunpack.c.l.b16 %v3759
        %v3888 = vunpack.c.l.b16 %v3760
        %v3889 = vunpack.c.l.b16 %v3761
        %v3890 = vunpack.c.l.b16 %v3762
        %v3891 = vunpack.c.l.b16 %v3763
        %v3892 = vunpack.c.l.b16 %v3764
        %v3893 = vunpack.c.l.b16 %v3765
        %v3894 = vunpack.c.l.b16 %v3766
        %v3895 = vunpack.c.l.b16 %v3767
        %v3896 = vunpack.c.l.b16 %v3768
        %v3897 = vunpack.c.l.b16 %v3769
        %v3898 = vunpack.c.l.b16 %v3770
        %v3899 = vunpack.c.l.b16 %v3771
        %v3900 = vunpack.c.l.b16 %v3772
        %v3901 = vunpack.c.l.b16 %v3773
        %v3902 = vunpack.c.l.b16 %v3774
        %v3903 = vunpack.c.l.b16 %v3775
        %v3904 = vunpack.c.l.b16 %v3776
        %v3905 = vunpack.c.l.b16 %v3777
        %v3906 = vunpack.c.l.b16 %v3778
        %v3907 = vunpack.c.l.b16 %v3779
        %v3908 = vunpack.c.l.b16 %v3780
        %v3909 = vunpack.c.l.b16 %v3781
        %v3910 = vunpack.c.l.b16 %v3782
        %v3911 = vunpack.c.l.b16 %v3783
        %v3912 = vunpack.c.l.b16 %v3784
        %v3913 = vunpack.c.l.b16 %v3785
        %v3914 = vunpack.c.l.b16 %v3786
        %v3915 = vunpack.c.l.b16 %v3787
        %v3916 = vunpack.c.l.b16 %v3788
        %v3917 = vunpack.c.l.b16 %v3789
        %v3918 = vunpack.c.l.b16 %v3790
        %v3919 = vunpack.c.l.b16 %v3791
        %v3920 = vunpack.c.l.b16 %v3792
        %v3921 = vunpack.c.l.b16 %v3793
        %v3922 = vunpack.c.l.b16 %v3794
        %v3923 = vunpack.c.l.b16 %v3795
        %v3924 = vunpack.c.l.b16 %v3796
        %v3925 = vpack.c.b16 %v3862, %v3861
        %v3926 = vpack.c.b16 %v3864, %v3863
        %v3927 = vpack.c.b16 %v3866, %v3865
        %v3928 = vpack.c.b16 %v3868, %v3867
        %v3929 = vpack.c.b16 %v3870, %v3869
        %v3930 = vpack.c.b16 %v3872, %v3871
        %v3931 = vpack.c.b16 %v3874, %v3873
        %v3932 = vpack.c.b16 %v3876, %v3875
        %v3933 = vpack.c.b16 %v3878, %v3877
        %v3934 = vpack.c.b16 %v3880, %v3879
        %v3935 = vpack.c.b16 %v3882, %v3881
        %v3936 = vpack.c.b16 %v3884, %v3883
        %v3937 = vpack.c.b16 %v3886, %v3885
        %v3938 = vpack.c.b16 %v3888, %v3887
        %v3939 = vpack.c.b16 %v3890, %v3889
        %v3940 = vpack.c.b16 %v3892, %v3891
        %v3941 = vpack.c.b16 %v3894, %v3893
        %v3942 = vpack.c.b16 %v3896, %v3895
        %v3943 = vpack.c.b16 %v3898, %v3897
        %v3944 = vpack.c.b16 %v3900, %v3899
        %v3945 = vpack.c.b16 %v3902, %v3901
        %v3946 = vpack.c.b16 %v3904, %v3903
        %v3947 = vpack.c.b16 %v3906, %v3905
        %v3948 = vpack.c.b16 %v3908, %v3907
        %v3949 = vpack.c.b16 %v3910, %v3909
        %v3950 = vpack.c.b16 %v3912, %v3911
        %v3951 = vpack.c.b16 %v3914, %v3913
        %v3952 = vpack.c.b16 %v3916, %v3915
        %v3953 = vpack.c.b16 %v3918, %v3917
        %v3954 = vpack.c.b16 %v3920, %v3919
        %v3955 = vpack.c.b16 %v3922, %v3921
        %v3956 = vpack.c.b16 %v3924, %v3923
        %3989 = vst [vmem:[#allocation3 + $0x8] sm:$0xff] %v3925
        %3990 = vst [vmem:[#allocation3 + $0x48] sm:$0xff] %v3926
        %3991 = vst [vmem:[#allocation3 + $0x88] sm:$0xff] %v3927
        %3992 = vst [vmem:[#allocation3 + $0xc8] sm:$0xff] %v3928
        %3993 = vst [vmem:[#allocation3 + $0x108] sm:$0xff] %v3929
        %3994 = vst [vmem:[#allocation3 + $0x148] sm:$0xff] %v3930
        %3995 = vst [vmem:[#allocation3 + $0x188] sm:$0xff] %v3931
        %3996 = vst [vmem:[#allocation3 + $0x1c8] sm:$0xff] %v3932
        %3997 = vst [vmem:[#allocation3 + $0x208] sm:$0xff] %v3933
        %3998 = vst [vmem:[#allocation3 + $0x248] sm:$0xff] %v3934
        %3999 = vst [vmem:[#allocation3 + $0x288] sm:$0xff] %v3935
        %4000 = vst [vmem:[#allocation3 + $0x2c8] sm:$0xff] %v3936
        %4001 = vst [vmem:[#allocation3 + $0x308] sm:$0xff] %v3937
        %4002 = vst [vmem:[#allocation3 + $0x348] sm:$0xff] %v3938
        %4003 = vst [vmem:[#allocation3 + $0x388] sm:$0xff] %v3939
        %4004 = vst [vmem:[#allocation3 + $0x3c8] sm:$0xff] %v3940
        %4005 = vst [vmem:[#allocation3 + $0x408] sm:$0xff] %v3941
        %4006 = vst [vmem:[#allocation3 + $0x448] sm:$0xff] %v3942
        %4007 = vst [vmem:[#allocation3 + $0x488] sm:$0xff] %v3943
        %4008 = vst [vmem:[#allocation3 + $0x4c8] sm:$0xff] %v3944
        %4009 = vst [vmem:[#allocation3 + $0x508] sm:$0xff] %v3945
        %4010 = vst [vmem:[#allocation3 + $0x548] sm:$0xff] %v3946
        %4011 = vst [vmem:[#allocation3 + $0x588] sm:$0xff] %v3947
        %4012 = vst [vmem:[#allocation3 + $0x5c8] sm:$0xff] %v3948
        %4013 = vst [vmem:[#allocation3 + $0x608] sm:$0xff] %v3949
        %4014 = vst [vmem:[#allocation3 + $0x648] sm:$0xff] %v3950
        %4015 = vst [vmem:[#allocation3 + $0x688] sm:$0xff] %v3951
        %4016 = vst [vmem:[#allocation3 + $0x6c8] sm:$0xff] %v3952
        %4017 = vst [vmem:[#allocation3 + $0x708] sm:$0xff] %v3953
        %4018 = vst [vmem:[#allocation3 + $0x748] sm:$0xff] %v3954
        %4019 = vst [vmem:[#allocation3 + $0x788] sm:$0xff] %v3955
        %4020 = vst [vmem:[#allocation3 + $0x7c8] sm:$0xff] %v3956
        %s4021 = scalar_lea.vmem [#allocation2], 256
        %v4022 = vld [vmem:[%s4021] sm:$0xf]
        %v4023 = vld [vmem:[%s4021 + $0x4] sm:$0xf]
        %v4024 = vld [vmem:[%s4021 + $0x8] sm:$0xf]
        %v4025 = vld [vmem:[%s4021 + $0xc] sm:$0xf]
        %v4026 = vld [vmem:[%s4021 + $0x10] sm:$0xf]
        %v4027 = vld [vmem:[%s4021 + $0x14] sm:$0xf]
        %v4028 = vld [vmem:[%s4021 + $0x18] sm:$0xf]
        %v4029 = vld [vmem:[%s4021 + $0x1c] sm:$0xf]
        %v4030 = vld [vmem:[%s4021 + $0x20] sm:$0xf]
        %v4031 = vld [vmem:[%s4021 + $0x24] sm:$0xf]
        %v4032 = vld [vmem:[%s4021 + $0x28] sm:$0xf]
        %v4033 = vld [vmem:[%s4021 + $0x2c] sm:$0xf]
        %v4034 = vld [vmem:[%s4021 + $0x30] sm:$0xf]
        %v4035 = vld [vmem:[%s4021 + $0x34] sm:$0xf]
        %v4036 = vld [vmem:[%s4021 + $0x38] sm:$0xf]
        %v4037 = vld [vmem:[%s4021 + $0x3c] sm:$0xf]
        %v4038 = vld [vmem:[%s4021 + $0x40] sm:$0xf]
        %v4039 = vld [vmem:[%s4021 + $0x44] sm:$0xf]
        %v4040 = vld [vmem:[%s4021 + $0x48] sm:$0xf]
        %v4041 = vld [vmem:[%s4021 + $0x4c] sm:$0xf]
        %v4042 = vld [vmem:[%s4021 + $0x50] sm:$0xf]
        %v4043 = vld [vmem:[%s4021 + $0x54] sm:$0xf]
        %v4044 = vld [vmem:[%s4021 + $0x58] sm:$0xf]
        %v4045 = vld [vmem:[%s4021 + $0x5c] sm:$0xf]
        %v4046 = vld [vmem:[%s4021 + $0x60] sm:$0xf]
        %v4047 = vld [vmem:[%s4021 + $0x64] sm:$0xf]
        %v4048 = vld [vmem:[%s4021 + $0x68] sm:$0xf]
        %v4049 = vld [vmem:[%s4021 + $0x6c] sm:$0xf]
        %v4050 = vld [vmem:[%s4021 + $0x70] sm:$0xf]
        %v4051 = vld [vmem:[%s4021 + $0x74] sm:$0xf]
        %v4052 = vld [vmem:[%s4021 + $0x78] sm:$0xf]
        %v4053 = vld [vmem:[%s4021 + $0x7c] sm:$0xf]
        %v4054 = vld [vmem:[%s4021 + $0x80] sm:$0xf]
        %v4055 = vld [vmem:[%s4021 + $0x84] sm:$0xf]
        %v4056 = vld [vmem:[%s4021 + $0x88] sm:$0xf]
        %v4057 = vld [vmem:[%s4021 + $0x8c] sm:$0xf]
        %v4058 = vld [vmem:[%s4021 + $0x90] sm:$0xf]
        %v4059 = vld [vmem:[%s4021 + $0x94] sm:$0xf]
        %v4060 = vld [vmem:[%s4021 + $0x98] sm:$0xf]
        %v4061 = vld [vmem:[%s4021 + $0x9c] sm:$0xf]
        %v4062 = vld [vmem:[%s4021 + $0xa0] sm:$0xf]
        %v4063 = vld [vmem:[%s4021 + $0xa4] sm:$0xf]
        %v4064 = vld [vmem:[%s4021 + $0xa8] sm:$0xf]
        %v4065 = vld [vmem:[%s4021 + $0xac] sm:$0xf]
        %v4066 = vld [vmem:[%s4021 + $0xb0] sm:$0xf]
        %v4067 = vld [vmem:[%s4021 + $0xb4] sm:$0xf]
        %v4068 = vld [vmem:[%s4021 + $0xb8] sm:$0xf]
        %v4069 = vld [vmem:[%s4021 + $0xbc] sm:$0xf]
        %v4070 = vld [vmem:[%s4021 + $0xc0] sm:$0xf]
        %v4071 = vld [vmem:[%s4021 + $0xc4] sm:$0xf]
        %v4072 = vld [vmem:[%s4021 + $0xc8] sm:$0xf]
        %v4073 = vld [vmem:[%s4021 + $0xcc] sm:$0xf]
        %v4074 = vld [vmem:[%s4021 + $0xd0] sm:$0xf]
        %v4075 = vld [vmem:[%s4021 + $0xd4] sm:$0xf]
        %v4076 = vld [vmem:[%s4021 + $0xd8] sm:$0xf]
        %v4077 = vld [vmem:[%s4021 + $0xdc] sm:$0xf]
        %v4078 = vld [vmem:[%s4021 + $0xe0] sm:$0xf]
        %v4079 = vld [vmem:[%s4021 + $0xe4] sm:$0xf]
        %v4080 = vld [vmem:[%s4021 + $0xe8] sm:$0xf]
        %v4081 = vld [vmem:[%s4021 + $0xec] sm:$0xf]
        %v4082 = vld [vmem:[%s4021 + $0xf0] sm:$0xf]
        %v4083 = vld [vmem:[%s4021 + $0xf4] sm:$0xf]
        %v4084 = vld [vmem:[%s4021 + $0xf8] sm:$0xf]
        %v4085 = vld [vmem:[%s4021 + $0xfc] sm:$0xf]
        %v4150 = vunpack.c.l.b16 %v4022
        %v4151 = vunpack.c.l.b16 %v4023
        %v4152 = vunpack.c.l.b16 %v4024
        %v4153 = vunpack.c.l.b16 %v4025
        %v4154 = vunpack.c.l.b16 %v4026
        %v4155 = vunpack.c.l.b16 %v4027
        %v4156 = vunpack.c.l.b16 %v4028
        %v4157 = vunpack.c.l.b16 %v4029
        %v4158 = vunpack.c.l.b16 %v4030
        %v4159 = vunpack.c.l.b16 %v4031
        %v4160 = vunpack.c.l.b16 %v4032
        %v4161 = vunpack.c.l.b16 %v4033
        %v4162 = vunpack.c.l.b16 %v4034
        %v4163 = vunpack.c.l.b16 %v4035
        %v4164 = vunpack.c.l.b16 %v4036
        %v4165 = vunpack.c.l.b16 %v4037
        %v4166 = vunpack.c.l.b16 %v4038
        %v4167 = vunpack.c.l.b16 %v4039
        %v4168 = vunpack.c.l.b16 %v4040
        %v4169 = vunpack.c.l.b16 %v4041
        %v4170 = vunpack.c.l.b16 %v4042
        %v4171 = vunpack.c.l.b16 %v4043
        %v4172 = vunpack.c.l.b16 %v4044
        %v4173 = vunpack.c.l.b16 %v4045
        %v4174 = vunpack.c.l.b16 %v4046
        %v4175 = vunpack.c.l.b16 %v4047
        %v4176 = vunpack.c.l.b16 %v4048
        %v4177 = vunpack.c.l.b16 %v4049
        %v4178 = vunpack.c.l.b16 %v4050
        %v4179 = vunpack.c.l.b16 %v4051
        %v4180 = vunpack.c.l.b16 %v4052
        %v4181 = vunpack.c.l.b16 %v4053
        %v4182 = vunpack.c.l.b16 %v4054
        %v4183 = vunpack.c.l.b16 %v4055
        %v4184 = vunpack.c.l.b16 %v4056
        %v4185 = vunpack.c.l.b16 %v4057
        %v4186 = vunpack.c.l.b16 %v4058
        %v4187 = vunpack.c.l.b16 %v4059
        %v4188 = vunpack.c.l.b16 %v4060
        %v4189 = vunpack.c.l.b16 %v4061
        %v4190 = vunpack.c.l.b16 %v4062
        %v4191 = vunpack.c.l.b16 %v4063
        %v4192 = vunpack.c.l.b16 %v4064
        %v4193 = vunpack.c.l.b16 %v4065
        %v4194 = vunpack.c.l.b16 %v4066
        %v4195 = vunpack.c.l.b16 %v4067
        %v4196 = vunpack.c.l.b16 %v4068
        %v4197 = vunpack.c.l.b16 %v4069
        %v4198 = vunpack.c.l.b16 %v4070
        %v4199 = vunpack.c.l.b16 %v4071
        %v4200 = vunpack.c.l.b16 %v4072
        %v4201 = vunpack.c.l.b16 %v4073
        %v4202 = vunpack.c.l.b16 %v4074
        %v4203 = vunpack.c.l.b16 %v4075
        %v4204 = vunpack.c.l.b16 %v4076
        %v4205 = vunpack.c.l.b16 %v4077
        %v4206 = vunpack.c.l.b16 %v4078
        %v4207 = vunpack.c.l.b16 %v4079
        %v4208 = vunpack.c.l.b16 %v4080
        %v4209 = vunpack.c.l.b16 %v4081
        %v4210 = vunpack.c.l.b16 %v4082
        %v4211 = vunpack.c.l.b16 %v4083
        %v4212 = vunpack.c.l.b16 %v4084
        %v4213 = vunpack.c.l.b16 %v4085
        %v4214 = vpack.c.b16 %v4151, %v4150
        %v4215 = vpack.c.b16 %v4153, %v4152
        %v4216 = vpack.c.b16 %v4155, %v4154
        %v4217 = vpack.c.b16 %v4157, %v4156
        %v4218 = vpack.c.b16 %v4159, %v4158
        %v4219 = vpack.c.b16 %v4161, %v4160
        %v4220 = vpack.c.b16 %v4163, %v4162
        %v4221 = vpack.c.b16 %v4165, %v4164
        %v4222 = vpack.c.b16 %v4167, %v4166
        %v4223 = vpack.c.b16 %v4169, %v4168
        %v4224 = vpack.c.b16 %v4171, %v4170
        %v4225 = vpack.c.b16 %v4173, %v4172
        %v4226 = vpack.c.b16 %v4175, %v4174
        %v4227 = vpack.c.b16 %v4177, %v4176
        %v4228 = vpack.c.b16 %v4179, %v4178
        %v4229 = vpack.c.b16 %v4181, %v4180
        %v4230 = vpack.c.b16 %v4183, %v4182
        %v4231 = vpack.c.b16 %v4185, %v4184
        %v4232 = vpack.c.b16 %v4187, %v4186
        %v4233 = vpack.c.b16 %v4189, %v4188
        %v4234 = vpack.c.b16 %v4191, %v4190
        %v4235 = vpack.c.b16 %v4193, %v4192
        %v4236 = vpack.c.b16 %v4195, %v4194
        %v4237 = vpack.c.b16 %v4197, %v4196
        %v4238 = vpack.c.b16 %v4199, %v4198
        %v4239 = vpack.c.b16 %v4201, %v4200
        %v4240 = vpack.c.b16 %v4203, %v4202
        %v4241 = vpack.c.b16 %v4205, %v4204
        %v4242 = vpack.c.b16 %v4207, %v4206
        %v4243 = vpack.c.b16 %v4209, %v4208
        %v4244 = vpack.c.b16 %v4211, %v4210
        %v4245 = vpack.c.b16 %v4213, %v4212
        %4278 = vst [vmem:[#allocation3 + $0x10] sm:$0xff] %v4214
        %4279 = vst [vmem:[#allocation3 + $0x50] sm:$0xff] %v4215
        %4280 = vst [vmem:[#allocation3 + $0x90] sm:$0xff] %v4216
        %4281 = vst [vmem:[#allocation3 + $0xd0] sm:$0xff] %v4217
        %4282 = vst [vmem:[#allocation3 + $0x110] sm:$0xff] %v4218
        %4283 = vst [vmem:[#allocation3 + $0x150] sm:$0xff] %v4219
        %4284 = vst [vmem:[#allocation3 + $0x190] sm:$0xff] %v4220
        %4285 = vst [vmem:[#allocation3 + $0x1d0] sm:$0xff] %v4221
        %4286 = vst [vmem:[#allocation3 + $0x210] sm:$0xff] %v4222
        %4287 = vst [vmem:[#allocation3 + $0x250] sm:$0xff] %v4223
        %4288 = vst [vmem:[#allocation3 + $0x290] sm:$0xff] %v4224
        %4289 = vst [vmem:[#allocation3 + $0x2d0] sm:$0xff] %v4225
        %4290 = vst [vmem:[#allocation3 + $0x310] sm:$0xff] %v4226
        %4291 = vst [vmem:[#allocation3 + $0x350] sm:$0xff] %v4227
        %4292 = vst [vmem:[#allocation3 + $0x390] sm:$0xff] %v4228
        %4293 = vst [vmem:[#allocation3 + $0x3d0] sm:$0xff] %v4229
        %4294 = vst [vmem:[#allocation3 + $0x410] sm:$0xff] %v4230
        %4295 = vst [vmem:[#allocation3 + $0x450] sm:$0xff] %v4231
        %4296 = vst [vmem:[#allocation3 + $0x490] sm:$0xff] %v4232
        %4297 = vst [vmem:[#allocation3 + $0x4d0] sm:$0xff] %v4233
        %4298 = vst [vmem:[#allocation3 + $0x510] sm:$0xff] %v4234
        %4299 = vst [vmem:[#allocation3 + $0x550] sm:$0xff] %v4235
        %4300 = vst [vmem:[#allocation3 + $0x590] sm:$0xff] %v4236
        %4301 = vst [vmem:[#allocation3 + $0x5d0] sm:$0xff] %v4237
        %4302 = vst [vmem:[#allocation3 + $0x610] sm:$0xff] %v4238
        %4303 = vst [vmem:[#allocation3 + $0x650] sm:$0xff] %v4239
        %4304 = vst [vmem:[#allocation3 + $0x690] sm:$0xff] %v4240
        %4305 = vst [vmem:[#allocation3 + $0x6d0] sm:$0xff] %v4241
        %4306 = vst [vmem:[#allocation3 + $0x710] sm:$0xff] %v4242
        %4307 = vst [vmem:[#allocation3 + $0x750] sm:$0xff] %v4243
        %4308 = vst [vmem:[#allocation3 + $0x790] sm:$0xff] %v4244
        %4309 = vst [vmem:[#allocation3 + $0x7d0] sm:$0xff] %v4245
        %v4310 = vpack.c.b16 %v4150, %v4150
        %v4311 = vpack.c.b16 %v4151, %v4151
        %v4312 = vpack.c.b16 %v4152, %v4152
        %v4313 = vpack.c.b16 %v4153, %v4153
        %v4314 = vpack.c.b16 %v4154, %v4154
        %v4315 = vpack.c.b16 %v4155, %v4155
        %v4316 = vpack.c.b16 %v4156, %v4156
        %v4317 = vpack.c.b16 %v4157, %v4157
        %v4318 = vpack.c.b16 %v4158, %v4158
        %v4319 = vpack.c.b16 %v4159, %v4159
        %v4320 = vpack.c.b16 %v4160, %v4160
        %v4321 = vpack.c.b16 %v4161, %v4161
        %v4322 = vpack.c.b16 %v4162, %v4162
        %v4323 = vpack.c.b16 %v4163, %v4163
        %v4324 = vpack.c.b16 %v4164, %v4164
        %v4325 = vpack.c.b16 %v4165, %v4165
        %v4326 = vpack.c.b16 %v4166, %v4166
        %v4327 = vpack.c.b16 %v4167, %v4167
        %v4328 = vpack.c.b16 %v4168, %v4168
        %v4329 = vpack.c.b16 %v4169, %v4169
        %v4330 = vpack.c.b16 %v4170, %v4170
        %v4331 = vpack.c.b16 %v4171, %v4171
        %v4332 = vpack.c.b16 %v4172, %v4172
        %v4333 = vpack.c.b16 %v4173, %v4173
        %v4334 = vpack.c.b16 %v4174, %v4174
        %v4335 = vpack.c.b16 %v4175, %v4175
        %v4336 = vpack.c.b16 %v4176, %v4176
        %v4337 = vpack.c.b16 %v4177, %v4177
        %v4338 = vpack.c.b16 %v4178, %v4178
        %v4339 = vpack.c.b16 %v4179, %v4179
        %v4340 = vpack.c.b16 %v4180, %v4180
        %v4341 = vpack.c.b16 %v4181, %v4181
        %v4342 = vpack.c.b16 %v4182, %v4182
        %v4343 = vpack.c.b16 %v4183, %v4183
        %v4344 = vpack.c.b16 %v4184, %v4184
        %v4345 = vpack.c.b16 %v4185, %v4185
        %v4346 = vpack.c.b16 %v4186, %v4186
        %v4347 = vpack.c.b16 %v4187, %v4187
        %v4348 = vpack.c.b16 %v4188, %v4188
        %v4349 = vpack.c.b16 %v4189, %v4189
        %v4350 = vpack.c.b16 %v4190, %v4190
        %v4351 = vpack.c.b16 %v4191, %v4191
        %v4352 = vpack.c.b16 %v4192, %v4192
        %v4353 = vpack.c.b16 %v4193, %v4193
        %v4354 = vpack.c.b16 %v4194, %v4194
        %v4355 = vpack.c.b16 %v4195, %v4195
        %v4356 = vpack.c.b16 %v4196, %v4196
        %v4357 = vpack.c.b16 %v4197, %v4197
        %v4358 = vpack.c.b16 %v4198, %v4198
        %v4359 = vpack.c.b16 %v4199, %v4199
        %v4360 = vpack.c.b16 %v4200, %v4200
        %v4361 = vpack.c.b16 %v4201, %v4201
        %v4362 = vpack.c.b16 %v4202, %v4202
        %v4363 = vpack.c.b16 %v4203, %v4203
        %v4364 = vpack.c.b16 %v4204, %v4204
        %v4365 = vpack.c.b16 %v4205, %v4205
        %v4366 = vpack.c.b16 %v4206, %v4206
        %v4367 = vpack.c.b16 %v4207, %v4207
        %v4368 = vpack.c.b16 %v4208, %v4208
        %v4369 = vpack.c.b16 %v4209, %v4209
        %v4370 = vpack.c.b16 %v4210, %v4210
        %v4371 = vpack.c.b16 %v4211, %v4211
        %v4372 = vpack.c.b16 %v4212, %v4212
        %v4373 = vpack.c.b16 %v4213, %v4213
        %v4375 = vshrl.u32 %v4310, 16
        %v4377 = vshll.u32 %v4310, 16
        %v4379 = vrot.slane %v4377, 1
        %v4380 = vor.u32 %v4375, %v4379
        %v4382 = vshrl.u32 %v4311, 16
        %v4384 = vshll.u32 %v4311, 16
        %v4386 = vrot.slane %v4384, 1
        %v4387 = vor.u32 %v4382, %v4386
        %v4389 = vshrl.u32 %v4312, 16
        %v4391 = vshll.u32 %v4312, 16
        %v4393 = vrot.slane %v4391, 1
        %v4394 = vor.u32 %v4389, %v4393
        %v4396 = vshrl.u32 %v4313, 16
        %v4398 = vshll.u32 %v4313, 16
        %v4400 = vrot.slane %v4398, 1
        %v4401 = vor.u32 %v4396, %v4400
        %v4403 = vshrl.u32 %v4314, 16
        %v4405 = vshll.u32 %v4314, 16
        %v4407 = vrot.slane %v4405, 1
        %v4408 = vor.u32 %v4403, %v4407
        %v4410 = vshrl.u32 %v4315, 16
        %v4412 = vshll.u32 %v4315, 16
        %v4414 = vrot.slane %v4412, 1
        %v4415 = vor.u32 %v4410, %v4414
        %v4417 = vshrl.u32 %v4316, 16
        %v4419 = vshll.u32 %v4316, 16
        %v4421 = vrot.slane %v4419, 1
        %v4422 = vor.u32 %v4417, %v4421
        %v4424 = vshrl.u32 %v4317, 16
        %v4426 = vshll.u32 %v4317, 16
        %v4428 = vrot.slane %v4426, 1
        %v4429 = vor.u32 %v4424, %v4428
        %v4431 = vshrl.u32 %v4318, 16
        %v4433 = vshll.u32 %v4318, 16
        %v4435 = vrot.slane %v4433, 1
        %v4436 = vor.u32 %v4431, %v4435
        %v4438 = vshrl.u32 %v4319, 16
        %v4440 = vshll.u32 %v4319, 16
        %v4442 = vrot.slane %v4440, 1
        %v4443 = vor.u32 %v4438, %v4442
        %v4445 = vshrl.u32 %v4320, 16
        %v4447 = vshll.u32 %v4320, 16
        %v4449 = vrot.slane %v4447, 1
        %v4450 = vor.u32 %v4445, %v4449
        %v4452 = vshrl.u32 %v4321, 16
        %v4454 = vshll.u32 %v4321, 16
        %v4456 = vrot.slane %v4454, 1
        %v4457 = vor.u32 %v4452, %v4456
        %v4459 = vshrl.u32 %v4322, 16
        %v4461 = vshll.u32 %v4322, 16
        %v4463 = vrot.slane %v4461, 1
        %v4464 = vor.u32 %v4459, %v4463
        %v4466 = vshrl.u32 %v4323, 16
        %v4468 = vshll.u32 %v4323, 16
        %v4470 = vrot.slane %v4468, 1
        %v4471 = vor.u32 %v4466, %v4470
        %v4473 = vshrl.u32 %v4324, 16
        %v4475 = vshll.u32 %v4324, 16
        %v4477 = vrot.slane %v4475, 1
        %v4478 = vor.u32 %v4473, %v4477
        %v4480 = vshrl.u32 %v4325, 16
        %v4482 = vshll.u32 %v4325, 16
        %v4484 = vrot.slane %v4482, 1
        %v4485 = vor.u32 %v4480, %v4484
        %v4487 = vshrl.u32 %v4326, 16
        %v4489 = vshll.u32 %v4326, 16
        %v4491 = vrot.slane %v4489, 1
        %v4492 = vor.u32 %v4487, %v4491
        %v4494 = vshrl.u32 %v4327, 16
        %v4496 = vshll.u32 %v4327, 16
        %v4498 = vrot.slane %v4496, 1
        %v4499 = vor.u32 %v4494, %v4498
        %v4501 = vshrl.u32 %v4328, 16
        %v4503 = vshll.u32 %v4328, 16
        %v4505 = vrot.slane %v4503, 1
        %v4506 = vor.u32 %v4501, %v4505
        %v4508 = vshrl.u32 %v4329, 16
        %v4510 = vshll.u32 %v4329, 16
        %v4512 = vrot.slane %v4510, 1
        %v4513 = vor.u32 %v4508, %v4512
        %v4515 = vshrl.u32 %v4330, 16
        %v4517 = vshll.u32 %v4330, 16
        %v4519 = vrot.slane %v4517, 1
        %v4520 = vor.u32 %v4515, %v4519
        %v4522 = vshrl.u32 %v4331, 16
        %v4524 = vshll.u32 %v4331, 16
        %v4526 = vrot.slane %v4524, 1
        %v4527 = vor.u32 %v4522, %v4526
        %v4529 = vshrl.u32 %v4332, 16
        %v4531 = vshll.u32 %v4332, 16
        %v4533 = vrot.slane %v4531, 1
        %v4534 = vor.u32 %v4529, %v4533
        %v4536 = vshrl.u32 %v4333, 16
        %v4538 = vshll.u32 %v4333, 16
        %v4540 = vrot.slane %v4538, 1
        %v4541 = vor.u32 %v4536, %v4540
        %v4543 = vshrl.u32 %v4334, 16
        %v4545 = vshll.u32 %v4334, 16
        %v4547 = vrot.slane %v4545, 1
        %v4548 = vor.u32 %v4543, %v4547
        %v4550 = vshrl.u32 %v4335, 16
        %v4552 = vshll.u32 %v4335, 16
        %v4554 = vrot.slane %v4552, 1
        %v4555 = vor.u32 %v4550, %v4554
        %v4557 = vshrl.u32 %v4336, 16
        %v4559 = vshll.u32 %v4336, 16
        %v4561 = vrot.slane %v4559, 1
        %v4562 = vor.u32 %v4557, %v4561
        %v4564 = vshrl.u32 %v4337, 16
        %v4566 = vshll.u32 %v4337, 16
        %v4568 = vrot.slane %v4566, 1
        %v4569 = vor.u32 %v4564, %v4568
        %v4571 = vshrl.u32 %v4338, 16
        %v4573 = vshll.u32 %v4338, 16
        %v4575 = vrot.slane %v4573, 1
        %v4576 = vor.u32 %v4571, %v4575
        %v4578 = vshrl.u32 %v4339, 16
        %v4580 = vshll.u32 %v4339, 16
        %v4582 = vrot.slane %v4580, 1
        %v4583 = vor.u32 %v4578, %v4582
        %v4585 = vshrl.u32 %v4340, 16
        %v4587 = vshll.u32 %v4340, 16
        %v4589 = vrot.slane %v4587, 1
        %v4590 = vor.u32 %v4585, %v4589
        %v4592 = vshrl.u32 %v4341, 16
        %v4594 = vshll.u32 %v4341, 16
        %v4596 = vrot.slane %v4594, 1
        %v4597 = vor.u32 %v4592, %v4596
        %v4599 = vshrl.u32 %v4342, 16
        %v4601 = vshll.u32 %v4342, 16
        %v4603 = vrot.slane %v4601, 1
        %v4604 = vor.u32 %v4599, %v4603
        %v4606 = vshrl.u32 %v4343, 16
        %v4608 = vshll.u32 %v4343, 16
        %v4610 = vrot.slane %v4608, 1
        %v4611 = vor.u32 %v4606, %v4610
        %v4613 = vshrl.u32 %v4344, 16
        %v4615 = vshll.u32 %v4344, 16
        %v4617 = vrot.slane %v4615, 1
        %v4618 = vor.u32 %v4613, %v4617
        %v4620 = vshrl.u32 %v4345, 16
        %v4622 = vshll.u32 %v4345, 16
        %v4624 = vrot.slane %v4622, 1
        %v4625 = vor.u32 %v4620, %v4624
        %v4627 = vshrl.u32 %v4346, 16
        %v4629 = vshll.u32 %v4346, 16
        %v4631 = vrot.slane %v4629, 1
        %v4632 = vor.u32 %v4627, %v4631
        %v4634 = vshrl.u32 %v4347, 16
        %v4636 = vshll.u32 %v4347, 16
        %v4638 = vrot.slane %v4636, 1
        %v4639 = vor.u32 %v4634, %v4638
        %v4641 = vshrl.u32 %v4348, 16
        %v4643 = vshll.u32 %v4348, 16
        %v4645 = vrot.slane %v4643, 1
        %v4646 = vor.u32 %v4641, %v4645
        %v4648 = vshrl.u32 %v4349, 16
        %v4650 = vshll.u32 %v4349, 16
        %v4652 = vrot.slane %v4650, 1
        %v4653 = vor.u32 %v4648, %v4652
        %v4655 = vshrl.u32 %v4350, 16
        %v4657 = vshll.u32 %v4350, 16
        %v4659 = vrot.slane %v4657, 1
        %v4660 = vor.u32 %v4655, %v4659
        %v4662 = vshrl.u32 %v4351, 16
        %v4664 = vshll.u32 %v4351, 16
        %v4666 = vrot.slane %v4664, 1
        %v4667 = vor.u32 %v4662, %v4666
        %v4669 = vshrl.u32 %v4352, 16
        %v4671 = vshll.u32 %v4352, 16
        %v4673 = vrot.slane %v4671, 1
        %v4674 = vor.u32 %v4669, %v4673
        %v4676 = vshrl.u32 %v4353, 16
        %v4678 = vshll.u32 %v4353, 16
        %v4680 = vrot.slane %v4678, 1
        %v4681 = vor.u32 %v4676, %v4680
        %v4683 = vshrl.u32 %v4354, 16
        %v4685 = vshll.u32 %v4354, 16
        %v4687 = vrot.slane %v4685, 1
        %v4688 = vor.u32 %v4683, %v4687
        %v4690 = vshrl.u32 %v4355, 16
        %v4692 = vshll.u32 %v4355, 16
        %v4694 = vrot.slane %v4692, 1
        %v4695 = vor.u32 %v4690, %v4694
        %v4697 = vshrl.u32 %v4356, 16
        %v4699 = vshll.u32 %v4356, 16
        %v4701 = vrot.slane %v4699, 1
        %v4702 = vor.u32 %v4697, %v4701
        %v4704 = vshrl.u32 %v4357, 16
        %v4706 = vshll.u32 %v4357, 16
        %v4708 = vrot.slane %v4706, 1
        %v4709 = vor.u32 %v4704, %v4708
        %v4711 = vshrl.u32 %v4358, 16
        %v4713 = vshll.u32 %v4358, 16
        %v4715 = vrot.slane %v4713, 1
        %v4716 = vor.u32 %v4711, %v4715
        %v4718 = vshrl.u32 %v4359, 16
        %v4720 = vshll.u32 %v4359, 16
        %v4722 = vrot.slane %v4720, 1
        %v4723 = vor.u32 %v4718, %v4722
        %v4725 = vshrl.u32 %v4360, 16
        %v4727 = vshll.u32 %v4360, 16
        %v4729 = vrot.slane %v4727, 1
        %v4730 = vor.u32 %v4725, %v4729
        %v4732 = vshrl.u32 %v4361, 16
        %v4734 = vshll.u32 %v4361, 16
        %v4736 = vrot.slane %v4734, 1
        %v4737 = vor.u32 %v4732, %v4736
        %v4739 = vshrl.u32 %v4362, 16
        %v4741 = vshll.u32 %v4362, 16
        %v4743 = vrot.slane %v4741, 1
        %v4744 = vor.u32 %v4739, %v4743
        %v4746 = vshrl.u32 %v4363, 16
        %v4748 = vshll.u32 %v4363, 16
        %v4750 = vrot.slane %v4748, 1
        %v4751 = vor.u32 %v4746, %v4750
        %v4753 = vshrl.u32 %v4364, 16
        %v4755 = vshll.u32 %v4364, 16
        %v4757 = vrot.slane %v4755, 1
        %v4758 = vor.u32 %v4753, %v4757
        %v4760 = vshrl.u32 %v4365, 16
        %v4762 = vshll.u32 %v4365, 16
        %v4764 = vrot.slane %v4762, 1
        %v4765 = vor.u32 %v4760, %v4764
        %v4767 = vshrl.u32 %v4366, 16
        %v4769 = vshll.u32 %v4366, 16
        %v4771 = vrot.slane %v4769, 1
        %v4772 = vor.u32 %v4767, %v4771
        %v4774 = vshrl.u32 %v4367, 16
        %v4776 = vshll.u32 %v4367, 16
        %v4778 = vrot.slane %v4776, 1
        %v4779 = vor.u32 %v4774, %v4778
        %v4781 = vshrl.u32 %v4368, 16
        %v4783 = vshll.u32 %v4368, 16
        %v4785 = vrot.slane %v4783, 1
        %v4786 = vor.u32 %v4781, %v4785
        %v4788 = vshrl.u32 %v4369, 16
        %v4790 = vshll.u32 %v4369, 16
        %v4792 = vrot.slane %v4790, 1
        %v4793 = vor.u32 %v4788, %v4792
        %v4795 = vshrl.u32 %v4370, 16
        %v4797 = vshll.u32 %v4370, 16
        %v4799 = vrot.slane %v4797, 1
        %v4800 = vor.u32 %v4795, %v4799
        %v4802 = vshrl.u32 %v4371, 16
        %v4804 = vshll.u32 %v4371, 16
        %v4806 = vrot.slane %v4804, 1
        %v4807 = vor.u32 %v4802, %v4806
        %v4809 = vshrl.u32 %v4372, 16
        %v4811 = vshll.u32 %v4372, 16
        %v4813 = vrot.slane %v4811, 1
        %v4814 = vor.u32 %v4809, %v4813
        %v4816 = vshrl.u32 %v4373, 16
        %v4818 = vshll.u32 %v4373, 16
        %v4820 = vrot.slane %v4818, 1
        %v4821 = vor.u32 %v4816, %v4820
        %v4886 = vrot.slane %v4377, 5
        %v4887 = vrot.slane %v4384, 5
        %v4888 = vrot.slane %v4391, 5
        %v4889 = vrot.slane %v4398, 5
        %v4890 = vrot.slane %v4405, 5
        %v4891 = vrot.slane %v4412, 5
        %v4892 = vrot.slane %v4419, 5
        %v4893 = vrot.slane %v4426, 5
        %v4894 = vrot.slane %v4433, 5
        %v4895 = vrot.slane %v4440, 5
        %v4896 = vrot.slane %v4447, 5
        %v4897 = vrot.slane %v4454, 5
        %v4898 = vrot.slane %v4461, 5
        %v4899 = vrot.slane %v4468, 5
        %v4900 = vrot.slane %v4475, 5
        %v4901 = vrot.slane %v4482, 5
        %v4902 = vrot.slane %v4489, 5
        %v4903 = vrot.slane %v4496, 5
        %v4904 = vrot.slane %v4503, 5
        %v4905 = vrot.slane %v4510, 5
        %v4906 = vrot.slane %v4517, 5
        %v4907 = vrot.slane %v4524, 5
        %v4908 = vrot.slane %v4531, 5
        %v4909 = vrot.slane %v4538, 5
        %v4910 = vrot.slane %v4545, 5
        %v4911 = vrot.slane %v4552, 5
        %v4912 = vrot.slane %v4559, 5
        %v4913 = vrot.slane %v4566, 5
        %v4914 = vrot.slane %v4573, 5
        %v4915 = vrot.slane %v4580, 5
        %v4916 = vrot.slane %v4587, 5
        %v4917 = vrot.slane %v4594, 5
        %v4918 = vrot.slane %v4601, 5
        %v4919 = vrot.slane %v4608, 5
        %v4920 = vrot.slane %v4615, 5
        %v4921 = vrot.slane %v4622, 5
        %v4922 = vrot.slane %v4629, 5
        %v4923 = vrot.slane %v4636, 5
        %v4924 = vrot.slane %v4643, 5
        %v4925 = vrot.slane %v4650, 5
        %v4926 = vrot.slane %v4657, 5
        %v4927 = vrot.slane %v4664, 5
        %v4928 = vrot.slane %v4671, 5
        %v4929 = vrot.slane %v4678, 5
        %v4930 = vrot.slane %v4685, 5
        %v4931 = vrot.slane %v4692, 5
        %v4932 = vrot.slane %v4699, 5
        %v4933 = vrot.slane %v4706, 5
        %v4934 = vrot.slane %v4713, 5
        %v4935 = vrot.slane %v4720, 5
        %v4936 = vrot.slane %v4727, 5
        %v4937 = vrot.slane %v4734, 5
        %v4938 = vrot.slane %v4741, 5
        %v4939 = vrot.slane %v4748, 5
        %v4940 = vrot.slane %v4755, 5
        %v4941 = vrot.slane %v4762, 5
        %v4942 = vrot.slane %v4769, 5
        %v4943 = vrot.slane %v4776, 5
        %v4944 = vrot.slane %v4783, 5
        %v4945 = vrot.slane %v4790, 5
        %v4946 = vrot.slane %v4797, 5
        %v4947 = vrot.slane %v4804, 5
        %v4948 = vrot.slane %v4811, 5
        %v4949 = vrot.slane %v4818, 5
        %v5014 = vsel %vm3732, %v4380, %v4886
        %v5015 = vsel %vm3732, %v4387, %v4887
        %v5016 = vsel %vm3732, %v4394, %v4888
        %v5017 = vsel %vm3732, %v4401, %v4889
        %v5018 = vsel %vm3732, %v4408, %v4890
        %v5019 = vsel %vm3732, %v4415, %v4891
        %v5020 = vsel %vm3732, %v4422, %v4892
        %v5021 = vsel %vm3732, %v4429, %v4893
        %v5022 = vsel %vm3732, %v4436, %v4894
        %v5023 = vsel %vm3732, %v4443, %v4895
        %v5024 = vsel %vm3732, %v4450, %v4896
        %v5025 = vsel %vm3732, %v4457, %v4897
        %v5026 = vsel %vm3732, %v4464, %v4898
        %v5027 = vsel %vm3732, %v4471, %v4899
        %v5028 = vsel %vm3732, %v4478, %v4900
        %v5029 = vsel %vm3732, %v4485, %v4901
        %v5030 = vsel %vm3732, %v4492, %v4902
        %v5031 = vsel %vm3732, %v4499, %v4903
        %v5032 = vsel %vm3732, %v4506, %v4904
        %v5033 = vsel %vm3732, %v4513, %v4905
        %v5034 = vsel %vm3732, %v4520, %v4906
        %v5035 = vsel %vm3732, %v4527, %v4907
        %v5036 = vsel %vm3732, %v4534, %v4908
        %v5037 = vsel %vm3732, %v4541, %v4909
        %v5038 = vsel %vm3732, %v4548, %v4910
        %v5039 = vsel %vm3732, %v4555, %v4911
        %v5040 = vsel %vm3732, %v4562, %v4912
        %v5041 = vsel %vm3732, %v4569, %v4913
        %v5042 = vsel %vm3732, %v4576, %v4914
        %v5043 = vsel %vm3732, %v4583, %v4915
        %v5044 = vsel %vm3732, %v4590, %v4916
        %v5045 = vsel %vm3732, %v4597, %v4917
        %v5046 = vsel %vm3732, %v4604, %v4918
        %v5047 = vsel %vm3732, %v4611, %v4919
        %v5048 = vsel %vm3732, %v4618, %v4920
        %v5049 = vsel %vm3732, %v4625, %v4921
        %v5050 = vsel %vm3732, %v4632, %v4922
        %v5051 = vsel %vm3732, %v4639, %v4923
        %v5052 = vsel %vm3732, %v4646, %v4924
        %v5053 = vsel %vm3732, %v4653, %v4925
        %v5054 = vsel %vm3732, %v4660, %v4926
        %v5055 = vsel %vm3732, %v4667, %v4927
        %v5056 = vsel %vm3732, %v4674, %v4928
        %v5057 = vsel %vm3732, %v4681, %v4929
        %v5058 = vsel %vm3732, %v4688, %v4930
        %v5059 = vsel %vm3732, %v4695, %v4931
        %v5060 = vsel %vm3732, %v4702, %v4932
        %v5061 = vsel %vm3732, %v4709, %v4933
        %v5062 = vsel %vm3732, %v4716, %v4934
        %v5063 = vsel %vm3732, %v4723, %v4935
        %v5064 = vsel %vm3732, %v4730, %v4936
        %v5065 = vsel %vm3732, %v4737, %v4937
        %v5066 = vsel %vm3732, %v4744, %v4938
        %v5067 = vsel %vm3732, %v4751, %v4939
        %v5068 = vsel %vm3732, %v4758, %v4940
        %v5069 = vsel %vm3732, %v4765, %v4941
        %v5070 = vsel %vm3732, %v4772, %v4942
        %v5071 = vsel %vm3732, %v4779, %v4943
        %v5072 = vsel %vm3732, %v4786, %v4944
        %v5073 = vsel %vm3732, %v4793, %v4945
        %v5074 = vsel %vm3732, %v4800, %v4946
        %v5075 = vsel %vm3732, %v4807, %v4947
        %v5076 = vsel %vm3732, %v4814, %v4948
        %v5077 = vsel %vm3732, %v4821, %v4949
        %v5142 = vunpack.c.l.b16 %v5014
        %v5143 = vunpack.c.l.b16 %v5015
        %v5144 = vunpack.c.l.b16 %v5016
        %v5145 = vunpack.c.l.b16 %v5017
        %v5146 = vunpack.c.l.b16 %v5018
        %v5147 = vunpack.c.l.b16 %v5019
        %v5148 = vunpack.c.l.b16 %v5020
        %v5149 = vunpack.c.l.b16 %v5021
        %v5150 = vunpack.c.l.b16 %v5022
        %v5151 = vunpack.c.l.b16 %v5023
        %v5152 = vunpack.c.l.b16 %v5024
        %v5153 = vunpack.c.l.b16 %v5025
        %v5154 = vunpack.c.l.b16 %v5026
        %v5155 = vunpack.c.l.b16 %v5027
        %v5156 = vunpack.c.l.b16 %v5028
        %v5157 = vunpack.c.l.b16 %v5029
        %v5158 = vunpack.c.l.b16 %v5030
        %v5159 = vunpack.c.l.b16 %v5031
        %v5160 = vunpack.c.l.b16 %v5032
        %v5161 = vunpack.c.l.b16 %v5033
        %v5162 = vunpack.c.l.b16 %v5034
        %v5163 = vunpack.c.l.b16 %v5035
        %v5164 = vunpack.c.l.b16 %v5036
        %v5165 = vunpack.c.l.b16 %v5037
        %v5166 = vunpack.c.l.b16 %v5038
        %v5167 = vunpack.c.l.b16 %v5039
        %v5168 = vunpack.c.l.b16 %v5040
        %v5169 = vunpack.c.l.b16 %v5041
        %v5170 = vunpack.c.l.b16 %v5042
        %v5171 = vunpack.c.l.b16 %v5043
        %v5172 = vunpack.c.l.b16 %v5044
        %v5173 = vunpack.c.l.b16 %v5045
        %v5174 = vunpack.c.l.b16 %v5046
        %v5175 = vunpack.c.l.b16 %v5047
        %v5176 = vunpack.c.l.b16 %v5048
        %v5177 = vunpack.c.l.b16 %v5049
        %v5178 = vunpack.c.l.b16 %v5050
        %v5179 = vunpack.c.l.b16 %v5051
        %v5180 = vunpack.c.l.b16 %v5052
        %v5181 = vunpack.c.l.b16 %v5053
        %v5182 = vunpack.c.l.b16 %v5054
        %v5183 = vunpack.c.l.b16 %v5055
        %v5184 = vunpack.c.l.b16 %v5056
        %v5185 = vunpack.c.l.b16 %v5057
        %v5186 = vunpack.c.l.b16 %v5058
        %v5187 = vunpack.c.l.b16 %v5059
        %v5188 = vunpack.c.l.b16 %v5060
        %v5189 = vunpack.c.l.b16 %v5061
        %v5190 = vunpack.c.l.b16 %v5062
        %v5191 = vunpack.c.l.b16 %v5063
        %v5192 = vunpack.c.l.b16 %v5064
        %v5193 = vunpack.c.l.b16 %v5065
        %v5194 = vunpack.c.l.b16 %v5066
        %v5195 = vunpack.c.l.b16 %v5067
        %v5196 = vunpack.c.l.b16 %v5068
        %v5197 = vunpack.c.l.b16 %v5069
        %v5198 = vunpack.c.l.b16 %v5070
        %v5199 = vunpack.c.l.b16 %v5071
        %v5200 = vunpack.c.l.b16 %v5072
        %v5201 = vunpack.c.l.b16 %v5073
        %v5202 = vunpack.c.l.b16 %v5074
        %v5203 = vunpack.c.l.b16 %v5075
        %v5204 = vunpack.c.l.b16 %v5076
        %v5205 = vunpack.c.l.b16 %v5077
        %v5206 = vpack.c.b16 %v5143, %v5142
        %v5207 = vpack.c.b16 %v5145, %v5144
        %v5208 = vpack.c.b16 %v5147, %v5146
        %v5209 = vpack.c.b16 %v5149, %v5148
        %v5210 = vpack.c.b16 %v5151, %v5150
        %v5211 = vpack.c.b16 %v5153, %v5152
        %v5212 = vpack.c.b16 %v5155, %v5154
        %v5213 = vpack.c.b16 %v5157, %v5156
        %v5214 = vpack.c.b16 %v5159, %v5158
        %v5215 = vpack.c.b16 %v5161, %v5160
        %v5216 = vpack.c.b16 %v5163, %v5162
        %v5217 = vpack.c.b16 %v5165, %v5164
        %v5218 = vpack.c.b16 %v5167, %v5166
        %v5219 = vpack.c.b16 %v5169, %v5168
        %v5220 = vpack.c.b16 %v5171, %v5170
        %v5221 = vpack.c.b16 %v5173, %v5172
        %v5222 = vpack.c.b16 %v5175, %v5174
        %v5223 = vpack.c.b16 %v5177, %v5176
        %v5224 = vpack.c.b16 %v5179, %v5178
        %v5225 = vpack.c.b16 %v5181, %v5180
        %v5226 = vpack.c.b16 %v5183, %v5182
        %v5227 = vpack.c.b16 %v5185, %v5184
        %v5228 = vpack.c.b16 %v5187, %v5186
        %v5229 = vpack.c.b16 %v5189, %v5188
        %v5230 = vpack.c.b16 %v5191, %v5190
        %v5231 = vpack.c.b16 %v5193, %v5192
        %v5232 = vpack.c.b16 %v5195, %v5194
        %v5233 = vpack.c.b16 %v5197, %v5196
        %v5234 = vpack.c.b16 %v5199, %v5198
        %v5235 = vpack.c.b16 %v5201, %v5200
        %v5236 = vpack.c.b16 %v5203, %v5202
        %v5237 = vpack.c.b16 %v5205, %v5204
        %5270 = vst [vmem:[#allocation3 + $0x18] sm:$0xff] %v5206
        %5271 = vst [vmem:[#allocation3 + $0x58] sm:$0xff] %v5207
        %5272 = vst [vmem:[#allocation3 + $0x98] sm:$0xff] %v5208
        %5273 = vst [vmem:[#allocation3 + $0xd8] sm:$0xff] %v5209
        %5274 = vst [vmem:[#allocation3 + $0x118] sm:$0xff] %v5210
        %5275 = vst [vmem:[#allocation3 + $0x158] sm:$0xff] %v5211
        %5276 = vst [vmem:[#allocation3 + $0x198] sm:$0xff] %v5212
        %5277 = vst [vmem:[#allocation3 + $0x1d8] sm:$0xff] %v5213
        %5278 = vst [vmem:[#allocation3 + $0x218] sm:$0xff] %v5214
        %5279 = vst [vmem:[#allocation3 + $0x258] sm:$0xff] %v5215
        %5280 = vst [vmem:[#allocation3 + $0x298] sm:$0xff] %v5216
        %5281 = vst [vmem:[#allocation3 + $0x2d8] sm:$0xff] %v5217
        %5282 = vst [vmem:[#allocation3 + $0x318] sm:$0xff] %v5218
        %5283 = vst [vmem:[#allocation3 + $0x358] sm:$0xff] %v5219
        %5284 = vst [vmem:[#allocation3 + $0x398] sm:$0xff] %v5220
        %5285 = vst [vmem:[#allocation3 + $0x3d8] sm:$0xff] %v5221
        %5286 = vst [vmem:[#allocation3 + $0x418] sm:$0xff] %v5222
        %5287 = vst [vmem:[#allocation3 + $0x458] sm:$0xff] %v5223
        %5288 = vst [vmem:[#allocation3 + $0x498] sm:$0xff] %v5224
        %5289 = vst [vmem:[#allocation3 + $0x4d8] sm:$0xff] %v5225
        %5290 = vst [vmem:[#allocation3 + $0x518] sm:$0xff] %v5226
        %5291 = vst [vmem:[#allocation3 + $0x558] sm:$0xff] %v5227
        %5292 = vst [vmem:[#allocation3 + $0x598] sm:$0xff] %v5228
        %5293 = vst [vmem:[#allocation3 + $0x5d8] sm:$0xff] %v5229
        %5294 = vst [vmem:[#allocation3 + $0x618] sm:$0xff] %v5230
        %5295 = vst [vmem:[#allocation3 + $0x658] sm:$0xff] %v5231
        %5296 = vst [vmem:[#allocation3 + $0x698] sm:$0xff] %v5232
        %5297 = vst [vmem:[#allocation3 + $0x6d8] sm:$0xff] %v5233
        %5298 = vst [vmem:[#allocation3 + $0x718] sm:$0xff] %v5234
        %5299 = vst [vmem:[#allocation3 + $0x758] sm:$0xff] %v5235
        %5300 = vst [vmem:[#allocation3 + $0x798] sm:$0xff] %v5236
        %5301 = vst [vmem:[#allocation3 + $0x7d8] sm:$0xff] %v5237
        %v5302 = vld [vmem:[#allocation2] sm:$0xf]
        %v5303 = vld [vmem:[#allocation2 + $0x4] sm:$0xf]
        %v5304 = vld [vmem:[#allocation2 + $0x8] sm:$0xf]
        %v5305 = vld [vmem:[#allocation2 + $0xc] sm:$0xf]
        %v5306 = vld [vmem:[#allocation2 + $0x10] sm:$0xf]
        %v5307 = vld [vmem:[#allocation2 + $0x14] sm:$0xf]
        %v5308 = vld [vmem:[#allocation2 + $0x18] sm:$0xf]
        %v5309 = vld [vmem:[#allocation2 + $0x1c] sm:$0xf]
        %v5310 = vld [vmem:[#allocation2 + $0x20] sm:$0xf]
        %v5311 = vld [vmem:[#allocation2 + $0x24] sm:$0xf]
        %v5312 = vld [vmem:[#allocation2 + $0x28] sm:$0xf]
        %v5313 = vld [vmem:[#allocation2 + $0x2c] sm:$0xf]
        %v5314 = vld [vmem:[#allocation2 + $0x30] sm:$0xf]
        %v5315 = vld [vmem:[#allocation2 + $0x34] sm:$0xf]
        %v5316 = vld [vmem:[#allocation2 + $0x38] sm:$0xf]
        %v5317 = vld [vmem:[#allocation2 + $0x3c] sm:$0xf]
        %v5318 = vld [vmem:[#allocation2 + $0x40] sm:$0xf]
        %v5319 = vld [vmem:[#allocation2 + $0x44] sm:$0xf]
        %v5320 = vld [vmem:[#allocation2 + $0x48] sm:$0xf]
        %v5321 = vld [vmem:[#allocation2 + $0x4c] sm:$0xf]
        %v5322 = vld [vmem:[#allocation2 + $0x50] sm:$0xf]
        %v5323 = vld [vmem:[#allocation2 + $0x54] sm:$0xf]
        %v5324 = vld [vmem:[#allocation2 + $0x58] sm:$0xf]
        %v5325 = vld [vmem:[#allocation2 + $0x5c] sm:$0xf]
        %v5326 = vld [vmem:[#allocation2 + $0x60] sm:$0xf]
        %v5327 = vld [vmem:[#allocation2 + $0x64] sm:$0xf]
        %v5328 = vld [vmem:[#allocation2 + $0x68] sm:$0xf]
        %v5329 = vld [vmem:[#allocation2 + $0x6c] sm:$0xf]
        %v5330 = vld [vmem:[#allocation2 + $0x70] sm:$0xf]
        %v5331 = vld [vmem:[#allocation2 + $0x74] sm:$0xf]
        %v5332 = vld [vmem:[#allocation2 + $0x78] sm:$0xf]
        %v5333 = vld [vmem:[#allocation2 + $0x7c] sm:$0xf]
        %v5334 = vld [vmem:[#allocation2 + $0x80] sm:$0xf]
        %v5335 = vld [vmem:[#allocation2 + $0x84] sm:$0xf]
        %v5336 = vld [vmem:[#allocation2 + $0x88] sm:$0xf]
        %v5337 = vld [vmem:[#allocation2 + $0x8c] sm:$0xf]
        %v5338 = vld [vmem:[#allocation2 + $0x90] sm:$0xf]
        %v5339 = vld [vmem:[#allocation2 + $0x94] sm:$0xf]
        %v5340 = vld [vmem:[#allocation2 + $0x98] sm:$0xf]
        %v5341 = vld [vmem:[#allocation2 + $0x9c] sm:$0xf]
        %v5342 = vld [vmem:[#allocation2 + $0xa0] sm:$0xf]
        %v5343 = vld [vmem:[#allocation2 + $0xa4] sm:$0xf]
        %v5344 = vld [vmem:[#allocation2 + $0xa8] sm:$0xf]
        %v5345 = vld [vmem:[#allocation2 + $0xac] sm:$0xf]
        %v5346 = vld [vmem:[#allocation2 + $0xb0] sm:$0xf]
        %v5347 = vld [vmem:[#allocation2 + $0xb4] sm:$0xf]
        %v5348 = vld [vmem:[#allocation2 + $0xb8] sm:$0xf]
        %v5349 = vld [vmem:[#allocation2 + $0xbc] sm:$0xf]
        %v5350 = vld [vmem:[#allocation2 + $0xc0] sm:$0xf]
        %v5351 = vld [vmem:[#allocation2 + $0xc4] sm:$0xf]
        %v5352 = vld [vmem:[#allocation2 + $0xc8] sm:$0xf]
        %v5353 = vld [vmem:[#allocation2 + $0xcc] sm:$0xf]
        %v5354 = vld [vmem:[#allocation2 + $0xd0] sm:$0xf]
        %v5355 = vld [vmem:[#allocation2 + $0xd4] sm:$0xf]
        %v5356 = vld [vmem:[#allocation2 + $0xd8] sm:$0xf]
        %v5357 = vld [vmem:[#allocation2 + $0xdc] sm:$0xf]
        %v5358 = vld [vmem:[#allocation2 + $0xe0] sm:$0xf]
        %v5359 = vld [vmem:[#allocation2 + $0xe4] sm:$0xf]
        %v5360 = vld [vmem:[#allocation2 + $0xe8] sm:$0xf]
        %v5361 = vld [vmem:[#allocation2 + $0xec] sm:$0xf]
        %v5362 = vld [vmem:[#allocation2 + $0xf0] sm:$0xf]
        %v5363 = vld [vmem:[#allocation2 + $0xf4] sm:$0xf]
        %v5364 = vld [vmem:[#allocation2 + $0xf8] sm:$0xf]
        %v5365 = vld [vmem:[#allocation2 + $0xfc] sm:$0xf]
        %v5430 = vunpack.c.l.b16 %v5303
        %v5431 = vunpack.c.l.b16 %v5304
        %v5432 = vunpack.c.l.b16 %v5305
        %v5433 = vunpack.c.l.b16 %v5306
        %v5434 = vunpack.c.l.b16 %v5307
        %v5435 = vunpack.c.l.b16 %v5308
        %v5436 = vunpack.c.l.b16 %v5309
        %v5437 = vunpack.c.l.b16 %v5302
        %v5438 = vunpack.c.l.b16 %v5311
        %v5439 = vunpack.c.l.b16 %v5312
        %v5440 = vunpack.c.l.b16 %v5313
        %v5441 = vunpack.c.l.b16 %v5314
        %v5442 = vunpack.c.l.b16 %v5315
        %v5443 = vunpack.c.l.b16 %v5316
        %v5444 = vunpack.c.l.b16 %v5317
        %v5445 = vunpack.c.l.b16 %v5310
        %v5446 = vunpack.c.l.b16 %v5319
        %v5447 = vunpack.c.l.b16 %v5320
        %v5448 = vunpack.c.l.b16 %v5321
        %v5449 = vunpack.c.l.b16 %v5322
        %v5450 = vunpack.c.l.b16 %v5323
        %v5451 = vunpack.c.l.b16 %v5324
        %v5452 = vunpack.c.l.b16 %v5325
        %v5453 = vunpack.c.l.b16 %v5318
        %v5454 = vunpack.c.l.b16 %v5327
        %v5455 = vunpack.c.l.b16 %v5328
        %v5456 = vunpack.c.l.b16 %v5329
        %v5457 = vunpack.c.l.b16 %v5330
        %v5458 = vunpack.c.l.b16 %v5331
        %v5459 = vunpack.c.l.b16 %v5332
        %v5460 = vunpack.c.l.b16 %v5333
        %v5461 = vunpack.c.l.b16 %v5326
        %v5462 = vunpack.c.l.b16 %v5335
        %v5463 = vunpack.c.l.b16 %v5336
        %v5464 = vunpack.c.l.b16 %v5337
        %v5465 = vunpack.c.l.b16 %v5338
        %v5466 = vunpack.c.l.b16 %v5339
        %v5467 = vunpack.c.l.b16 %v5340
        %v5468 = vunpack.c.l.b16 %v5341
        %v5469 = vunpack.c.l.b16 %v5334
        %v5470 = vunpack.c.l.b16 %v5343
        %v5471 = vunpack.c.l.b16 %v5344
        %v5472 = vunpack.c.l.b16 %v5345
        %v5473 = vunpack.c.l.b16 %v5346
        %v5474 = vunpack.c.l.b16 %v5347
        %v5475 = vunpack.c.l.b16 %v5348
        %v5476 = vunpack.c.l.b16 %v5349
        %v5477 = vunpack.c.l.b16 %v5342
        %v5478 = vunpack.c.l.b16 %v5351
        %v5479 = vunpack.c.l.b16 %v5352
        %v5480 = vunpack.c.l.b16 %v5353
        %v5481 = vunpack.c.l.b16 %v5354
        %v5482 = vunpack.c.l.b16 %v5355
        %v5483 = vunpack.c.l.b16 %v5356
        %v5484 = vunpack.c.l.b16 %v5357
        %v5485 = vunpack.c.l.b16 %v5350
        %v5486 = vunpack.c.l.b16 %v5359
        %v5487 = vunpack.c.l.b16 %v5360
        %v5488 = vunpack.c.l.b16 %v5361
        %v5489 = vunpack.c.l.b16 %v5362
        %v5490 = vunpack.c.l.b16 %v5363
        %v5491 = vunpack.c.l.b16 %v5364
        %v5492 = vunpack.c.l.b16 %v5365
        %v5493 = vunpack.c.l.b16 %v5358
        %v5494 = vpack.c.b16 %v5431, %v5430
        %v5495 = vpack.c.b16 %v5433, %v5432
        %v5496 = vpack.c.b16 %v5435, %v5434
        %v5497 = vpack.c.b16 %v5437, %v5436
        %v5498 = vpack.c.b16 %v5439, %v5438
        %v5499 = vpack.c.b16 %v5441, %v5440
        %v5500 = vpack.c.b16 %v5443, %v5442
        %v5501 = vpack.c.b16 %v5445, %v5444
        %v5502 = vpack.c.b16 %v5447, %v5446
        %v5503 = vpack.c.b16 %v5449, %v5448
        %v5504 = vpack.c.b16 %v5451, %v5450
        %v5505 = vpack.c.b16 %v5453, %v5452
        %v5506 = vpack.c.b16 %v5455, %v5454
        %v5507 = vpack.c.b16 %v5457, %v5456
        %v5508 = vpack.c.b16 %v5459, %v5458
        %v5509 = vpack.c.b16 %v5461, %v5460
        %v5510 = vpack.c.b16 %v5463, %v5462
        %v5511 = vpack.c.b16 %v5465, %v5464
        %v5512 = vpack.c.b16 %v5467, %v5466
        %v5513 = vpack.c.b16 %v5469, %v5468
        %v5514 = vpack.c.b16 %v5471, %v5470
        %v5515 = vpack.c.b16 %v5473, %v5472
        %v5516 = vpack.c.b16 %v5475, %v5474
        %v5517 = vpack.c.b16 %v5477, %v5476
        %v5518 = vpack.c.b16 %v5479, %v5478
        %v5519 = vpack.c.b16 %v5481, %v5480
        %v5520 = vpack.c.b16 %v5483, %v5482
        %v5521 = vpack.c.b16 %v5485, %v5484
        %v5522 = vpack.c.b16 %v5487, %v5486
        %v5523 = vpack.c.b16 %v5489, %v5488
        %v5524 = vpack.c.b16 %v5491, %v5490
        %v5525 = vpack.c.b16 %v5493, %v5492
        %5558 = vst [vmem:[#allocation3 + $0x20] sm:$0xff] %v5494
        %5559 = vst [vmem:[#allocation3 + $0x60] sm:$0xff] %v5495
        %5560 = vst [vmem:[#allocation3 + $0xa0] sm:$0xff] %v5496
        %5561 = vst [vmem:[#allocation3 + $0xe0] sm:$0xff] %v5497
        %5562 = vst [vmem:[#allocation3 + $0x120] sm:$0xff] %v5498
        %5563 = vst [vmem:[#allocation3 + $0x160] sm:$0xff] %v5499
        %5564 = vst [vmem:[#allocation3 + $0x1a0] sm:$0xff] %v5500
        %5565 = vst [vmem:[#allocation3 + $0x1e0] sm:$0xff] %v5501
        %5566 = vst [vmem:[#allocation3 + $0x220] sm:$0xff] %v5502
        %5567 = vst [vmem:[#allocation3 + $0x260] sm:$0xff] %v5503
        %5568 = vst [vmem:[#allocation3 + $0x2a0] sm:$0xff] %v5504
        %5569 = vst [vmem:[#allocation3 + $0x2e0] sm:$0xff] %v5505
        %5570 = vst [vmem:[#allocation3 + $0x320] sm:$0xff] %v5506
        %5571 = vst [vmem:[#allocation3 + $0x360] sm:$0xff] %v5507
        %5572 = vst [vmem:[#allocation3 + $0x3a0] sm:$0xff] %v5508
        %5573 = vst [vmem:[#allocation3 + $0x3e0] sm:$0xff] %v5509
        %5574 = vst [vmem:[#allocation3 + $0x420] sm:$0xff] %v5510
        %5575 = vst [vmem:[#allocation3 + $0x460] sm:$0xff] %v5511
        %5576 = vst [vmem:[#allocation3 + $0x4a0] sm:$0xff] %v5512
        %5577 = vst [vmem:[#allocation3 + $0x4e0] sm:$0xff] %v5513
        %5578 = vst [vmem:[#allocation3 + $0x520] sm:$0xff] %v5514
        %5579 = vst [vmem:[#allocation3 + $0x560] sm:$0xff] %v5515
        %5580 = vst [vmem:[#allocation3 + $0x5a0] sm:$0xff] %v5516
        %5581 = vst [vmem:[#allocation3 + $0x5e0] sm:$0xff] %v5517
        %5582 = vst [vmem:[#allocation3 + $0x620] sm:$0xff] %v5518
        %5583 = vst [vmem:[#allocation3 + $0x660] sm:$0xff] %v5519
        %5584 = vst [vmem:[#allocation3 + $0x6a0] sm:$0xff] %v5520
        %5585 = vst [vmem:[#allocation3 + $0x6e0] sm:$0xff] %v5521
        %5586 = vst [vmem:[#allocation3 + $0x720] sm:$0xff] %v5522
        %5587 = vst [vmem:[#allocation3 + $0x760] sm:$0xff] %v5523
        %5588 = vst [vmem:[#allocation3 + $0x7a0] sm:$0xff] %v5524
        %5589 = vst [vmem:[#allocation3 + $0x7e0] sm:$0xff] %v5525
        %v5590 = vpack.c.b16 %v5430, %v5430
        %v5591 = vpack.c.b16 %v5431, %v5431
        %v5592 = vpack.c.b16 %v5432, %v5432
        %v5593 = vpack.c.b16 %v5433, %v5433
        %v5594 = vpack.c.b16 %v5434, %v5434
        %v5595 = vpack.c.b16 %v5435, %v5435
        %v5596 = vpack.c.b16 %v5436, %v5436
        %v5597 = vpack.c.b16 %v5437, %v5437
        %v5598 = vpack.c.b16 %v5438, %v5438
        %v5599 = vpack.c.b16 %v5439, %v5439
        %v5600 = vpack.c.b16 %v5440, %v5440
        %v5601 = vpack.c.b16 %v5441, %v5441
        %v5602 = vpack.c.b16 %v5442, %v5442
        %v5603 = vpack.c.b16 %v5443, %v5443
        %v5604 = vpack.c.b16 %v5444, %v5444
        %v5605 = vpack.c.b16 %v5445, %v5445
        %v5606 = vpack.c.b16 %v5446, %v5446
        %v5607 = vpack.c.b16 %v5447, %v5447
        %v5608 = vpack.c.b16 %v5448, %v5448
        %v5609 = vpack.c.b16 %v5449, %v5449
        %v5610 = vpack.c.b16 %v5450, %v5450
        %v5611 = vpack.c.b16 %v5451, %v5451
        %v5612 = vpack.c.b16 %v5452, %v5452
        %v5613 = vpack.c.b16 %v5453, %v5453
        %v5614 = vpack.c.b16 %v5454, %v5454
        %v5615 = vpack.c.b16 %v5455, %v5455
        %v5616 = vpack.c.b16 %v5456, %v5456
        %v5617 = vpack.c.b16 %v5457, %v5457
        %v5618 = vpack.c.b16 %v5458, %v5458
        %v5619 = vpack.c.b16 %v5459, %v5459
        %v5620 = vpack.c.b16 %v5460, %v5460
        %v5621 = vpack.c.b16 %v5461, %v5461
        %v5622 = vpack.c.b16 %v5462, %v5462
        %v5623 = vpack.c.b16 %v5463, %v5463
        %v5624 = vpack.c.b16 %v5464, %v5464
        %v5625 = vpack.c.b16 %v5465, %v5465
        %v5626 = vpack.c.b16 %v5466, %v5466
        %v5627 = vpack.c.b16 %v5467, %v5467
        %v5628 = vpack.c.b16 %v5468, %v5468
        %v5629 = vpack.c.b16 %v5469, %v5469
        %v5630 = vpack.c.b16 %v5470, %v5470
        %v5631 = vpack.c.b16 %v5471, %v5471
        %v5632 = vpack.c.b16 %v5472, %v5472
        %v5633 = vpack.c.b16 %v5473, %v5473
        %v5634 = vpack.c.b16 %v5474, %v5474
        %v5635 = vpack.c.b16 %v5475, %v5475
        %v5636 = vpack.c.b16 %v5476, %v5476
        %v5637 = vpack.c.b16 %v5477, %v5477
        %v5638 = vpack.c.b16 %v5478, %v5478
        %v5639 = vpack.c.b16 %v5479, %v5479
        %v5640 = vpack.c.b16 %v5480, %v5480
        %v5641 = vpack.c.b16 %v5481, %v5481
        %v5642 = vpack.c.b16 %v5482, %v5482
        %v5643 = vpack.c.b16 %v5483, %v5483
        %v5644 = vpack.c.b16 %v5484, %v5484
        %v5645 = vpack.c.b16 %v5485, %v5485
        %v5646 = vpack.c.b16 %v5486, %v5486
        %v5647 = vpack.c.b16 %v5487, %v5487
        %v5648 = vpack.c.b16 %v5488, %v5488
        %v5649 = vpack.c.b16 %v5489, %v5489
        %v5650 = vpack.c.b16 %v5490, %v5490
        %v5651 = vpack.c.b16 %v5491, %v5491
        %v5652 = vpack.c.b16 %v5492, %v5492
        %v5653 = vpack.c.b16 %v5493, %v5493
        %v5655 = vshrl.u32 %v5590, 16
        %v5657 = vshll.u32 %v5590, 16
        %v5659 = vrot.slane %v5657, 1
        %v5660 = vor.u32 %v5655, %v5659
        %v5662 = vshrl.u32 %v5591, 16
        %v5664 = vshll.u32 %v5591, 16
        %v5666 = vrot.slane %v5664, 1
        %v5667 = vor.u32 %v5662, %v5666
        %v5669 = vshrl.u32 %v5592, 16
        %v5671 = vshll.u32 %v5592, 16
        %v5673 = vrot.slane %v5671, 1
        %v5674 = vor.u32 %v5669, %v5673
        %v5676 = vshrl.u32 %v5593, 16
        %v5678 = vshll.u32 %v5593, 16
        %v5680 = vrot.slane %v5678, 1
        %v5681 = vor.u32 %v5676, %v5680
        %v5683 = vshrl.u32 %v5594, 16
        %v5685 = vshll.u32 %v5594, 16
        %v5687 = vrot.slane %v5685, 1
        %v5688 = vor.u32 %v5683, %v5687
        %v5690 = vshrl.u32 %v5595, 16
        %v5692 = vshll.u32 %v5595, 16
        %v5694 = vrot.slane %v5692, 1
        %v5695 = vor.u32 %v5690, %v5694
        %v5697 = vshrl.u32 %v5596, 16
        %v5699 = vshll.u32 %v5596, 16
        %v5701 = vrot.slane %v5699, 1
        %v5702 = vor.u32 %v5697, %v5701
        %v5704 = vshrl.u32 %v5597, 16
        %v5706 = vshll.u32 %v5597, 16
        %v5708 = vrot.slane %v5706, 1
        %v5709 = vor.u32 %v5704, %v5708
        %v5711 = vshrl.u32 %v5598, 16
        %v5713 = vshll.u32 %v5598, 16
        %v5715 = vrot.slane %v5713, 1
        %v5716 = vor.u32 %v5711, %v5715
        %v5718 = vshrl.u32 %v5599, 16
        %v5720 = vshll.u32 %v5599, 16
        %v5722 = vrot.slane %v5720, 1
        %v5723 = vor.u32 %v5718, %v5722
        %v5725 = vshrl.u32 %v5600, 16
        %v5727 = vshll.u32 %v5600, 16
        %v5729 = vrot.slane %v5727, 1
        %v5730 = vor.u32 %v5725, %v5729
        %v5732 = vshrl.u32 %v5601, 16
        %v5734 = vshll.u32 %v5601, 16
        %v5736 = vrot.slane %v5734, 1
        %v5737 = vor.u32 %v5732, %v5736
        %v5739 = vshrl.u32 %v5602, 16
        %v5741 = vshll.u32 %v5602, 16
        %v5743 = vrot.slane %v5741, 1
        %v5744 = vor.u32 %v5739, %v5743
        %v5746 = vshrl.u32 %v5603, 16
        %v5748 = vshll.u32 %v5603, 16
        %v5750 = vrot.slane %v5748, 1
        %v5751 = vor.u32 %v5746, %v5750
        %v5753 = vshrl.u32 %v5604, 16
        %v5755 = vshll.u32 %v5604, 16
        %v5757 = vrot.slane %v5755, 1
        %v5758 = vor.u32 %v5753, %v5757
        %v5760 = vshrl.u32 %v5605, 16
        %v5762 = vshll.u32 %v5605, 16
        %v5764 = vrot.slane %v5762, 1
        %v5765 = vor.u32 %v5760, %v5764
        %v5767 = vshrl.u32 %v5606, 16
        %v5769 = vshll.u32 %v5606, 16
        %v5771 = vrot.slane %v5769, 1
        %v5772 = vor.u32 %v5767, %v5771
        %v5774 = vshrl.u32 %v5607, 16
        %v5776 = vshll.u32 %v5607, 16
        %v5778 = vrot.slane %v5776, 1
        %v5779 = vor.u32 %v5774, %v5778
        %v5781 = vshrl.u32 %v5608, 16
        %v5783 = vshll.u32 %v5608, 16
        %v5785 = vrot.slane %v5783, 1
        %v5786 = vor.u32 %v5781, %v5785
        %v5788 = vshrl.u32 %v5609, 16
        %v5790 = vshll.u32 %v5609, 16
        %v5792 = vrot.slane %v5790, 1
        %v5793 = vor.u32 %v5788, %v5792
        %v5795 = vshrl.u32 %v5610, 16
        %v5797 = vshll.u32 %v5610, 16
        %v5799 = vrot.slane %v5797, 1
        %v5800 = vor.u32 %v5795, %v5799
        %v5802 = vshrl.u32 %v5611, 16
        %v5804 = vshll.u32 %v5611, 16
        %v5806 = vrot.slane %v5804, 1
        %v5807 = vor.u32 %v5802, %v5806
        %v5809 = vshrl.u32 %v5612, 16
        %v5811 = vshll.u32 %v5612, 16
        %v5813 = vrot.slane %v5811, 1
        %v5814 = vor.u32 %v5809, %v5813
        %v5816 = vshrl.u32 %v5613, 16
        %v5818 = vshll.u32 %v5613, 16
        %v5820 = vrot.slane %v5818, 1
        %v5821 = vor.u32 %v5816, %v5820
        %v5823 = vshrl.u32 %v5614, 16
        %v5825 = vshll.u32 %v5614, 16
        %v5827 = vrot.slane %v5825, 1
        %v5828 = vor.u32 %v5823, %v5827
        %v5830 = vshrl.u32 %v5615, 16
        %v5832 = vshll.u32 %v5615, 16
        %v5834 = vrot.slane %v5832, 1
        %v5835 = vor.u32 %v5830, %v5834
        %v5837 = vshrl.u32 %v5616, 16
        %v5839 = vshll.u32 %v5616, 16
        %v5841 = vrot.slane %v5839, 1
        %v5842 = vor.u32 %v5837, %v5841
        %v5844 = vshrl.u32 %v5617, 16
        %v5846 = vshll.u32 %v5617, 16
        %v5848 = vrot.slane %v5846, 1
        %v5849 = vor.u32 %v5844, %v5848
        %v5851 = vshrl.u32 %v5618, 16
        %v5853 = vshll.u32 %v5618, 16
        %v5855 = vrot.slane %v5853, 1
        %v5856 = vor.u32 %v5851, %v5855
        %v5858 = vshrl.u32 %v5619, 16
        %v5860 = vshll.u32 %v5619, 16
        %v5862 = vrot.slane %v5860, 1
        %v5863 = vor.u32 %v5858, %v5862
        %v5865 = vshrl.u32 %v5620, 16
        %v5867 = vshll.u32 %v5620, 16
        %v5869 = vrot.slane %v5867, 1
        %v5870 = vor.u32 %v5865, %v5869
        %v5872 = vshrl.u32 %v5621, 16
        %v5874 = vshll.u32 %v5621, 16
        %v5876 = vrot.slane %v5874, 1
        %v5877 = vor.u32 %v5872, %v5876
        %v5879 = vshrl.u32 %v5622, 16
        %v5881 = vshll.u32 %v5622, 16
        %v5883 = vrot.slane %v5881, 1
        %v5884 = vor.u32 %v5879, %v5883
        %v5886 = vshrl.u32 %v5623, 16
        %v5888 = vshll.u32 %v5623, 16
        %v5890 = vrot.slane %v5888, 1
        %v5891 = vor.u32 %v5886, %v5890
        %v5893 = vshrl.u32 %v5624, 16
        %v5895 = vshll.u32 %v5624, 16
        %v5897 = vrot.slane %v5895, 1
        %v5898 = vor.u32 %v5893, %v5897
        %v5900 = vshrl.u32 %v5625, 16
        %v5902 = vshll.u32 %v5625, 16
        %v5904 = vrot.slane %v5902, 1
        %v5905 = vor.u32 %v5900, %v5904
        %v5907 = vshrl.u32 %v5626, 16
        %v5909 = vshll.u32 %v5626, 16
        %v5911 = vrot.slane %v5909, 1
        %v5912 = vor.u32 %v5907, %v5911
        %v5914 = vshrl.u32 %v5627, 16
        %v5916 = vshll.u32 %v5627, 16
        %v5918 = vrot.slane %v5916, 1
        %v5919 = vor.u32 %v5914, %v5918
        %v5921 = vshrl.u32 %v5628, 16
        %v5923 = vshll.u32 %v5628, 16
        %v5925 = vrot.slane %v5923, 1
        %v5926 = vor.u32 %v5921, %v5925
        %v5928 = vshrl.u32 %v5629, 16
        %v5930 = vshll.u32 %v5629, 16
        %v5932 = vrot.slane %v5930, 1
        %v5933 = vor.u32 %v5928, %v5932
        %v5935 = vshrl.u32 %v5630, 16
        %v5937 = vshll.u32 %v5630, 16
        %v5939 = vrot.slane %v5937, 1
        %v5940 = vor.u32 %v5935, %v5939
        %v5942 = vshrl.u32 %v5631, 16
        %v5944 = vshll.u32 %v5631, 16
        %v5946 = vrot.slane %v5944, 1
        %v5947 = vor.u32 %v5942, %v5946
        %v5949 = vshrl.u32 %v5632, 16
        %v5951 = vshll.u32 %v5632, 16
        %v5953 = vrot.slane %v5951, 1
        %v5954 = vor.u32 %v5949, %v5953
        %v5956 = vshrl.u32 %v5633, 16
        %v5958 = vshll.u32 %v5633, 16
        %v5960 = vrot.slane %v5958, 1
        %v5961 = vor.u32 %v5956, %v5960
        %v5963 = vshrl.u32 %v5634, 16
        %v5965 = vshll.u32 %v5634, 16
        %v5967 = vrot.slane %v5965, 1
        %v5968 = vor.u32 %v5963, %v5967
        %v5970 = vshrl.u32 %v5635, 16
        %v5972 = vshll.u32 %v5635, 16
        %v5974 = vrot.slane %v5972, 1
        %v5975 = vor.u32 %v5970, %v5974
        %v5977 = vshrl.u32 %v5636, 16
        %v5979 = vshll.u32 %v5636, 16
        %v5981 = vrot.slane %v5979, 1
        %v5982 = vor.u32 %v5977, %v5981
        %v5984 = vshrl.u32 %v5637, 16
        %v5986 = vshll.u32 %v5637, 16
        %v5988 = vrot.slane %v5986, 1
        %v5989 = vor.u32 %v5984, %v5988
        %v5991 = vshrl.u32 %v5638, 16
        %v5993 = vshll.u32 %v5638, 16
        %v5995 = vrot.slane %v5993, 1
        %v5996 = vor.u32 %v5991, %v5995
        %v5998 = vshrl.u32 %v5639, 16
        %v6000 = vshll.u32 %v5639, 16
        %v6002 = vrot.slane %v6000, 1
        %v6003 = vor.u32 %v5998, %v6002
        %v6005 = vshrl.u32 %v5640, 16
        %v6007 = vshll.u32 %v5640, 16
        %v6009 = vrot.slane %v6007, 1
        %v6010 = vor.u32 %v6005, %v6009
        %v6012 = vshrl.u32 %v5641, 16
        %v6014 = vshll.u32 %v5641, 16
        %v6016 = vrot.slane %v6014, 1
        %v6017 = vor.u32 %v6012, %v6016
        %v6019 = vshrl.u32 %v5642, 16
        %v6021 = vshll.u32 %v5642, 16
        %v6023 = vrot.slane %v6021, 1
        %v6024 = vor.u32 %v6019, %v6023
        %v6026 = vshrl.u32 %v5643, 16
        %v6028 = vshll.u32 %v5643, 16
        %v6030 = vrot.slane %v6028, 1
        %v6031 = vor.u32 %v6026, %v6030
        %v6033 = vshrl.u32 %v5644, 16
        %v6035 = vshll.u32 %v5644, 16
        %v6037 = vrot.slane %v6035, 1
        %v6038 = vor.u32 %v6033, %v6037
        %v6040 = vshrl.u32 %v5645, 16
        %v6042 = vshll.u32 %v5645, 16
        %v6044 = vrot.slane %v6042, 1
        %v6045 = vor.u32 %v6040, %v6044
        %v6047 = vshrl.u32 %v5646, 16
        %v6049 = vshll.u32 %v5646, 16
        %v6051 = vrot.slane %v6049, 1
        %v6052 = vor.u32 %v6047, %v6051
        %v6054 = vshrl.u32 %v5647, 16
        %v6056 = vshll.u32 %v5647, 16
        %v6058 = vrot.slane %v6056, 1
        %v6059 = vor.u32 %v6054, %v6058
        %v6061 = vshrl.u32 %v5648, 16
        %v6063 = vshll.u32 %v5648, 16
        %v6065 = vrot.slane %v6063, 1
        %v6066 = vor.u32 %v6061, %v6065
        %v6068 = vshrl.u32 %v5649, 16
        %v6070 = vshll.u32 %v5649, 16
        %v6072 = vrot.slane %v6070, 1
        %v6073 = vor.u32 %v6068, %v6072
        %v6075 = vshrl.u32 %v5650, 16
        %v6077 = vshll.u32 %v5650, 16
        %v6079 = vrot.slane %v6077, 1
        %v6080 = vor.u32 %v6075, %v6079
        %v6082 = vshrl.u32 %v5651, 16
        %v6084 = vshll.u32 %v5651, 16
        %v6086 = vrot.slane %v6084, 1
        %v6087 = vor.u32 %v6082, %v6086
        %v6089 = vshrl.u32 %v5652, 16
        %v6091 = vshll.u32 %v5652, 16
        %v6093 = vrot.slane %v6091, 1
        %v6094 = vor.u32 %v6089, %v6093
        %v6096 = vshrl.u32 %v5653, 16
        %v6098 = vshll.u32 %v5653, 16
        %v6100 = vrot.slane %v6098, 1
        %v6101 = vor.u32 %v6096, %v6100
        %v6166 = vrot.slane %v5657, 5
        %v6167 = vrot.slane %v5664, 5
        %v6168 = vrot.slane %v5671, 5
        %v6169 = vrot.slane %v5678, 5
        %v6170 = vrot.slane %v5685, 5
        %v6171 = vrot.slane %v5692, 5
        %v6172 = vrot.slane %v5699, 5
        %v6173 = vrot.slane %v5706, 5
        %v6174 = vrot.slane %v5713, 5
        %v6175 = vrot.slane %v5720, 5
        %v6176 = vrot.slane %v5727, 5
        %v6177 = vrot.slane %v5734, 5
        %v6178 = vrot.slane %v5741, 5
        %v6179 = vrot.slane %v5748, 5
        %v6180 = vrot.slane %v5755, 5
        %v6181 = vrot.slane %v5762, 5
        %v6182 = vrot.slane %v5769, 5
        %v6183 = vrot.slane %v5776, 5
        %v6184 = vrot.slane %v5783, 5
        %v6185 = vrot.slane %v5790, 5
        %v6186 = vrot.slane %v5797, 5
        %v6187 = vrot.slane %v5804, 5
        %v6188 = vrot.slane %v5811, 5
        %v6189 = vrot.slane %v5818, 5
        %v6190 = vrot.slane %v5825, 5
        %v6191 = vrot.slane %v5832, 5
        %v6192 = vrot.slane %v5839, 5
        %v6193 = vrot.slane %v5846, 5
        %v6194 = vrot.slane %v5853, 5
        %v6195 = vrot.slane %v5860, 5
        %v6196 = vrot.slane %v5867, 5
        %v6197 = vrot.slane %v5874, 5
        %v6198 = vrot.slane %v5881, 5
        %v6199 = vrot.slane %v5888, 5
        %v6200 = vrot.slane %v5895, 5
        %v6201 = vrot.slane %v5902, 5
        %v6202 = vrot.slane %v5909, 5
        %v6203 = vrot.slane %v5916, 5
        %v6204 = vrot.slane %v5923, 5
        %v6205 = vrot.slane %v5930, 5
        %v6206 = vrot.slane %v5937, 5
        %v6207 = vrot.slane %v5944, 5
        %v6208 = vrot.slane %v5951, 5
        %v6209 = vrot.slane %v5958, 5
        %v6210 = vrot.slane %v5965, 5
        %v6211 = vrot.slane %v5972, 5
        %v6212 = vrot.slane %v5979, 5
        %v6213 = vrot.slane %v5986, 5
        %v6214 = vrot.slane %v5993, 5
        %v6215 = vrot.slane %v6000, 5
        %v6216 = vrot.slane %v6007, 5
        %v6217 = vrot.slane %v6014, 5
        %v6218 = vrot.slane %v6021, 5
        %v6219 = vrot.slane %v6028, 5
        %v6220 = vrot.slane %v6035, 5
        %v6221 = vrot.slane %v6042, 5
        %v6222 = vrot.slane %v6049, 5
        %v6223 = vrot.slane %v6056, 5
        %v6224 = vrot.slane %v6063, 5
        %v6225 = vrot.slane %v6070, 5
        %v6226 = vrot.slane %v6077, 5
        %v6227 = vrot.slane %v6084, 5
        %v6228 = vrot.slane %v6091, 5
        %v6229 = vrot.slane %v6098, 5
        %v6294 = vsel %vm3732, %v5660, %v6166
        %v6295 = vsel %vm3732, %v5667, %v6167
        %v6296 = vsel %vm3732, %v5674, %v6168
        %v6297 = vsel %vm3732, %v5681, %v6169
        %v6298 = vsel %vm3732, %v5688, %v6170
        %v6299 = vsel %vm3732, %v5695, %v6171
        %v6300 = vsel %vm3732, %v5702, %v6172
        %v6301 = vsel %vm3732, %v5709, %v6173
        %v6302 = vsel %vm3732, %v5716, %v6174
        %v6303 = vsel %vm3732, %v5723, %v6175
        %v6304 = vsel %vm3732, %v5730, %v6176
        %v6305 = vsel %vm3732, %v5737, %v6177
        %v6306 = vsel %vm3732, %v5744, %v6178
        %v6307 = vsel %vm3732, %v5751, %v6179
        %v6308 = vsel %vm3732, %v5758, %v6180
        %v6309 = vsel %vm3732, %v5765, %v6181
        %v6310 = vsel %vm3732, %v5772, %v6182
        %v6311 = vsel %vm3732, %v5779, %v6183
        %v6312 = vsel %vm3732, %v5786, %v6184
        %v6313 = vsel %vm3732, %v5793, %v6185
        %v6314 = vsel %vm3732, %v5800, %v6186
        %v6315 = vsel %vm3732, %v5807, %v6187
        %v6316 = vsel %vm3732, %v5814, %v6188
        %v6317 = vsel %vm3732, %v5821, %v6189
        %v6318 = vsel %vm3732, %v5828, %v6190
        %v6319 = vsel %vm3732, %v5835, %v6191
        %v6320 = vsel %vm3732, %v5842, %v6192
        %v6321 = vsel %vm3732, %v5849, %v6193
        %v6322 = vsel %vm3732, %v5856, %v6194
        %v6323 = vsel %vm3732, %v5863, %v6195
        %v6324 = vsel %vm3732, %v5870, %v6196
        %v6325 = vsel %vm3732, %v5877, %v6197
        %v6326 = vsel %vm3732, %v5884, %v6198
        %v6327 = vsel %vm3732, %v5891, %v6199
        %v6328 = vsel %vm3732, %v5898, %v6200
        %v6329 = vsel %vm3732, %v5905, %v6201
        %v6330 = vsel %vm3732, %v5912, %v6202
        %v6331 = vsel %vm3732, %v5919, %v6203
        %v6332 = vsel %vm3732, %v5926, %v6204
        %v6333 = vsel %vm3732, %v5933, %v6205
        %v6334 = vsel %vm3732, %v5940, %v6206
        %v6335 = vsel %vm3732, %v5947, %v6207
        %v6336 = vsel %vm3732, %v5954, %v6208
        %v6337 = vsel %vm3732, %v5961, %v6209
        %v6338 = vsel %vm3732, %v5968, %v6210
        %v6339 = vsel %vm3732, %v5975, %v6211
        %v6340 = vsel %vm3732, %v5982, %v6212
        %v6341 = vsel %vm3732, %v5989, %v6213
        %v6342 = vsel %vm3732, %v5996, %v6214
        %v6343 = vsel %vm3732, %v6003, %v6215
        %v6344 = vsel %vm3732, %v6010, %v6216
        %v6345 = vsel %vm3732, %v6017, %v6217
        %v6346 = vsel %vm3732, %v6024, %v6218
        %v6347 = vsel %vm3732, %v6031, %v6219
        %v6348 = vsel %vm3732, %v6038, %v6220
        %v6349 = vsel %vm3732, %v6045, %v6221
        %v6350 = vsel %vm3732, %v6052, %v6222
        %v6351 = vsel %vm3732, %v6059, %v6223
        %v6352 = vsel %vm3732, %v6066, %v6224
        %v6353 = vsel %vm3732, %v6073, %v6225
        %v6354 = vsel %vm3732, %v6080, %v6226
        %v6355 = vsel %vm3732, %v6087, %v6227
        %v6356 = vsel %vm3732, %v6094, %v6228
        %v6357 = vsel %vm3732, %v6101, %v6229
        %v6422 = vunpack.c.l.b16 %v6294
        %v6423 = vunpack.c.l.b16 %v6295
        %v6424 = vunpack.c.l.b16 %v6296
        %v6425 = vunpack.c.l.b16 %v6297
        %v6426 = vunpack.c.l.b16 %v6298
        %v6427 = vunpack.c.l.b16 %v6299
        %v6428 = vunpack.c.l.b16 %v6300
        %v6429 = vunpack.c.l.b16 %v6301
        %v6430 = vunpack.c.l.b16 %v6302
        %v6431 = vunpack.c.l.b16 %v6303
        %v6432 = vunpack.c.l.b16 %v6304
        %v6433 = vunpack.c.l.b16 %v6305
        %v6434 = vunpack.c.l.b16 %v6306
        %v6435 = vunpack.c.l.b16 %v6307
        %v6436 = vunpack.c.l.b16 %v6308
        %v6437 = vunpack.c.l.b16 %v6309
        %v6438 = vunpack.c.l.b16 %v6310
        %v6439 = vunpack.c.l.b16 %v6311
        %v6440 = vunpack.c.l.b16 %v6312
        %v6441 = vunpack.c.l.b16 %v6313
        %v6442 = vunpack.c.l.b16 %v6314
        %v6443 = vunpack.c.l.b16 %v6315
        %v6444 = vunpack.c.l.b16 %v6316
        %v6445 = vunpack.c.l.b16 %v6317
        %v6446 = vunpack.c.l.b16 %v6318
        %v6447 = vunpack.c.l.b16 %v6319
        %v6448 = vunpack.c.l.b16 %v6320
        %v6449 = vunpack.c.l.b16 %v6321
        %v6450 = vunpack.c.l.b16 %v6322
        %v6451 = vunpack.c.l.b16 %v6323
        %v6452 = vunpack.c.l.b16 %v6324
        %v6453 = vunpack.c.l.b16 %v6325
        %v6454 = vunpack.c.l.b16 %v6326
        %v6455 = vunpack.c.l.b16 %v6327
        %v6456 = vunpack.c.l.b16 %v6328
        %v6457 = vunpack.c.l.b16 %v6329
        %v6458 = vunpack.c.l.b16 %v6330
        %v6459 = vunpack.c.l.b16 %v6331
        %v6460 = vunpack.c.l.b16 %v6332
        %v6461 = vunpack.c.l.b16 %v6333
        %v6462 = vunpack.c.l.b16 %v6334
        %v6463 = vunpack.c.l.b16 %v6335
        %v6464 = vunpack.c.l.b16 %v6336
        %v6465 = vunpack.c.l.b16 %v6337
        %v6466 = vunpack.c.l.b16 %v6338
        %v6467 = vunpack.c.l.b16 %v6339
        %v6468 = vunpack.c.l.b16 %v6340
        %v6469 = vunpack.c.l.b16 %v6341
        %v6470 = vunpack.c.l.b16 %v6342
        %v6471 = vunpack.c.l.b16 %v6343
        %v6472 = vunpack.c.l.b16 %v6344
        %v6473 = vunpack.c.l.b16 %v6345
        %v6474 = vunpack.c.l.b16 %v6346
        %v6475 = vunpack.c.l.b16 %v6347
        %v6476 = vunpack.c.l.b16 %v6348
        %v6477 = vunpack.c.l.b16 %v6349
        %v6478 = vunpack.c.l.b16 %v6350
        %v6479 = vunpack.c.l.b16 %v6351
        %v6480 = vunpack.c.l.b16 %v6352
        %v6481 = vunpack.c.l.b16 %v6353
        %v6482 = vunpack.c.l.b16 %v6354
        %v6483 = vunpack.c.l.b16 %v6355
        %v6484 = vunpack.c.l.b16 %v6356
        %v6485 = vunpack.c.l.b16 %v6357
        %v6486 = vpack.c.b16 %v6423, %v6422
        %v6487 = vpack.c.b16 %v6425, %v6424
        %v6488 = vpack.c.b16 %v6427, %v6426
        %v6489 = vpack.c.b16 %v6429, %v6428
        %v6490 = vpack.c.b16 %v6431, %v6430
        %v6491 = vpack.c.b16 %v6433, %v6432
        %v6492 = vpack.c.b16 %v6435, %v6434
        %v6493 = vpack.c.b16 %v6437, %v6436
        %v6494 = vpack.c.b16 %v6439, %v6438
        %v6495 = vpack.c.b16 %v6441, %v6440
        %v6496 = vpack.c.b16 %v6443, %v6442
        %v6497 = vpack.c.b16 %v6445, %v6444
        %v6498 = vpack.c.b16 %v6447, %v6446
        %v6499 = vpack.c.b16 %v6449, %v6448
        %v6500 = vpack.c.b16 %v6451, %v6450
        %v6501 = vpack.c.b16 %v6453, %v6452
        %v6502 = vpack.c.b16 %v6455, %v6454
        %v6503 = vpack.c.b16 %v6457, %v6456
        %v6504 = vpack.c.b16 %v6459, %v6458
        %v6505 = vpack.c.b16 %v6461, %v6460
        %v6506 = vpack.c.b16 %v6463, %v6462
        %v6507 = vpack.c.b16 %v6465, %v6464
        %v6508 = vpack.c.b16 %v6467, %v6466
        %v6509 = vpack.c.b16 %v6469, %v6468
        %v6510 = vpack.c.b16 %v6471, %v6470
        %v6511 = vpack.c.b16 %v6473, %v6472
        %v6512 = vpack.c.b16 %v6475, %v6474
        %v6513 = vpack.c.b16 %v6477, %v6476
        %v6514 = vpack.c.b16 %v6479, %v6478
        %v6515 = vpack.c.b16 %v6481, %v6480
        %v6516 = vpack.c.b16 %v6483, %v6482
        %v6517 = vpack.c.b16 %v6485, %v6484
        %6550 = vst [vmem:[#allocation3 + $0x28] sm:$0xff] %v6486
        %6551 = vst [vmem:[#allocation3 + $0x68] sm:$0xff] %v6487
        %6552 = vst [vmem:[#allocation3 + $0xa8] sm:$0xff] %v6488
        %6553 = vst [vmem:[#allocation3 + $0xe8] sm:$0xff] %v6489
        %6554 = vst [vmem:[#allocation3 + $0x128] sm:$0xff] %v6490
        %6555 = vst [vmem:[#allocation3 + $0x168] sm:$0xff] %v6491
        %6556 = vst [vmem:[#allocation3 + $0x1a8] sm:$0xff] %v6492
        %6557 = vst [vmem:[#allocation3 + $0x1e8] sm:$0xff] %v6493
        %6558 = vst [vmem:[#allocation3 + $0x228] sm:$0xff] %v6494
        %6559 = vst [vmem:[#allocation3 + $0x268] sm:$0xff] %v6495
        %6560 = vst [vmem:[#allocation3 + $0x2a8] sm:$0xff] %v6496
        %6561 = vst [vmem:[#allocation3 + $0x2e8] sm:$0xff] %v6497
        %6562 = vst [vmem:[#allocation3 + $0x328] sm:$0xff] %v6498
        %6563 = vst [vmem:[#allocation3 + $0x368] sm:$0xff] %v6499
        %6564 = vst [vmem:[#allocation3 + $0x3a8] sm:$0xff] %v6500
        %6565 = vst [vmem:[#allocation3 + $0x3e8] sm:$0xff] %v6501
        %6566 = vst [vmem:[#allocation3 + $0x428] sm:$0xff] %v6502
        %6567 = vst [vmem:[#allocation3 + $0x468] sm:$0xff] %v6503
        %6568 = vst [vmem:[#allocation3 + $0x4a8] sm:$0xff] %v6504
        %6569 = vst [vmem:[#allocation3 + $0x4e8] sm:$0xff] %v6505
        %6570 = vst [vmem:[#allocation3 + $0x528] sm:$0xff] %v6506
        %6571 = vst [vmem:[#allocation3 + $0x568] sm:$0xff] %v6507
        %6572 = vst [vmem:[#allocation3 + $0x5a8] sm:$0xff] %v6508
        %6573 = vst [vmem:[#allocation3 + $0x5e8] sm:$0xff] %v6509
        %6574 = vst [vmem:[#allocation3 + $0x628] sm:$0xff] %v6510
        %6575 = vst [vmem:[#allocation3 + $0x668] sm:$0xff] %v6511
        %6576 = vst [vmem:[#allocation3 + $0x6a8] sm:$0xff] %v6512
        %6577 = vst [vmem:[#allocation3 + $0x6e8] sm:$0xff] %v6513
        %6578 = vst [vmem:[#allocation3 + $0x728] sm:$0xff] %v6514
        %6579 = vst [vmem:[#allocation3 + $0x768] sm:$0xff] %v6515
        %6580 = vst [vmem:[#allocation3 + $0x7a8] sm:$0xff] %v6516
        %6581 = vst [vmem:[#allocation3 + $0x7e8] sm:$0xff] %v6517
        %v6582 = vld [vmem:[%s4021] sm:$0xf]
        %v6583 = vld [vmem:[%s4021 + $0x4] sm:$0xf]
        %v6584 = vld [vmem:[%s4021 + $0x8] sm:$0xf]
        %v6585 = vld [vmem:[%s4021 + $0xc] sm:$0xf]
        %v6586 = vld [vmem:[%s4021 + $0x10] sm:$0xf]
        %v6587 = vld [vmem:[%s4021 + $0x14] sm:$0xf]
        %v6588 = vld [vmem:[%s4021 + $0x18] sm:$0xf]
        %v6589 = vld [vmem:[%s4021 + $0x1c] sm:$0xf]
        %v6590 = vld [vmem:[%s4021 + $0x20] sm:$0xf]
        %v6591 = vld [vmem:[%s4021 + $0x24] sm:$0xf]
        %v6592 = vld [vmem:[%s4021 + $0x28] sm:$0xf]
        %v6593 = vld [vmem:[%s4021 + $0x2c] sm:$0xf]
        %v6594 = vld [vmem:[%s4021 + $0x30] sm:$0xf]
        %v6595 = vld [vmem:[%s4021 + $0x34] sm:$0xf]
        %v6596 = vld [vmem:[%s4021 + $0x38] sm:$0xf]
        %v6597 = vld [vmem:[%s4021 + $0x3c] sm:$0xf]
        %v6598 = vld [vmem:[%s4021 + $0x40] sm:$0xf]
        %v6599 = vld [vmem:[%s4021 + $0x44] sm:$0xf]
        %v6600 = vld [vmem:[%s4021 + $0x48] sm:$0xf]
        %v6601 = vld [vmem:[%s4021 + $0x4c] sm:$0xf]
        %v6602 = vld [vmem:[%s4021 + $0x50] sm:$0xf]
        %v6603 = vld [vmem:[%s4021 + $0x54] sm:$0xf]
        %v6604 = vld [vmem:[%s4021 + $0x58] sm:$0xf]
        %v6605 = vld [vmem:[%s4021 + $0x5c] sm:$0xf]
        %v6606 = vld [vmem:[%s4021 + $0x60] sm:$0xf]
        %v6607 = vld [vmem:[%s4021 + $0x64] sm:$0xf]
        %v6608 = vld [vmem:[%s4021 + $0x68] sm:$0xf]
        %v6609 = vld [vmem:[%s4021 + $0x6c] sm:$0xf]
        %v6610 = vld [vmem:[%s4021 + $0x70] sm:$0xf]
        %v6611 = vld [vmem:[%s4021 + $0x74] sm:$0xf]
        %v6612 = vld [vmem:[%s4021 + $0x78] sm:$0xf]
        %v6613 = vld [vmem:[%s4021 + $0x7c] sm:$0xf]
        %v6614 = vld [vmem:[%s4021 + $0x80] sm:$0xf]
        %v6615 = vld [vmem:[%s4021 + $0x84] sm:$0xf]
        %v6616 = vld [vmem:[%s4021 + $0x88] sm:$0xf]
        %v6617 = vld [vmem:[%s4021 + $0x8c] sm:$0xf]
        %v6618 = vld [vmem:[%s4021 + $0x90] sm:$0xf]
        %v6619 = vld [vmem:[%s4021 + $0x94] sm:$0xf]
        %v6620 = vld [vmem:[%s4021 + $0x98] sm:$0xf]
        %v6621 = vld [vmem:[%s4021 + $0x9c] sm:$0xf]
        %v6622 = vld [vmem:[%s4021 + $0xa0] sm:$0xf]
        %v6623 = vld [vmem:[%s4021 + $0xa4] sm:$0xf]
        %v6624 = vld [vmem:[%s4021 + $0xa8] sm:$0xf]
        %v6625 = vld [vmem:[%s4021 + $0xac] sm:$0xf]
        %v6626 = vld [vmem:[%s4021 + $0xb0] sm:$0xf]
        %v6627 = vld [vmem:[%s4021 + $0xb4] sm:$0xf]
        %v6628 = vld [vmem:[%s4021 + $0xb8] sm:$0xf]
        %v6629 = vld [vmem:[%s4021 + $0xbc] sm:$0xf]
        %v6630 = vld [vmem:[%s4021 + $0xc0] sm:$0xf]
        %v6631 = vld [vmem:[%s4021 + $0xc4] sm:$0xf]
        %v6632 = vld [vmem:[%s4021 + $0xc8] sm:$0xf]
        %v6633 = vld [vmem:[%s4021 + $0xcc] sm:$0xf]
        %v6634 = vld [vmem:[%s4021 + $0xd0] sm:$0xf]
        %v6635 = vld [vmem:[%s4021 + $0xd4] sm:$0xf]
        %v6636 = vld [vmem:[%s4021 + $0xd8] sm:$0xf]
        %v6637 = vld [vmem:[%s4021 + $0xdc] sm:$0xf]
        %v6638 = vld [vmem:[%s4021 + $0xe0] sm:$0xf]
        %v6639 = vld [vmem:[%s4021 + $0xe4] sm:$0xf]
        %v6640 = vld [vmem:[%s4021 + $0xe8] sm:$0xf]
        %v6641 = vld [vmem:[%s4021 + $0xec] sm:$0xf]
        %v6642 = vld [vmem:[%s4021 + $0xf0] sm:$0xf]
        %v6643 = vld [vmem:[%s4021 + $0xf4] sm:$0xf]
        %v6644 = vld [vmem:[%s4021 + $0xf8] sm:$0xf]
        %v6645 = vld [vmem:[%s4021 + $0xfc] sm:$0xf]
        %v6710 = vunpack.c.l.b16 %v6583
        %v6711 = vunpack.c.l.b16 %v6584
        %v6712 = vunpack.c.l.b16 %v6585
        %v6713 = vunpack.c.l.b16 %v6586
        %v6714 = vunpack.c.l.b16 %v6587
        %v6715 = vunpack.c.l.b16 %v6588
        %v6716 = vunpack.c.l.b16 %v6589
        %v6717 = vunpack.c.l.b16 %v6582
        %v6718 = vunpack.c.l.b16 %v6591
        %v6719 = vunpack.c.l.b16 %v6592
        %v6720 = vunpack.c.l.b16 %v6593
        %v6721 = vunpack.c.l.b16 %v6594
        %v6722 = vunpack.c.l.b16 %v6595
        %v6723 = vunpack.c.l.b16 %v6596
        %v6724 = vunpack.c.l.b16 %v6597
        %v6725 = vunpack.c.l.b16 %v6590
        %v6726 = vunpack.c.l.b16 %v6599
        %v6727 = vunpack.c.l.b16 %v6600
        %v6728 = vunpack.c.l.b16 %v6601
        %v6729 = vunpack.c.l.b16 %v6602
        %v6730 = vunpack.c.l.b16 %v6603
        %v6731 = vunpack.c.l.b16 %v6604
        %v6732 = vunpack.c.l.b16 %v6605
        %v6733 = vunpack.c.l.b16 %v6598
        %v6734 = vunpack.c.l.b16 %v6607
        %v6735 = vunpack.c.l.b16 %v6608
        %v6736 = vunpack.c.l.b16 %v6609
        %v6737 = vunpack.c.l.b16 %v6610
        %v6738 = vunpack.c.l.b16 %v6611
        %v6739 = vunpack.c.l.b16 %v6612
        %v6740 = vunpack.c.l.b16 %v6613
        %v6741 = vunpack.c.l.b16 %v6606
        %v6742 = vunpack.c.l.b16 %v6615
        %v6743 = vunpack.c.l.b16 %v6616
        %v6744 = vunpack.c.l.b16 %v6617
        %v6745 = vunpack.c.l.b16 %v6618
        %v6746 = vunpack.c.l.b16 %v6619
        %v6747 = vunpack.c.l.b16 %v6620
        %v6748 = vunpack.c.l.b16 %v6621
        %v6749 = vunpack.c.l.b16 %v6614
        %v6750 = vunpack.c.l.b16 %v6623
        %v6751 = vunpack.c.l.b16 %v6624
        %v6752 = vunpack.c.l.b16 %v6625
        %v6753 = vunpack.c.l.b16 %v6626
        %v6754 = vunpack.c.l.b16 %v6627
        %v6755 = vunpack.c.l.b16 %v6628
        %v6756 = vunpack.c.l.b16 %v6629
        %v6757 = vunpack.c.l.b16 %v6622
        %v6758 = vunpack.c.l.b16 %v6631
        %v6759 = vunpack.c.l.b16 %v6632
        %v6760 = vunpack.c.l.b16 %v6633
        %v6761 = vunpack.c.l.b16 %v6634
        %v6762 = vunpack.c.l.b16 %v6635
        %v6763 = vunpack.c.l.b16 %v6636
        %v6764 = vunpack.c.l.b16 %v6637
        %v6765 = vunpack.c.l.b16 %v6630
        %v6766 = vunpack.c.l.b16 %v6639
        %v6767 = vunpack.c.l.b16 %v6640
        %v6768 = vunpack.c.l.b16 %v6641
        %v6769 = vunpack.c.l.b16 %v6642
        %v6770 = vunpack.c.l.b16 %v6643
        %v6771 = vunpack.c.l.b16 %v6644
        %v6772 = vunpack.c.l.b16 %v6645
        %v6773 = vunpack.c.l.b16 %v6638
        %v6774 = vpack.c.b16 %v6711, %v6710
        %v6775 = vpack.c.b16 %v6713, %v6712
        %v6776 = vpack.c.b16 %v6715, %v6714
        %v6777 = vpack.c.b16 %v6717, %v6716
        %v6778 = vpack.c.b16 %v6719, %v6718
        %v6779 = vpack.c.b16 %v6721, %v6720
        %v6780 = vpack.c.b16 %v6723, %v6722
        %v6781 = vpack.c.b16 %v6725, %v6724
        %v6782 = vpack.c.b16 %v6727, %v6726
        %v6783 = vpack.c.b16 %v6729, %v6728
        %v6784 = vpack.c.b16 %v6731, %v6730
        %v6785 = vpack.c.b16 %v6733, %v6732
        %v6786 = vpack.c.b16 %v6735, %v6734
        %v6787 = vpack.c.b16 %v6737, %v6736
        %v6788 = vpack.c.b16 %v6739, %v6738
        %v6789 = vpack.c.b16 %v6741, %v6740
        %v6790 = vpack.c.b16 %v6743, %v6742
        %v6791 = vpack.c.b16 %v6745, %v6744
        %v6792 = vpack.c.b16 %v6747, %v6746
        %v6793 = vpack.c.b16 %v6749, %v6748
        %v6794 = vpack.c.b16 %v6751, %v6750
        %v6795 = vpack.c.b16 %v6753, %v6752
        %v6796 = vpack.c.b16 %v6755, %v6754
        %v6797 = vpack.c.b16 %v6757, %v6756
        %v6798 = vpack.c.b16 %v6759, %v6758
        %v6799 = vpack.c.b16 %v6761, %v6760
        %v6800 = vpack.c.b16 %v6763, %v6762
        %v6801 = vpack.c.b16 %v6765, %v6764
        %v6802 = vpack.c.b16 %v6767, %v6766
        %v6803 = vpack.c.b16 %v6769, %v6768
        %v6804 = vpack.c.b16 %v6771, %v6770
        %v6805 = vpack.c.b16 %v6773, %v6772
        %6838 = vst [vmem:[#allocation3 + $0x30] sm:$0xff] %v6774
        %6839 = vst [vmem:[#allocation3 + $0x70] sm:$0xff] %v6775
        %6840 = vst [vmem:[#allocation3 + $0xb0] sm:$0xff] %v6776
        %6841 = vst [vmem:[#allocation3 + $0xf0] sm:$0xff] %v6777
        %6842 = vst [vmem:[#allocation3 + $0x130] sm:$0xff] %v6778
        %6843 = vst [vmem:[#allocation3 + $0x170] sm:$0xff] %v6779
        %6844 = vst [vmem:[#allocation3 + $0x1b0] sm:$0xff] %v6780
        %6845 = vst [vmem:[#allocation3 + $0x1f0] sm:$0xff] %v6781
        %6846 = vst [vmem:[#allocation3 + $0x230] sm:$0xff] %v6782
        %6847 = vst [vmem:[#allocation3 + $0x270] sm:$0xff] %v6783
        %6848 = vst [vmem:[#allocation3 + $0x2b0] sm:$0xff] %v6784
        %6849 = vst [vmem:[#allocation3 + $0x2f0] sm:$0xff] %v6785
        %6850 = vst [vmem:[#allocation3 + $0x330] sm:$0xff] %v6786
        %6851 = vst [vmem:[#allocation3 + $0x370] sm:$0xff] %v6787
        %6852 = vst [vmem:[#allocation3 + $0x3b0] sm:$0xff] %v6788
        %6853 = vst [vmem:[#allocation3 + $0x3f0] sm:$0xff] %v6789
        %6854 = vst [vmem:[#allocation3 + $0x430] sm:$0xff] %v6790
        %6855 = vst [vmem:[#allocation3 + $0x470] sm:$0xff] %v6791
        %6856 = vst [vmem:[#allocation3 + $0x4b0] sm:$0xff] %v6792
        %6857 = vst [vmem:[#allocation3 + $0x4f0] sm:$0xff] %v6793
        %6858 = vst [vmem:[#allocation3 + $0x530] sm:$0xff] %v6794
        %6859 = vst [vmem:[#allocation3 + $0x570] sm:$0xff] %v6795
        %6860 = vst [vmem:[#allocation3 + $0x5b0] sm:$0xff] %v6796
        %6861 = vst [vmem:[#allocation3 + $0x5f0] sm:$0xff] %v6797
        %6862 = vst [vmem:[#allocation3 + $0x630] sm:$0xff] %v6798
        %6863 = vst [vmem:[#allocation3 + $0x670] sm:$0xff] %v6799
        %6864 = vst [vmem:[#allocation3 + $0x6b0] sm:$0xff] %v6800
        %6865 = vst [vmem:[#allocation3 + $0x6f0] sm:$0xff] %v6801
        %6866 = vst [vmem:[#allocation3 + $0x730] sm:$0xff] %v6802
        %6867 = vst [vmem:[#allocation3 + $0x770] sm:$0xff] %v6803
        %6868 = vst [vmem:[#allocation3 + $0x7b0] sm:$0xff] %v6804
        %6869 = vst [vmem:[#allocation3 + $0x7f0] sm:$0xff] %v6805
        %v6870 = vpack.c.b16 %v6710, %v6710
        %v6871 = vpack.c.b16 %v6711, %v6711
        %v6872 = vpack.c.b16 %v6712, %v6712
        %v6873 = vpack.c.b16 %v6713, %v6713
        %v6874 = vpack.c.b16 %v6714, %v6714
        %v6875 = vpack.c.b16 %v6715, %v6715
        %v6876 = vpack.c.b16 %v6716, %v6716
        %v6877 = vpack.c.b16 %v6717, %v6717
        %v6878 = vpack.c.b16 %v6718, %v6718
        %v6879 = vpack.c.b16 %v6719, %v6719
        %v6880 = vpack.c.b16 %v6720, %v6720
        %v6881 = vpack.c.b16 %v6721, %v6721
        %v6882 = vpack.c.b16 %v6722, %v6722
        %v6883 = vpack.c.b16 %v6723, %v6723
        %v6884 = vpack.c.b16 %v6724, %v6724
        %v6885 = vpack.c.b16 %v6725, %v6725
        %v6886 = vpack.c.b16 %v6726, %v6726
        %v6887 = vpack.c.b16 %v6727, %v6727
        %v6888 = vpack.c.b16 %v6728, %v6728
        %v6889 = vpack.c.b16 %v6729, %v6729
        %v6890 = vpack.c.b16 %v6730, %v6730
        %v6891 = vpack.c.b16 %v6731, %v6731
        %v6892 = vpack.c.b16 %v6732, %v6732
        %v6893 = vpack.c.b16 %v6733, %v6733
        %v6894 = vpack.c.b16 %v6734, %v6734
        %v6895 = vpack.c.b16 %v6735, %v6735
        %v6896 = vpack.c.b16 %v6736, %v6736
        %v6897 = vpack.c.b16 %v6737, %v6737
        %v6898 = vpack.c.b16 %v6738, %v6738
        %v6899 = vpack.c.b16 %v6739, %v6739
        %v6900 = vpack.c.b16 %v6740, %v6740
        %v6901 = vpack.c.b16 %v6741, %v6741
        %v6902 = vpack.c.b16 %v6742, %v6742
        %v6903 = vpack.c.b16 %v6743, %v6743
        %v6904 = vpack.c.b16 %v6744, %v6744
        %v6905 = vpack.c.b16 %v6745, %v6745
        %v6906 = vpack.c.b16 %v6746, %v6746
        %v6907 = vpack.c.b16 %v6747, %v6747
        %v6908 = vpack.c.b16 %v6748, %v6748
        %v6909 = vpack.c.b16 %v6749, %v6749
        %v6910 = vpack.c.b16 %v6750, %v6750
        %v6911 = vpack.c.b16 %v6751, %v6751
        %v6912 = vpack.c.b16 %v6752, %v6752
        %v6913 = vpack.c.b16 %v6753, %v6753
        %v6914 = vpack.c.b16 %v6754, %v6754
        %v6915 = vpack.c.b16 %v6755, %v6755
        %v6916 = vpack.c.b16 %v6756, %v6756
        %v6917 = vpack.c.b16 %v6757, %v6757
        %v6918 = vpack.c.b16 %v6758, %v6758
        %v6919 = vpack.c.b16 %v6759, %v6759
        %v6920 = vpack.c.b16 %v6760, %v6760
        %v6921 = vpack.c.b16 %v6761, %v6761
        %v6922 = vpack.c.b16 %v6762, %v6762
        %v6923 = vpack.c.b16 %v6763, %v6763
        %v6924 = vpack.c.b16 %v6764, %v6764
        %v6925 = vpack.c.b16 %v6765, %v6765
        %v6926 = vpack.c.b16 %v6766, %v6766
        %v6927 = vpack.c.b16 %v6767, %v6767
        %v6928 = vpack.c.b16 %v6768, %v6768
        %v6929 = vpack.c.b16 %v6769, %v6769
        %v6930 = vpack.c.b16 %v6770, %v6770
        %v6931 = vpack.c.b16 %v6771, %v6771
        %v6932 = vpack.c.b16 %v6772, %v6772
        %v6933 = vpack.c.b16 %v6773, %v6773
        %v6935 = vshrl.u32 %v6870, 16
        %v6937 = vshll.u32 %v6870, 16
        %v6939 = vrot.slane %v6937, 1
        %v6940 = vor.u32 %v6935, %v6939
        %v6942 = vshrl.u32 %v6871, 16
        %v6944 = vshll.u32 %v6871, 16
        %v6946 = vrot.slane %v6944, 1
        %v6947 = vor.u32 %v6942, %v6946
        %v6949 = vshrl.u32 %v6872, 16
        %v6951 = vshll.u32 %v6872, 16
        %v6953 = vrot.slane %v6951, 1
        %v6954 = vor.u32 %v6949, %v6953
        %v6956 = vshrl.u32 %v6873, 16
        %v6958 = vshll.u32 %v6873, 16
        %v6960 = vrot.slane %v6958, 1
        %v6961 = vor.u32 %v6956, %v6960
        %v6963 = vshrl.u32 %v6874, 16
        %v6965 = vshll.u32 %v6874, 16
        %v6967 = vrot.slane %v6965, 1
        %v6968 = vor.u32 %v6963, %v6967
        %v6970 = vshrl.u32 %v6875, 16
        %v6972 = vshll.u32 %v6875, 16
        %v6974 = vrot.slane %v6972, 1
        %v6975 = vor.u32 %v6970, %v6974
        %v6977 = vshrl.u32 %v6876, 16
        %v6979 = vshll.u32 %v6876, 16
        %v6981 = vrot.slane %v6979, 1
        %v6982 = vor.u32 %v6977, %v6981
        %v6984 = vshrl.u32 %v6877, 16
        %v6986 = vshll.u32 %v6877, 16
        %v6988 = vrot.slane %v6986, 1
        %v6989 = vor.u32 %v6984, %v6988
        %v6991 = vshrl.u32 %v6878, 16
        %v6993 = vshll.u32 %v6878, 16
        %v6995 = vrot.slane %v6993, 1
        %v6996 = vor.u32 %v6991, %v6995
        %v6998 = vshrl.u32 %v6879, 16
        %v7000 = vshll.u32 %v6879, 16
        %v7002 = vrot.slane %v7000, 1
        %v7003 = vor.u32 %v6998, %v7002
        %v7005 = vshrl.u32 %v6880, 16
        %v7007 = vshll.u32 %v6880, 16
        %v7009 = vrot.slane %v7007, 1
        %v7010 = vor.u32 %v7005, %v7009
        %v7012 = vshrl.u32 %v6881, 16
        %v7014 = vshll.u32 %v6881, 16
        %v7016 = vrot.slane %v7014, 1
        %v7017 = vor.u32 %v7012, %v7016
        %v7019 = vshrl.u32 %v6882, 16
        %v7021 = vshll.u32 %v6882, 16
        %v7023 = vrot.slane %v7021, 1
        %v7024 = vor.u32 %v7019, %v7023
        %v7026 = vshrl.u32 %v6883, 16
        %v7028 = vshll.u32 %v6883, 16
        %v7030 = vrot.slane %v7028, 1
        %v7031 = vor.u32 %v7026, %v7030
        %v7033 = vshrl.u32 %v6884, 16
        %v7035 = vshll.u32 %v6884, 16
        %v7037 = vrot.slane %v7035, 1
        %v7038 = vor.u32 %v7033, %v7037
        %v7040 = vshrl.u32 %v6885, 16
        %v7042 = vshll.u32 %v6885, 16
        %v7044 = vrot.slane %v7042, 1
        %v7045 = vor.u32 %v7040, %v7044
        %v7047 = vshrl.u32 %v6886, 16
        %v7049 = vshll.u32 %v6886, 16
        %v7051 = vrot.slane %v7049, 1
        %v7052 = vor.u32 %v7047, %v7051
        %v7054 = vshrl.u32 %v6887, 16
        %v7056 = vshll.u32 %v6887, 16
        %v7058 = vrot.slane %v7056, 1
        %v7059 = vor.u32 %v7054, %v7058
        %v7061 = vshrl.u32 %v6888, 16
        %v7063 = vshll.u32 %v6888, 16
        %v7065 = vrot.slane %v7063, 1
        %v7066 = vor.u32 %v7061, %v7065
        %v7068 = vshrl.u32 %v6889, 16
        %v7070 = vshll.u32 %v6889, 16
        %v7072 = vrot.slane %v7070, 1
        %v7073 = vor.u32 %v7068, %v7072
        %v7075 = vshrl.u32 %v6890, 16
        %v7077 = vshll.u32 %v6890, 16
        %v7079 = vrot.slane %v7077, 1
        %v7080 = vor.u32 %v7075, %v7079
        %v7082 = vshrl.u32 %v6891, 16
        %v7084 = vshll.u32 %v6891, 16
        %v7086 = vrot.slane %v7084, 1
        %v7087 = vor.u32 %v7082, %v7086
        %v7089 = vshrl.u32 %v6892, 16
        %v7091 = vshll.u32 %v6892, 16
        %v7093 = vrot.slane %v7091, 1
        %v7094 = vor.u32 %v7089, %v7093
        %v7096 = vshrl.u32 %v6893, 16
        %v7098 = vshll.u32 %v6893, 16
        %v7100 = vrot.slane %v7098, 1
        %v7101 = vor.u32 %v7096, %v7100
        %v7103 = vshrl.u32 %v6894, 16
        %v7105 = vshll.u32 %v6894, 16
        %v7107 = vrot.slane %v7105, 1
        %v7108 = vor.u32 %v7103, %v7107
        %v7110 = vshrl.u32 %v6895, 16
        %v7112 = vshll.u32 %v6895, 16
        %v7114 = vrot.slane %v7112, 1
        %v7115 = vor.u32 %v7110, %v7114
        %v7117 = vshrl.u32 %v6896, 16
        %v7119 = vshll.u32 %v6896, 16
        %v7121 = vrot.slane %v7119, 1
        %v7122 = vor.u32 %v7117, %v7121
        %v7124 = vshrl.u32 %v6897, 16
        %v7126 = vshll.u32 %v6897, 16
        %v7128 = vrot.slane %v7126, 1
        %v7129 = vor.u32 %v7124, %v7128
        %v7131 = vshrl.u32 %v6898, 16
        %v7133 = vshll.u32 %v6898, 16
        %v7135 = vrot.slane %v7133, 1
        %v7136 = vor.u32 %v7131, %v7135
        %v7138 = vshrl.u32 %v6899, 16
        %v7140 = vshll.u32 %v6899, 16
        %v7142 = vrot.slane %v7140, 1
        %v7143 = vor.u32 %v7138, %v7142
        %v7145 = vshrl.u32 %v6900, 16
        %v7147 = vshll.u32 %v6900, 16
        %v7149 = vrot.slane %v7147, 1
        %v7150 = vor.u32 %v7145, %v7149
        %v7152 = vshrl.u32 %v6901, 16
        %v7154 = vshll.u32 %v6901, 16
        %v7156 = vrot.slane %v7154, 1
        %v7157 = vor.u32 %v7152, %v7156
        %v7159 = vshrl.u32 %v6902, 16
        %v7161 = vshll.u32 %v6902, 16
        %v7163 = vrot.slane %v7161, 1
        %v7164 = vor.u32 %v7159, %v7163
        %v7166 = vshrl.u32 %v6903, 16
        %v7168 = vshll.u32 %v6903, 16
        %v7170 = vrot.slane %v7168, 1
        %v7171 = vor.u32 %v7166, %v7170
        %v7173 = vshrl.u32 %v6904, 16
        %v7175 = vshll.u32 %v6904, 16
        %v7177 = vrot.slane %v7175, 1
        %v7178 = vor.u32 %v7173, %v7177
        %v7180 = vshrl.u32 %v6905, 16
        %v7182 = vshll.u32 %v6905, 16
        %v7184 = vrot.slane %v7182, 1
        %v7185 = vor.u32 %v7180, %v7184
        %v7187 = vshrl.u32 %v6906, 16
        %v7189 = vshll.u32 %v6906, 16
        %v7191 = vrot.slane %v7189, 1
        %v7192 = vor.u32 %v7187, %v7191
        %v7194 = vshrl.u32 %v6907, 16
        %v7196 = vshll.u32 %v6907, 16
        %v7198 = vrot.slane %v7196, 1
        %v7199 = vor.u32 %v7194, %v7198
        %v7201 = vshrl.u32 %v6908, 16
        %v7203 = vshll.u32 %v6908, 16
        %v7205 = vrot.slane %v7203, 1
        %v7206 = vor.u32 %v7201, %v7205
        %v7208 = vshrl.u32 %v6909, 16
        %v7210 = vshll.u32 %v6909, 16
        %v7212 = vrot.slane %v7210, 1
        %v7213 = vor.u32 %v7208, %v7212
        %v7215 = vshrl.u32 %v6910, 16
        %v7217 = vshll.u32 %v6910, 16
        %v7219 = vrot.slane %v7217, 1
        %v7220 = vor.u32 %v7215, %v7219
        %v7222 = vshrl.u32 %v6911, 16
        %v7224 = vshll.u32 %v6911, 16
        %v7226 = vrot.slane %v7224, 1
        %v7227 = vor.u32 %v7222, %v7226
        %v7229 = vshrl.u32 %v6912, 16
        %v7231 = vshll.u32 %v6912, 16
        %v7233 = vrot.slane %v7231, 1
        %v7234 = vor.u32 %v7229, %v7233
        %v7236 = vshrl.u32 %v6913, 16
        %v7238 = vshll.u32 %v6913, 16
        %v7240 = vrot.slane %v7238, 1
        %v7241 = vor.u32 %v7236, %v7240
        %v7243 = vshrl.u32 %v6914, 16
        %v7245 = vshll.u32 %v6914, 16
        %v7247 = vrot.slane %v7245, 1
        %v7248 = vor.u32 %v7243, %v7247
        %v7250 = vshrl.u32 %v6915, 16
        %v7252 = vshll.u32 %v6915, 16
        %v7254 = vrot.slane %v7252, 1
        %v7255 = vor.u32 %v7250, %v7254
        %v7257 = vshrl.u32 %v6916, 16
        %v7259 = vshll.u32 %v6916, 16
        %v7261 = vrot.slane %v7259, 1
        %v7262 = vor.u32 %v7257, %v7261
        %v7264 = vshrl.u32 %v6917, 16
        %v7266 = vshll.u32 %v6917, 16
        %v7268 = vrot.slane %v7266, 1
        %v7269 = vor.u32 %v7264, %v7268
        %v7271 = vshrl.u32 %v6918, 16
        %v7273 = vshll.u32 %v6918, 16
        %v7275 = vrot.slane %v7273, 1
        %v7276 = vor.u32 %v7271, %v7275
        %v7278 = vshrl.u32 %v6919, 16
        %v7280 = vshll.u32 %v6919, 16
        %v7282 = vrot.slane %v7280, 1
        %v7283 = vor.u32 %v7278, %v7282
        %v7285 = vshrl.u32 %v6920, 16
        %v7287 = vshll.u32 %v6920, 16
        %v7289 = vrot.slane %v7287, 1
        %v7290 = vor.u32 %v7285, %v7289
        %v7292 = vshrl.u32 %v6921, 16
        %v7294 = vshll.u32 %v6921, 16
        %v7296 = vrot.slane %v7294, 1
        %v7297 = vor.u32 %v7292, %v7296
        %v7299 = vshrl.u32 %v6922, 16
        %v7301 = vshll.u32 %v6922, 16
        %v7303 = vrot.slane %v7301, 1
        %v7304 = vor.u32 %v7299, %v7303
        %v7306 = vshrl.u32 %v6923, 16
        %v7308 = vshll.u32 %v6923, 16
        %v7310 = vrot.slane %v7308, 1
        %v7311 = vor.u32 %v7306, %v7310
        %v7313 = vshrl.u32 %v6924, 16
        %v7315 = vshll.u32 %v6924, 16
        %v7317 = vrot.slane %v7315, 1
        %v7318 = vor.u32 %v7313, %v7317
        %v7320 = vshrl.u32 %v6925, 16
        %v7322 = vshll.u32 %v6925, 16
        %v7324 = vrot.slane %v7322, 1
        %v7325 = vor.u32 %v7320, %v7324
        %v7327 = vshrl.u32 %v6926, 16
        %v7329 = vshll.u32 %v6926, 16
        %v7331 = vrot.slane %v7329, 1
        %v7332 = vor.u32 %v7327, %v7331
        %v7334 = vshrl.u32 %v6927, 16
        %v7336 = vshll.u32 %v6927, 16
        %v7338 = vrot.slane %v7336, 1
        %v7339 = vor.u32 %v7334, %v7338
        %v7341 = vshrl.u32 %v6928, 16
        %v7343 = vshll.u32 %v6928, 16
        %v7345 = vrot.slane %v7343, 1
        %v7346 = vor.u32 %v7341, %v7345
        %v7348 = vshrl.u32 %v6929, 16
        %v7350 = vshll.u32 %v6929, 16
        %v7352 = vrot.slane %v7350, 1
        %v7353 = vor.u32 %v7348, %v7352
        %v7355 = vshrl.u32 %v6930, 16
        %v7357 = vshll.u32 %v6930, 16
        %v7359 = vrot.slane %v7357, 1
        %v7360 = vor.u32 %v7355, %v7359
        %v7362 = vshrl.u32 %v6931, 16
        %v7364 = vshll.u32 %v6931, 16
        %v7366 = vrot.slane %v7364, 1
        %v7367 = vor.u32 %v7362, %v7366
        %v7369 = vshrl.u32 %v6932, 16
        %v7371 = vshll.u32 %v6932, 16
        %v7373 = vrot.slane %v7371, 1
        %v7374 = vor.u32 %v7369, %v7373
        %v7376 = vshrl.u32 %v6933, 16
        %v7378 = vshll.u32 %v6933, 16
        %v7380 = vrot.slane %v7378, 1
        %v7381 = vor.u32 %v7376, %v7380
        %v7446 = vrot.slane %v6937, 5
        %v7447 = vrot.slane %v6944, 5
        %v7448 = vrot.slane %v6951, 5
        %v7449 = vrot.slane %v6958, 5
        %v7450 = vrot.slane %v6965, 5
        %v7451 = vrot.slane %v6972, 5
        %v7452 = vrot.slane %v6979, 5
        %v7453 = vrot.slane %v6986, 5
        %v7454 = vrot.slane %v6993, 5
        %v7455 = vrot.slane %v7000, 5
        %v7456 = vrot.slane %v7007, 5
        %v7457 = vrot.slane %v7014, 5
        %v7458 = vrot.slane %v7021, 5
        %v7459 = vrot.slane %v7028, 5
        %v7460 = vrot.slane %v7035, 5
        %v7461 = vrot.slane %v7042, 5
        %v7462 = vrot.slane %v7049, 5
        %v7463 = vrot.slane %v7056, 5
        %v7464 = vrot.slane %v7063, 5
        %v7465 = vrot.slane %v7070, 5
        %v7466 = vrot.slane %v7077, 5
        %v7467 = vrot.slane %v7084, 5
        %v7468 = vrot.slane %v7091, 5
        %v7469 = vrot.slane %v7098, 5
        %v7470 = vrot.slane %v7105, 5
        %v7471 = vrot.slane %v7112, 5
        %v7472 = vrot.slane %v7119, 5
        %v7473 = vrot.slane %v7126, 5
        %v7474 = vrot.slane %v7133, 5
        %v7475 = vrot.slane %v7140, 5
        %v7476 = vrot.slane %v7147, 5
        %v7477 = vrot.slane %v7154, 5
        %v7478 = vrot.slane %v7161, 5
        %v7479 = vrot.slane %v7168, 5
        %v7480 = vrot.slane %v7175, 5
        %v7481 = vrot.slane %v7182, 5
        %v7482 = vrot.slane %v7189, 5
        %v7483 = vrot.slane %v7196, 5
        %v7484 = vrot.slane %v7203, 5
        %v7485 = vrot.slane %v7210, 5
        %v7486 = vrot.slane %v7217, 5
        %v7487 = vrot.slane %v7224, 5
        %v7488 = vrot.slane %v7231, 5
        %v7489 = vrot.slane %v7238, 5
        %v7490 = vrot.slane %v7245, 5
        %v7491 = vrot.slane %v7252, 5
        %v7492 = vrot.slane %v7259, 5
        %v7493 = vrot.slane %v7266, 5
        %v7494 = vrot.slane %v7273, 5
        %v7495 = vrot.slane %v7280, 5
        %v7496 = vrot.slane %v7287, 5
        %v7497 = vrot.slane %v7294, 5
        %v7498 = vrot.slane %v7301, 5
        %v7499 = vrot.slane %v7308, 5
        %v7500 = vrot.slane %v7315, 5
        %v7501 = vrot.slane %v7322, 5
        %v7502 = vrot.slane %v7329, 5
        %v7503 = vrot.slane %v7336, 5
        %v7504 = vrot.slane %v7343, 5
        %v7505 = vrot.slane %v7350, 5
        %v7506 = vrot.slane %v7357, 5
        %v7507 = vrot.slane %v7364, 5
        %v7508 = vrot.slane %v7371, 5
        %v7509 = vrot.slane %v7378, 5
        %v7574 = vsel %vm3732, %v6940, %v7446
        %v7575 = vsel %vm3732, %v6947, %v7447
        %v7576 = vsel %vm3732, %v6954, %v7448
        %v7577 = vsel %vm3732, %v6961, %v7449
        %v7578 = vsel %vm3732, %v6968, %v7450
        %v7579 = vsel %vm3732, %v6975, %v7451
        %v7580 = vsel %vm3732, %v6982, %v7452
        %v7581 = vsel %vm3732, %v6989, %v7453
        %v7582 = vsel %vm3732, %v6996, %v7454
        %v7583 = vsel %vm3732, %v7003, %v7455
        %v7584 = vsel %vm3732, %v7010, %v7456
        %v7585 = vsel %vm3732, %v7017, %v7457
        %v7586 = vsel %vm3732, %v7024, %v7458
        %v7587 = vsel %vm3732, %v7031, %v7459
        %v7588 = vsel %vm3732, %v7038, %v7460
        %v7589 = vsel %vm3732, %v7045, %v7461
        %v7590 = vsel %vm3732, %v7052, %v7462
        %v7591 = vsel %vm3732, %v7059, %v7463
        %v7592 = vsel %vm3732, %v7066, %v7464
        %v7593 = vsel %vm3732, %v7073, %v7465
        %v7594 = vsel %vm3732, %v7080, %v7466
        %v7595 = vsel %vm3732, %v7087, %v7467
        %v7596 = vsel %vm3732, %v7094, %v7468
        %v7597 = vsel %vm3732, %v7101, %v7469
        %v7598 = vsel %vm3732, %v7108, %v7470
        %v7599 = vsel %vm3732, %v7115, %v7471
        %v7600 = vsel %vm3732, %v7122, %v7472
        %v7601 = vsel %vm3732, %v7129, %v7473
        %v7602 = vsel %vm3732, %v7136, %v7474
        %v7603 = vsel %vm3732, %v7143, %v7475
        %v7604 = vsel %vm3732, %v7150, %v7476
        %v7605 = vsel %vm3732, %v7157, %v7477
        %v7606 = vsel %vm3732, %v7164, %v7478
        %v7607 = vsel %vm3732, %v7171, %v7479
        %v7608 = vsel %vm3732, %v7178, %v7480
        %v7609 = vsel %vm3732, %v7185, %v7481
        %v7610 = vsel %vm3732, %v7192, %v7482
        %v7611 = vsel %vm3732, %v7199, %v7483
        %v7612 = vsel %vm3732, %v7206, %v7484
        %v7613 = vsel %vm3732, %v7213, %v7485
        %v7614 = vsel %vm3732, %v7220, %v7486
        %v7615 = vsel %vm3732, %v7227, %v7487
        %v7616 = vsel %vm3732, %v7234, %v7488
        %v7617 = vsel %vm3732, %v7241, %v7489
        %v7618 = vsel %vm3732, %v7248, %v7490
        %v7619 = vsel %vm3732, %v7255, %v7491
        %v7620 = vsel %vm3732, %v7262, %v7492
        %v7621 = vsel %vm3732, %v7269, %v7493
        %v7622 = vsel %vm3732, %v7276, %v7494
        %v7623 = vsel %vm3732, %v7283, %v7495
        %v7624 = vsel %vm3732, %v7290, %v7496
        %v7625 = vsel %vm3732, %v7297, %v7497
        %v7626 = vsel %vm3732, %v7304, %v7498
        %v7627 = vsel %vm3732, %v7311, %v7499
        %v7628 = vsel %vm3732, %v7318, %v7500
        %v7629 = vsel %vm3732, %v7325, %v7501
        %v7630 = vsel %vm3732, %v7332, %v7502
        %v7631 = vsel %vm3732, %v7339, %v7503
        %v7632 = vsel %vm3732, %v7346, %v7504
        %v7633 = vsel %vm3732, %v7353, %v7505
        %v7634 = vsel %vm3732, %v7360, %v7506
        %v7635 = vsel %vm3732, %v7367, %v7507
        %v7636 = vsel %vm3732, %v7374, %v7508
        %v7637 = vsel %vm3732, %v7381, %v7509
        %v7702 = vunpack.c.l.b16 %v7574
        %v7703 = vunpack.c.l.b16 %v7575
        %v7704 = vunpack.c.l.b16 %v7576
        %v7705 = vunpack.c.l.b16 %v7577
        %v7706 = vunpack.c.l.b16 %v7578
        %v7707 = vunpack.c.l.b16 %v7579
        %v7708 = vunpack.c.l.b16 %v7580
        %v7709 = vunpack.c.l.b16 %v7581
        %v7710 = vunpack.c.l.b16 %v7582
        %v7711 = vunpack.c.l.b16 %v7583
        %v7712 = vunpack.c.l.b16 %v7584
        %v7713 = vunpack.c.l.b16 %v7585
        %v7714 = vunpack.c.l.b16 %v7586
        %v7715 = vunpack.c.l.b16 %v7587
        %v7716 = vunpack.c.l.b16 %v7588
        %v7717 = vunpack.c.l.b16 %v7589
        %v7718 = vunpack.c.l.b16 %v7590
        %v7719 = vunpack.c.l.b16 %v7591
        %v7720 = vunpack.c.l.b16 %v7592
        %v7721 = vunpack.c.l.b16 %v7593
        %v7722 = vunpack.c.l.b16 %v7594
        %v7723 = vunpack.c.l.b16 %v7595
        %v7724 = vunpack.c.l.b16 %v7596
        %v7725 = vunpack.c.l.b16 %v7597
        %v7726 = vunpack.c.l.b16 %v7598
        %v7727 = vunpack.c.l.b16 %v7599
        %v7728 = vunpack.c.l.b16 %v7600
        %v7729 = vunpack.c.l.b16 %v7601
        %v7730 = vunpack.c.l.b16 %v7602
        %v7731 = vunpack.c.l.b16 %v7603
        %v7732 = vunpack.c.l.b16 %v7604
        %v7733 = vunpack.c.l.b16 %v7605
        %v7734 = vunpack.c.l.b16 %v7606
        %v7735 = vunpack.c.l.b16 %v7607
        %v7736 = vunpack.c.l.b16 %v7608
        %v7737 = vunpack.c.l.b16 %v7609
        %v7738 = vunpack.c.l.b16 %v7610
        %v7739 = vunpack.c.l.b16 %v7611
        %v7740 = vunpack.c.l.b16 %v7612
        %v7741 = vunpack.c.l.b16 %v7613
        %v7742 = vunpack.c.l.b16 %v7614
        %v7743 = vunpack.c.l.b16 %v7615
        %v7744 = vunpack.c.l.b16 %v7616
        %v7745 = vunpack.c.l.b16 %v7617
        %v7746 = vunpack.c.l.b16 %v7618
        %v7747 = vunpack.c.l.b16 %v7619
        %v7748 = vunpack.c.l.b16 %v7620
        %v7749 = vunpack.c.l.b16 %v7621
        %v7750 = vunpack.c.l.b16 %v7622
        %v7751 = vunpack.c.l.b16 %v7623
        %v7752 = vunpack.c.l.b16 %v7624
        %v7753 = vunpack.c.l.b16 %v7625
        %v7754 = vunpack.c.l.b16 %v7626
        %v7755 = vunpack.c.l.b16 %v7627
        %v7756 = vunpack.c.l.b16 %v7628
        %v7757 = vunpack.c.l.b16 %v7629
        %v7758 = vunpack.c.l.b16 %v7630
        %v7759 = vunpack.c.l.b16 %v7631
        %v7760 = vunpack.c.l.b16 %v7632
        %v7761 = vunpack.c.l.b16 %v7633
        %v7762 = vunpack.c.l.b16 %v7634
        %v7763 = vunpack.c.l.b16 %v7635
        %v7764 = vunpack.c.l.b16 %v7636
        %v7765 = vunpack.c.l.b16 %v7637
        %v7766 = vpack.c.b16 %v7703, %v7702
        %v7767 = vpack.c.b16 %v7705, %v7704
        %v7768 = vpack.c.b16 %v7707, %v7706
        %v7769 = vpack.c.b16 %v7709, %v7708
        %v7770 = vpack.c.b16 %v7711, %v7710
        %v7771 = vpack.c.b16 %v7713, %v7712
        %v7772 = vpack.c.b16 %v7715, %v7714
        %v7773 = vpack.c.b16 %v7717, %v7716
        %v7774 = vpack.c.b16 %v7719, %v7718
        %v7775 = vpack.c.b16 %v7721, %v7720
        %v7776 = vpack.c.b16 %v7723, %v7722
        %v7777 = vpack.c.b16 %v7725, %v7724
        %v7778 = vpack.c.b16 %v7727, %v7726
        %v7779 = vpack.c.b16 %v7729, %v7728
        %v7780 = vpack.c.b16 %v7731, %v7730
        %v7781 = vpack.c.b16 %v7733, %v7732
        %v7782 = vpack.c.b16 %v7735, %v7734
        %v7783 = vpack.c.b16 %v7737, %v7736
        %v7784 = vpack.c.b16 %v7739, %v7738
        %v7785 = vpack.c.b16 %v7741, %v7740
        %v7786 = vpack.c.b16 %v7743, %v7742
        %v7787 = vpack.c.b16 %v7745, %v7744
        %v7788 = vpack.c.b16 %v7747, %v7746
        %v7789 = vpack.c.b16 %v7749, %v7748
        %v7790 = vpack.c.b16 %v7751, %v7750
        %v7791 = vpack.c.b16 %v7753, %v7752
        %v7792 = vpack.c.b16 %v7755, %v7754
        %v7793 = vpack.c.b16 %v7757, %v7756
        %v7794 = vpack.c.b16 %v7759, %v7758
        %v7795 = vpack.c.b16 %v7761, %v7760
        %v7796 = vpack.c.b16 %v7763, %v7762
        %v7797 = vpack.c.b16 %v7765, %v7764
        %7830 = vst [vmem:[#allocation3 + $0x38] sm:$0xff] %v7766
        %7831 = vst [vmem:[#allocation3 + $0x78] sm:$0xff] %v7767
        %7832 = vst [vmem:[#allocation3 + $0xb8] sm:$0xff] %v7768
        %7833 = vst [vmem:[#allocation3 + $0xf8] sm:$0xff] %v7769
        %7834 = vst [vmem:[#allocation3 + $0x138] sm:$0xff] %v7770
        %7835 = vst [vmem:[#allocation3 + $0x178] sm:$0xff] %v7771
        %7836 = vst [vmem:[#allocation3 + $0x1b8] sm:$0xff] %v7772
        %7837 = vst [vmem:[#allocation3 + $0x1f8] sm:$0xff] %v7773
        %7838 = vst [vmem:[#allocation3 + $0x238] sm:$0xff] %v7774
        %7839 = vst [vmem:[#allocation3 + $0x278] sm:$0xff] %v7775
        %7840 = vst [vmem:[#allocation3 + $0x2b8] sm:$0xff] %v7776
        %7841 = vst [vmem:[#allocation3 + $0x2f8] sm:$0xff] %v7777
        %7842 = vst [vmem:[#allocation3 + $0x338] sm:$0xff] %v7778
        %7843 = vst [vmem:[#allocation3 + $0x378] sm:$0xff] %v7779
        %7844 = vst [vmem:[#allocation3 + $0x3b8] sm:$0xff] %v7780
        %7845 = vst [vmem:[#allocation3 + $0x3f8] sm:$0xff] %v7781
        %7846 = vst [vmem:[#allocation3 + $0x438] sm:$0xff] %v7782
        %7847 = vst [vmem:[#allocation3 + $0x478] sm:$0xff] %v7783
        %7848 = vst [vmem:[#allocation3 + $0x4b8] sm:$0xff] %v7784
        %7849 = vst [vmem:[#allocation3 + $0x4f8] sm:$0xff] %v7785
        %7850 = vst [vmem:[#allocation3 + $0x538] sm:$0xff] %v7786
        %7851 = vst [vmem:[#allocation3 + $0x578] sm:$0xff] %v7787
        %7852 = vst [vmem:[#allocation3 + $0x5b8] sm:$0xff] %v7788
        %7853 = vst [vmem:[#allocation3 + $0x5f8] sm:$0xff] %v7789
        %7854 = vst [vmem:[#allocation3 + $0x638] sm:$0xff] %v7790
        %7855 = vst [vmem:[#allocation3 + $0x678] sm:$0xff] %v7791
        %7856 = vst [vmem:[#allocation3 + $0x6b8] sm:$0xff] %v7792
        %7857 = vst [vmem:[#allocation3 + $0x6f8] sm:$0xff] %v7793
        %7858 = vst [vmem:[#allocation3 + $0x738] sm:$0xff] %v7794
        %7859 = vst [vmem:[#allocation3 + $0x778] sm:$0xff] %v7795
        %7860 = vst [vmem:[#allocation3 + $0x7b8] sm:$0xff] %v7796
        %7861 = vst [vmem:[#allocation3 + $0x7f8] sm:$0xff] %v7797
        %v7862 = vld [vmem:[#allocation3] sm:$0xff]
        %v7863 = vld [vmem:[#allocation3 + $0x8] sm:$0xff]
        %v7864 = vld [vmem:[#allocation3 + $0x10] sm:$0xff]
        %v7865 = vld [vmem:[#allocation3 + $0x18] sm:$0xff]
        %v7866 = vld [vmem:[#allocation3 + $0x20] sm:$0xff]
        %v7867 = vld [vmem:[#allocation3 + $0x28] sm:$0xff]
        %v7868 = vld [vmem:[#allocation3 + $0x30] sm:$0xff]
        %v7869 = vld [vmem:[#allocation3 + $0x38] sm:$0xff]
        %v7870 = vld [vmem:[#allocation3 + $0x40] sm:$0xff]
        %v7871 = vld [vmem:[#allocation3 + $0x48] sm:$0xff]
        %v7872 = vld [vmem:[#allocation3 + $0x50] sm:$0xff]
        %v7873 = vld [vmem:[#allocation3 + $0x58] sm:$0xff]
        %v7874 = vld [vmem:[#allocation3 + $0x60] sm:$0xff]
        %v7875 = vld [vmem:[#allocation3 + $0x68] sm:$0xff]
        %v7876 = vld [vmem:[#allocation3 + $0x70] sm:$0xff]
        %v7877 = vld [vmem:[#allocation3 + $0x78] sm:$0xff]
        %v7878 = vld [vmem:[#allocation3 + $0x80] sm:$0xff]
        %v7879 = vld [vmem:[#allocation3 + $0x88] sm:$0xff]
        %v7880 = vld [vmem:[#allocation3 + $0x90] sm:$0xff]
        %v7881 = vld [vmem:[#allocation3 + $0x98] sm:$0xff]
        %v7882 = vld [vmem:[#allocation3 + $0xa0] sm:$0xff]
        %v7883 = vld [vmem:[#allocation3 + $0xa8] sm:$0xff]
        %v7884 = vld [vmem:[#allocation3 + $0xb0] sm:$0xff]
        %v7885 = vld [vmem:[#allocation3 + $0xb8] sm:$0xff]
        %v7886 = vld [vmem:[#allocation3 + $0xc0] sm:$0xff]
        %v7887 = vld [vmem:[#allocation3 + $0xc8] sm:$0xff]
        %v7888 = vld [vmem:[#allocation3 + $0xd0] sm:$0xff]
        %v7889 = vld [vmem:[#allocation3 + $0xd8] sm:$0xff]
        %v7890 = vld [vmem:[#allocation3 + $0xe0] sm:$0xff]
        %v7891 = vld [vmem:[#allocation3 + $0xe8] sm:$0xff]
        %v7892 = vld [vmem:[#allocation3 + $0xf0] sm:$0xff]
        %v7893 = vld [vmem:[#allocation3 + $0xf8] sm:$0xff]
        %v7894 = vld [vmem:[#allocation3 + $0x100] sm:$0xff]
        %v7895 = vld [vmem:[#allocation3 + $0x108] sm:$0xff]
        %v7896 = vld [vmem:[#allocation3 + $0x110] sm:$0xff]
        %v7897 = vld [vmem:[#allocation3 + $0x118] sm:$0xff]
        %v7898 = vld [vmem:[#allocation3 + $0x120] sm:$0xff]
        %v7899 = vld [vmem:[#allocation3 + $0x128] sm:$0xff]
        %v7900 = vld [vmem:[#allocation3 + $0x130] sm:$0xff]
        %v7901 = vld [vmem:[#allocation3 + $0x138] sm:$0xff]
        %v7902 = vld [vmem:[#allocation3 + $0x140] sm:$0xff]
        %v7903 = vld [vmem:[#allocation3 + $0x148] sm:$0xff]
        %v7904 = vld [vmem:[#allocation3 + $0x150] sm:$0xff]
        %v7905 = vld [vmem:[#allocation3 + $0x158] sm:$0xff]
        %v7906 = vld [vmem:[#allocation3 + $0x160] sm:$0xff]
        %v7907 = vld [vmem:[#allocation3 + $0x168] sm:$0xff]
        %v7908 = vld [vmem:[#allocation3 + $0x170] sm:$0xff]
        %v7909 = vld [vmem:[#allocation3 + $0x178] sm:$0xff]
        %v7910 = vld [vmem:[#allocation3 + $0x180] sm:$0xff]
        %v7911 = vld [vmem:[#allocation3 + $0x188] sm:$0xff]
        %v7912 = vld [vmem:[#allocation3 + $0x190] sm:$0xff]
        %v7913 = vld [vmem:[#allocation3 + $0x198] sm:$0xff]
        %v7914 = vld [vmem:[#allocation3 + $0x1a0] sm:$0xff]
        %v7915 = vld [vmem:[#allocation3 + $0x1a8] sm:$0xff]
        %v7916 = vld [vmem:[#allocation3 + $0x1b0] sm:$0xff]
        %v7917 = vld [vmem:[#allocation3 + $0x1b8] sm:$0xff]
        %v7918 = vld [vmem:[#allocation3 + $0x1c0] sm:$0xff]
        %v7919 = vld [vmem:[#allocation3 + $0x1c8] sm:$0xff]
        %v7920 = vld [vmem:[#allocation3 + $0x1d0] sm:$0xff]
        %v7921 = vld [vmem:[#allocation3 + $0x1d8] sm:$0xff]
        %v7922 = vld [vmem:[#allocation3 + $0x1e0] sm:$0xff]
        %v7923 = vld [vmem:[#allocation3 + $0x1e8] sm:$0xff]
        %v7924 = vld [vmem:[#allocation3 + $0x1f0] sm:$0xff]
        %v7925 = vld [vmem:[#allocation3 + $0x1f8] sm:$0xff]
        %v7926 = vld [vmem:[#allocation3 + $0x200] sm:$0xff]
        %v7927 = vld [vmem:[#allocation3 + $0x208] sm:$0xff]
        %v7928 = vld [vmem:[#allocation3 + $0x210] sm:$0xff]
        %v7929 = vld [vmem:[#allocation3 + $0x218] sm:$0xff]
        %v7930 = vld [vmem:[#allocation3 + $0x220] sm:$0xff]
        %v7931 = vld [vmem:[#allocation3 + $0x228] sm:$0xff]
        %v7932 = vld [vmem:[#allocation3 + $0x230] sm:$0xff]
        %v7933 = vld [vmem:[#allocation3 + $0x238] sm:$0xff]
        %v7934 = vld [vmem:[#allocation3 + $0x240] sm:$0xff]
        %v7935 = vld [vmem:[#allocation3 + $0x248] sm:$0xff]
        %v7936 = vld [vmem:[#allocation3 + $0x250] sm:$0xff]
        %v7937 = vld [vmem:[#allocation3 + $0x258] sm:$0xff]
        %v7938 = vld [vmem:[#allocation3 + $0x260] sm:$0xff]
        %v7939 = vld [vmem:[#allocation3 + $0x268] sm:$0xff]
        %v7940 = vld [vmem:[#allocation3 + $0x270] sm:$0xff]
        %v7941 = vld [vmem:[#allocation3 + $0x278] sm:$0xff]
        %v7942 = vld [vmem:[#allocation3 + $0x280] sm:$0xff]
        %v7943 = vld [vmem:[#allocation3 + $0x288] sm:$0xff]
        %v7944 = vld [vmem:[#allocation3 + $0x290] sm:$0xff]
        %v7945 = vld [vmem:[#allocation3 + $0x298] sm:$0xff]
        %v7946 = vld [vmem:[#allocation3 + $0x2a0] sm:$0xff]
        %v7947 = vld [vmem:[#allocation3 + $0x2a8] sm:$0xff]
        %v7948 = vld [vmem:[#allocation3 + $0x2b0] sm:$0xff]
        %v7949 = vld [vmem:[#allocation3 + $0x2b8] sm:$0xff]
        %v7950 = vld [vmem:[#allocation3 + $0x2c0] sm:$0xff]
        %v7951 = vld [vmem:[#allocation3 + $0x2c8] sm:$0xff]
        %v7952 = vld [vmem:[#allocation3 + $0x2d0] sm:$0xff]
        %v7953 = vld [vmem:[#allocation3 + $0x2d8] sm:$0xff]
        %v7954 = vld [vmem:[#allocation3 + $0x2e0] sm:$0xff]
        %v7955 = vld [vmem:[#allocation3 + $0x2e8] sm:$0xff]
        %v7956 = vld [vmem:[#allocation3 + $0x2f0] sm:$0xff]
        %v7957 = vld [vmem:[#allocation3 + $0x2f8] sm:$0xff]
        %v7958 = vld [vmem:[#allocation3 + $0x300] sm:$0xff]
        %v7959 = vld [vmem:[#allocation3 + $0x308] sm:$0xff]
        %v7960 = vld [vmem:[#allocation3 + $0x310] sm:$0xff]
        %v7961 = vld [vmem:[#allocation3 + $0x318] sm:$0xff]
        %v7962 = vld [vmem:[#allocation3 + $0x320] sm:$0xff]
        %v7963 = vld [vmem:[#allocation3 + $0x328] sm:$0xff]
        %v7964 = vld [vmem:[#allocation3 + $0x330] sm:$0xff]
        %v7965 = vld [vmem:[#allocation3 + $0x338] sm:$0xff]
        %v7966 = vld [vmem:[#allocation3 + $0x340] sm:$0xff]
        %v7967 = vld [vmem:[#allocation3 + $0x348] sm:$0xff]
        %v7968 = vld [vmem:[#allocation3 + $0x350] sm:$0xff]
        %v7969 = vld [vmem:[#allocation3 + $0x358] sm:$0xff]
        %v7970 = vld [vmem:[#allocation3 + $0x360] sm:$0xff]
        %v7971 = vld [vmem:[#allocation3 + $0x368] sm:$0xff]
        %v7972 = vld [vmem:[#allocation3 + $0x370] sm:$0xff]
        %v7973 = vld [vmem:[#allocation3 + $0x378] sm:$0xff]
        %v7974 = vld [vmem:[#allocation3 + $0x380] sm:$0xff]
        %v7975 = vld [vmem:[#allocation3 + $0x388] sm:$0xff]
        %v7976 = vld [vmem:[#allocation3 + $0x390] sm:$0xff]
        %v7977 = vld [vmem:[#allocation3 + $0x398] sm:$0xff]
        %v7978 = vld [vmem:[#allocation3 + $0x3a0] sm:$0xff]
        %v7979 = vld [vmem:[#allocation3 + $0x3a8] sm:$0xff]
        %v7980 = vld [vmem:[#allocation3 + $0x3b0] sm:$0xff]
        %v7981 = vld [vmem:[#allocation3 + $0x3b8] sm:$0xff]
        %v7982 = vld [vmem:[#allocation3 + $0x3c0] sm:$0xff]
        %v7983 = vld [vmem:[#allocation3 + $0x3c8] sm:$0xff]
        %v7984 = vld [vmem:[#allocation3 + $0x3d0] sm:$0xff]
        %v7985 = vld [vmem:[#allocation3 + $0x3d8] sm:$0xff]
        %v7986 = vld [vmem:[#allocation3 + $0x3e0] sm:$0xff]
        %v7987 = vld [vmem:[#allocation3 + $0x3e8] sm:$0xff]
        %v7988 = vld [vmem:[#allocation3 + $0x3f0] sm:$0xff]
        %v7989 = vld [vmem:[#allocation3 + $0x3f8] sm:$0xff]
        %v7990 = vld [vmem:[#allocation3 + $0x400] sm:$0xff]
        %v7991 = vld [vmem:[#allocation3 + $0x408] sm:$0xff]
        %v7992 = vld [vmem:[#allocation3 + $0x410] sm:$0xff]
        %v7993 = vld [vmem:[#allocation3 + $0x418] sm:$0xff]
        %v7994 = vld [vmem:[#allocation3 + $0x420] sm:$0xff]
        %v7995 = vld [vmem:[#allocation3 + $0x428] sm:$0xff]
        %v7996 = vld [vmem:[#allocation3 + $0x430] sm:$0xff]
        %v7997 = vld [vmem:[#allocation3 + $0x438] sm:$0xff]
        %v7998 = vld [vmem:[#allocation3 + $0x440] sm:$0xff]
        %v7999 = vld [vmem:[#allocation3 + $0x448] sm:$0xff]
        %v8000 = vld [vmem:[#allocation3 + $0x450] sm:$0xff]
        %v8001 = vld [vmem:[#allocation3 + $0x458] sm:$0xff]
        %v8002 = vld [vmem:[#allocation3 + $0x460] sm:$0xff]
        %v8003 = vld [vmem:[#allocation3 + $0x468] sm:$0xff]
        %v8004 = vld [vmem:[#allocation3 + $0x470] sm:$0xff]
        %v8005 = vld [vmem:[#allocation3 + $0x478] sm:$0xff]
        %v8006 = vld [vmem:[#allocation3 + $0x480] sm:$0xff]
        %v8007 = vld [vmem:[#allocation3 + $0x488] sm:$0xff]
        %v8008 = vld [vmem:[#allocation3 + $0x490] sm:$0xff]
        %v8009 = vld [vmem:[#allocation3 + $0x498] sm:$0xff]
        %v8010 = vld [vmem:[#allocation3 + $0x4a0] sm:$0xff]
        %v8011 = vld [vmem:[#allocation3 + $0x4a8] sm:$0xff]
        %v8012 = vld [vmem:[#allocation3 + $0x4b0] sm:$0xff]
        %v8013 = vld [vmem:[#allocation3 + $0x4b8] sm:$0xff]
        %v8014 = vld [vmem:[#allocation3 + $0x4c0] sm:$0xff]
        %v8015 = vld [vmem:[#allocation3 + $0x4c8] sm:$0xff]
        %v8016 = vld [vmem:[#allocation3 + $0x4d0] sm:$0xff]
        %v8017 = vld [vmem:[#allocation3 + $0x4d8] sm:$0xff]
        %v8018 = vld [vmem:[#allocation3 + $0x4e0] sm:$0xff]
        %v8019 = vld [vmem:[#allocation3 + $0x4e8] sm:$0xff]
        %v8020 = vld [vmem:[#allocation3 + $0x4f0] sm:$0xff]
        %v8021 = vld [vmem:[#allocation3 + $0x4f8] sm:$0xff]
        %v8022 = vld [vmem:[#allocation3 + $0x500] sm:$0xff]
        %v8023 = vld [vmem:[#allocation3 + $0x508] sm:$0xff]
        %v8024 = vld [vmem:[#allocation3 + $0x510] sm:$0xff]
        %v8025 = vld [vmem:[#allocation3 + $0x518] sm:$0xff]
        %v8026 = vld [vmem:[#allocation3 + $0x520] sm:$0xff]
        %v8027 = vld [vmem:[#allocation3 + $0x528] sm:$0xff]
        %v8028 = vld [vmem:[#allocation3 + $0x530] sm:$0xff]
        %v8029 = vld [vmem:[#allocation3 + $0x538] sm:$0xff]
        %v8030 = vld [vmem:[#allocation3 + $0x540] sm:$0xff]
        %v8031 = vld [vmem:[#allocation3 + $0x548] sm:$0xff]
        %v8032 = vld [vmem:[#allocation3 + $0x550] sm:$0xff]
        %v8033 = vld [vmem:[#allocation3 + $0x558] sm:$0xff]
        %v8034 = vld [vmem:[#allocation3 + $0x560] sm:$0xff]
        %v8035 = vld [vmem:[#allocation3 + $0x568] sm:$0xff]
        %v8036 = vld [vmem:[#allocation3 + $0x570] sm:$0xff]
        %v8037 = vld [vmem:[#allocation3 + $0x578] sm:$0xff]
        %v8038 = vld [vmem:[#allocation3 + $0x580] sm:$0xff]
        %v8039 = vld [vmem:[#allocation3 + $0x588] sm:$0xff]
        %v8040 = vld [vmem:[#allocation3 + $0x590] sm:$0xff]
        %v8041 = vld [vmem:[#allocation3 + $0x598] sm:$0xff]
        %v8042 = vld [vmem:[#allocation3 + $0x5a0] sm:$0xff]
        %v8043 = vld [vmem:[#allocation3 + $0x5a8] sm:$0xff]
        %v8044 = vld [vmem:[#allocation3 + $0x5b0] sm:$0xff]
        %v8045 = vld [vmem:[#allocation3 + $0x5b8] sm:$0xff]
        %v8046 = vld [vmem:[#allocation3 + $0x5c0] sm:$0xff]
        %v8047 = vld [vmem:[#allocation3 + $0x5c8] sm:$0xff]
        %v8048 = vld [vmem:[#allocation3 + $0x5d0] sm:$0xff]
        %v8049 = vld [vmem:[#allocation3 + $0x5d8] sm:$0xff]
        %v8050 = vld [vmem:[#allocation3 + $0x5e0] sm:$0xff]
        %v8051 = vld [vmem:[#allocation3 + $0x5e8] sm:$0xff]
        %v8052 = vld [vmem:[#allocation3 + $0x5f0] sm:$0xff]
        %v8053 = vld [vmem:[#allocation3 + $0x5f8] sm:$0xff]
        %v8054 = vld [vmem:[#allocation3 + $0x600] sm:$0xff]
        %v8055 = vld [vmem:[#allocation3 + $0x608] sm:$0xff]
        %v8056 = vld [vmem:[#allocation3 + $0x610] sm:$0xff]
        %v8057 = vld [vmem:[#allocation3 + $0x618] sm:$0xff]
        %v8058 = vld [vmem:[#allocation3 + $0x620] sm:$0xff]
        %v8059 = vld [vmem:[#allocation3 + $0x628] sm:$0xff]
        %v8060 = vld [vmem:[#allocation3 + $0x630] sm:$0xff]
        %v8061 = vld [vmem:[#allocation3 + $0x638] sm:$0xff]
        %v8062 = vld [vmem:[#allocation3 + $0x640] sm:$0xff]
        %v8063 = vld [vmem:[#allocation3 + $0x648] sm:$0xff]
        %v8064 = vld [vmem:[#allocation3 + $0x650] sm:$0xff]
        %v8065 = vld [vmem:[#allocation3 + $0x658] sm:$0xff]
        %v8066 = vld [vmem:[#allocation3 + $0x660] sm:$0xff]
        %v8067 = vld [vmem:[#allocation3 + $0x668] sm:$0xff]
        %v8068 = vld [vmem:[#allocation3 + $0x670] sm:$0xff]
        %v8069 = vld [vmem:[#allocation3 + $0x678] sm:$0xff]
        %v8070 = vld [vmem:[#allocation3 + $0x680] sm:$0xff]
        %v8071 = vld [vmem:[#allocation3 + $0x688] sm:$0xff]
        %v8072 = vld [vmem:[#allocation3 + $0x690] sm:$0xff]
        %v8073 = vld [vmem:[#allocation3 + $0x698] sm:$0xff]
        %v8074 = vld [vmem:[#allocation3 + $0x6a0] sm:$0xff]
        %v8075 = vld [vmem:[#allocation3 + $0x6a8] sm:$0xff]
        %v8076 = vld [vmem:[#allocation3 + $0x6b0] sm:$0xff]
        %v8077 = vld [vmem:[#allocation3 + $0x6b8] sm:$0xff]
        %v8078 = vld [vmem:[#allocation3 + $0x6c0] sm:$0xff]
        %v8079 = vld [vmem:[#allocation3 + $0x6c8] sm:$0xff]
        %v8080 = vld [vmem:[#allocation3 + $0x6d0] sm:$0xff]
        %v8081 = vld [vmem:[#allocation3 + $0x6d8] sm:$0xff]
        %v8082 = vld [vmem:[#allocation3 + $0x6e0] sm:$0xff]
        %v8083 = vld [vmem:[#allocation3 + $0x6e8] sm:$0xff]
        %v8084 = vld [vmem:[#allocation3 + $0x6f0] sm:$0xff]
        %v8085 = vld [vmem:[#allocation3 + $0x6f8] sm:$0xff]
        %v8086 = vld [vmem:[#allocation3 + $0x700] sm:$0xff]
        %v8087 = vld [vmem:[#allocation3 + $0x708] sm:$0xff]
        %v8088 = vld [vmem:[#allocation3 + $0x710] sm:$0xff]
        %v8089 = vld [vmem:[#allocation3 + $0x718] sm:$0xff]
        %v8090 = vld [vmem:[#allocation3 + $0x720] sm:$0xff]
        %v8091 = vld [vmem:[#allocation3 + $0x728] sm:$0xff]
        %v8092 = vld [vmem:[#allocation3 + $0x730] sm:$0xff]
        %v8093 = vld [vmem:[#allocation3 + $0x738] sm:$0xff]
        %v8094 = vld [vmem:[#allocation3 + $0x740] sm:$0xff]
        %v8095 = vld [vmem:[#allocation3 + $0x748] sm:$0xff]
        %v8096 = vld [vmem:[#allocation3 + $0x750] sm:$0xff]
        %v8097 = vld [vmem:[#allocation3 + $0x758] sm:$0xff]
        %v8098 = vld [vmem:[#allocation3 + $0x760] sm:$0xff]
        %v8099 = vld [vmem:[#allocation3 + $0x768] sm:$0xff]
        %v8100 = vld [vmem:[#allocation3 + $0x770] sm:$0xff]
        %v8101 = vld [vmem:[#allocation3 + $0x778] sm:$0xff]
        %v8102 = vld [vmem:[#allocation3 + $0x780] sm:$0xff]
        %v8103 = vld [vmem:[#allocation3 + $0x788] sm:$0xff]
        %v8104 = vld [vmem:[#allocation3 + $0x790] sm:$0xff]
        %v8105 = vld [vmem:[#allocation3 + $0x798] sm:$0xff]
        %v8106 = vld [vmem:[#allocation3 + $0x7a0] sm:$0xff]
        %v8107 = vld [vmem:[#allocation3 + $0x7a8] sm:$0xff]
        %v8108 = vld [vmem:[#allocation3 + $0x7b0] sm:$0xff]
        %v8109 = vld [vmem:[#allocation3 + $0x7b8] sm:$0xff]
        %v8110 = vld [vmem:[#allocation3 + $0x7c0] sm:$0xff]
        %v8111 = vld [vmem:[#allocation3 + $0x7c8] sm:$0xff]
        %v8112 = vld [vmem:[#allocation3 + $0x7d0] sm:$0xff]
        %v8113 = vld [vmem:[#allocation3 + $0x7d8] sm:$0xff]
        %v8114 = vld [vmem:[#allocation3 + $0x7e0] sm:$0xff]
        %v8115 = vld [vmem:[#allocation3 + $0x7e8] sm:$0xff]
        %v8116 = vld [vmem:[#allocation3 + $0x7f0] sm:$0xff]
        %v8117 = vld [vmem:[#allocation3 + $0x7f8] sm:$0xff]
        %v8118 = vld [vmem:[%s4] sm:$0xf]
        %v8119 = vld [vmem:[%s4 + $0x4] sm:$0xf]
        %v8120 = vld [vmem:[%s4 + $0x8] sm:$0xf]
        %v8121 = vld [vmem:[%s4 + $0xc] sm:$0xf]
        %v8122 = vld [vmem:[%s4 + $0x10] sm:$0xf]
        %v8123 = vld [vmem:[%s4 + $0x14] sm:$0xf]
        %v8124 = vld [vmem:[%s4 + $0x18] sm:$0xf]
        %v8125 = vld [vmem:[%s4 + $0x1c] sm:$0xf]
        %v8126 = vld [vmem:[%s4 + $0x20] sm:$0xf]
        %v8127 = vld [vmem:[%s4 + $0x24] sm:$0xf]
        %v8128 = vld [vmem:[%s4 + $0x28] sm:$0xf]
        %v8129 = vld [vmem:[%s4 + $0x2c] sm:$0xf]
        %v8130 = vld [vmem:[%s4 + $0x30] sm:$0xf]
        %v8131 = vld [vmem:[%s4 + $0x34] sm:$0xf]
        %v8132 = vld [vmem:[%s4 + $0x38] sm:$0xf]
        %v8133 = vld [vmem:[%s4 + $0x3c] sm:$0xf]
        %v8134 = vld [vmem:[%s4 + $0x40] sm:$0xf]
        %v8135 = vld [vmem:[%s4 + $0x44] sm:$0xf]
        %v8136 = vld [vmem:[%s4 + $0x48] sm:$0xf]
        %v8137 = vld [vmem:[%s4 + $0x4c] sm:$0xf]
        %v8138 = vld [vmem:[%s4 + $0x50] sm:$0xf]
        %v8139 = vld [vmem:[%s4 + $0x54] sm:$0xf]
        %v8140 = vld [vmem:[%s4 + $0x58] sm:$0xf]
        %v8141 = vld [vmem:[%s4 + $0x5c] sm:$0xf]
        %v8142 = vld [vmem:[%s4 + $0x60] sm:$0xf]
        %v8143 = vld [vmem:[%s4 + $0x64] sm:$0xf]
        %v8144 = vld [vmem:[%s4 + $0x68] sm:$0xf]
        %v8145 = vld [vmem:[%s4 + $0x6c] sm:$0xf]
        %v8146 = vld [vmem:[%s4 + $0x70] sm:$0xf]
        %v8147 = vld [vmem:[%s4 + $0x74] sm:$0xf]
        %v8148 = vld [vmem:[%s4 + $0x78] sm:$0xf]
        %v8149 = vld [vmem:[%s4 + $0x7c] sm:$0xf]
        %v8150 = vld [vmem:[%s4 + $0x80] sm:$0xf]
        %v8151 = vld [vmem:[%s4 + $0x84] sm:$0xf]
        %v8152 = vld [vmem:[%s4 + $0x88] sm:$0xf]
        %v8153 = vld [vmem:[%s4 + $0x8c] sm:$0xf]
        %v8154 = vld [vmem:[%s4 + $0x90] sm:$0xf]
        %v8155 = vld [vmem:[%s4 + $0x94] sm:$0xf]
        %v8156 = vld [vmem:[%s4 + $0x98] sm:$0xf]
        %v8157 = vld [vmem:[%s4 + $0x9c] sm:$0xf]
        %v8158 = vld [vmem:[%s4 + $0xa0] sm:$0xf]
        %v8159 = vld [vmem:[%s4 + $0xa4] sm:$0xf]
        %v8160 = vld [vmem:[%s4 + $0xa8] sm:$0xf]
        %v8161 = vld [vmem:[%s4 + $0xac] sm:$0xf]
        %v8162 = vld [vmem:[%s4 + $0xb0] sm:$0xf]
        %v8163 = vld [vmem:[%s4 + $0xb4] sm:$0xf]
        %v8164 = vld [vmem:[%s4 + $0xb8] sm:$0xf]
        %v8165 = vld [vmem:[%s4 + $0xbc] sm:$0xf]
        %v8166 = vld [vmem:[%s4 + $0xc0] sm:$0xf]
        %v8167 = vld [vmem:[%s4 + $0xc4] sm:$0xf]
        %v8168 = vld [vmem:[%s4 + $0xc8] sm:$0xf]
        %v8169 = vld [vmem:[%s4 + $0xcc] sm:$0xf]
        %v8170 = vld [vmem:[%s4 + $0xd0] sm:$0xf]
        %v8171 = vld [vmem:[%s4 + $0xd4] sm:$0xf]
        %v8172 = vld [vmem:[%s4 + $0xd8] sm:$0xf]
        %v8173 = vld [vmem:[%s4 + $0xdc] sm:$0xf]
        %v8174 = vld [vmem:[%s4 + $0xe0] sm:$0xf]
        %v8175 = vld [vmem:[%s4 + $0xe4] sm:$0xf]
        %v8176 = vld [vmem:[%s4 + $0xe8] sm:$0xf]
        %v8177 = vld [vmem:[%s4 + $0xec] sm:$0xf]
        %v8178 = vld [vmem:[%s4 + $0xf0] sm:$0xf]
        %v8179 = vld [vmem:[%s4 + $0xf4] sm:$0xf]
        %v8180 = vld [vmem:[%s4 + $0xf8] sm:$0xf]
        %v8181 = vld [vmem:[%s4 + $0xfc] sm:$0xf]
        %v8182 = vld [vmem:[%s4 + $0x100] sm:$0xf]
        %v8183 = vld [vmem:[%s4 + $0x104] sm:$0xf]
        %v8184 = vld [vmem:[%s4 + $0x108] sm:$0xf]
        %v8185 = vld [vmem:[%s4 + $0x10c] sm:$0xf]
        %v8186 = vld [vmem:[%s4 + $0x110] sm:$0xf]
        %v8187 = vld [vmem:[%s4 + $0x114] sm:$0xf]
        %v8188 = vld [vmem:[%s4 + $0x118] sm:$0xf]
        %v8189 = vld [vmem:[%s4 + $0x11c] sm:$0xf]
        %v8190 = vld [vmem:[%s4 + $0x120] sm:$0xf]
        %v8191 = vld [vmem:[%s4 + $0x124] sm:$0xf]
        %v8192 = vld [vmem:[%s4 + $0x128] sm:$0xf]
        %v8193 = vld [vmem:[%s4 + $0x12c] sm:$0xf]
        %v8194 = vld [vmem:[%s4 + $0x130] sm:$0xf]
        %v8195 = vld [vmem:[%s4 + $0x134] sm:$0xf]
        %v8196 = vld [vmem:[%s4 + $0x138] sm:$0xf]
        %v8197 = vld [vmem:[%s4 + $0x13c] sm:$0xf]
        %v8198 = vld [vmem:[%s4 + $0x140] sm:$0xf]
        %v8199 = vld [vmem:[%s4 + $0x144] sm:$0xf]
        %v8200 = vld [vmem:[%s4 + $0x148] sm:$0xf]
        %v8201 = vld [vmem:[%s4 + $0x14c] sm:$0xf]
        %v8202 = vld [vmem:[%s4 + $0x150] sm:$0xf]
        %v8203 = vld [vmem:[%s4 + $0x154] sm:$0xf]
        %v8204 = vld [vmem:[%s4 + $0x158] sm:$0xf]
        %v8205 = vld [vmem:[%s4 + $0x15c] sm:$0xf]
        %v8206 = vld [vmem:[%s4 + $0x160] sm:$0xf]
        %v8207 = vld [vmem:[%s4 + $0x164] sm:$0xf]
        %v8208 = vld [vmem:[%s4 + $0x168] sm:$0xf]
        %v8209 = vld [vmem:[%s4 + $0x16c] sm:$0xf]
        %v8210 = vld [vmem:[%s4 + $0x170] sm:$0xf]
        %v8211 = vld [vmem:[%s4 + $0x174] sm:$0xf]
        %v8212 = vld [vmem:[%s4 + $0x178] sm:$0xf]
        %v8213 = vld [vmem:[%s4 + $0x17c] sm:$0xf]
        %v8214 = vld [vmem:[%s4 + $0x180] sm:$0xf]
        %v8215 = vld [vmem:[%s4 + $0x184] sm:$0xf]
        %v8216 = vld [vmem:[%s4 + $0x188] sm:$0xf]
        %v8217 = vld [vmem:[%s4 + $0x18c] sm:$0xf]
        %v8218 = vld [vmem:[%s4 + $0x190] sm:$0xf]
        %v8219 = vld [vmem:[%s4 + $0x194] sm:$0xf]
        %v8220 = vld [vmem:[%s4 + $0x198] sm:$0xf]
        %v8221 = vld [vmem:[%s4 + $0x19c] sm:$0xf]
        %v8222 = vld [vmem:[%s4 + $0x1a0] sm:$0xf]
        %v8223 = vld [vmem:[%s4 + $0x1a4] sm:$0xf]
        %v8224 = vld [vmem:[%s4 + $0x1a8] sm:$0xf]
        %v8225 = vld [vmem:[%s4 + $0x1ac] sm:$0xf]
        %v8226 = vld [vmem:[%s4 + $0x1b0] sm:$0xf]
        %v8227 = vld [vmem:[%s4 + $0x1b4] sm:$0xf]
        %v8228 = vld [vmem:[%s4 + $0x1b8] sm:$0xf]
        %v8229 = vld [vmem:[%s4 + $0x1bc] sm:$0xf]
        %v8230 = vld [vmem:[%s4 + $0x1c0] sm:$0xf]
        %v8231 = vld [vmem:[%s4 + $0x1c4] sm:$0xf]
        %v8232 = vld [vmem:[%s4 + $0x1c8] sm:$0xf]
        %v8233 = vld [vmem:[%s4 + $0x1cc] sm:$0xf]
        %v8234 = vld [vmem:[%s4 + $0x1d0] sm:$0xf]
        %v8235 = vld [vmem:[%s4 + $0x1d4] sm:$0xf]
        %v8236 = vld [vmem:[%s4 + $0x1d8] sm:$0xf]
        %v8237 = vld [vmem:[%s4 + $0x1dc] sm:$0xf]
        %v8238 = vld [vmem:[%s4 + $0x1e0] sm:$0xf]
        %v8239 = vld [vmem:[%s4 + $0x1e4] sm:$0xf]
        %v8240 = vld [vmem:[%s4 + $0x1e8] sm:$0xf]
        %v8241 = vld [vmem:[%s4 + $0x1ec] sm:$0xf]
        %v8242 = vld [vmem:[%s4 + $0x1f0] sm:$0xf]
        %v8243 = vld [vmem:[%s4 + $0x1f4] sm:$0xf]
        %v8244 = vld [vmem:[%s4 + $0x1f8] sm:$0xf]
        %v8245 = vld [vmem:[%s4 + $0x1fc] sm:$0xf]
        %v8246 = vld [vmem:[%s5] sm:$0x1]
        %v8248 = vlaneseq
        %v8249 = vshrl.u32 %v8248, 7
        %v8250 = vsub.s32 0, %v8249
        %v8251 = vrot.slane %v8246, %v8250
        %v8381 = vunpack.c.l.b16 %v8118
        %v8382 = vunpack.c.l.b16 %v8119
        %v8383 = vunpack.c.l.b16 %v8120
        %v8384 = vunpack.c.l.b16 %v8121
        %v8385 = vunpack.c.l.b16 %v8122
        %v8386 = vunpack.c.l.b16 %v8123
        %v8387 = vunpack.c.l.b16 %v8124
        %v8388 = vunpack.c.l.b16 %v8125
        %v8389 = vunpack.c.l.b16 %v8126
        %v8390 = vunpack.c.l.b16 %v8127
        %v8391 = vunpack.c.l.b16 %v8128
        %v8392 = vunpack.c.l.b16 %v8129
        %v8393 = vunpack.c.l.b16 %v8130
        %v8394 = vunpack.c.l.b16 %v8131
        %v8395 = vunpack.c.l.b16 %v8132
        %v8396 = vunpack.c.l.b16 %v8133
        %v8397 = vunpack.c.l.b16 %v8134
        %v8398 = vunpack.c.l.b16 %v8135
        %v8399 = vunpack.c.l.b16 %v8136
        %v8400 = vunpack.c.l.b16 %v8137
        %v8401 = vunpack.c.l.b16 %v8138
        %v8402 = vunpack.c.l.b16 %v8139
        %v8403 = vunpack.c.l.b16 %v8140
        %v8404 = vunpack.c.l.b16 %v8141
        %v8405 = vunpack.c.l.b16 %v8142
        %v8406 = vunpack.c.l.b16 %v8143
        %v8407 = vunpack.c.l.b16 %v8144
        %v8408 = vunpack.c.l.b16 %v8145
        %v8409 = vunpack.c.l.b16 %v8146
        %v8410 = vunpack.c.l.b16 %v8147
        %v8411 = vunpack.c.l.b16 %v8148
        %v8412 = vunpack.c.l.b16 %v8149
        %v8413 = vunpack.c.l.b16 %v8150
        %v8414 = vunpack.c.l.b16 %v8151
        %v8415 = vunpack.c.l.b16 %v8152
        %v8416 = vunpack.c.l.b16 %v8153
        %v8417 = vunpack.c.l.b16 %v8154
        %v8418 = vunpack.c.l.b16 %v8155
        %v8419 = vunpack.c.l.b16 %v8156
        %v8420 = vunpack.c.l.b16 %v8157
        %v8421 = vunpack.c.l.b16 %v8158
        %v8422 = vunpack.c.l.b16 %v8159
        %v8423 = vunpack.c.l.b16 %v8160
        %v8424 = vunpack.c.l.b16 %v8161
        %v8425 = vunpack.c.l.b16 %v8162
        %v8426 = vunpack.c.l.b16 %v8163
        %v8427 = vunpack.c.l.b16 %v8164
        %v8428 = vunpack.c.l.b16 %v8165
        %v8429 = vunpack.c.l.b16 %v8166
        %v8430 = vunpack.c.l.b16 %v8167
        %v8431 = vunpack.c.l.b16 %v8168
        %v8432 = vunpack.c.l.b16 %v8169
        %v8433 = vunpack.c.l.b16 %v8170
        %v8434 = vunpack.c.l.b16 %v8171
        %v8435 = vunpack.c.l.b16 %v8172
        %v8436 = vunpack.c.l.b16 %v8173
        %v8437 = vunpack.c.l.b16 %v8174
        %v8438 = vunpack.c.l.b16 %v8175
        %v8439 = vunpack.c.l.b16 %v8176
        %v8440 = vunpack.c.l.b16 %v8177
        %v8441 = vunpack.c.l.b16 %v8178
        %v8442 = vunpack.c.l.b16 %v8179
        %v8443 = vunpack.c.l.b16 %v8180
        %v8444 = vunpack.c.l.b16 %v8181
        %v8445 = vunpack.c.l.b16 %v8182
        %v8446 = vunpack.c.l.b16 %v8183
        %v8447 = vunpack.c.l.b16 %v8184
        %v8448 = vunpack.c.l.b16 %v8185
        %v8449 = vunpack.c.l.b16 %v8186
        %v8450 = vunpack.c.l.b16 %v8187
        %v8451 = vunpack.c.l.b16 %v8188
        %v8452 = vunpack.c.l.b16 %v8189
        %v8453 = vunpack.c.l.b16 %v8190
        %v8454 = vunpack.c.l.b16 %v8191
        %v8455 = vunpack.c.l.b16 %v8192
        %v8456 = vunpack.c.l.b16 %v8193
        %v8457 = vunpack.c.l.b16 %v8194
        %v8458 = vunpack.c.l.b16 %v8195
        %v8459 = vunpack.c.l.b16 %v8196
        %v8460 = vunpack.c.l.b16 %v8197
        %v8461 = vunpack.c.l.b16 %v8198
        %v8462 = vunpack.c.l.b16 %v8199
        %v8463 = vunpack.c.l.b16 %v8200
        %v8464 = vunpack.c.l.b16 %v8201
        %v8465 = vunpack.c.l.b16 %v8202
        %v8466 = vunpack.c.l.b16 %v8203
        %v8467 = vunpack.c.l.b16 %v8204
        %v8468 = vunpack.c.l.b16 %v8205
        %v8469 = vunpack.c.l.b16 %v8206
        %v8470 = vunpack.c.l.b16 %v8207
        %v8471 = vunpack.c.l.b16 %v8208
        %v8472 = vunpack.c.l.b16 %v8209
        %v8473 = vunpack.c.l.b16 %v8210
        %v8474 = vunpack.c.l.b16 %v8211
        %v8475 = vunpack.c.l.b16 %v8212
        %v8476 = vunpack.c.l.b16 %v8213
        %v8477 = vunpack.c.l.b16 %v8214
        %v8478 = vunpack.c.l.b16 %v8215
        %v8479 = vunpack.c.l.b16 %v8216
        %v8480 = vunpack.c.l.b16 %v8217
        %v8481 = vunpack.c.l.b16 %v8218
        %v8482 = vunpack.c.l.b16 %v8219
        %v8483 = vunpack.c.l.b16 %v8220
        %v8484 = vunpack.c.l.b16 %v8221
        %v8485 = vunpack.c.l.b16 %v8222
        %v8486 = vunpack.c.l.b16 %v8223
        %v8487 = vunpack.c.l.b16 %v8224
        %v8488 = vunpack.c.l.b16 %v8225
        %v8489 = vunpack.c.l.b16 %v8226
        %v8490 = vunpack.c.l.b16 %v8227
        %v8491 = vunpack.c.l.b16 %v8228
        %v8492 = vunpack.c.l.b16 %v8229
        %v8493 = vunpack.c.l.b16 %v8230
        %v8494 = vunpack.c.l.b16 %v8231
        %v8495 = vunpack.c.l.b16 %v8232
        %v8496 = vunpack.c.l.b16 %v8233
        %v8497 = vunpack.c.l.b16 %v8234
        %v8498 = vunpack.c.l.b16 %v8235
        %v8499 = vunpack.c.l.b16 %v8236
        %v8500 = vunpack.c.l.b16 %v8237
        %v8501 = vunpack.c.l.b16 %v8238
        %v8502 = vunpack.c.l.b16 %v8239
        %v8503 = vunpack.c.l.b16 %v8240
        %v8504 = vunpack.c.l.b16 %v8241
        %v8505 = vunpack.c.l.b16 %v8242
        %v8506 = vunpack.c.l.b16 %v8243
        %v8507 = vunpack.c.l.b16 %v8244
        %v8508 = vunpack.c.l.b16 %v8245
        %v8509 = vpack.c.b16 %v8382, %v8381
        %v8510 = vpack.c.b16 %v8384, %v8383
        %v8511 = vpack.c.b16 %v8386, %v8385
        %v8512 = vpack.c.b16 %v8388, %v8387
        %v8513 = vpack.c.b16 %v8390, %v8389
        %v8514 = vpack.c.b16 %v8392, %v8391
        %v8515 = vpack.c.b16 %v8394, %v8393
        %v8516 = vpack.c.b16 %v8396, %v8395
        %v8517 = vpack.c.b16 %v8398, %v8397
        %v8518 = vpack.c.b16 %v8400, %v8399
        %v8519 = vpack.c.b16 %v8402, %v8401
        %v8520 = vpack.c.b16 %v8404, %v8403
        %v8521 = vpack.c.b16 %v8406, %v8405
        %v8522 = vpack.c.b16 %v8408, %v8407
        %v8523 = vpack.c.b16 %v8410, %v8409
        %v8524 = vpack.c.b16 %v8412, %v8411
        %v8525 = vpack.c.b16 %v8414, %v8413
        %v8526 = vpack.c.b16 %v8416, %v8415
        %v8527 = vpack.c.b16 %v8418, %v8417
        %v8528 = vpack.c.b16 %v8420, %v8419
        %v8529 = vpack.c.b16 %v8422, %v8421
        %v8530 = vpack.c.b16 %v8424, %v8423
        %v8531 = vpack.c.b16 %v8426, %v8425
        %v8532 = vpack.c.b16 %v8428, %v8427
        %v8533 = vpack.c.b16 %v8430, %v8429
        %v8534 = vpack.c.b16 %v8432, %v8431
        %v8535 = vpack.c.b16 %v8434, %v8433
        %v8536 = vpack.c.b16 %v8436, %v8435
        %v8537 = vpack.c.b16 %v8438, %v8437
        %v8538 = vpack.c.b16 %v8440, %v8439
        %v8539 = vpack.c.b16 %v8442, %v8441
        %v8540 = vpack.c.b16 %v8444, %v8443
        %v8541 = vpack.c.b16 %v8446, %v8445
        %v8542 = vpack.c.b16 %v8448, %v8447
        %v8543 = vpack.c.b16 %v8450, %v8449
        %v8544 = vpack.c.b16 %v8452, %v8451
        %v8545 = vpack.c.b16 %v8454, %v8453
        %v8546 = vpack.c.b16 %v8456, %v8455
        %v8547 = vpack.c.b16 %v8458, %v8457
        %v8548 = vpack.c.b16 %v8460, %v8459
        %v8549 = vpack.c.b16 %v8462, %v8461
        %v8550 = vpack.c.b16 %v8464, %v8463
        %v8551 = vpack.c.b16 %v8466, %v8465
        %v8552 = vpack.c.b16 %v8468, %v8467
        %v8553 = vpack.c.b16 %v8470, %v8469
        %v8554 = vpack.c.b16 %v8472, %v8471
        %v8555 = vpack.c.b16 %v8474, %v8473
        %v8556 = vpack.c.b16 %v8476, %v8475
        %v8557 = vpack.c.b16 %v8478, %v8477
        %v8558 = vpack.c.b16 %v8480, %v8479
        %v8559 = vpack.c.b16 %v8482, %v8481
        %v8560 = vpack.c.b16 %v8484, %v8483
        %v8561 = vpack.c.b16 %v8486, %v8485
        %v8562 = vpack.c.b16 %v8488, %v8487
        %v8563 = vpack.c.b16 %v8490, %v8489
        %v8564 = vpack.c.b16 %v8492, %v8491
        %v8565 = vpack.c.b16 %v8494, %v8493
        %v8566 = vpack.c.b16 %v8496, %v8495
        %v8567 = vpack.c.b16 %v8498, %v8497
        %v8568 = vpack.c.b16 %v8500, %v8499
        %v8569 = vpack.c.b16 %v8502, %v8501
        %v8570 = vpack.c.b16 %v8504, %v8503
        %v8571 = vpack.c.b16 %v8506, %v8505
        %v8572 = vpack.c.b16 %v8508, %v8507
        %8637 = vmatprep.subr.bf16.mxu0 0
        %8638 = vmatpush1.bf16.msra.mxu0 %v8509
        %8639 = vmatprep.subr.bf16.mxu0 0
        %8640 = vmatpush1.bf16.msra.mxu0 %v8510
        %8641 = vmatprep.subr.bf16.mxu0 0
        %8642 = vmatpush1.bf16.msra.mxu0 %v8511
        %8643 = vmatprep.subr.bf16.mxu0 0
        %8644 = vmatpush1.bf16.msra.mxu0 %v8512
        %8645 = vmatprep.subr.bf16.mxu0 0
        %8646 = vmatpush1.bf16.msra.mxu0 %v8513
        %8647 = vmatprep.subr.bf16.mxu0 0
        %8648 = vmatpush1.bf16.msra.mxu0 %v8514
        %8649 = vmatprep.subr.bf16.mxu0 0
        %8650 = vmatpush1.bf16.msra.mxu0 %v8515
        %8651 = vmatprep.subr.bf16.mxu0 0
        %8652 = vmatpush1.bf16.msra.mxu0 %v8516
        %8653 = vmatprep.subr.bf16.mxu0 0
        %8654 = vmatpush1.bf16.msra.mxu0 %v8517
        %8655 = vmatprep.subr.bf16.mxu0 0
        %8656 = vmatpush1.bf16.msra.mxu0 %v8518
        %8657 = vmatprep.subr.bf16.mxu0 0
        %8658 = vmatpush1.bf16.msra.mxu0 %v8519
        %8659 = vmatprep.subr.bf16.mxu0 0
        %8660 = vmatpush1.bf16.msra.mxu0 %v8520
        %8661 = vmatprep.subr.bf16.mxu0 0
        %8662 = vmatpush1.bf16.msra.mxu0 %v8521
        %8663 = vmatprep.subr.bf16.mxu0 0
        %8664 = vmatpush1.bf16.msra.mxu0 %v8522
        %8665 = vmatprep.subr.bf16.mxu0 0
        %8666 = vmatpush1.bf16.msra.mxu0 %v8523
        %8667 = vmatprep.subr.bf16.mxu0 0
        %8668 = vmatpush1.bf16.msra.mxu0 %v8524
        %8669 = vmatprep.mubr.bf16.mxu0 %v7863
        %8670 = vmatmul.mubr.bf16.gmra.mrb[0].mxu0 %v7862
        %v8671 = vpop.f32.mrb[0].mxu0
        %v8672 = vadd.f32 %v8251, %v8671
        %v8673 = vpop.f32.mrb[0].mxu0
        %v8674 = vpop.f32.mrb[0].mxu0
        %v8675 = vadd.f32 %v8251, %v8674
        %v8676 = vpop.f32.mrb[0].mxu0
        %8677 = vmatprep.mubr.bf16.mxu0 %v7871
        %8678 = vmatmul.mubr.bf16.gmra.mrb[0].mxu0 %v7870
        %v8679 = vpop.f32.mrb[0].mxu0
        %v8680 = vadd.f32 %v8251, %v8679
        %v8681 = vpop.f32.mrb[0].mxu0
        %v8682 = vpop.f32.mrb[0].mxu0
        %v8683 = vadd.f32 %v8251, %v8682
        %v8684 = vpop.f32.mrb[0].mxu0
        %8685 = vmatprep.mubr.bf16.mxu0 %v7879
        %8686 = vmatmul.mubr.bf16.gmra.mrb[0].mxu0 %v7878
        %v8687 = vpop.f32.mrb[0].mxu0
        %v8688 = vadd.f32 %v8251, %v8687
        %v8689 = vpop.f32.mrb[0].mxu0
        %v8690 = vpop.f32.mrb[0].mxu0
        %v8691 = vadd.f32 %v8251, %v8690
        %v8692 = vpop.f32.mrb[0].mxu0
        %8693 = vmatprep.mubr.bf16.mxu0 %v7887
        %8694 = vmatmul.mubr.bf16.gmra.mrb[0].mxu0 %v7886
        %v8695 = vpop.f32.mrb[0].mxu0
        %v8696 = vadd.f32 %v8251, %v8695
        %v8697 = vpop.f32.mrb[0].mxu0
        %v8698 = vpop.f32.mrb[0].mxu0
        %v8699 = vadd.f32 %v8251, %v8698
        %v8700 = vpop.f32.mrb[0].mxu0
        %8701 = vmatprep.mubr.bf16.mxu0 %v7895
        %8702 = vmatmul.mubr.bf16.gmra.mrb[0].mxu0 %v7894
        %v8703 = vpop.f32.mrb[0].mxu0
        %v8704 = vadd.f32 %v8251, %v8703
        %v8705 = vpop.f32.mrb[0].mxu0
        %v8706 = vpop.f32.mrb[0].mxu0
        %v8707 = vadd.f32 %v8251, %v8706
        %v8708 = vpop.f32.mrb[0].mxu0
        %8709 = vmatprep.mubr.bf16.mxu0 %v7903
        %8710 = vmatmul.mubr.bf16.gmra.mrb[0].mxu0 %v7902
        %v8711 = vpop.f32.mrb[0].mxu0
        %v8712 = vadd.f32 %v8251, %v8711
        %v8713 = vpop.f32.mrb[0].mxu0
        %v8714 = vpop.f32.mrb[0].mxu0
        %v8715 = vadd.f32 %v8251, %v8714
        %v8716 = vpop.f32.mrb[0].mxu0
        %8717 = vmatprep.mubr.bf16.mxu0 %v7911
        %8718 = vmatmul.mubr.bf16.gmra.mrb[0].mxu0 %v7910
        %v8719 = vpop.f32.mrb[0].mxu0
        %v8720 = vadd.f32 %v8251, %v8719
        %v8721 = vpop.f32.mrb[0].mxu0
        %v8722 = vpop.f32.mrb[0].mxu0
        %v8723 = vadd.f32 %v8251, %v8722
        %v8724 = vpop.f32.mrb[0].mxu0
        %8725 = vmatprep.mubr.bf16.mxu0 %v7919
        %8726 = vmatmul.mubr.bf16.gmra.mrb[0].mxu0 %v7918
        %v8727 = vpop.f32.mrb[0].mxu0
        %v8728 = vadd.f32 %v8251, %v8727
        %v8729 = vpop.f32.mrb[0].mxu0
        %v8730 = vpop.f32.mrb[0].mxu0
        %v8731 = vadd.f32 %v8251, %v8730
        %v8732 = vpop.f32.mrb[0].mxu0
        %8733 = vmatprep.mubr.bf16.mxu0 %v7927
        %8734 = vmatmul.mubr.bf16.gmra.mrb[0].mxu0 %v7926
        %v8735 = vpop.f32.mrb[0].mxu0
        %v8736 = vadd.f32 %v8251, %v8735
        %v8737 = vpop.f32.mrb[0].mxu0
        %v8738 = vpop.f32.mrb[0].mxu0
        %v8739 = vadd.f32 %v8251, %v8738
        %v8740 = vpop.f32.mrb[0].mxu0
        %8741 = vmatprep.mubr.bf16.mxu0 %v7935
        %8742 = vmatmul.mubr.bf16.gmra.mrb[0].mxu0 %v7934
        %v8743 = vpop.f32.mrb[0].mxu0
        %v8744 = vadd.f32 %v8251, %v8743
        %v8745 = vpop.f32.mrb[0].mxu0
        %v8746 = vpop.f32.mrb[0].mxu0
        %v8747 = vadd.f32 %v8251, %v8746
        %v8748 = vpop.f32.mrb[0].mxu0
        %8749 = vmatprep.mubr.bf16.mxu0 %v7943
        %8750 = vmatmul.mubr.bf16.gmra.mrb[0].mxu0 %v7942
        %v8751 = vpop.f32.mrb[0].mxu0
        %v8752 = vadd.f32 %v8251, %v8751
        %v8753 = vpop.f32.mrb[0].mxu0
        %v8754 = vpop.f32.mrb[0].mxu0
        %v8755 = vadd.f32 %v8251, %v8754
        %v8756 = vpop.f32.mrb[0].mxu0
        %8757 = vmatprep.mubr.bf16.mxu0 %v7951
        %8758 = vmatmul.mubr.bf16.gmra.mrb[0].mxu0 %v7950
        %v8759 = vpop.f32.mrb[0].mxu0
        %v8760 = vadd.f32 %v8251, %v8759
        %v8761 = vpop.f32.mrb[0].mxu0
        %v8762 = vpop.f32.mrb[0].mxu0
        %v8763 = vadd.f32 %v8251, %v8762
        %v8764 = vpop.f32.mrb[0].mxu0
        %8765 = vmatprep.mubr.bf16.mxu0 %v7959
        %8766 = vmatmul.mubr.bf16.gmra.mrb[0].mxu0 %v7958
        %v8767 = vpop.f32.mrb[0].mxu0
        %v8768 = vadd.f32 %v8251, %v8767
        %v8769 = vpop.f32.mrb[0].mxu0
        %v8770 = vpop.f32.mrb[0].mxu0
        %v8771 = vadd.f32 %v8251, %v8770
        %v8772 = vpop.f32.mrb[0].mxu0
        %8773 = vmatprep.mubr.bf16.mxu0 %v7967
        %8774 = vmatmul.mubr.bf16.gmra.mrb[0].mxu0 %v7966
        %v8775 = vpop.f32.mrb[0].mxu0
        %v8776 = vadd.f32 %v8251, %v8775
        %v8777 = vpop.f32.mrb[0].mxu0
        %v8778 = vpop.f32.mrb[0].mxu0
        %v8779 = vadd.f32 %v8251, %v8778
        %v8780 = vpop.f32.mrb[0].mxu0
        %8781 = vmatprep.mubr.bf16.mxu0 %v7975
        %8782 = vmatmul.mubr.bf16.gmra.mrb[0].mxu0 %v7974
        %v8783 = vpop.f32.mrb[0].mxu0
        %v8784 = vadd.f32 %v8251, %v8783
        %v8785 = vpop.f32.mrb[0].mxu0
        %v8786 = vpop.f32.mrb[0].mxu0
        %v8787 = vadd.f32 %v8251, %v8786
        %v8788 = vpop.f32.mrb[0].mxu0
        %8789 = vmatprep.mubr.bf16.mxu0 %v7983
        %8790 = vmatmul.mubr.bf16.gmra.mrb[0].mxu0 %v7982
        %v8791 = vpop.f32.mrb[0].mxu0
        %v8792 = vadd.f32 %v8251, %v8791
        %v8793 = vpop.f32.mrb[0].mxu0
        %v8794 = vpop.f32.mrb[0].mxu0
        %v8795 = vadd.f32 %v8251, %v8794
        %v8796 = vpop.f32.mrb[0].mxu0
        %8797 = vmatprep.mubr.bf16.mxu0 %v7991
        %8798 = vmatmul.mubr.bf16.gmra.mrb[0].mxu0 %v7990
        %v8799 = vpop.f32.mrb[0].mxu0
        %v8800 = vadd.f32 %v8251, %v8799
        %v8801 = vpop.f32.mrb[0].mxu0
        %v8802 = vpop.f32.mrb[0].mxu0
        %v8803 = vadd.f32 %v8251, %v8802
        %v8804 = vpop.f32.mrb[0].mxu0
        %8805 = vmatprep.mubr.bf16.mxu0 %v7999
        %8806 = vmatmul.mubr.bf16.gmra.mrb[0].mxu0 %v7998
        %v8807 = vpop.f32.mrb[0].mxu0
        %v8808 = vadd.f32 %v8251, %v8807
        %v8809 = vpop.f32.mrb[0].mxu0
        %v8810 = vpop.f32.mrb[0].mxu0
        %v8811 = vadd.f32 %v8251, %v8810
        %v8812 = vpop.f32.mrb[0].mxu0
        %8813 = vmatprep.mubr.bf16.mxu0 %v8007
        %8814 = vmatmul.mubr.bf16.gmra.mrb[0].mxu0 %v8006
        %v8815 = vpop.f32.mrb[0].mxu0
        %v8816 = vadd.f32 %v8251, %v8815
        %v8817 = vpop.f32.mrb[0].mxu0
        %v8818 = vpop.f32.mrb[0].mxu0
        %v8819 = vadd.f32 %v8251, %v8818
        %v8820 = vpop.f32.mrb[0].mxu0
        %8821 = vmatprep.mubr.bf16.mxu0 %v8015
        %8822 = vmatmul.mubr.bf16.gmra.mrb[0].mxu0 %v8014
        %v8823 = vpop.f32.mrb[0].mxu0
        %v8824 = vadd.f32 %v8251, %v8823
        %v8825 = vpop.f32.mrb[0].mxu0
        %v8826 = vpop.f32.mrb[0].mxu0
        %v8827 = vadd.f32 %v8251, %v8826
        %v8828 = vpop.f32.mrb[0].mxu0
        %8829 = vmatprep.mubr.bf16.mxu0 %v8023
        %8830 = vmatmul.mubr.bf16.gmra.mrb[0].mxu0 %v8022
        %v8831 = vpop.f32.mrb[0].mxu0
        %v8832 = vadd.f32 %v8251, %v8831
        %v8833 = vpop.f32.mrb[0].mxu0
        %v8834 = vpop.f32.mrb[0].mxu0
        %v8835 = vadd.f32 %v8251, %v8834
        %v8836 = vpop.f32.mrb[0].mxu0
        %8837 = vmatprep.mubr.bf16.mxu0 %v8031
        %8838 = vmatmul.mubr.bf16.gmra.mrb[0].mxu0 %v8030
        %v8839 = vpop.f32.mrb[0].mxu0
        %v8840 = vadd.f32 %v8251, %v8839
        %v8841 = vpop.f32.mrb[0].mxu0
        %v8842 = vpop.f32.mrb[0].mxu0
        %v8843 = vadd.f32 %v8251, %v8842
        %v8844 = vpop.f32.mrb[0].mxu0
        %8845 = vmatprep.mubr.bf16.mxu0 %v8039
        %8846 = vmatmul.mubr.bf16.gmra.mrb[0].mxu0 %v8038
        %v8847 = vpop.f32.mrb[0].mxu0
        %v8848 = vadd.f32 %v8251, %v8847
        %v8849 = vpop.f32.mrb[0].mxu0
        %v8850 = vpop.f32.mrb[0].mxu0
        %v8851 = vadd.f32 %v8251, %v8850
        %v8852 = vpop.f32.mrb[0].mxu0
        %8853 = vmatprep.mubr.bf16.mxu0 %v8047
        %8854 = vmatmul.mubr.bf16.gmra.mrb[0].mxu0 %v8046
        %v8855 = vpop.f32.mrb[0].mxu0
        %v8856 = vadd.f32 %v8251, %v8855
        %v8857 = vpop.f32.mrb[0].mxu0
        %v8858 = vpop.f32.mrb[0].mxu0
        %v8859 = vadd.f32 %v8251, %v8858
        %v8860 = vpop.f32.mrb[0].mxu0
        %8861 = vmatprep.mubr.bf16.mxu0 %v8055
        %8862 = vmatmul.mubr.bf16.gmra.mrb[0].mxu0 %v8054
        %v8863 = vpop.f32.mrb[0].mxu0
        %v8864 = vadd.f32 %v8251, %v8863
        %v8865 = vpop.f32.mrb[0].mxu0
        %v8866 = vpop.f32.mrb[0].mxu0
        %v8867 = vadd.f32 %v8251, %v8866
        %v8868 = vpop.f32.mrb[0].mxu0
        %8869 = vmatprep.mubr.bf16.mxu0 %v8063
        %8870 = vmatmul.mubr.bf16.gmra.mrb[0].mxu0 %v8062
        %v8871 = vpop.f32.mrb[0].mxu0
        %v8872 = vadd.f32 %v8251, %v8871
        %v8873 = vpop.f32.mrb[0].mxu0
        %v8874 = vpop.f32.mrb[0].mxu0
        %v8875 = vadd.f32 %v8251, %v8874
        %v8876 = vpop.f32.mrb[0].mxu0
        %8877 = vmatprep.mubr.bf16.mxu0 %v8071
        %8878 = vmatmul.mubr.bf16.gmra.mrb[0].mxu0 %v8070
        %v8879 = vpop.f32.mrb[0].mxu0
        %v8880 = vadd.f32 %v8251, %v8879
        %v8881 = vpop.f32.mrb[0].mxu0
        %v8882 = vpop.f32.mrb[0].mxu0
        %v8883 = vadd.f32 %v8251, %v8882
        %v8884 = vpop.f32.mrb[0].mxu0
        %8885 = vmatprep.mubr.bf16.mxu0 %v8079
        %8886 = vmatmul.mubr.bf16.gmra.mrb[0].mxu0 %v8078
        %v8887 = vpop.f32.mrb[0].mxu0
        %v8888 = vadd.f32 %v8251, %v8887
        %v8889 = vpop.f32.mrb[0].mxu0
        %v8890 = vpop.f32.mrb[0].mxu0
        %v8891 = vadd.f32 %v8251, %v8890
        %v8892 = vpop.f32.mrb[0].mxu0
        %8893 = vmatprep.mubr.bf16.mxu0 %v8087
        %8894 = vmatmul.mubr.bf16.gmra.mrb[0].mxu0 %v8086
        %v8895 = vpop.f32.mrb[0].mxu0
        %v8896 = vadd.f32 %v8251, %v8895
        %v8897 = vpop.f32.mrb[0].mxu0
        %v8898 = vpop.f32.mrb[0].mxu0
        %v8899 = vadd.f32 %v8251, %v8898
        %v8900 = vpop.f32.mrb[0].mxu0
        %8901 = vmatprep.mubr.bf16.mxu0 %v8095
        %8902 = vmatmul.mubr.bf16.gmra.mrb[0].mxu0 %v8094
        %v8903 = vpop.f32.mrb[0].mxu0
        %v8904 = vadd.f32 %v8251, %v8903
        %v8905 = vpop.f32.mrb[0].mxu0
        %v8906 = vpop.f32.mrb[0].mxu0
        %v8907 = vadd.f32 %v8251, %v8906
        %v8908 = vpop.f32.mrb[0].mxu0
        %8909 = vmatprep.mubr.bf16.mxu0 %v8103
        %8910 = vmatmul.mubr.bf16.gmra.mrb[0].mxu0 %v8102
        %v8911 = vpop.f32.mrb[0].mxu0
        %v8912 = vadd.f32 %v8251, %v8911
        %v8913 = vpop.f32.mrb[0].mxu0
        %v8914 = vpop.f32.mrb[0].mxu0
        %v8915 = vadd.f32 %v8251, %v8914
        %v8916 = vpop.f32.mrb[0].mxu0
        %8917 = vmatprep.mubr.bf16.mxu0 %v8111
        %8918 = vmatmul.mubr.bf16.gmra.mrb[0].mxu0 %v8110
        %v8919 = vpop.f32.mrb[0].mxu0
        %v8920 = vadd.f32 %v8251, %v8919
        %v8921 = vpop.f32.mrb[0].mxu0
        %v8922 = vpop.f32.mrb[0].mxu0
        %v8923 = vadd.f32 %v8251, %v8922
        %v8924 = vpop.f32.mrb[0].mxu0
        %8925 = vdwg.mxu0
        %8926 = vmatprep.subr.bf16.mxu0 0
        %8927 = vmatpush1.bf16.msra.mxu0 %v8525
        %8928 = vmatprep.subr.bf16.mxu0 0
        %8929 = vmatpush1.bf16.msra.mxu0 %v8526
        %8930 = vmatprep.subr.bf16.mxu0 0
        %8931 = vmatpush1.bf16.msra.mxu0 %v8527
        %8932 = vmatprep.subr.bf16.mxu0 0
        %8933 = vmatpush1.bf16.msra.mxu0 %v8528
        %8934 = vmatprep.subr.bf16.mxu0 0
        %8935 = vmatpush1.bf16.msra.mxu0 %v8529
        %8936 = vmatprep.subr.bf16.mxu0 0
        %8937 = vmatpush1.bf16.msra.mxu0 %v8530
        %8938 = vmatprep.subr.bf16.mxu0 0
        %8939 = vmatpush1.bf16.msra.mxu0 %v8531
        %8940 = vmatprep.subr.bf16.mxu0 0
        %8941 = vmatpush1.bf16.msra.mxu0 %v8532
        %8942 = vmatprep.subr.bf16.mxu0 0
        %8943 = vmatpush1.bf16.msra.mxu0 %v8533
        %8944 = vmatprep.subr.bf16.mxu0 0
        %8945 = vmatpush1.bf16.msra.mxu0 %v8534
        %8946 = vmatprep.subr.bf16.mxu0 0
        %8947 = vmatpush1.bf16.msra.mxu0 %v8535
        %8948 = vmatprep.subr.bf16.mxu0 0
        %8949 = vmatpush1.bf16.msra.mxu0 %v8536
        %8950 = vmatprep.subr.bf16.mxu0 0
        %8951 = vmatpush1.bf16.msra.mxu0 %v8537
        %8952 = vmatprep.subr.bf16.mxu0 0
        %8953 = vmatpush1.bf16.msra.mxu0 %v8538
        %8954 = vmatprep.subr.bf16.mxu0 0
        %8955 = vmatpush1.bf16.msra.mxu0 %v8539
        %8956 = vmatprep.subr.bf16.mxu0 0
        %8957 = vmatpush1.bf16.msra.mxu0 %v8540
        %8958 = vmatprep.mubr.bf16.mxu0 %v7865
        %8959 = vmatmul.mubr.bf16.gmra.mrb[0].mxu0 %v7864
        %v8960 = vpop.f32.mrb[0].mxu0
        %v8961 = vadd.f32 %v8672, %v8960
        %v8962 = vpop.f32.mrb[0].mxu0
        %v8963 = vpop.f32.mrb[0].mxu0
        %v8964 = vadd.f32 %v8675, %v8963
        %v8965 = vpop.f32.mrb[0].mxu0
        %8966 = vmatprep.mubr.bf16.mxu0 %v7873
        %8967 = vmatmul.mubr.bf16.gmra.mrb[0].mxu0 %v7872
        %v8968 = vpop.f32.mrb[0].mxu0
        %v8969 = vadd.f32 %v8680, %v8968
        %v8970 = vpop.f32.mrb[0].mxu0
        %v8971 = vpop.f32.mrb[0].mxu0
        %v8972 = vadd.f32 %v8683, %v8971
        %v8973 = vpop.f32.mrb[0].mxu0
        %8974 = vmatprep.mubr.bf16.mxu0 %v7881
        %8975 = vmatmul.mubr.bf16.gmra.mrb[0].mxu0 %v7880
        %v8976 = vpop.f32.mrb[0].mxu0
        %v8977 = vadd.f32 %v8688, %v8976
        %v8978 = vpop.f32.mrb[0].mxu0
        %v8979 = vpop.f32.mrb[0].mxu0
        %v8980 = vadd.f32 %v8691, %v8979
        %v8981 = vpop.f32.mrb[0].mxu0
        %8982 = vmatprep.mubr.bf16.mxu0 %v7889
        %8983 = vmatmul.mubr.bf16.gmra.mrb[0].mxu0 %v7888
        %v8984 = vpop.f32.mrb[0].mxu0
        %v8985 = vadd.f32 %v8696, %v8984
        %v8986 = vpop.f32.mrb[0].mxu0
        %v8987 = vpop.f32.mrb[0].mxu0
        %v8988 = vadd.f32 %v8699, %v8987
        %v8989 = vpop.f32.mrb[0].mxu0
        %8990 = vmatprep.mubr.bf16.mxu0 %v7897
        %8991 = vmatmul.mubr.bf16.gmra.mrb[0].mxu0 %v7896
        %v8992 = vpop.f32.mrb[0].mxu0
        %v8993 = vadd.f32 %v8704, %v8992
        %v8994 = vpop.f32.mrb[0].mxu0
        %v8995 = vpop.f32.mrb[0].mxu0
        %v8996 = vadd.f32 %v8707, %v8995
        %v8997 = vpop.f32.mrb[0].mxu0
        %8998 = vmatprep.mubr.bf16.mxu0 %v7905
        %8999 = vmatmul.mubr.bf16.gmra.mrb[0].mxu0 %v7904
        %v9000 = vpop.f32.mrb[0].mxu0
        %v9001 = vadd.f32 %v8712, %v9000
        %v9002 = vpop.f32.mrb[0].mxu0
        %v9003 = vpop.f32.mrb[0].mxu0
        %v9004 = vadd.f32 %v8715, %v9003
        %v9005 = vpop.f32.mrb[0].mxu0
        %9006 = vmatprep.mubr.bf16.mxu0 %v7913
        %9007 = vmatmul.mubr.bf16.gmra.mrb[0].mxu0 %v7912
        %v9008 = vpop.f32.mrb[0].mxu0
        %v9009 = vadd.f32 %v8720, %v9008
        %v9010 = vpop.f32.mrb[0].mxu0
        %v9011 = vpop.f32.mrb[0].mxu0
        %v9012 = vadd.f32 %v8723, %v9011
        %v9013 = vpop.f32.mrb[0].mxu0
        %9014 = vmatprep.mubr.bf16.mxu0 %v7921
        %9015 = vmatmul.mubr.bf16.gmra.mrb[0].mxu0 %v7920
        %v9016 = vpop.f32.mrb[0].mxu0
        %v9017 = vadd.f32 %v8728, %v9016
        %v9018 = vpop.f32.mrb[0].mxu0
        %v9019 = vpop.f32.mrb[0].mxu0
        %v9020 = vadd.f32 %v8731, %v9019
        %v9021 = vpop.f32.mrb[0].mxu0
        %9022 = vmatprep.mubr.bf16.mxu0 %v7929
        %9023 = vmatmul.mubr.bf16.gmra.mrb[0].mxu0 %v7928
        %v9024 = vpop.f32.mrb[0].mxu0
        %v9025 = vadd.f32 %v8736, %v9024
        %v9026 = vpop.f32.mrb[0].mxu0
        %v9027 = vpop.f32.mrb[0].mxu0
        %v9028 = vadd.f32 %v8739, %v9027
        %v9029 = vpop.f32.mrb[0].mxu0
        %9030 = vmatprep.mubr.bf16.mxu0 %v7937
        %9031 = vmatmul.mubr.bf16.gmra.mrb[0].mxu0 %v7936
        %v9032 = vpop.f32.mrb[0].mxu0
        %v9033 = vadd.f32 %v8744, %v9032
        %v9034 = vpop.f32.mrb[0].mxu0
        %v9035 = vpop.f32.mrb[0].mxu0
        %v9036 = vadd.f32 %v8747, %v9035
        %v9037 = vpop.f32.mrb[0].mxu0
        %9038 = vmatprep.mubr.bf16.mxu0 %v7945
        %9039 = vmatmul.mubr.bf16.gmra.mrb[0].mxu0 %v7944
        %v9040 = vpop.f32.mrb[0].mxu0
        %v9041 = vadd.f32 %v8752, %v9040
        %v9042 = vpop.f32.mrb[0].mxu0
        %v9043 = vpop.f32.mrb[0].mxu0
        %v9044 = vadd.f32 %v8755, %v9043
        %v9045 = vpop.f32.mrb[0].mxu0
        %9046 = vmatprep.mubr.bf16.mxu0 %v7953
        %9047 = vmatmul.mubr.bf16.gmra.mrb[0].mxu0 %v7952
        %v9048 = vpop.f32.mrb[0].mxu0
        %v9049 = vadd.f32 %v8760, %v9048
        %v9050 = vpop.f32.mrb[0].mxu0
        %v9051 = vpop.f32.mrb[0].mxu0
        %v9052 = vadd.f32 %v8763, %v9051
        %v9053 = vpop.f32.mrb[0].mxu0
        %9054 = vmatprep.mubr.bf16.mxu0 %v7961
        %9055 = vmatmul.mubr.bf16.gmra.mrb[0].mxu0 %v7960
        %v9056 = vpop.f32.mrb[0].mxu0
        %v9057 = vadd.f32 %v8768, %v9056
        %v9058 = vpop.f32.mrb[0].mxu0
        %v9059 = vpop.f32.mrb[0].mxu0
        %v9060 = vadd.f32 %v8771, %v9059
        %v9061 = vpop.f32.mrb[0].mxu0
        %9062 = vmatprep.mubr.bf16.mxu0 %v7969
        %9063 = vmatmul.mubr.bf16.gmra.mrb[0].mxu0 %v7968
        %v9064 = vpop.f32.mrb[0].mxu0
        %v9065 = vadd.f32 %v8776, %v9064
        %v9066 = vpop.f32.mrb[0].mxu0
        %v9067 = vpop.f32.mrb[0].mxu0
        %v9068 = vadd.f32 %v8779, %v9067
        %v9069 = vpop.f32.mrb[0].mxu0
        %9070 = vmatprep.mubr.bf16.mxu0 %v7977
        %9071 = vmatmul.mubr.bf16.gmra.mrb[0].mxu0 %v7976
        %v9072 = vpop.f32.mrb[0].mxu0
        %v9073 = vadd.f32 %v8784, %v9072
        %v9074 = vpop.f32.mrb[0].mxu0
        %v9075 = vpop.f32.mrb[0].mxu0
        %v9076 = vadd.f32 %v8787, %v9075
        %v9077 = vpop.f32.mrb[0].mxu0
        %9078 = vmatprep.mubr.bf16.mxu0 %v7985
        %9079 = vmatmul.mubr.bf16.gmra.mrb[0].mxu0 %v7984
        %v9080 = vpop.f32.mrb[0].mxu0
        %v9081 = vadd.f32 %v8792, %v9080
        %v9082 = vpop.f32.mrb[0].mxu0
        %v9083 = vpop.f32.mrb[0].mxu0
        %v9084 = vadd.f32 %v8795, %v9083
        %v9085 = vpop.f32.mrb[0].mxu0
        %9086 = vmatprep.mubr.bf16.mxu0 %v7993
        %9087 = vmatmul.mubr.bf16.gmra.mrb[0].mxu0 %v7992
        %v9088 = vpop.f32.mrb[0].mxu0
        %v9089 = vadd.f32 %v8800, %v9088
        %v9090 = vpop.f32.mrb[0].mxu0
        %v9091 = vpop.f32.mrb[0].mxu0
        %v9092 = vadd.f32 %v8803, %v9091
        %v9093 = vpop.f32.mrb[0].mxu0
        %9094 = vmatprep.mubr.bf16.mxu0 %v8001
        %9095 = vmatmul.mubr.bf16.gmra.mrb[0].mxu0 %v8000
        %v9096 = vpop.f32.mrb[0].mxu0
        %v9097 = vadd.f32 %v8808, %v9096
        %v9098 = vpop.f32.mrb[0].mxu0
        %v9099 = vpop.f32.mrb[0].mxu0
        %v9100 = vadd.f32 %v8811, %v9099
        %v9101 = vpop.f32.mrb[0].mxu0
        %9102 = vmatprep.mubr.bf16.mxu0 %v8009
        %9103 = vmatmul.mubr.bf16.gmra.mrb[0].mxu0 %v8008
        %v9104 = vpop.f32.mrb[0].mxu0
        %v9105 = vadd.f32 %v8816, %v9104
        %v9106 = vpop.f32.mrb[0].mxu0
        %v9107 = vpop.f32.mrb[0].mxu0
        %v9108 = vadd.f32 %v8819, %v9107
        %v9109 = vpop.f32.mrb[0].mxu0
        %9110 = vmatprep.mubr.bf16.mxu0 %v8017
        %9111 = vmatmul.mubr.bf16.gmra.mrb[0].mxu0 %v8016
        %v9112 = vpop.f32.mrb[0].mxu0
        %v9113 = vadd.f32 %v8824, %v9112
        %v9114 = vpop.f32.mrb[0].mxu0
        %v9115 = vpop.f32.mrb[0].mxu0
        %v9116 = vadd.f32 %v8827, %v9115
        %v9117 = vpop.f32.mrb[0].mxu0
        %9118 = vmatprep.mubr.bf16.mxu0 %v8025
        %9119 = vmatmul.mubr.bf16.gmra.mrb[0].mxu0 %v8024
        %v9120 = vpop.f32.mrb[0].mxu0
        %v9121 = vadd.f32 %v8832, %v9120
        %v9122 = vpop.f32.mrb[0].mxu0
        %v9123 = vpop.f32.mrb[0].mxu0
        %v9124 = vadd.f32 %v8835, %v9123
        %v9125 = vpop.f32.mrb[0].mxu0
        %9126 = vmatprep.mubr.bf16.mxu0 %v8033
        %9127 = vmatmul.mubr.bf16.gmra.mrb[0].mxu0 %v8032
        %v9128 = vpop.f32.mrb[0].mxu0
        %v9129 = vadd.f32 %v8840, %v9128
        %v9130 = vpop.f32.mrb[0].mxu0
        %v9131 = vpop.f32.mrb[0].mxu0
        %v9132 = vadd.f32 %v8843, %v9131
        %v9133 = vpop.f32.mrb[0].mxu0
        %9134 = vmatprep.mubr.bf16.mxu0 %v8041
        %9135 = vmatmul.mubr.bf16.gmra.mrb[0].mxu0 %v8040
        %v9136 = vpop.f32.mrb[0].mxu0
        %v9137 = vadd.f32 %v8848, %v9136
        %v9138 = vpop.f32.mrb[0].mxu0
        %v9139 = vpop.f32.mrb[0].mxu0
        %v9140 = vadd.f32 %v8851, %v9139
        %v9141 = vpop.f32.mrb[0].mxu0
        %9142 = vmatprep.mubr.bf16.mxu0 %v8049
        %9143 = vmatmul.mubr.bf16.gmra.mrb[0].mxu0 %v8048
        %v9144 = vpop.f32.mrb[0].mxu0
        %v9145 = vadd.f32 %v8856, %v9144
        %v9146 = vpop.f32.mrb[0].mxu0
        %v9147 = vpop.f32.mrb[0].mxu0
        %v9148 = vadd.f32 %v8859, %v9147
        %v9149 = vpop.f32.mrb[0].mxu0
        %9150 = vmatprep.mubr.bf16.mxu0 %v8057
        %9151 = vmatmul.mubr.bf16.gmra.mrb[0].mxu0 %v8056
        %v9152 = vpop.f32.mrb[0].mxu0
        %v9153 = vadd.f32 %v8864, %v9152
        %v9154 = vpop.f32.mrb[0].mxu0
        %v9155 = vpop.f32.mrb[0].mxu0
        %v9156 = vadd.f32 %v8867, %v9155
        %v9157 = vpop.f32.mrb[0].mxu0
        %9158 = vmatprep.mubr.bf16.mxu0 %v8065
        %9159 = vmatmul.mubr.bf16.gmra.mrb[0].mxu0 %v8064
        %v9160 = vpop.f32.mrb[0].mxu0
        %v9161 = vadd.f32 %v8872, %v9160
        %v9162 = vpop.f32.mrb[0].mxu0
        %v9163 = vpop.f32.mrb[0].mxu0
        %v9164 = vadd.f32 %v8875, %v9163
        %v9165 = vpop.f32.mrb[0].mxu0
        %9166 = vmatprep.mubr.bf16.mxu0 %v8073
        %9167 = vmatmul.mubr.bf16.gmra.mrb[0].mxu0 %v8072
        %v9168 = vpop.f32.mrb[0].mxu0
        %v9169 = vadd.f32 %v8880, %v9168
        %v9170 = vpop.f32.mrb[0].mxu0
        %v9171 = vpop.f32.mrb[0].mxu0
        %v9172 = vadd.f32 %v8883, %v9171
        %v9173 = vpop.f32.mrb[0].mxu0
        %9174 = vmatprep.mubr.bf16.mxu0 %v8081
        %9175 = vmatmul.mubr.bf16.gmra.mrb[0].mxu0 %v8080
        %v9176 = vpop.f32.mrb[0].mxu0
        %v9177 = vadd.f32 %v8888, %v9176
        %v9178 = vpop.f32.mrb[0].mxu0
        %v9179 = vpop.f32.mrb[0].mxu0
        %v9180 = vadd.f32 %v8891, %v9179
        %v9181 = vpop.f32.mrb[0].mxu0
        %9182 = vmatprep.mubr.bf16.mxu0 %v8089
        %9183 = vmatmul.mubr.bf16.gmra.mrb[0].mxu0 %v8088
        %v9184 = vpop.f32.mrb[0].mxu0
        %v9185 = vadd.f32 %v8896, %v9184
        %v9186 = vpop.f32.mrb[0].mxu0
        %v9187 = vpop.f32.mrb[0].mxu0
        %v9188 = vadd.f32 %v8899, %v9187
        %v9189 = vpop.f32.mrb[0].mxu0
        %9190 = vmatprep.mubr.bf16.mxu0 %v8097
        %9191 = vmatmul.mubr.bf16.gmra.mrb[0].mxu0 %v8096
        %v9192 = vpop.f32.mrb[0].mxu0
        %v9193 = vadd.f32 %v8904, %v9192
        %v9194 = vpop.f32.mrb[0].mxu0
        %v9195 = vpop.f32.mrb[0].mxu0
        %v9196 = vadd.f32 %v8907, %v9195
        %v9197 = vpop.f32.mrb[0].mxu0
        %9198 = vmatprep.mubr.bf16.mxu0 %v8105
        %9199 = vmatmul.mubr.bf16.gmra.mrb[0].mxu0 %v8104
        %v9200 = vpop.f32.mrb[0].mxu0
        %v9201 = vadd.f32 %v8912, %v9200
        %v9202 = vpop.f32.mrb[0].mxu0
        %v9203 = vpop.f32.mrb[0].mxu0
        %v9204 = vadd.f32 %v8915, %v9203
        %v9205 = vpop.f32.mrb[0].mxu0
        %9206 = vmatprep.mubr.bf16.mxu0 %v8113
        %9207 = vmatmul.mubr.bf16.gmra.mrb[0].mxu0 %v8112
        %v9208 = vpop.f32.mrb[0].mxu0
        %v9209 = vadd.f32 %v8920, %v9208
        %v9210 = vpop.f32.mrb[0].mxu0
        %v9211 = vpop.f32.mrb[0].mxu0
        %v9212 = vadd.f32 %v8923, %v9211
        %v9213 = vpop.f32.mrb[0].mxu0
        %9214 = vdwg.mxu0
        %9215 = vmatprep.subr.bf16.mxu0 0
        %9216 = vmatpush1.bf16.msra.mxu0 %v8541
        %9217 = vmatprep.subr.bf16.mxu0 0
        %9218 = vmatpush1.bf16.msra.mxu0 %v8542
        %9219 = vmatprep.subr.bf16.mxu0 0
        %9220 = vmatpush1.bf16.msra.mxu0 %v8543
        %9221 = vmatprep.subr.bf16.mxu0 0
        %9222 = vmatpush1.bf16.msra.mxu0 %v8544
        %9223 = vmatprep.subr.bf16.mxu0 0
        %9224 = vmatpush1.bf16.msra.mxu0 %v8545
        %9225 = vmatprep.subr.bf16.mxu0 0
        %9226 = vmatpush1.bf16.msra.mxu0 %v8546
        %9227 = vmatprep.subr.bf16.mxu0 0
        %9228 = vmatpush1.bf16.msra.mxu0 %v8547
        %9229 = vmatprep.subr.bf16.mxu0 0
        %9230 = vmatpush1.bf16.msra.mxu0 %v8548
        %9231 = vmatprep.subr.bf16.mxu0 0
        %9232 = vmatpush1.bf16.msra.mxu0 %v8549
        %9233 = vmatprep.subr.bf16.mxu0 0
        %9234 = vmatpush1.bf16.msra.mxu0 %v8550
        %9235 = vmatprep.subr.bf16.mxu0 0
        %9236 = vmatpush1.bf16.msra.mxu0 %v8551
        %9237 = vmatprep.subr.bf16.mxu0 0
        %9238 = vmatpush1.bf16.msra.mxu0 %v8552
        %9239 = vmatprep.subr.bf16.mxu0 0
        %9240 = vmatpush1.bf16.msra.mxu0 %v8553
        %9241 = vmatprep.subr.bf16.mxu0 0
        %9242 = vmatpush1.bf16.msra.mxu0 %v8554
        %9243 = vmatprep.subr.bf16.mxu0 0
        %9244 = vmatpush1.bf16.msra.mxu0 %v8555
        %9245 = vmatprep.subr.bf16.mxu0 0
        %9246 = vmatpush1.bf16.msra.mxu0 %v8556
        %9247 = vmatprep.mubr.bf16.mxu0 %v7867
        %9248 = vmatmul.mubr.bf16.gmra.mrb[0].mxu0 %v7866
        %v9249 = vpop.f32.mrb[0].mxu0
        %v9250 = vadd.f32 %v8961, %v9249
        %v9251 = vpop.f32.mrb[0].mxu0
        %v9252 = vpop.f32.mrb[0].mxu0
        %v9253 = vadd.f32 %v8964, %v9252
        %v9254 = vpop.f32.mrb[0].mxu0
        %9255 = vmatprep.mubr.bf16.mxu0 %v7875
        %9256 = vmatmul.mubr.bf16.gmra.mrb[0].mxu0 %v7874
        %v9257 = vpop.f32.mrb[0].mxu0
        %v9258 = vadd.f32 %v8969, %v9257
        %v9259 = vpop.f32.mrb[0].mxu0
        %v9260 = vpop.f32.mrb[0].mxu0
        %v9261 = vadd.f32 %v8972, %v9260
        %v9262 = vpop.f32.mrb[0].mxu0
        %9263 = vmatprep.mubr.bf16.mxu0 %v7883
        %9264 = vmatmul.mubr.bf16.gmra.mrb[0].mxu0 %v7882
        %v9265 = vpop.f32.mrb[0].mxu0
        %v9266 = vadd.f32 %v8977, %v9265
        %v9267 = vpop.f32.mrb[0].mxu0
        %v9268 = vpop.f32.mrb[0].mxu0
        %v9269 = vadd.f32 %v8980, %v9268
        %v9270 = vpop.f32.mrb[0].mxu0
        %9271 = vmatprep.mubr.bf16.mxu0 %v7891
        %9272 = vmatmul.mubr.bf16.gmra.mrb[0].mxu0 %v7890
        %v9273 = vpop.f32.mrb[0].mxu0
        %v9274 = vadd.f32 %v8985, %v9273
        %v9275 = vpop.f32.mrb[0].mxu0
        %v9276 = vpop.f32.mrb[0].mxu0
        %v9277 = vadd.f32 %v8988, %v9276
        %v9278 = vpop.f32.mrb[0].mxu0
        %9279 = vmatprep.mubr.bf16.mxu0 %v7899
        %9280 = vmatmul.mubr.bf16.gmra.mrb[0].mxu0 %v7898
        %v9281 = vpop.f32.mrb[0].mxu0
        %v9282 = vadd.f32 %v8993, %v9281
        %v9283 = vpop.f32.mrb[0].mxu0
        %v9284 = vpop.f32.mrb[0].mxu0
        %v9285 = vadd.f32 %v8996, %v9284
        %v9286 = vpop.f32.mrb[0].mxu0
        %9287 = vmatprep.mubr.bf16.mxu0 %v7907
        %9288 = vmatmul.mubr.bf16.gmra.mrb[0].mxu0 %v7906
        %v9289 = vpop.f32.mrb[0].mxu0
        %v9290 = vadd.f32 %v9001, %v9289
        %v9291 = vpop.f32.mrb[0].mxu0
        %v9292 = vpop.f32.mrb[0].mxu0
        %v9293 = vadd.f32 %v9004, %v9292
        %v9294 = vpop.f32.mrb[0].mxu0
        %9295 = vmatprep.mubr.bf16.mxu0 %v7915
        %9296 = vmatmul.mubr.bf16.gmra.mrb[0].mxu0 %v7914
        %v9297 = vpop.f32.mrb[0].mxu0
        %v9298 = vadd.f32 %v9009, %v9297
        %v9299 = vpop.f32.mrb[0].mxu0
        %v9300 = vpop.f32.mrb[0].mxu0
        %v9301 = vadd.f32 %v9012, %v9300
        %v9302 = vpop.f32.mrb[0].mxu0
        %9303 = vmatprep.mubr.bf16.mxu0 %v7923
        %9304 = vmatmul.mubr.bf16.gmra.mrb[0].mxu0 %v7922
        %v9305 = vpop.f32.mrb[0].mxu0
        %v9306 = vadd.f32 %v9017, %v9305
        %v9307 = vpop.f32.mrb[0].mxu0
        %v9308 = vpop.f32.mrb[0].mxu0
        %v9309 = vadd.f32 %v9020, %v9308
        %v9310 = vpop.f32.mrb[0].mxu0
        %9311 = vmatprep.mubr.bf16.mxu0 %v7931
        %9312 = vmatmul.mubr.bf16.gmra.mrb[0].mxu0 %v7930
        %v9313 = vpop.f32.mrb[0].mxu0
        %v9314 = vadd.f32 %v9025, %v9313
        %v9315 = vpop.f32.mrb[0].mxu0
        %v9316 = vpop.f32.mrb[0].mxu0
        %v9317 = vadd.f32 %v9028, %v9316
        %v9318 = vpop.f32.mrb[0].mxu0
        %9319 = vmatprep.mubr.bf16.mxu0 %v7939
        %9320 = vmatmul.mubr.bf16.gmra.mrb[0].mxu0 %v7938
        %v9321 = vpop.f32.mrb[0].mxu0
        %v9322 = vadd.f32 %v9033, %v9321
        %v9323 = vpop.f32.mrb[0].mxu0
        %v9324 = vpop.f32.mrb[0].mxu0
        %v9325 = vadd.f32 %v9036, %v9324
        %v9326 = vpop.f32.mrb[0].mxu0
        %9327 = vmatprep.mubr.bf16.mxu0 %v7947
        %9328 = vmatmul.mubr.bf16.gmra.mrb[0].mxu0 %v7946
        %v9329 = vpop.f32.mrb[0].mxu0
        %v9330 = vadd.f32 %v9041, %v9329
        %v9331 = vpop.f32.mrb[0].mxu0
        %v9332 = vpop.f32.mrb[0].mxu0
        %v9333 = vadd.f32 %v9044, %v9332
        %v9334 = vpop.f32.mrb[0].mxu0
        %9335 = vmatprep.mubr.bf16.mxu0 %v7955
        %9336 = vmatmul.mubr.bf16.gmra.mrb[0].mxu0 %v7954
        %v9337 = vpop.f32.mrb[0].mxu0
        %v9338 = vadd.f32 %v9049, %v9337
        %v9339 = vpop.f32.mrb[0].mxu0
        %v9340 = vpop.f32.mrb[0].mxu0
        %v9341 = vadd.f32 %v9052, %v9340
        %v9342 = vpop.f32.mrb[0].mxu0
        %9343 = vmatprep.mubr.bf16.mxu0 %v7963
        %9344 = vmatmul.mubr.bf16.gmra.mrb[0].mxu0 %v7962
        %v9345 = vpop.f32.mrb[0].mxu0
        %v9346 = vadd.f32 %v9057, %v9345
        %v9347 = vpop.f32.mrb[0].mxu0
        %v9348 = vpop.f32.mrb[0].mxu0
        %v9349 = vadd.f32 %v9060, %v9348
        %v9350 = vpop.f32.mrb[0].mxu0
        %9351 = vmatprep.mubr.bf16.mxu0 %v7971
        %9352 = vmatmul.mubr.bf16.gmra.mrb[0].mxu0 %v7970
        %v9353 = vpop.f32.mrb[0].mxu0
        %v9354 = vadd.f32 %v9065, %v9353
        %v9355 = vpop.f32.mrb[0].mxu0
        %v9356 = vpop.f32.mrb[0].mxu0
        %v9357 = vadd.f32 %v9068, %v9356
        %v9358 = vpop.f32.mrb[0].mxu0
        %9359 = vmatprep.mubr.bf16.mxu0 %v7979
        %9360 = vmatmul.mubr.bf16.gmra.mrb[0].mxu0 %v7978
        %v9361 = vpop.f32.mrb[0].mxu0
        %v9362 = vadd.f32 %v9073, %v9361
        %v9363 = vpop.f32.mrb[0].mxu0
        %v9364 = vpop.f32.mrb[0].mxu0
        %v9365 = vadd.f32 %v9076, %v9364
        %v9366 = vpop.f32.mrb[0].mxu0
        %9367 = vmatprep.mubr.bf16.mxu0 %v7987
        %9368 = vmatmul.mubr.bf16.gmra.mrb[0].mxu0 %v7986
        %v9369 = vpop.f32.mrb[0].mxu0
        %v9370 = vadd.f32 %v9081, %v9369
        %v9371 = vpop.f32.mrb[0].mxu0
        %v9372 = vpop.f32.mrb[0].mxu0
        %v9373 = vadd.f32 %v9084, %v9372
        %v9374 = vpop.f32.mrb[0].mxu0
        %9375 = vmatprep.mubr.bf16.mxu0 %v7995
        %9376 = vmatmul.mubr.bf16.gmra.mrb[0].mxu0 %v7994
        %v9377 = vpop.f32.mrb[0].mxu0
        %v9378 = vadd.f32 %v9089, %v9377
        %v9379 = vpop.f32.mrb[0].mxu0
        %v9380 = vpop.f32.mrb[0].mxu0
        %v9381 = vadd.f32 %v9092, %v9380
        %v9382 = vpop.f32.mrb[0].mxu0
        %9383 = vmatprep.mubr.bf16.mxu0 %v8003
        %9384 = vmatmul.mubr.bf16.gmra.mrb[0].mxu0 %v8002
        %v9385 = vpop.f32.mrb[0].mxu0
        %v9386 = vadd.f32 %v9097, %v9385
        %v9387 = vpop.f32.mrb[0].mxu0
        %v9388 = vpop.f32.mrb[0].mxu0
        %v9389 = vadd.f32 %v9100, %v9388
        %v9390 = vpop.f32.mrb[0].mxu0
        %9391 = vmatprep.mubr.bf16.mxu0 %v8011
        %9392 = vmatmul.mubr.bf16.gmra.mrb[0].mxu0 %v8010
        %v9393 = vpop.f32.mrb[0].mxu0
        %v9394 = vadd.f32 %v9105, %v9393
        %v9395 = vpop.f32.mrb[0].mxu0
        %v9396 = vpop.f32.mrb[0].mxu0
        %v9397 = vadd.f32 %v9108, %v9396
        %v9398 = vpop.f32.mrb[0].mxu0
        %9399 = vmatprep.mubr.bf16.mxu0 %v8019
        %9400 = vmatmul.mubr.bf16.gmra.mrb[0].mxu0 %v8018
        %v9401 = vpop.f32.mrb[0].mxu0
        %v9402 = vadd.f32 %v9113, %v9401
        %v9403 = vpop.f32.mrb[0].mxu0
        %v9404 = vpop.f32.mrb[0].mxu0
        %v9405 = vadd.f32 %v9116, %v9404
        %v9406 = vpop.f32.mrb[0].mxu0
        %9407 = vmatprep.mubr.bf16.mxu0 %v8027
        %9408 = vmatmul.mubr.bf16.gmra.mrb[0].mxu0 %v8026
        %v9409 = vpop.f32.mrb[0].mxu0
        %v9410 = vadd.f32 %v9121, %v9409
        %v9411 = vpop.f32.mrb[0].mxu0
        %v9412 = vpop.f32.mrb[0].mxu0
        %v9413 = vadd.f32 %v9124, %v9412
        %v9414 = vpop.f32.mrb[0].mxu0
        %9415 = vmatprep.mubr.bf16.mxu0 %v8035
        %9416 = vmatmul.mubr.bf16.gmra.mrb[0].mxu0 %v8034
        %v9417 = vpop.f32.mrb[0].mxu0
        %v9418 = vadd.f32 %v9129, %v9417
        %v9419 = vpop.f32.mrb[0].mxu0
        %v9420 = vpop.f32.mrb[0].mxu0
        %v9421 = vadd.f32 %v9132, %v9420
        %v9422 = vpop.f32.mrb[0].mxu0
        %9423 = vmatprep.mubr.bf16.mxu0 %v8043
        %9424 = vmatmul.mubr.bf16.gmra.mrb[0].mxu0 %v8042
        %v9425 = vpop.f32.mrb[0].mxu0
        %v9426 = vadd.f32 %v9137, %v9425
        %v9427 = vpop.f32.mrb[0].mxu0
        %v9428 = vpop.f32.mrb[0].mxu0
        %v9429 = vadd.f32 %v9140, %v9428
        %v9430 = vpop.f32.mrb[0].mxu0
        %9431 = vmatprep.mubr.bf16.mxu0 %v8051
        %9432 = vmatmul.mubr.bf16.gmra.mrb[0].mxu0 %v8050
        %v9433 = vpop.f32.mrb[0].mxu0
        %v9434 = vadd.f32 %v9145, %v9433
        %v9435 = vpop.f32.mrb[0].mxu0
        %v9436 = vpop.f32.mrb[0].mxu0
        %v9437 = vadd.f32 %v9148, %v9436
        %v9438 = vpop.f32.mrb[0].mxu0
        %9439 = vmatprep.mubr.bf16.mxu0 %v8059
        %9440 = vmatmul.mubr.bf16.gmra.mrb[0].mxu0 %v8058
        %v9441 = vpop.f32.mrb[0].mxu0
        %v9442 = vadd.f32 %v9153, %v9441
        %v9443 = vpop.f32.mrb[0].mxu0
        %v9444 = vpop.f32.mrb[0].mxu0
        %v9445 = vadd.f32 %v9156, %v9444
        %v9446 = vpop.f32.mrb[0].mxu0
        %9447 = vmatprep.mubr.bf16.mxu0 %v8067
        %9448 = vmatmul.mubr.bf16.gmra.mrb[0].mxu0 %v8066
        %v9449 = vpop.f32.mrb[0].mxu0
        %v9450 = vadd.f32 %v9161, %v9449
        %v9451 = vpop.f32.mrb[0].mxu0
        %v9452 = vpop.f32.mrb[0].mxu0
        %v9453 = vadd.f32 %v9164, %v9452
        %v9454 = vpop.f32.mrb[0].mxu0
        %9455 = vmatprep.mubr.bf16.mxu0 %v8075
        %9456 = vmatmul.mubr.bf16.gmra.mrb[0].mxu0 %v8074
        %v9457 = vpop.f32.mrb[0].mxu0
        %v9458 = vadd.f32 %v9169, %v9457
        %v9459 = vpop.f32.mrb[0].mxu0
        %v9460 = vpop.f32.mrb[0].mxu0
        %v9461 = vadd.f32 %v9172, %v9460
        %v9462 = vpop.f32.mrb[0].mxu0
        %9463 = vmatprep.mubr.bf16.mxu0 %v8083
        %9464 = vmatmul.mubr.bf16.gmra.mrb[0].mxu0 %v8082
        %v9465 = vpop.f32.mrb[0].mxu0
        %v9466 = vadd.f32 %v9177, %v9465
        %v9467 = vpop.f32.mrb[0].mxu0
        %v9468 = vpop.f32.mrb[0].mxu0
        %v9469 = vadd.f32 %v9180, %v9468
        %v9470 = vpop.f32.mrb[0].mxu0
        %9471 = vmatprep.mubr.bf16.mxu0 %v8091
        %9472 = vmatmul.mubr.bf16.gmra.mrb[0].mxu0 %v8090
        %v9473 = vpop.f32.mrb[0].mxu0
        %v9474 = vadd.f32 %v9185, %v9473
        %v9475 = vpop.f32.mrb[0].mxu0
        %v9476 = vpop.f32.mrb[0].mxu0
        %v9477 = vadd.f32 %v9188, %v9476
        %v9478 = vpop.f32.mrb[0].mxu0
        %9479 = vmatprep.mubr.bf16.mxu0 %v8099
        %9480 = vmatmul.mubr.bf16.gmra.mrb[0].mxu0 %v8098
        %v9481 = vpop.f32.mrb[0].mxu0
        %v9482 = vadd.f32 %v9193, %v9481
        %v9483 = vpop.f32.mrb[0].mxu0
        %v9484 = vpop.f32.mrb[0].mxu0
        %v9485 = vadd.f32 %v9196, %v9484
        %v9486 = vpop.f32.mrb[0].mxu0
        %9487 = vmatprep.mubr.bf16.mxu0 %v8107
        %9488 = vmatmul.mubr.bf16.gmra.mrb[0].mxu0 %v8106
        %v9489 = vpop.f32.mrb[0].mxu0
        %v9490 = vadd.f32 %v9201, %v9489
        %v9491 = vpop.f32.mrb[0].mxu0
        %v9492 = vpop.f32.mrb[0].mxu0
        %v9493 = vadd.f32 %v9204, %v9492
        %v9494 = vpop.f32.mrb[0].mxu0
        %9495 = vmatprep.mubr.bf16.mxu0 %v8115
        %9496 = vmatmul.mubr.bf16.gmra.mrb[0].mxu0 %v8114
        %v9497 = vpop.f32.mrb[0].mxu0
        %v9498 = vadd.f32 %v9209, %v9497
        %v9499 = vpop.f32.mrb[0].mxu0
        %v9500 = vpop.f32.mrb[0].mxu0
        %v9501 = vadd.f32 %v9212, %v9500
        %v9502 = vpop.f32.mrb[0].mxu0
        %9503 = vdwg.mxu0
        %9504 = vmatprep.subr.bf16.mxu0 0
        %9505 = vmatpush1.bf16.msra.mxu0 %v8557
        %9506 = vmatprep.subr.bf16.mxu0 0
        %9507 = vmatpush1.bf16.msra.mxu0 %v8558
        %9508 = vmatprep.subr.bf16.mxu0 0
        %9509 = vmatpush1.bf16.msra.mxu0 %v8559
        %9510 = vmatprep.subr.bf16.mxu0 0
        %9511 = vmatpush1.bf16.msra.mxu0 %v8560
        %9512 = vmatprep.subr.bf16.mxu0 0
        %9513 = vmatpush1.bf16.msra.mxu0 %v8561
        %9514 = vmatprep.subr.bf16.mxu0 0
        %9515 = vmatpush1.bf16.msra.mxu0 %v8562
        %9516 = vmatprep.subr.bf16.mxu0 0
        %9517 = vmatpush1.bf16.msra.mxu0 %v8563
        %9518 = vmatprep.subr.bf16.mxu0 0
        %9519 = vmatpush1.bf16.msra.mxu0 %v8564
        %9520 = vmatprep.subr.bf16.mxu0 0
        %9521 = vmatpush1.bf16.msra.mxu0 %v8565
        %9522 = vmatprep.subr.bf16.mxu0 0
        %9523 = vmatpush1.bf16.msra.mxu0 %v8566
        %9524 = vmatprep.subr.bf16.mxu0 0
        %9525 = vmatpush1.bf16.msra.mxu0 %v8567
        %9526 = vmatprep.subr.bf16.mxu0 0
        %9527 = vmatpush1.bf16.msra.mxu0 %v8568
        %9528 = vmatprep.subr.bf16.mxu0 0
        %9529 = vmatpush1.bf16.msra.mxu0 %v8569
        %9530 = vmatprep.subr.bf16.mxu0 0
        %9531 = vmatpush1.bf16.msra.mxu0 %v8570
        %9532 = vmatprep.subr.bf16.mxu0 0
        %9533 = vmatpush1.bf16.msra.mxu0 %v8571
        %9534 = vmatprep.subr.bf16.mxu0 0
        %9535 = vmatpush1.bf16.msra.mxu0 %v8572
        %9536 = vmatprep.mubr.bf16.mxu0 %v7869
        %9537 = vmatmul.mubr.bf16.gmra.mrb[0].mxu0 %v7868
        %v9538 = vpop.f32.mrb[0].mxu0
        %v9539 = vadd.f32 %v9250, %v9538
        %v9540 = vpop.f32.mrb[0].mxu0
        %v9541 = vpop.f32.mrb[0].mxu0
        %v9542 = vadd.f32 %v9253, %v9541
        %v9543 = vpop.f32.mrb[0].mxu0
        %9544 = vmatprep.mubr.bf16.mxu0 %v7877
        %9545 = vmatmul.mubr.bf16.gmra.mrb[0].mxu0 %v7876
        %v9546 = vpop.f32.mrb[0].mxu0
        %v9547 = vadd.f32 %v9258, %v9546
        %v9548 = vpop.f32.mrb[0].mxu0
        %v9549 = vpop.f32.mrb[0].mxu0
        %v9550 = vadd.f32 %v9261, %v9549
        %v9551 = vpop.f32.mrb[0].mxu0
        %9552 = vmatprep.mubr.bf16.mxu0 %v7885
        %9553 = vmatmul.mubr.bf16.gmra.mrb[0].mxu0 %v7884
        %v9554 = vpop.f32.mrb[0].mxu0
        %v9555 = vadd.f32 %v9266, %v9554
        %v9556 = vpop.f32.mrb[0].mxu0
        %v9557 = vpop.f32.mrb[0].mxu0
        %v9558 = vadd.f32 %v9269, %v9557
        %v9559 = vpop.f32.mrb[0].mxu0
        %9560 = vmatprep.mubr.bf16.mxu0 %v7893
        %9561 = vmatmul.mubr.bf16.gmra.mrb[0].mxu0 %v7892
        %v9562 = vpop.f32.mrb[0].mxu0
        %v9563 = vadd.f32 %v9274, %v9562
        %v9564 = vpop.f32.mrb[0].mxu0
        %v9565 = vpop.f32.mrb[0].mxu0
        %v9566 = vadd.f32 %v9277, %v9565
        %v9567 = vpop.f32.mrb[0].mxu0
        %9568 = vmatprep.mubr.bf16.mxu0 %v7901
        %9569 = vmatmul.mubr.bf16.gmra.mrb[0].mxu0 %v7900
        %v9570 = vpop.f32.mrb[0].mxu0
        %v9571 = vadd.f32 %v9282, %v9570
        %v9572 = vpop.f32.mrb[0].mxu0
        %v9573 = vpop.f32.mrb[0].mxu0
        %v9574 = vadd.f32 %v9285, %v9573
        %v9575 = vpop.f32.mrb[0].mxu0
        %9576 = vmatprep.mubr.bf16.mxu0 %v7909
        %9577 = vmatmul.mubr.bf16.gmra.mrb[0].mxu0 %v7908
        %v9578 = vpop.f32.mrb[0].mxu0
        %v9579 = vadd.f32 %v9290, %v9578
        %v9580 = vpop.f32.mrb[0].mxu0
        %v9581 = vpop.f32.mrb[0].mxu0
        %v9582 = vadd.f32 %v9293, %v9581
        %v9583 = vpop.f32.mrb[0].mxu0
        %9584 = vmatprep.mubr.bf16.mxu0 %v7917
        %9585 = vmatmul.mubr.bf16.gmra.mrb[0].mxu0 %v7916
        %v9586 = vpop.f32.mrb[0].mxu0
        %v9587 = vadd.f32 %v9298, %v9586
        %v9588 = vpop.f32.mrb[0].mxu0
        %v9589 = vpop.f32.mrb[0].mxu0
        %v9590 = vadd.f32 %v9301, %v9589
        %v9591 = vpop.f32.mrb[0].mxu0
        %9592 = vmatprep.mubr.bf16.mxu0 %v7925
        %9593 = vmatmul.mubr.bf16.gmra.mrb[0].mxu0 %v7924
        %v9594 = vpop.f32.mrb[0].mxu0
        %v9595 = vadd.f32 %v9306, %v9594
        %v9596 = vpop.f32.mrb[0].mxu0
        %v9597 = vpop.f32.mrb[0].mxu0
        %v9598 = vadd.f32 %v9309, %v9597
        %v9599 = vpop.f32.mrb[0].mxu0
        %9600 = vmatprep.mubr.bf16.mxu0 %v7933
        %9601 = vmatmul.mubr.bf16.gmra.mrb[0].mxu0 %v7932
        %v9602 = vpop.f32.mrb[0].mxu0
        %v9603 = vadd.f32 %v9314, %v9602
        %v9604 = vpop.f32.mrb[0].mxu0
        %v9605 = vpop.f32.mrb[0].mxu0
        %v9606 = vadd.f32 %v9317, %v9605
        %v9607 = vpop.f32.mrb[0].mxu0
        %9608 = vmatprep.mubr.bf16.mxu0 %v7941
        %9609 = vmatmul.mubr.bf16.gmra.mrb[0].mxu0 %v7940
        %v9610 = vpop.f32.mrb[0].mxu0
        %v9611 = vadd.f32 %v9322, %v9610
        %v9612 = vpop.f32.mrb[0].mxu0
        %v9613 = vpop.f32.mrb[0].mxu0
        %v9614 = vadd.f32 %v9325, %v9613
        %v9615 = vpop.f32.mrb[0].mxu0
        %9616 = vmatprep.mubr.bf16.mxu0 %v7949
        %9617 = vmatmul.mubr.bf16.gmra.mrb[0].mxu0 %v7948
        %v9618 = vpop.f32.mrb[0].mxu0
        %v9619 = vadd.f32 %v9330, %v9618
        %v9620 = vpop.f32.mrb[0].mxu0
        %v9621 = vpop.f32.mrb[0].mxu0
        %v9622 = vadd.f32 %v9333, %v9621
        %v9623 = vpop.f32.mrb[0].mxu0
        %9624 = vmatprep.mubr.bf16.mxu0 %v7957
        %9625 = vmatmul.mubr.bf16.gmra.mrb[0].mxu0 %v7956
        %v9626 = vpop.f32.mrb[0].mxu0
        %v9627 = vadd.f32 %v9338, %v9626
        %v9628 = vpop.f32.mrb[0].mxu0
        %v9629 = vpop.f32.mrb[0].mxu0
        %v9630 = vadd.f32 %v9341, %v9629
        %v9631 = vpop.f32.mrb[0].mxu0
        %9632 = vmatprep.mubr.bf16.mxu0 %v7965
        %9633 = vmatmul.mubr.bf16.gmra.mrb[0].mxu0 %v7964
        %v9634 = vpop.f32.mrb[0].mxu0
        %v9635 = vadd.f32 %v9346, %v9634
        %v9636 = vpop.f32.mrb[0].mxu0
        %v9637 = vpop.f32.mrb[0].mxu0
        %v9638 = vadd.f32 %v9349, %v9637
        %v9639 = vpop.f32.mrb[0].mxu0
        %9640 = vmatprep.mubr.bf16.mxu0 %v7973
        %9641 = vmatmul.mubr.bf16.gmra.mrb[0].mxu0 %v7972
        %v9642 = vpop.f32.mrb[0].mxu0
        %v9643 = vadd.f32 %v9354, %v9642
        %v9644 = vpop.f32.mrb[0].mxu0
        %v9645 = vpop.f32.mrb[0].mxu0
        %v9646 = vadd.f32 %v9357, %v9645
        %v9647 = vpop.f32.mrb[0].mxu0
        %9648 = vmatprep.mubr.bf16.mxu0 %v7981
        %9649 = vmatmul.mubr.bf16.gmra.mrb[0].mxu0 %v7980
        %v9650 = vpop.f32.mrb[0].mxu0
        %v9651 = vadd.f32 %v9362, %v9650
        %v9652 = vpop.f32.mrb[0].mxu0
        %v9653 = vpop.f32.mrb[0].mxu0
        %v9654 = vadd.f32 %v9365, %v9653
        %v9655 = vpop.f32.mrb[0].mxu0
        %9656 = vmatprep.mubr.bf16.mxu0 %v7989
        %9657 = vmatmul.mubr.bf16.gmra.mrb[0].mxu0 %v7988
        %v9658 = vpop.f32.mrb[0].mxu0
        %v9659 = vadd.f32 %v9370, %v9658
        %v9660 = vpop.f32.mrb[0].mxu0
        %v9661 = vpop.f32.mrb[0].mxu0
        %v9662 = vadd.f32 %v9373, %v9661
        %v9663 = vpop.f32.mrb[0].mxu0
        %9664 = vmatprep.mubr.bf16.mxu0 %v7997
        %9665 = vmatmul.mubr.bf16.gmra.mrb[0].mxu0 %v7996
        %v9666 = vpop.f32.mrb[0].mxu0
        %v9667 = vadd.f32 %v9378, %v9666
        %v9668 = vpop.f32.mrb[0].mxu0
        %v9669 = vpop.f32.mrb[0].mxu0
        %v9670 = vadd.f32 %v9381, %v9669
        %v9671 = vpop.f32.mrb[0].mxu0
        %9672 = vmatprep.mubr.bf16.mxu0 %v8005
        %9673 = vmatmul.mubr.bf16.gmra.mrb[0].mxu0 %v8004
        %v9674 = vpop.f32.mrb[0].mxu0
        %v9675 = vadd.f32 %v9386, %v9674
        %v9676 = vpop.f32.mrb[0].mxu0
        %v9677 = vpop.f32.mrb[0].mxu0
        %v9678 = vadd.f32 %v9389, %v9677
        %v9679 = vpop.f32.mrb[0].mxu0
        %9680 = vmatprep.mubr.bf16.mxu0 %v8013
        %9681 = vmatmul.mubr.bf16.gmra.mrb[0].mxu0 %v8012
        %v9682 = vpop.f32.mrb[0].mxu0
        %v9683 = vadd.f32 %v9394, %v9682
        %v9684 = vpop.f32.mrb[0].mxu0
        %v9685 = vpop.f32.mrb[0].mxu0
        %v9686 = vadd.f32 %v9397, %v9685
        %v9687 = vpop.f32.mrb[0].mxu0
        %9688 = vmatprep.mubr.bf16.mxu0 %v8021
        %9689 = vmatmul.mubr.bf16.gmra.mrb[0].mxu0 %v8020
        %v9690 = vpop.f32.mrb[0].mxu0
        %v9691 = vadd.f32 %v9402, %v9690
        %v9692 = vpop.f32.mrb[0].mxu0
        %v9693 = vpop.f32.mrb[0].mxu0
        %v9694 = vadd.f32 %v9405, %v9693
        %v9695 = vpop.f32.mrb[0].mxu0
        %9696 = vmatprep.mubr.bf16.mxu0 %v8029
        %9697 = vmatmul.mubr.bf16.gmra.mrb[0].mxu0 %v8028
        %v9698 = vpop.f32.mrb[0].mxu0
        %v9699 = vadd.f32 %v9410, %v9698
        %v9700 = vpop.f32.mrb[0].mxu0
        %v9701 = vpop.f32.mrb[0].mxu0
        %v9702 = vadd.f32 %v9413, %v9701
        %v9703 = vpop.f32.mrb[0].mxu0
        %9704 = vmatprep.mubr.bf16.mxu0 %v8037
        %9705 = vmatmul.mubr.bf16.gmra.mrb[0].mxu0 %v8036
        %v9706 = vpop.f32.mrb[0].mxu0
        %v9707 = vadd.f32 %v9418, %v9706
        %v9708 = vpop.f32.mrb[0].mxu0
        %v9709 = vpop.f32.mrb[0].mxu0
        %v9710 = vadd.f32 %v9421, %v9709
        %v9711 = vpop.f32.mrb[0].mxu0
        %9712 = vmatprep.mubr.bf16.mxu0 %v8045
        %9713 = vmatmul.mubr.bf16.gmra.mrb[0].mxu0 %v8044
        %v9714 = vpop.f32.mrb[0].mxu0
        %v9715 = vadd.f32 %v9426, %v9714
        %v9716 = vpop.f32.mrb[0].mxu0
        %v9717 = vpop.f32.mrb[0].mxu0
        %v9718 = vadd.f32 %v9429, %v9717
        %v9719 = vpop.f32.mrb[0].mxu0
        %9720 = vmatprep.mubr.bf16.mxu0 %v8053
        %9721 = vmatmul.mubr.bf16.gmra.mrb[0].mxu0 %v8052
        %v9722 = vpop.f32.mrb[0].mxu0
        %v9723 = vadd.f32 %v9434, %v9722
        %v9724 = vpop.f32.mrb[0].mxu0
        %v9725 = vpop.f32.mrb[0].mxu0
        %v9726 = vadd.f32 %v9437, %v9725
        %v9727 = vpop.f32.mrb[0].mxu0
        %9728 = vmatprep.mubr.bf16.mxu0 %v8061
        %9729 = vmatmul.mubr.bf16.gmra.mrb[0].mxu0 %v8060
        %v9730 = vpop.f32.mrb[0].mxu0
        %v9731 = vadd.f32 %v9442, %v9730
        %v9732 = vpop.f32.mrb[0].mxu0
        %v9733 = vpop.f32.mrb[0].mxu0
        %v9734 = vadd.f32 %v9445, %v9733
        %v9735 = vpop.f32.mrb[0].mxu0
        %9736 = vmatprep.mubr.bf16.mxu0 %v8069
        %9737 = vmatmul.mubr.bf16.gmra.mrb[0].mxu0 %v8068
        %v9738 = vpop.f32.mrb[0].mxu0
        %v9739 = vadd.f32 %v9450, %v9738
        %v9740 = vpop.f32.mrb[0].mxu0
        %v9741 = vpop.f32.mrb[0].mxu0
        %v9742 = vadd.f32 %v9453, %v9741
        %v9743 = vpop.f32.mrb[0].mxu0
        %9744 = vmatprep.mubr.bf16.mxu0 %v8077
        %9745 = vmatmul.mubr.bf16.gmra.mrb[0].mxu0 %v8076
        %v9746 = vpop.f32.mrb[0].mxu0
        %v9747 = vadd.f32 %v9458, %v9746
        %v9748 = vpop.f32.mrb[0].mxu0
        %v9749 = vpop.f32.mrb[0].mxu0
        %v9750 = vadd.f32 %v9461, %v9749
        %v9751 = vpop.f32.mrb[0].mxu0
        %9752 = vmatprep.mubr.bf16.mxu0 %v8085
        %9753 = vmatmul.mubr.bf16.gmra.mrb[0].mxu0 %v8084
        %v9754 = vpop.f32.mrb[0].mxu0
        %v9755 = vadd.f32 %v9466, %v9754
        %v9756 = vpop.f32.mrb[0].mxu0
        %v9757 = vpop.f32.mrb[0].mxu0
        %v9758 = vadd.f32 %v9469, %v9757
        %v9759 = vpop.f32.mrb[0].mxu0
        %9760 = vmatprep.mubr.bf16.mxu0 %v8093
        %9761 = vmatmul.mubr.bf16.gmra.mrb[0].mxu0 %v8092
        %v9762 = vpop.f32.mrb[0].mxu0
        %v9763 = vadd.f32 %v9474, %v9762
        %v9764 = vpop.f32.mrb[0].mxu0
        %v9765 = vpop.f32.mrb[0].mxu0
        %v9766 = vadd.f32 %v9477, %v9765
        %v9767 = vpop.f32.mrb[0].mxu0
        %9768 = vmatprep.mubr.bf16.mxu0 %v8101
        %9769 = vmatmul.mubr.bf16.gmra.mrb[0].mxu0 %v8100
        %v9770 = vpop.f32.mrb[0].mxu0
        %v9771 = vadd.f32 %v9482, %v9770
        %v9772 = vpop.f32.mrb[0].mxu0
        %v9773 = vpop.f32.mrb[0].mxu0
        %v9774 = vadd.f32 %v9485, %v9773
        %v9775 = vpop.f32.mrb[0].mxu0
        %9776 = vmatprep.mubr.bf16.mxu0 %v8109
        %9777 = vmatmul.mubr.bf16.gmra.mrb[0].mxu0 %v8108
        %v9778 = vpop.f32.mrb[0].mxu0
        %v9779 = vadd.f32 %v9490, %v9778
        %v9780 = vpop.f32.mrb[0].mxu0
        %v9781 = vpop.f32.mrb[0].mxu0
        %v9782 = vadd.f32 %v9493, %v9781
        %v9783 = vpop.f32.mrb[0].mxu0
        %9784 = vmatprep.mubr.bf16.mxu0 %v8117
        %9785 = vmatmul.mubr.bf16.gmra.mrb[0].mxu0 %v8116
        %v9786 = vpop.f32.mrb[0].mxu0
        %v9787 = vadd.f32 %v9498, %v9786
        %v9788 = vpop.f32.mrb[0].mxu0
        %v9789 = vpop.f32.mrb[0].mxu0
        %v9790 = vadd.f32 %v9501, %v9789
        %v9791 = vpop.f32.mrb[0].mxu0
        %9792 = vdwg.mxu0
        %v9793 = vmul.f32 %v9539, 0.2
        %v9794 = vmul.f32 %v9542, 0.2
        %v9795 = vmul.f32 %v9547, 0.2
        %v9796 = vmul.f32 %v9550, 0.2
        %v9797 = vmul.f32 %v9555, 0.2
        %v9798 = vmul.f32 %v9558, 0.2
        %v9799 = vmul.f32 %v9563, 0.2
        %v9800 = vmul.f32 %v9566, 0.2
        %v9801 = vmul.f32 %v9571, 0.2
        %v9802 = vmul.f32 %v9574, 0.2
        %v9803 = vmul.f32 %v9579, 0.2
        %v9804 = vmul.f32 %v9582, 0.2
        %v9805 = vmul.f32 %v9587, 0.2
        %v9806 = vmul.f32 %v9590, 0.2
        %v9807 = vmul.f32 %v9595, 0.2
        %v9808 = vmul.f32 %v9598, 0.2
        %v9809 = vmul.f32 %v9603, 0.2
        %v9810 = vmul.f32 %v9606, 0.2
        %v9811 = vmul.f32 %v9611, 0.2
        %v9812 = vmul.f32 %v9614, 0.2
        %v9813 = vmul.f32 %v9619, 0.2
        %v9814 = vmul.f32 %v9622, 0.2
        %v9815 = vmul.f32 %v9627, 0.2
        %v9816 = vmul.f32 %v9630, 0.2
        %v9817 = vmul.f32 %v9635, 0.2
        %v9818 = vmul.f32 %v9638, 0.2
        %v9819 = vmul.f32 %v9643, 0.2
        %v9820 = vmul.f32 %v9646, 0.2
        %v9821 = vmul.f32 %v9651, 0.2
        %v9822 = vmul.f32 %v9654, 0.2
        %v9823 = vmul.f32 %v9659, 0.2
        %v9824 = vmul.f32 %v9662, 0.2
        %v9825 = vmul.f32 %v9667, 0.2
        %v9826 = vmul.f32 %v9670, 0.2
        %v9827 = vmul.f32 %v9675, 0.2
        %v9828 = vmul.f32 %v9678, 0.2
        %v9829 = vmul.f32 %v9683, 0.2
        %v9830 = vmul.f32 %v9686, 0.2
        %v9831 = vmul.f32 %v9691, 0.2
        %v9832 = vmul.f32 %v9694, 0.2
        %v9833 = vmul.f32 %v9699, 0.2
        %v9834 = vmul.f32 %v9702, 0.2
        %v9835 = vmul.f32 %v9707, 0.2
        %v9836 = vmul.f32 %v9710, 0.2
        %v9837 = vmul.f32 %v9715, 0.2
        %v9838 = vmul.f32 %v9718, 0.2
        %v9839 = vmul.f32 %v9723, 0.2
        %v9840 = vmul.f32 %v9726, 0.2
        %v9841 = vmul.f32 %v9731, 0.2
        %v9842 = vmul.f32 %v9734, 0.2
        %v9843 = vmul.f32 %v9739, 0.2
        %v9844 = vmul.f32 %v9742, 0.2
        %v9845 = vmul.f32 %v9747, 0.2
        %v9846 = vmul.f32 %v9750, 0.2
        %v9847 = vmul.f32 %v9755, 0.2
        %v9848 = vmul.f32 %v9758, 0.2
        %v9849 = vmul.f32 %v9763, 0.2
        %v9850 = vmul.f32 %v9766, 0.2
        %v9851 = vmul.f32 %v9771, 0.2
        %v9852 = vmul.f32 %v9774, 0.2
        %v9853 = vmul.f32 %v9779, 0.2
        %v9854 = vmul.f32 %v9782, 0.2
        %v9855 = vmul.f32 %v9787, 0.2
        %v9856 = vmul.f32 %v9790, 0.2
        %v9857 = vmax.f32 %v9539, %v9793
        %v9858 = vmax.f32 %v9542, %v9794
        %v9859 = vmax.f32 %v9547, %v9795
        %v9860 = vmax.f32 %v9550, %v9796
        %v9861 = vmax.f32 %v9555, %v9797
        %v9862 = vmax.f32 %v9558, %v9798
        %v9863 = vmax.f32 %v9563, %v9799
        %v9864 = vmax.f32 %v9566, %v9800
        %v9865 = vmax.f32 %v9571, %v9801
        %v9866 = vmax.f32 %v9574, %v9802
        %v9867 = vmax.f32 %v9579, %v9803
        %v9868 = vmax.f32 %v9582, %v9804
        %v9869 = vmax.f32 %v9587, %v9805
        %v9870 = vmax.f32 %v9590, %v9806
        %v9871 = vmax.f32 %v9595, %v9807
        %v9872 = vmax.f32 %v9598, %v9808
        %v9873 = vmax.f32 %v9603, %v9809
        %v9874 = vmax.f32 %v9606, %v9810
        %v9875 = vmax.f32 %v9611, %v9811
        %v9876 = vmax.f32 %v9614, %v9812
        %v9877 = vmax.f32 %v9619, %v9813
        %v9878 = vmax.f32 %v9622, %v9814
        %v9879 = vmax.f32 %v9627, %v9815
        %v9880 = vmax.f32 %v9630, %v9816
        %v9881 = vmax.f32 %v9635, %v9817
        %v9882 = vmax.f32 %v9638, %v9818
        %v9883 = vmax.f32 %v9643, %v9819
        %v9884 = vmax.f32 %v9646, %v9820
        %v9885 = vmax.f32 %v9651, %v9821
        %v9886 = vmax.f32 %v9654, %v9822
        %v9887 = vmax.f32 %v9659, %v9823
        %v9888 = vmax.f32 %v9662, %v9824
        %v9889 = vmax.f32 %v9667, %v9825
        %v9890 = vmax.f32 %v9670, %v9826
        %v9891 = vmax.f32 %v9675, %v9827
        %v9892 = vmax.f32 %v9678, %v9828
        %v9893 = vmax.f32 %v9683, %v9829
        %v9894 = vmax.f32 %v9686, %v9830
        %v9895 = vmax.f32 %v9691, %v9831
        %v9896 = vmax.f32 %v9694, %v9832
        %v9897 = vmax.f32 %v9699, %v9833
        %v9898 = vmax.f32 %v9702, %v9834
        %v9899 = vmax.f32 %v9707, %v9835
        %v9900 = vmax.f32 %v9710, %v9836
        %v9901 = vmax.f32 %v9715, %v9837
        %v9902 = vmax.f32 %v9718, %v9838
        %v9903 = vmax.f32 %v9723, %v9839
        %v9904 = vmax.f32 %v9726, %v9840
        %v9905 = vmax.f32 %v9731, %v9841
        %v9906 = vmax.f32 %v9734, %v9842
        %v9907 = vmax.f32 %v9739, %v9843
        %v9908 = vmax.f32 %v9742, %v9844
        %v9909 = vmax.f32 %v9747, %v9845
        %v9910 = vmax.f32 %v9750, %v9846
        %v9911 = vmax.f32 %v9755, %v9847
        %v9912 = vmax.f32 %v9758, %v9848
        %v9913 = vmax.f32 %v9763, %v9849
        %v9914 = vmax.f32 %v9766, %v9850
        %v9915 = vmax.f32 %v9771, %v9851
        %v9916 = vmax.f32 %v9774, %v9852
        %v9917 = vmax.f32 %v9779, %v9853
        %v9918 = vmax.f32 %v9782, %v9854
        %v9919 = vmax.f32 %v9787, %v9855
        %v9920 = vmax.f32 %v9790, %v9856
        %v9921 = vld [vmem:[%s6] sm:$0xff]
        %v9922 = vld [vmem:[%s6 + $0x8] sm:$0xff]
        %v9923 = vld [vmem:[%s6 + $0x10] sm:$0xff]
        %v9924 = vld [vmem:[%s6 + $0x18] sm:$0xff]
        %v9925 = vld [vmem:[%s6 + $0x20] sm:$0xff]
        %v9926 = vld [vmem:[%s6 + $0x28] sm:$0xff]
        %v9927 = vld [vmem:[%s6 + $0x30] sm:$0xff]
        %v9928 = vld [vmem:[%s6 + $0x38] sm:$0xff]
        %v9929 = vmul.f32 %v9857, %v9921
        %v9930 = vmul.f32 %v9858, %v9922
        %v9931 = vmul.f32 %v9859, %v9923
        %v9932 = vmul.f32 %v9860, %v9924
        %v9933 = vmul.f32 %v9861, %v9925
        %v9934 = vmul.f32 %v9862, %v9926
        %v9935 = vmul.f32 %v9863, %v9927
        %v9936 = vmul.f32 %v9864, %v9928
        %v9937 = vmul.f32 %v9865, %v9921
        %v9938 = vmul.f32 %v9866, %v9922
        %v9939 = vmul.f32 %v9867, %v9923
        %v9940 = vmul.f32 %v9868, %v9924
        %v9941 = vmul.f32 %v9869, %v9925
        %v9942 = vmul.f32 %v9870, %v9926
        %v9943 = vmul.f32 %v9871, %v9927
        %v9944 = vmul.f32 %v9872, %v9928
        %v9945 = vmul.f32 %v9873, %v9921
        %v9946 = vmul.f32 %v9874, %v9922
        %v9947 = vmul.f32 %v9875, %v9923
        %v9948 = vmul.f32 %v9876, %v9924
        %v9949 = vmul.f32 %v9877, %v9925
        %v9950 = vmul.f32 %v9878, %v9926
        %v9951 = vmul.f32 %v9879, %v9927
        %v9952 = vmul.f32 %v9880, %v9928
        %v9953 = vmul.f32 %v9881, %v9921
        %v9954 = vmul.f32 %v9882, %v9922
        %v9955 = vmul.f32 %v9883, %v9923
        %v9956 = vmul.f32 %v9884, %v9924
        %v9957 = vmul.f32 %v9885, %v9925
        %v9958 = vmul.f32 %v9886, %v9926
        %v9959 = vmul.f32 %v9887, %v9927
        %v9960 = vmul.f32 %v9888, %v9928
        %v9961 = vmul.f32 %v9889, %v9921
        %v9962 = vmul.f32 %v9890, %v9922
        %v9963 = vmul.f32 %v9891, %v9923
        %v9964 = vmul.f32 %v9892, %v9924
        %v9965 = vmul.f32 %v9893, %v9925
        %v9966 = vmul.f32 %v9894, %v9926
        %v9967 = vmul.f32 %v9895, %v9927
        %v9968 = vmul.f32 %v9896, %v9928
        %v9969 = vmul.f32 %v9897, %v9921
        %v9970 = vmul.f32 %v9898, %v9922
        %v9971 = vmul.f32 %v9899, %v9923
        %v9972 = vmul.f32 %v9900, %v9924
        %v9973 = vmul.f32 %v9901, %v9925
        %v9974 = vmul.f32 %v9902, %v9926
        %v9975 = vmul.f32 %v9903, %v9927
        %v9976 = vmul.f32 %v9904, %v9928
        %v9977 = vmul.f32 %v9905, %v9921
        %v9978 = vmul.f32 %v9906, %v9922
        %v9979 = vmul.f32 %v9907, %v9923
        %v9980 = vmul.f32 %v9908, %v9924
        %v9981 = vmul.f32 %v9909, %v9925
        %v9982 = vmul.f32 %v9910, %v9926
        %v9983 = vmul.f32 %v9911, %v9927
        %v9984 = vmul.f32 %v9912, %v9928
        %v9985 = vmul.f32 %v9913, %v9921
        %v9986 = vmul.f32 %v9914, %v9922
        %v9987 = vmul.f32 %v9915, %v9923
        %v9988 = vmul.f32 %v9916, %v9924
        %v9989 = vmul.f32 %v9917, %v9925
        %v9990 = vmul.f32 %v9918, %v9926
        %v9991 = vmul.f32 %v9919, %v9927
        %v9992 = vmul.f32 %v9920, %v9928
        %v9993 = vsel %vm1344, %v9929, 0.0
        %9994 = vadd.xlane.f32.xlu0 %v9993
        %v9995 = vpop.xlane.xlu0 %9994
        %v9996 = vsel %vm1344, %v9930, 0.0
        %9997 = vadd.xlane.f32.xlu0 %v9996
        %v9998 = vpop.xlane.xlu0 %9997
        %v9999 = vsel %vm1344, %v9931, 0.0
        %10000 = vadd.xlane.f32.xlu0 %v9999
        %v10001 = vpop.xlane.xlu0 %10000
        %v10002 = vsel %vm1344, %v9932, 0.0
        %10003 = vadd.xlane.f32.xlu0 %v10002
        %v10004 = vpop.xlane.xlu0 %10003
        %v10005 = vsel %vm1344, %v9933, 0.0
        %10006 = vadd.xlane.f32.xlu0 %v10005
        %v10007 = vpop.xlane.xlu0 %10006
        %v10008 = vsel %vm1344, %v9934, 0.0
        %10009 = vadd.xlane.f32.xlu0 %v10008
        %v10010 = vpop.xlane.xlu0 %10009
        %v10011 = vsel %vm1344, %v9935, 0.0
        %10012 = vadd.xlane.f32.xlu0 %v10011
        %v10013 = vpop.xlane.xlu0 %10012
        %v10014 = vsel %vm1344, %v9936, 0.0
        %10015 = vadd.xlane.f32.xlu0 %v10014
        %v10016 = vpop.xlane.xlu0 %10015
        %v10017 = vsel %vm1344, %v9937, 0.0
        %10018 = vadd.xlane.f32.xlu0 %v10017
        %v10019 = vpop.xlane.xlu0 %10018
        %v10020 = vsel %vm1344, %v9938, 0.0
        %10021 = vadd.xlane.f32.xlu0 %v10020
        %v10022 = vpop.xlane.xlu0 %10021
        %v10023 = vsel %vm1344, %v9939, 0.0
        %10024 = vadd.xlane.f32.xlu0 %v10023
        %v10025 = vpop.xlane.xlu0 %10024
        %v10026 = vsel %vm1344, %v9940, 0.0
        %10027 = vadd.xlane.f32.xlu0 %v10026
        %v10028 = vpop.xlane.xlu0 %10027
        %v10029 = vsel %vm1344, %v9941, 0.0
        %10030 = vadd.xlane.f32.xlu0 %v10029
        %v10031 = vpop.xlane.xlu0 %10030
        %v10032 = vsel %vm1344, %v9942, 0.0
        %10033 = vadd.xlane.f32.xlu0 %v10032
        %v10034 = vpop.xlane.xlu0 %10033
        %v10035 = vsel %vm1344, %v9943, 0.0
        %10036 = vadd.xlane.f32.xlu0 %v10035
        %v10037 = vpop.xlane.xlu0 %10036
        %v10038 = vsel %vm1344, %v9944, 0.0
        %10039 = vadd.xlane.f32.xlu0 %v10038
        %v10040 = vpop.xlane.xlu0 %10039
        %v10041 = vsel %vm1344, %v9945, 0.0
        %10042 = vadd.xlane.f32.xlu0 %v10041
        %v10043 = vpop.xlane.xlu0 %10042
        %v10044 = vsel %vm1344, %v9946, 0.0
        %10045 = vadd.xlane.f32.xlu0 %v10044
        %v10046 = vpop.xlane.xlu0 %10045
        %v10047 = vsel %vm1344, %v9947, 0.0
        %10048 = vadd.xlane.f32.xlu0 %v10047
        %v10049 = vpop.xlane.xlu0 %10048
        %v10050 = vsel %vm1344, %v9948, 0.0
        %10051 = vadd.xlane.f32.xlu0 %v10050
        %v10052 = vpop.xlane.xlu0 %10051
        %v10053 = vsel %vm1344, %v9949, 0.0
        %10054 = vadd.xlane.f32.xlu0 %v10053
        %v10055 = vpop.xlane.xlu0 %10054
        %v10056 = vsel %vm1344, %v9950, 0.0
        %10057 = vadd.xlane.f32.xlu0 %v10056
        %v10058 = vpop.xlane.xlu0 %10057
        %v10059 = vsel %vm1344, %v9951, 0.0
        %10060 = vadd.xlane.f32.xlu0 %v10059
        %v10061 = vpop.xlane.xlu0 %10060
        %v10062 = vsel %vm1344, %v9952, 0.0
        %10063 = vadd.xlane.f32.xlu0 %v10062
        %v10064 = vpop.xlane.xlu0 %10063
        %v10065 = vsel %vm1344, %v9953, 0.0
        %10066 = vadd.xlane.f32.xlu0 %v10065
        %v10067 = vpop.xlane.xlu0 %10066
        %v10068 = vsel %vm1344, %v9954, 0.0
        %10069 = vadd.xlane.f32.xlu0 %v10068
        %v10070 = vpop.xlane.xlu0 %10069
        %v10071 = vsel %vm1344, %v9955, 0.0
        %10072 = vadd.xlane.f32.xlu0 %v10071
        %v10073 = vpop.xlane.xlu0 %10072
        %v10074 = vsel %vm1344, %v9956, 0.0
        %10075 = vadd.xlane.f32.xlu0 %v10074
        %v10076 = vpop.xlane.xlu0 %10075
        %v10077 = vsel %vm1344, %v9957, 0.0
        %10078 = vadd.xlane.f32.xlu0 %v10077
        %v10079 = vpop.xlane.xlu0 %10078
        %v10080 = vsel %vm1344, %v9958, 0.0
        %10081 = vadd.xlane.f32.xlu0 %v10080
        %v10082 = vpop.xlane.xlu0 %10081
        %v10083 = vsel %vm1344, %v9959, 0.0
        %10084 = vadd.xlane.f32.xlu0 %v10083
        %v10085 = vpop.xlane.xlu0 %10084
        %v10086 = vsel %vm1344, %v9960, 0.0
        %10087 = vadd.xlane.f32.xlu0 %v10086
        %v10088 = vpop.xlane.xlu0 %10087
        %v10089 = vsel %vm1344, %v9961, 0.0
        %10090 = vadd.xlane.f32.xlu0 %v10089
        %v10091 = vpop.xlane.xlu0 %10090
        %v10092 = vsel %vm1344, %v9962, 0.0
        %10093 = vadd.xlane.f32.xlu0 %v10092
        %v10094 = vpop.xlane.xlu0 %10093
        %v10095 = vsel %vm1344, %v9963, 0.0
        %10096 = vadd.xlane.f32.xlu0 %v10095
        %v10097 = vpop.xlane.xlu0 %10096
        %v10098 = vsel %vm1344, %v9964, 0.0
        %10099 = vadd.xlane.f32.xlu0 %v10098
        %v10100 = vpop.xlane.xlu0 %10099
        %v10101 = vsel %vm1344, %v9965, 0.0
        %10102 = vadd.xlane.f32.xlu0 %v10101
        %v10103 = vpop.xlane.xlu0 %10102
        %v10104 = vsel %vm1344, %v9966, 0.0
        %10105 = vadd.xlane.f32.xlu0 %v10104
        %v10106 = vpop.xlane.xlu0 %10105
        %v10107 = vsel %vm1344, %v9967, 0.0
        %10108 = vadd.xlane.f32.xlu0 %v10107
        %v10109 = vpop.xlane.xlu0 %10108
        %v10110 = vsel %vm1344, %v9968, 0.0
        %10111 = vadd.xlane.f32.xlu0 %v10110
        %v10112 = vpop.xlane.xlu0 %10111
        %v10113 = vsel %vm1344, %v9969, 0.0
        %10114 = vadd.xlane.f32.xlu0 %v10113
        %v10115 = vpop.xlane.xlu0 %10114
        %v10116 = vsel %vm1344, %v9970, 0.0
        %10117 = vadd.xlane.f32.xlu0 %v10116
        %v10118 = vpop.xlane.xlu0 %10117
        %v10119 = vsel %vm1344, %v9971, 0.0
        %10120 = vadd.xlane.f32.xlu0 %v10119
        %v10121 = vpop.xlane.xlu0 %10120
        %v10122 = vsel %vm1344, %v9972, 0.0
        %10123 = vadd.xlane.f32.xlu0 %v10122
        %v10124 = vpop.xlane.xlu0 %10123
        %v10125 = vsel %vm1344, %v9973, 0.0
        %10126 = vadd.xlane.f32.xlu0 %v10125
        %v10127 = vpop.xlane.xlu0 %10126
        %v10128 = vsel %vm1344, %v9974, 0.0
        %10129 = vadd.xlane.f32.xlu0 %v10128
        %v10130 = vpop.xlane.xlu0 %10129
        %v10131 = vsel %vm1344, %v9975, 0.0
        %10132 = vadd.xlane.f32.xlu0 %v10131
        %v10133 = vpop.xlane.xlu0 %10132
        %v10134 = vsel %vm1344, %v9976, 0.0
        %10135 = vadd.xlane.f32.xlu0 %v10134
        %v10136 = vpop.xlane.xlu0 %10135
        %v10137 = vsel %vm1344, %v9977, 0.0
        %10138 = vadd.xlane.f32.xlu0 %v10137
        %v10139 = vpop.xlane.xlu0 %10138
        %v10140 = vsel %vm1344, %v9978, 0.0
        %10141 = vadd.xlane.f32.xlu0 %v10140
        %v10142 = vpop.xlane.xlu0 %10141
        %v10143 = vsel %vm1344, %v9979, 0.0
        %10144 = vadd.xlane.f32.xlu0 %v10143
        %v10145 = vpop.xlane.xlu0 %10144
        %v10146 = vsel %vm1344, %v9980, 0.0
        %10147 = vadd.xlane.f32.xlu0 %v10146
        %v10148 = vpop.xlane.xlu0 %10147
        %v10149 = vsel %vm1344, %v9981, 0.0
        %10150 = vadd.xlane.f32.xlu0 %v10149
        %v10151 = vpop.xlane.xlu0 %10150
        %v10152 = vsel %vm1344, %v9982, 0.0
        %10153 = vadd.xlane.f32.xlu0 %v10152
        %v10154 = vpop.xlane.xlu0 %10153
        %v10155 = vsel %vm1344, %v9983, 0.0
        %10156 = vadd.xlane.f32.xlu0 %v10155
        %v10157 = vpop.xlane.xlu0 %10156
        %v10158 = vsel %vm1344, %v9984, 0.0
        %10159 = vadd.xlane.f32.xlu0 %v10158
        %v10160 = vpop.xlane.xlu0 %10159
        %v10161 = vsel %vm1344, %v9985, 0.0
        %10162 = vadd.xlane.f32.xlu0 %v10161
        %v10163 = vpop.xlane.xlu0 %10162
        %v10164 = vsel %vm1344, %v9986, 0.0
        %10165 = vadd.xlane.f32.xlu0 %v10164
        %v10166 = vpop.xlane.xlu0 %10165
        %v10167 = vsel %vm1344, %v9987, 0.0
        %10168 = vadd.xlane.f32.xlu0 %v10167
        %v10169 = vpop.xlane.xlu0 %10168
        %v10170 = vsel %vm1344, %v9988, 0.0
        %10171 = vadd.xlane.f32.xlu0 %v10170
        %v10172 = vpop.xlane.xlu0 %10171
        %v10173 = vsel %vm1344, %v9989, 0.0
        %10174 = vadd.xlane.f32.xlu0 %v10173
        %v10175 = vpop.xlane.xlu0 %10174
        %v10176 = vsel %vm1344, %v9990, 0.0
        %10177 = vadd.xlane.f32.xlu0 %v10176
        %v10178 = vpop.xlane.xlu0 %10177
        %v10179 = vsel %vm1344, %v9991, 0.0
        %10180 = vadd.xlane.f32.xlu0 %v10179
        %v10181 = vpop.xlane.xlu0 %10180
        %v10182 = vsel %vm1344, %v9992, 0.0
        %10183 = vadd.xlane.f32.xlu0 %v10182
        %v10184 = vpop.xlane.xlu0 %10183
        %v10249 = vlaneseq
        %v10250 = vand.u32 %v10249, 127
        %v10251 = vlaneseq
        %v10252 = vshrl.u32 %v10251, 7
        %v10253 = vsub.s32 %v10250, %v10252
        %v10254 = vrot.slane %v9995, %v10253
        %v10255 = vadd.s32 %v10250, 4294967288
        %v10256 = vlaneseq
        %v10257 = vshrl.u32 %v10256, 7
        %v10258 = vsub.s32 %v10255, %v10257
        %v10259 = vrot.slane %v9998, %v10258
        %vm10260 = vcmask 130112
        %v10261 = vsel %vm10260, %v10259, %v10254
        %v10262 = vadd.s32 %v10250, 4294967280
        %v10263 = vlaneseq
        %v10264 = vshrl.u32 %v10263, 7
        %v10265 = vsub.s32 %v10262, %v10264
        %v10266 = vrot.slane %v10001, %v10265
        %vm10267 = vcmask 195712
        %v10268 = vsel %vm10267, %v10266, %v10261
        %v10269 = vadd.s32 %v10250, 4294967272
        %v10270 = vlaneseq
        %v10271 = vshrl.u32 %v10270, 7
        %v10272 = vsub.s32 %v10269, %v10271
        %v10273 = vrot.slane %v10004, %v10272
        %vm10274 = vcmask 261312
        %v10275 = vsel %vm10274, %v10273, %v10268
        %v10276 = vadd.s32 %v10250, 4294967264
        %v10277 = vlaneseq
        %v10278 = vshrl.u32 %v10277, 7
        %v10279 = vsub.s32 %v10276, %v10278
        %v10280 = vrot.slane %v10007, %v10279
        %vm10281 = vcmask 326912
        %v10282 = vsel %vm10281, %v10280, %v10275
        %v10283 = vadd.s32 %v10250, 4294967256
        %v10284 = vlaneseq
        %v10285 = vshrl.u32 %v10284, 7
        %v10286 = vsub.s32 %v10283, %v10285
        %v10287 = vrot.slane %v10010, %v10286
        %vm10288 = vcmask 392512
        %v10289 = vsel %vm10288, %v10287, %v10282
        %v10290 = vadd.s32 %v10250, 4294967248
        %v10291 = vlaneseq
        %v10292 = vshrl.u32 %v10291, 7
        %v10293 = vsub.s32 %v10290, %v10292
        %v10294 = vrot.slane %v10013, %v10293
        %vm10295 = vcmask 458112
        %v10296 = vsel %vm10295, %v10294, %v10289
        %v10297 = vadd.s32 %v10250, 4294967240
        %v10298 = vlaneseq
        %v10299 = vshrl.u32 %v10298, 7
        %v10300 = vsub.s32 %v10297, %v10299
        %v10301 = vrot.slane %v10016, %v10300
        %vm10302 = vcmask 523712
        %v10303 = vsel %vm10302, %v10301, %v10296
        %v10304 = vlaneseq
        %v10305 = vshrl.u32 %v10304, 7
        %v10306 = vsub.s32 %v10250, %v10305
        %v10307 = vrot.slane %v10019, %v10306
        %v10308 = vlaneseq
        %v10309 = vshrl.u32 %v10308, 7
        %v10310 = vsub.s32 %v10255, %v10309
        %v10311 = vrot.slane %v10022, %v10310
        %v10312 = vsel %vm10260, %v10311, %v10307
        %v10313 = vlaneseq
        %v10314 = vshrl.u32 %v10313, 7
        %v10315 = vsub.s32 %v10262, %v10314
        %v10316 = vrot.slane %v10025, %v10315
        %v10317 = vsel %vm10267, %v10316, %v10312
        %v10318 = vlaneseq
        %v10319 = vshrl.u32 %v10318, 7
        %v10320 = vsub.s32 %v10269, %v10319
        %v10321 = vrot.slane %v10028, %v10320
        %v10322 = vsel %vm10274, %v10321, %v10317
        %v10323 = vlaneseq
        %v10324 = vshrl.u32 %v10323, 7
        %v10325 = vsub.s32 %v10276, %v10324
        %v10326 = vrot.slane %v10031, %v10325
        %v10327 = vsel %vm10281, %v10326, %v10322
        %v10328 = vlaneseq
        %v10329 = vshrl.u32 %v10328, 7
        %v10330 = vsub.s32 %v10283, %v10329
        %v10331 = vrot.slane %v10034, %v10330
        %v10332 = vsel %vm10288, %v10331, %v10327
        %v10333 = vlaneseq
        %v10334 = vshrl.u32 %v10333, 7
        %v10335 = vsub.s32 %v10290, %v10334
        %v10336 = vrot.slane %v10037, %v10335
        %v10337 = vsel %vm10295, %v10336, %v10332
        %v10338 = vlaneseq
        %v10339 = vshrl.u32 %v10338, 7
        %v10340 = vsub.s32 %v10297, %v10339
        %v10341 = vrot.slane %v10040, %v10340
        %v10342 = vsel %vm10302, %v10341, %v10337
        %v10343 = vlaneseq
        %v10344 = vshrl.u32 %v10343, 7
        %v10345 = vsub.s32 %v10250, %v10344
        %v10346 = vrot.slane %v10043, %v10345
        %v10347 = vlaneseq
        %v10348 = vshrl.u32 %v10347, 7
        %v10349 = vsub.s32 %v10255, %v10348
        %v10350 = vrot.slane %v10046, %v10349
        %v10351 = vsel %vm10260, %v10350, %v10346
        %v10352 = vlaneseq
        %v10353 = vshrl.u32 %v10352, 7
        %v10354 = vsub.s32 %v10262, %v10353
        %v10355 = vrot.slane %v10049, %v10354
        %v10356 = vsel %vm10267, %v10355, %v10351
        %v10357 = vlaneseq
        %v10358 = vshrl.u32 %v10357, 7
        %v10359 = vsub.s32 %v10269, %v10358
        %v10360 = vrot.slane %v10052, %v10359
        %v10361 = vsel %vm10274, %v10360, %v10356
        %v10362 = vlaneseq
        %v10363 = vshrl.u32 %v10362, 7
        %v10364 = vsub.s32 %v10276, %v10363
        %v10365 = vrot.slane %v10055, %v10364
        %v10366 = vsel %vm10281, %v10365, %v10361
        %v10367 = vlaneseq
        %v10368 = vshrl.u32 %v10367, 7
        %v10369 = vsub.s32 %v10283, %v10368
        %v10370 = vrot.slane %v10058, %v10369
        %v10371 = vsel %vm10288, %v10370, %v10366
        %v10372 = vlaneseq
        %v10373 = vshrl.u32 %v10372, 7
        %v10374 = vsub.s32 %v10290, %v10373
        %v10375 = vrot.slane %v10061, %v10374
        %v10376 = vsel %vm10295, %v10375, %v10371
        %v10377 = vlaneseq
        %v10378 = vshrl.u32 %v10377, 7
        %v10379 = vsub.s32 %v10297, %v10378
        %v10380 = vrot.slane %v10064, %v10379
        %v10381 = vsel %vm10302, %v10380, %v10376
        %v10382 = vlaneseq
        %v10383 = vshrl.u32 %v10382, 7
        %v10384 = vsub.s32 %v10250, %v10383
        %v10385 = vrot.slane %v10067, %v10384
        %v10386 = vlaneseq
        %v10387 = vshrl.u32 %v10386, 7
        %v10388 = vsub.s32 %v10255, %v10387
        %v10389 = vrot.slane %v10070, %v10388
        %v10390 = vsel %vm10260, %v10389, %v10385
        %v10391 = vlaneseq
        %v10392 = vshrl.u32 %v10391, 7
        %v10393 = vsub.s32 %v10262, %v10392
        %v10394 = vrot.slane %v10073, %v10393
        %v10395 = vsel %vm10267, %v10394, %v10390
        %v10396 = vlaneseq
        %v10397 = vshrl.u32 %v10396, 7
        %v10398 = vsub.s32 %v10269, %v10397
        %v10399 = vrot.slane %v10076, %v10398
        %v10400 = vsel %vm10274, %v10399, %v10395
        %v10401 = vlaneseq
        %v10402 = vshrl.u32 %v10401, 7
        %v10403 = vsub.s32 %v10276, %v10402
        %v10404 = vrot.slane %v10079, %v10403
        %v10405 = vsel %vm10281, %v10404, %v10400
        %v10406 = vlaneseq
        %v10407 = vshrl.u32 %v10406, 7
        %v10408 = vsub.s32 %v10283, %v10407
        %v10409 = vrot.slane %v10082, %v10408
        %v10410 = vsel %vm10288, %v10409, %v10405
        %v10411 = vlaneseq
        %v10412 = vshrl.u32 %v10411, 7
        %v10413 = vsub.s32 %v10290, %v10412
        %v10414 = vrot.slane %v10085, %v10413
        %v10415 = vsel %vm10295, %v10414, %v10410
        %v10416 = vlaneseq
        %v10417 = vshrl.u32 %v10416, 7
        %v10418 = vsub.s32 %v10297, %v10417
        %v10419 = vrot.slane %v10088, %v10418
        %v10420 = vsel %vm10302, %v10419, %v10415
        %v10421 = vlaneseq
        %v10422 = vshrl.u32 %v10421, 7
        %v10423 = vsub.s32 %v10250, %v10422
        %v10424 = vrot.slane %v10091, %v10423
        %v10425 = vlaneseq
        %v10426 = vshrl.u32 %v10425, 7
        %v10427 = vsub.s32 %v10255, %v10426
        %v10428 = vrot.slane %v10094, %v10427
        %v10429 = vsel %vm10260, %v10428, %v10424
        %v10430 = vlaneseq
        %v10431 = vshrl.u32 %v10430, 7
        %v10432 = vsub.s32 %v10262, %v10431
        %v10433 = vrot.slane %v10097, %v10432
        %v10434 = vsel %vm10267, %v10433, %v10429
        %v10435 = vlaneseq
        %v10436 = vshrl.u32 %v10435, 7
        %v10437 = vsub.s32 %v10269, %v10436
        %v10438 = vrot.slane %v10100, %v10437
        %v10439 = vsel %vm10274, %v10438, %v10434
        %v10440 = vlaneseq
        %v10441 = vshrl.u32 %v10440, 7
        %v10442 = vsub.s32 %v10276, %v10441
        %v10443 = vrot.slane %v10103, %v10442
        %v10444 = vsel %vm10281, %v10443, %v10439
        %v10445 = vlaneseq
        %v10446 = vshrl.u32 %v10445, 7
        %v10447 = vsub.s32 %v10283, %v10446
        %v10448 = vrot.slane %v10106, %v10447
        %v10449 = vsel %vm10288, %v10448, %v10444
        %v10450 = vlaneseq
        %v10451 = vshrl.u32 %v10450, 7
        %v10452 = vsub.s32 %v10290, %v10451
        %v10453 = vrot.slane %v10109, %v10452
        %v10454 = vsel %vm10295, %v10453, %v10449
        %v10455 = vlaneseq
        %v10456 = vshrl.u32 %v10455, 7
        %v10457 = vsub.s32 %v10297, %v10456
        %v10458 = vrot.slane %v10112, %v10457
        %v10459 = vsel %vm10302, %v10458, %v10454
        %v10460 = vlaneseq
        %v10461 = vshrl.u32 %v10460, 7
        %v10462 = vsub.s32 %v10250, %v10461
        %v10463 = vrot.slane %v10115, %v10462
        %v10464 = vlaneseq
        %v10465 = vshrl.u32 %v10464, 7
        %v10466 = vsub.s32 %v10255, %v10465
        %v10467 = vrot.slane %v10118, %v10466
        %v10468 = vsel %vm10260, %v10467, %v10463
        %v10469 = vlaneseq
        %v10470 = vshrl.u32 %v10469, 7
        %v10471 = vsub.s32 %v10262, %v10470
        %v10472 = vrot.slane %v10121, %v10471
        %v10473 = vsel %vm10267, %v10472, %v10468
        %v10474 = vlaneseq
        %v10475 = vshrl.u32 %v10474, 7
        %v10476 = vsub.s32 %v10269, %v10475
        %v10477 = vrot.slane %v10124, %v10476
        %v10478 = vsel %vm10274, %v10477, %v10473
        %v10479 = vlaneseq
        %v10480 = vshrl.u32 %v10479, 7
        %v10481 = vsub.s32 %v10276, %v10480
        %v10482 = vrot.slane %v10127, %v10481
        %v10483 = vsel %vm10281, %v10482, %v10478
        %v10484 = vlaneseq
        %v10485 = vshrl.u32 %v10484, 7
        %v10486 = vsub.s32 %v10283, %v10485
        %v10487 = vrot.slane %v10130, %v10486
        %v10488 = vsel %vm10288, %v10487, %v10483
        %v10489 = vlaneseq
        %v10490 = vshrl.u32 %v10489, 7
        %v10491 = vsub.s32 %v10290, %v10490
        %v10492 = vrot.slane %v10133, %v10491
        %v10493 = vsel %vm10295, %v10492, %v10488
        %v10494 = vlaneseq
        %v10495 = vshrl.u32 %v10494, 7
        %v10496 = vsub.s32 %v10297, %v10495
        %v10497 = vrot.slane %v10136, %v10496
        %v10498 = vsel %vm10302, %v10497, %v10493
        %v10499 = vlaneseq
        %v10500 = vshrl.u32 %v10499, 7
        %v10501 = vsub.s32 %v10250, %v10500
        %v10502 = vrot.slane %v10139, %v10501
        %v10503 = vlaneseq
        %v10504 = vshrl.u32 %v10503, 7
        %v10505 = vsub.s32 %v10255, %v10504
        %v10506 = vrot.slane %v10142, %v10505
        %v10507 = vsel %vm10260, %v10506, %v10502
        %v10508 = vlaneseq
        %v10509 = vshrl.u32 %v10508, 7
        %v10510 = vsub.s32 %v10262, %v10509
        %v10511 = vrot.slane %v10145, %v10510
        %v10512 = vsel %vm10267, %v10511, %v10507
        %v10513 = vlaneseq
        %v10514 = vshrl.u32 %v10513, 7
        %v10515 = vsub.s32 %v10269, %v10514
        %v10516 = vrot.slane %v10148, %v10515
        %v10517 = vsel %vm10274, %v10516, %v10512
        %v10518 = vlaneseq
        %v10519 = vshrl.u32 %v10518, 7
        %v10520 = vsub.s32 %v10276, %v10519
        %v10521 = vrot.slane %v10151, %v10520
        %v10522 = vsel %vm10281, %v10521, %v10517
        %v10523 = vlaneseq
        %v10524 = vshrl.u32 %v10523, 7
        %v10525 = vsub.s32 %v10283, %v10524
        %v10526 = vrot.slane %v10154, %v10525
        %v10527 = vsel %vm10288, %v10526, %v10522
        %v10528 = vlaneseq
        %v10529 = vshrl.u32 %v10528, 7
        %v10530 = vsub.s32 %v10290, %v10529
        %v10531 = vrot.slane %v10157, %v10530
        %v10532 = vsel %vm10295, %v10531, %v10527
        %v10533 = vlaneseq
        %v10534 = vshrl.u32 %v10533, 7
        %v10535 = vsub.s32 %v10297, %v10534
        %v10536 = vrot.slane %v10160, %v10535
        %v10537 = vsel %vm10302, %v10536, %v10532
        %v10538 = vlaneseq
        %v10539 = vshrl.u32 %v10538, 7
        %v10540 = vsub.s32 %v10250, %v10539
        %v10541 = vrot.slane %v10163, %v10540
        %v10542 = vlaneseq
        %v10543 = vshrl.u32 %v10542, 7
        %v10544 = vsub.s32 %v10255, %v10543
        %v10545 = vrot.slane %v10166, %v10544
        %v10546 = vsel %vm10260, %v10545, %v10541
        %v10547 = vlaneseq
        %v10548 = vshrl.u32 %v10547, 7
        %v10549 = vsub.s32 %v10262, %v10548
        %v10550 = vrot.slane %v10169, %v10549
        %v10551 = vsel %vm10267, %v10550, %v10546
        %v10552 = vlaneseq
        %v10553 = vshrl.u32 %v10552, 7
        %v10554 = vsub.s32 %v10269, %v10553
        %v10555 = vrot.slane %v10172, %v10554
        %v10556 = vsel %vm10274, %v10555, %v10551
        %v10557 = vlaneseq
        %v10558 = vshrl.u32 %v10557, 7
        %v10559 = vsub.s32 %v10276, %v10558
        %v10560 = vrot.slane %v10175, %v10559
        %v10561 = vsel %vm10281, %v10560, %v10556
        %v10562 = vlaneseq
        %v10563 = vshrl.u32 %v10562, 7
        %v10564 = vsub.s32 %v10283, %v10563
        %v10565 = vrot.slane %v10178, %v10564
        %v10566 = vsel %vm10288, %v10565, %v10561
        %v10567 = vlaneseq
        %v10568 = vshrl.u32 %v10567, 7
        %v10569 = vsub.s32 %v10290, %v10568
        %v10570 = vrot.slane %v10181, %v10569
        %v10571 = vsel %vm10295, %v10570, %v10566
        %v10572 = vlaneseq
        %v10573 = vshrl.u32 %v10572, 7
        %v10574 = vsub.s32 %v10297, %v10573
        %v10575 = vrot.slane %v10184, %v10574
        %v10576 = vsel %vm10302, %v10575, %v10571
        %vm10577 = vcmask 1041409
        %v10578 = vsel %vm10577, %v10342, %v10303
        %vm10579 = vcmask 1042434
        %v10580 = vsel %vm10579, %v10381, %v10578
        %vm10581 = vcmask 1043459
        %v10582 = vsel %vm10581, %v10420, %v10580
        %vm10583 = vcmask 1044484
        %v10584 = vsel %vm10583, %v10459, %v10582
        %vm10585 = vcmask 1045509
        %v10586 = vsel %vm10585, %v10498, %v10584
        %vm10587 = vcmask 1046534
        %v10588 = vsel %vm10587, %v10537, %v10586
        %vm10589 = vcmask 1047559
        %v10590 = vsel %vm10589, %v10576, %v10588
        %v10592 = vsel %vm1344, %v10590, 0.0
        %10593 = vadd.xlane.f32.xlu0 %v10592
        %v10594 = vpop.xlane.xlu0 %10593
        %v10595 = vld [vmem:[#allocation4] sm:$0x1]
        %v10597 = vlaneseq
        %v10598 = vshrl.u32 %v10597, 7
        %v10599 = vsub.s32 0, %v10598
        %v10600 = vrot.slane %v10595, %v10599
        %v10602 = vadd.f32 %v10594, %v10600
        %v10603 = vsub.f32 0.0, %v10602
        %v10604 = vmul.f32 %v10603, 1.442695
        %v10605 = vpow.pop %v10604
        %v10606 = vadd.f32 %v10605, 1.0
        %v10607 = vrcp.pop %v10606
        %v10608 = vlaneseq
        %v10609 = vshrl.u32 %v10608, 7
        %vm10610 = vcmp.eq.s32.totalorder %v10609, %v10250
        %10612 = vset.pattern.permute.xlu0 0
        %10613 = vperm.xlu0 %10612, %v10607
        %v10614 = vpop.permute.xlu0 %10613
        %v10616 = vsel %vm10610, %v10614, 0.0
        %vm10617 = vcmask 64512
        %v10618 = vsel %vm10617, %v10616, 0.0
        %v10619 = vrot.slane %v10618, 4
        %v10620 = vadd.f32 %v10618, %v10619
        %v10621 = vrot.slane %v10620, 2
        %v10622 = vadd.f32 %v10620, %v10621
        %v10623 = vrot.slane %v10622, 1
        %v10624 = vadd.f32 %v10622, %v10623
        %vm10625 = vcmask 57344
        %10626 = vst.msk [vmem:[%s855] sm:$0x1] %vm10625, %v10624
        %p10627 = scmp.lt.s32.totalorder %s21, 1
        %s10628 = scalar_select %p10627, %s21, 1
        %s10629 = scalar_lea.vmem %s8, %s10628
        // Predicated region
        $region94: #{discriminator_forward.1} parent=88 // pred_check
          %p10630 = pneg %p212
        $region95: #{discriminator_forward.1} parent=88 // pred_check_branch
          %10632 = sbr.rel (%p10630) target = $region97
        $region96: #{discriminator_forward.1} parent=88 // pred_region
          _
        $region97: #{discriminator_forward.1} parent=88 // pred_fallthru
          _
      $region89: #{discriminator_forward.1} parent=5 // pred_fallthru
        _
      %p10633 = scmp.le.s32.totalorder 2, %s16
      // Predicated region
      $region98: #{discriminator_forward.1} parent=5 // pred_check
        %p10634 = pneg %p10633
      $region99: #{discriminator_forward.1} parent=5 // pred_check_branch
        %10636 = sbr.rel (%p10634) target = $region101
      $region100: #{discriminator_forward.1} parent=5 // pred_region
        %s10637 = ssub.s32 %s16, 2
        // Predicated region
        $region102: #{discriminator_forward.1} parent=100 // pred_check
          %p10638 = pneg %p218
        $region103: #{discriminator_forward.1} parent=100 // pred_check_branch
          %10640 = sbr.rel (%p10638) target = $region105
        $region104: #{discriminator_forward.1} parent=100 // pred_region
          %p10641 = scmp.lt.s32.totalorder %s22, 1
          %s10642 = scalar_select %p10641, %s22, 1
          %s10643 = scalar_lea.vmem %s8, %s10642
        $region105: #{discriminator_forward.1} parent=100 // pred_fallthru
          _
      $region101: #{discriminator_forward.1} parent=5 // pred_fallthru
        _
    $region6: #{discriminator_forward.1} parent=1 // loop_footer
      %s20 = sadd.s32 1, %s16
    $region7: #{discriminator_forward.1} parent=1 // loop_footer_branch
      %15 = sbr.rel target = $region3
    $region8: #{discriminator_forward.1} parent=1 // loop_exit
      _

</llo_original>
